<compile_context>
chip_gen: v7x
topology: tpu7x:2x2x1
jax: 0.10.0
libtpu: 0.0.40
codegen_flags: <defaults>
</compile_context>

<pallas_src>
import functools

import jax
import jax.numpy as jnp
from jax.experimental import pallas as pl
from jax.experimental.pallas import tpu as pltpu


def _pick_row_tile(m, max_tile=256):
    """Largest multiple-of-8 row tile <= max_tile that divides m (else m)."""
    if m <= max_tile:
        return m
    for t in range(max_tile, 7, -8):
        if m % t == 0:
            return t
    return m


# ---------------------------------------------------------------------------
# K1: fused q/k 1x1 projections + channel concat.
# ---------------------------------------------------------------------------
def _qk_proj_concat_kernel(q_ref, k_ref, wq_ref, bq_ref, wk_ref, bk_ref, o_ref):
    # q_ref: (TM, Cq)  k_ref: (TM, Ck)  wq: (Cq, Co)  wk: (Ck, Co)
    # bq/bk: (1, Co) f32   o_ref: (TM, 2*Co)
    co = wq_ref.shape[-1]
    yq = jnp.dot(q_ref[...], wq_ref[...], preferred_element_type=jnp.float32)
    yq = yq + bq_ref[...]
    yk = jnp.dot(k_ref[...], wk_ref[...], preferred_element_type=jnp.float32)
    yk = yk + bk_ref[...]
    o_ref[:, :co] = yq.astype(o_ref.dtype)
    o_ref[:, co:] = yk.astype(o_ref.dtype)


def qk_proj_concat(q2d, k2d, wq, bq, wk, bk):
    m, cq = q2d.shape
    ck = k2d.shape[1]
    co = wq.shape[1]
    tm = _pick_row_tile(m)
    bq2 = bq.reshape(1, co).astype(jnp.float32)
    bk2 = bk.reshape(1, co).astype(jnp.float32)

    itemsize = q2d.dtype.itemsize
    cost = pl.CostEstimate(
        flops=2 * m * (cq + ck) * co,
        transcendentals=0,
        bytes_accessed=(q2d.size + k2d.size + wq.size + wk.size) * itemsize
        + (bq2.size + bk2.size) * 4
        + m * 2 * co * itemsize,
    )
    return pl.pallas_call(
        _qk_proj_concat_kernel,
        out_shape=jax.ShapeDtypeStruct((m, 2 * co), q2d.dtype),
        grid=(m // tm,),
        in_specs=[
            pl.BlockSpec((tm, cq), lambda i: (i, 0)),
            pl.BlockSpec((tm, ck), lambda i: (i, 0)),
            pl.BlockSpec((cq, co), lambda i: (0, 0)),   # weights stay resident
            pl.BlockSpec((1, co), lambda i: (0, 0)),
            pl.BlockSpec((ck, co), lambda i: (0, 0)),
            pl.BlockSpec((1, co), lambda i: (0, 0)),
        ],
        out_specs=pl.BlockSpec((tm, 2 * co), lambda i: (i, 0)),
        compiler_params=pltpu.CompilerParams(dimension_semantics=("parallel",)),
        cost_estimate=cost,
    )(q2d, k2d, wq, bq2, wk, bk2)


# ---------------------------------------------------------------------------
# K2: 3x3 conv (pad=1) + bias + ReLU as 9 shifted-slab matmuls.
# ---------------------------------------------------------------------------
def _conv3x3_relu_kernel(x_ref, w_ref, b_ref, o_ref, *, wp):
    # x_ref: (1, Lin, Cin) flattened zero-padded spatial grid
    # w_ref: (9, Cin, Cout)   b_ref: (1, Cout) f32   o_ref: (1, Lo, Cout)
    lo = o_ref.shape[1]
    cout = o_ref.shape[2]
    acc = jnp.zeros((lo, cout), jnp.float32) + b_ref[...]   # bias folded into init
    for t in range(9):                                      # 9 taps, unrolled
        dy, dx = t // 3, t % 3
        start = dy * wp + dx                                # static offset
        lhs = x_ref[0, pl.ds(start, lo), :]
        acc = acc + jnp.dot(lhs, w_ref[t], preferred_element_type=jnp.float32)
    o_ref[0, :, :] = jnp.maximum(acc, 0.0).astype(o_ref.dtype)


def conv3x3_relu(x_nhwc, w_hwio, b):
    bsz, h, w, cin = x_nhwc.shape
    cout = w_hwio.shape[-1]
    wp = w + 2
    lo = h * wp
    x_pad = jnp.pad(x_nhwc, ((0, 0), (1, 1), (1, 1), (0, 0)))
    x_flat = x_pad.reshape(bsz, (h + 2) * wp, cin)
    # extra zero rows so the largest tap offset (2*wp + 2) stays in bounds
    x_flat = jnp.pad(x_flat, ((0, 0), (0, 8), (0, 0)))
    lin = x_flat.shape[1]
    w9 = w_hwio.reshape(9, cin, cout)
    b2 = b.reshape(1, cout).astype(jnp.float32)

    itemsize = x_nhwc.dtype.itemsize
    cost = pl.CostEstimate(
        flops=2 * bsz * lo * 9 * cin * cout,
        transcendentals=0,
        bytes_accessed=(x_flat.size + w9.size) * itemsize + b2.size * 4
        + bsz * lo * cout * itemsize,
    )
    out_flat = pl.pallas_call(
        functools.partial(_conv3x3_relu_kernel, wp=wp),
        out_shape=jax.ShapeDtypeStruct((bsz, lo, cout), x_nhwc.dtype),
        grid=(bsz,),
        in_specs=[
            pl.BlockSpec((1, lin, cin), lambda i: (i, 0, 0)),
            pl.BlockSpec((9, cin, cout), lambda i: (0, 0, 0)),
            pl.BlockSpec((1, cout), lambda i: (0, 0)),
        ],
        out_specs=pl.BlockSpec((1, lo, cout), lambda i: (i, 0, 0)),
        compiler_params=pltpu.CompilerParams(dimension_semantics=("parallel",)),
        cost_estimate=cost,
    )(x_flat, w9, b2)
    # rows whose (flat % wp) >= w are junk from the padded-width grid; drop them.
    return out_flat.reshape(bsz, h, wp, cout)[:, :, :w, :]


# ---------------------------------------------------------------------------
# K3: 1-channel attention logit + sigmoid + gate (out = k * att).
# ---------------------------------------------------------------------------
def _attn_gate_kernel(f_ref, k_ref, wa_ref, ba_ref, o_ref):
    # f_ref: (TM, Co)  k_ref: (TM, Ck)  wa_ref: (1, Co)  ba_ref: (1, 1) f32
    prod = f_ref[...].astype(jnp.float32) * wa_ref[...].astype(jnp.float32)
    logit = jnp.sum(prod, axis=-1, keepdims=True) + ba_ref[...]
    gate = 1.0 / (1.0 + jnp.exp(-logit))                 # sigmoid (EUP)
    o_ref[...] = (k_ref[...].astype(jnp.float32) * gate).astype(o_ref.dtype)


def attn_gate(f2d, k2d, wa_row, ba_11):
    m, co = f2d.shape
    ck = k2d.shape[1]
    tm = _pick_row_tile(m)
    cost = pl.CostEstimate(
        flops=2 * m * co + 4 * m * ck,
        transcendentals=m,
        bytes_accessed=f2d.size * f2d.dtype.itemsize
        + 2 * k2d.size * k2d.dtype.itemsize
        + wa_row.size * wa_row.dtype.itemsize + 4,
    )
    return pl.pallas_call(
        _attn_gate_kernel,
        out_shape=jax.ShapeDtypeStruct((m, ck), k2d.dtype),
        grid=(m // tm,),
        in_specs=[
            pl.BlockSpec((tm, co), lambda i: (i, 0)),
            pl.BlockSpec((tm, ck), lambda i: (i, 0)),
            pl.BlockSpec((1, co), lambda i: (0, 0)),
            pl.BlockSpec((1, 1), lambda i: (0, 0)),
        ],
        out_specs=pl.BlockSpec((tm, ck), lambda i: (i, 0)),
        compiler_params=pltpu.CompilerParams(dimension_semantics=("parallel",)),
        cost_estimate=cost,
    )(f2d, k2d, wa_row, ba_11)


# ---------------------------------------------------------------------------
# Forward wrapper (NCHW in / NCHW out, matching the PyTorch module).
# ---------------------------------------------------------------------------
def qkplus_forward(q, k, params, *, compute_dtype=None):
    """q: (B,Cq,H,W), k: (B,Ck,H,W). compute_dtype=jnp.bfloat16 recommended on
    v6e/v7x for MXU operands (accumulation stays f32)."""
    cd = jnp.dtype(compute_dtype) if compute_dtype is not None else q.dtype
    q_nhwc = jnp.transpose(q, (0, 2, 3, 1))
    k_nhwc = jnp.transpose(k, (0, 2, 3, 1))
    bsz, h, w, cq = q_nhwc.shape
    ck = k_nhwc.shape[-1]
    co = params["wq"].shape[-1]
    m = bsz * h * w

    q2d = q_nhwc.reshape(m, cq).astype(cd)
    k2d = k_nhwc.reshape(m, ck)

    combined2d = qk_proj_concat(
        q2d, k2d.astype(cd),
        params["wq"].astype(cd), params["bq"],
        params["wk"].astype(cd), params["bk"])
    combined = combined2d.reshape(bsz, h, w, 2 * co)

    h1 = conv3x3_relu(combined, params["w1"].astype(cd), params["b1"])
    h2 = conv3x3_relu(h1, params["w2"].astype(cd), params["b2"])

    f2d = h2.reshape(m, co)
    out2d = attn_gate(
        f2d, k2d,
        params["wa"].reshape(1, co).astype(cd),
        params["ba"].reshape(1, 1).astype(jnp.float32))
    return jnp.transpose(out2d.reshape(bsz, h, w, ck), (0, 3, 1, 2))


# ---------------------------------------------------------------------------
# Pure-JAX reference for verification.
# ---------------------------------------------------------------------------
def qkplus_reference(q, k, p):
    q_nhwc = jnp.transpose(q, (0, 2, 3, 1))
    k_nhwc = jnp.transpose(k, (0, 2, 3, 1))
    qp = jnp.einsum("bhwc,co->bhwo", q_nhwc, p["wq"]) + p["bq"]
    kp = jnp.einsum("bhwc,co->bhwo", k_nhwc, p["wk"]) + p["bk"]
    comb = jnp.concatenate([qp, kp], axis=-1)

    def conv(x, wgt, b):
        y = jax.lax.conv_general_dilated(
            x, wgt, (1, 1), "SAME",
            dimension_numbers=("NHWC", "HWIO", "NHWC"))
        return jnp.maximum(y + b, 0.0)

    fused = conv(conv(comb, p["w1"], p["b1"]), p["w2"], p["b2"])
    logit = jnp.einsum("bhwc,c->bhw", fused, p["wa"]) + p["ba"]
    gate = jax.nn.sigmoid(logit)[..., None]
    return jnp.transpose(k_nhwc * gate, (0, 3, 1, 2))


if __name__ == "__main__":
    key = jax.random.PRNGKey(0)
    ks = jax.random.split(key, 12)

    batch, height, width = 2, 16, 16
    q_channels, k_channels, out_channels = 8, 8, 64
    co = out_channels

    q = jax.random.normal(ks[0], (batch, q_channels, height, width), jnp.float32)
    k = jax.random.normal(ks[1], (batch, k_channels, height, width), jnp.float32)

    params = {
        "wq": jax.random.normal(ks[2], (q_channels, co), jnp.float32) / q_channels ** 0.5,
        "bq": jax.random.normal(ks[3], (co,), jnp.float32) * 0.01,
        "wk": jax.random.normal(ks[4], (k_channels, co), jnp.float32) / k_channels ** 0.5,
        "bk": jax.random.normal(ks[5], (co,), jnp.float32) * 0.01,
        "w1": jax.random.normal(ks[6], (3, 3, 2 * co, co), jnp.float32) / (9 * 2 * co) ** 0.5,
        "b1": jax.random.normal(ks[7], (co,), jnp.float32) * 0.01,
        "w2": jax.random.normal(ks[8], (3, 3, co, co), jnp.float32) / (9 * co) ** 0.5,
        "b2": jax.random.normal(ks[9], (co,), jnp.float32) * 0.01,
        "wa": jax.random.normal(ks[10], (co,), jnp.float32) / co ** 0.5,
        "ba": jax.random.normal(ks[11], (), jnp.float32) * 0.01,
    }

    out = jax.jit(qkplus_forward)(q, k, params)
    jax.block_until_ready(out)

    ref = qkplus_reference(q, k, params)
    assert out.shape == k.shape, (out.shape, k.shape)
    assert jnp.allclose(out, ref, atol=1e-3, rtol=1e-3), float(jnp.max(jnp.abs(out - ref)))

    print("KERNEL_OK")
</pallas_src>

<mosaic_0001>
module attributes {stable_mosaic.version = 11 : i64} {
  func.func @_qk_proj_concat_kernel(%arg0: i32, %arg1: memref<256x8xf32, #tpu.memory_space<vmem>>, %arg2: memref<256x8xf32, #tpu.memory_space<vmem>>, %arg3: memref<8x64xf32, #tpu.memory_space<vmem>>, %arg4: memref<1x64xf32, #tpu.memory_space<vmem>>, %arg5: memref<8x64xf32, #tpu.memory_space<vmem>>, %arg6: memref<1x64xf32, #tpu.memory_space<vmem>>, %arg7: memref<256x128xf32, #tpu.memory_space<vmem>>) attributes {dimension_semantics = [#tpu.dimension_semantics<parallel>], iteration_bounds = array<i64: 2>, scalar_prefetch = 0 : i64, scratch_operands = 0 : i64, tpu.core_type = #tpu.core_type<tc>, window_params = [{transform_indices = @transform_0, window_bounds = array<i64: 256, 8>}, {transform_indices = @transform_1, window_bounds = array<i64: 256, 8>}, {pipeline_mode = #tpu.pipeline_mode<synchronous>, transform_indices = @transform_2, window_bounds = array<i64: 8, 64>}, {pipeline_mode = #tpu.pipeline_mode<synchronous>, transform_indices = @transform_3, window_bounds = array<i64: 1, 64>}, {pipeline_mode = #tpu.pipeline_mode<synchronous>, transform_indices = @transform_4, window_bounds = array<i64: 8, 64>}, {pipeline_mode = #tpu.pipeline_mode<synchronous>, transform_indices = @transform_5, window_bounds = array<i64: 1, 64>}, {transform_indices = @transform_6, window_bounds = array<i64: 256, 128>}]} {
    %c0 = arith.constant 0 : index
    %c0_0 = arith.constant 0 : index
    %0 = vector.load %arg1[%c0, %c0_0] : memref<256x8xf32, #tpu.memory_space<vmem>>, vector<256x8xf32>
    %c0_1 = arith.constant 0 : index
    %c0_2 = arith.constant 0 : index
    %1 = vector.load %arg3[%c0_1, %c0_2] : memref<8x64xf32, #tpu.memory_space<vmem>>, vector<8x64xf32>
    %cst = arith.constant dense<0.000000e+00> : vector<256x64xf32>
    %2 = tpu.matmul %0, %1, %cst {dimension_numbers = #tpu.dot_dimension_numbers<[1], [0], [0], [1], [0, 0, 1, 1], [], []>} : vector<256x8xf32>, vector<8x64xf32>, vector<256x64xf32> -> vector<256x64xf32>
    %c0_3 = arith.constant 0 : index
    %c0_4 = arith.constant 0 : index
    %3 = vector.load %arg4[%c0_3, %c0_4] : memref<1x64xf32, #tpu.memory_space<vmem>>, vector<1x64xf32>
    %4 = vector.broadcast %3 : vector<1x64xf32> to vector<256x64xf32>
    %5 = arith.addf %2, %4 : vector<256x64xf32>
    %c0_5 = arith.constant 0 : index
    %c0_6 = arith.constant 0 : index
    %6 = vector.load %arg2[%c0_5, %c0_6] : memref<256x8xf32, #tpu.memory_space<vmem>>, vector<256x8xf32>
    %c0_7 = arith.constant 0 : index
    %c0_8 = arith.constant 0 : index
    %7 = vector.load %arg5[%c0_7, %c0_8] : memref<8x64xf32, #tpu.memory_space<vmem>>, vector<8x64xf32>
    %cst_9 = arith.constant dense<0.000000e+00> : vector<256x64xf32>
    %8 = tpu.matmul %6, %7, %cst_9 {dimension_numbers = #tpu.dot_dimension_numbers<[1], [0], [0], [1], [0, 0, 1, 1], [], []>} : vector<256x8xf32>, vector<8x64xf32>, vector<256x64xf32> -> vector<256x64xf32>
    %c0_10 = arith.constant 0 : index
    %c0_11 = arith.constant 0 : index
    %9 = vector.load %arg6[%c0_10, %c0_11] : memref<1x64xf32, #tpu.memory_space<vmem>>, vector<1x64xf32>
    %10 = vector.broadcast %9 : vector<1x64xf32> to vector<256x64xf32>
    %11 = arith.addf %8, %10 : vector<256x64xf32>
    %c0_12 = arith.constant 0 : index
    %c0_13 = arith.constant 0 : index
    %12 = vector.load %arg7[%c0_12, %c0_13] : memref<256x128xf32, #tpu.memory_space<vmem>>, vector<256x64xf32>
    tpu.vector_store %arg7[%c0_12, %c0_13], %5 {strides = array<i32>} : memref<256x128xf32, #tpu.memory_space<vmem>>, vector<256x64xf32>,
    %c0_14 = arith.constant 0 : index
    %c64 = arith.constant 64 : index
    %13 = vector.load %arg7[%c0_14, %c64] : memref<256x128xf32, #tpu.memory_space<vmem>>, vector<256x64xf32>
    tpu.vector_store %arg7[%c0_14, %c64], %11 {strides = array<i32>} : memref<256x128xf32, #tpu.memory_space<vmem>>, vector<256x64xf32>,
    return
  }
  func.func @transform_0(%arg0: i32) -> (i32, i32) {
    %c0_i32 = arith.constant 0 : i32
    %c0_i32_0 = arith.constant 0 : i32
    return %arg0, %c0_i32 : i32, i32
  }
  func.func @transform_1(%arg0: i32) -> (i32, i32) {
    %c0_i32 = arith.constant 0 : i32
    %c0_i32_0 = arith.constant 0 : i32
    return %arg0, %c0_i32 : i32, i32
  }
  func.func @transform_2(%arg0: i32) -> (i32, i32) {
    %c0_i32 = arith.constant 0 : i32
    %c0_i32_0 = arith.constant 0 : i32
    %c0_i32_1 = arith.constant 0 : i32
    return %c0_i32, %c0_i32_0 : i32, i32
  }
  func.func @transform_3(%arg0: i32) -> (i32, i32) {
    %c0_i32 = arith.constant 0 : i32
    %c0_i32_0 = arith.constant 0 : i32
    %c0_i32_1 = arith.constant 0 : i32
    return %c0_i32, %c0_i32_0 : i32, i32
  }
  func.func @transform_4(%arg0: i32) -> (i32, i32) {
    %c0_i32 = arith.constant 0 : i32
    %c0_i32_0 = arith.constant 0 : i32
    %c0_i32_1 = arith.constant 0 : i32
    return %c0_i32, %c0_i32_0 : i32, i32
  }
  func.func @transform_5(%arg0: i32) -> (i32, i32) {
    %c0_i32 = arith.constant 0 : i32
    %c0_i32_0 = arith.constant 0 : i32
    %c0_i32_1 = arith.constant 0 : i32
    return %c0_i32, %c0_i32_0 : i32, i32
  }
  func.func @transform_6(%arg0: i32) -> (i32, i32) {
    %c0_i32 = arith.constant 0 : i32
    %c0_i32_0 = arith.constant 0 : i32
    return %arg0, %c0_i32 : i32, i32
  }
}

module attributes {stable_mosaic.version = 11 : i64} {
  func.func @_conv3x3_relu_kernel(%arg0: i32, %arg1: memref<1x332x128xf32, #tpu.memory_space<vmem>>, %arg2: memref<9x128x64xf32, #tpu.memory_space<vmem>>, %arg3: memref<1x64xf32, #tpu.memory_space<vmem>>, %arg4: memref<1x288x64xf32, #tpu.memory_space<vmem>>) attributes {dimension_semantics = [#tpu.dimension_semantics<parallel>], iteration_bounds = array<i64: 2>, scalar_prefetch = 0 : i64, scratch_operands = 0 : i64, tpu.core_type = #tpu.core_type<tc>, window_params = [{transform_indices = @transform_0, window_bounds = array<i64: 1, 332, 128>}, {pipeline_mode = #tpu.pipeline_mode<synchronous>, transform_indices = @transform_1, window_bounds = array<i64: 9, 128, 64>}, {pipeline_mode = #tpu.pipeline_mode<synchronous>, transform_indices = @transform_2, window_bounds = array<i64: 1, 64>}, {transform_indices = @transform_3, window_bounds = array<i64: 1, 288, 64>}]} {
    %cst = arith.constant 0.000000e+00 : f32
    %0 = vector.broadcast %cst : f32 to vector<288x64xf32>
    %c0 = arith.constant 0 : index
    %c0_0 = arith.constant 0 : index
    %1 = vector.load %arg3[%c0, %c0_0] : memref<1x64xf32, #tpu.memory_space<vmem>>, vector<1x64xf32>
    %2 = vector.broadcast %1 : vector<1x64xf32> to vector<288x64xf32>
    %3 = arith.addf %0, %2 : vector<288x64xf32>
    %c0_1 = arith.constant 0 : index
    %c0_2 = arith.constant 0 : index
    %c0_3 = arith.constant 0 : index
    %4 = vector.load %arg1[%c0_1, %c0_2, %c0_3] : memref<1x332x128xf32, #tpu.memory_space<vmem>>, vector<1x288x128xf32>
    %5 = vector.shape_cast %4 : vector<1x288x128xf32> to vector<288x128xf32>
    %c0_4 = arith.constant 0 : index
    %c0_5 = arith.constant 0 : index
    %c0_6 = arith.constant 0 : index
    %6 = vector.load %arg2[%c0_4, %c0_5, %c0_6] : memref<9x128x64xf32, #tpu.memory_space<vmem>>, vector<1x128x64xf32>
    %7 = vector.shape_cast %6 : vector<1x128x64xf32> to vector<128x64xf32>
    %cst_7 = arith.constant dense<0.000000e+00> : vector<288x64xf32>
    %8 = tpu.matmul %5, %7, %cst_7 {dimension_numbers = #tpu.dot_dimension_numbers<[1], [0], [0], [1], [0, 0, 1, 1], [], []>} : vector<288x128xf32>, vector<128x64xf32>, vector<288x64xf32> -> vector<288x64xf32>
    %9 = arith.addf %3, %8 : vector<288x64xf32>
    %c0_8 = arith.constant 0 : index
    %c1 = arith.constant 1 : index
    %c0_9 = arith.constant 0 : index
    %10 = vector.load %arg1[%c0_8, %c1, %c0_9] : memref<1x332x128xf32, #tpu.memory_space<vmem>>, vector<1x288x128xf32>
    %11 = vector.shape_cast %10 : vector<1x288x128xf32> to vector<288x128xf32>
    %c1_10 = arith.constant 1 : index
    %c0_11 = arith.constant 0 : index
    %c0_12 = arith.constant 0 : index
    %12 = vector.load %arg2[%c1_10, %c0_11, %c0_12] : memref<9x128x64xf32, #tpu.memory_space<vmem>>, vector<1x128x64xf32>
    %13 = vector.shape_cast %12 : vector<1x128x64xf32> to vector<128x64xf32>
    %cst_13 = arith.constant dense<0.000000e+00> : vector<288x64xf32>
    %14 = tpu.matmul %11, %13, %cst_13 {dimension_numbers = #tpu.dot_dimension_numbers<[1], [0], [0], [1], [0, 0, 1, 1], [], []>} : vector<288x128xf32>, vector<128x64xf32>, vector<288x64xf32> -> vector<288x64xf32>
    %15 = arith.addf %9, %14 : vector<288x64xf32>
    %c0_14 = arith.constant 0 : index
    %c2 = arith.constant 2 : index
    %c0_15 = arith.constant 0 : index
    %16 = vector.load %arg1[%c0_14, %c2, %c0_15] : memref<1x332x128xf32, #tpu.memory_space<vmem>>, vector<1x288x128xf32>
    %17 = vector.shape_cast %16 : vector<1x288x128xf32> to vector<288x128xf32>
    %c2_16 = arith.constant 2 : index
    %c0_17 = arith.constant 0 : index
    %c0_18 = arith.constant 0 : index
    %18 = vector.load %arg2[%c2_16, %c0_17, %c0_18] : memref<9x128x64xf32, #tpu.memory_space<vmem>>, vector<1x128x64xf32>
    %19 = vector.shape_cast %18 : vector<1x128x64xf32> to vector<128x64xf32>
    %cst_19 = arith.constant dense<0.000000e+00> : vector<288x64xf32>
    %20 = tpu.matmul %17, %19, %cst_19 {dimension_numbers = #tpu.dot_dimension_numbers<[1], [0], [0], [1], [0, 0, 1, 1], [], []>} : vector<288x128xf32>, vector<128x64xf32>, vector<288x64xf32> -> vector<288x64xf32>
    %21 = arith.addf %15, %20 : vector<288x64xf32>
    %c0_20 = arith.constant 0 : index
    %c18 = arith.constant 18 : index
    %c0_21 = arith.constant 0 : index
    %22 = vector.load %arg1[%c0_20, %c18, %c0_21] : memref<1x332x128xf32, #tpu.memory_space<vmem>>, vector<1x288x128xf32>
    %23 = vector.shape_cast %22 : vector<1x288x128xf32> to vector<288x128xf32>
    %c3 = arith.constant 3 : index
    %c0_22 = arith.constant 0 : index
    %c0_23 = arith.constant 0 : index
    %24 = vector.load %arg2[%c3, %c0_22, %c0_23] : memref<9x128x64xf32, #tpu.memory_space<vmem>>, vector<1x128x64xf32>
    %25 = vector.shape_cast %24 : vector<1x128x64xf32> to vector<128x64xf32>
    %cst_24 = arith.constant dense<0.000000e+00> : vector<288x64xf32>
    %26 = tpu.matmul %23, %25, %cst_24 {dimension_numbers = #tpu.dot_dimension_numbers<[1], [0], [0], [1], [0, 0, 1, 1], [], []>} : vector<288x128xf32>, vector<128x64xf32>, vector<288x64xf32> -> vector<288x64xf32>
    %27 = arith.addf %21, %26 : vector<288x64xf32>
    %c0_25 = arith.constant 0 : index
    %c19 = arith.constant 19 : index
    %c0_26 = arith.constant 0 : index
    %28 = vector.load %arg1[%c0_25, %c19, %c0_26] : memref<1x332x128xf32, #tpu.memory_space<vmem>>, vector<1x288x128xf32>
    %29 = vector.shape_cast %28 : vector<1x288x128xf32> to vector<288x128xf32>
    %c4 = arith.constant 4 : index
    %c0_27 = arith.constant 0 : index
    %c0_28 = arith.constant 0 : index
    %30 = vector.load %arg2[%c4, %c0_27, %c0_28] : memref<9x128x64xf32, #tpu.memory_space<vmem>>, vector<1x128x64xf32>
    %31 = vector.shape_cast %30 : vector<1x128x64xf32> to vector<128x64xf32>
    %cst_29 = arith.constant dense<0.000000e+00> : vector<288x64xf32>
    %32 = tpu.matmul %29, %31, %cst_29 {dimension_numbers = #tpu.dot_dimension_numbers<[1], [0], [0], [1], [0, 0, 1, 1], [], []>} : vector<288x128xf32>, vector<128x64xf32>, vector<288x64xf32> -> vector<288x64xf32>
    %33 = arith.addf %27, %32 : vector<288x64xf32>
    %c0_30 = arith.constant 0 : index
    %c20 = arith.constant 20 : index
    %c0_31 = arith.constant 0 : index
    %34 = vector.load %arg1[%c0_30, %c20, %c0_31] : memref<1x332x128xf32, #tpu.memory_space<vmem>>, vector<1x288x128xf32>
    %35 = vector.shape_cast %34 : vector<1x288x128xf32> to vector<288x128xf32>
    %c5 = arith.constant 5 : index
    %c0_32 = arith.constant 0 : index
    %c0_33 = arith.constant 0 : index
    %36 = vector.load %arg2[%c5, %c0_32, %c0_33] : memref<9x128x64xf32, #tpu.memory_space<vmem>>, vector<1x128x64xf32>
    %37 = vector.shape_cast %36 : vector<1x128x64xf32> to vector<128x64xf32>
    %cst_34 = arith.constant dense<0.000000e+00> : vector<288x64xf32>
    %38 = tpu.matmul %35, %37, %cst_34 {dimension_numbers = #tpu.dot_dimension_numbers<[1], [0], [0], [1], [0, 0, 1, 1], [], []>} : vector<288x128xf32>, vector<128x64xf32>, vector<288x64xf32> -> vector<288x64xf32>
    %39 = arith.addf %33, %38 : vector<288x64xf32>
    %c0_35 = arith.constant 0 : index
    %c36 = arith.constant 36 : index
    %c0_36 = arith.constant 0 : index
    %40 = vector.load %arg1[%c0_35, %c36, %c0_36] : memref<1x332x128xf32, #tpu.memory_space<vmem>>, vector<1x288x128xf32>
    %41 = vector.shape_cast %40 : vector<1x288x128xf32> to vector<288x128xf32>
    %c6 = arith.constant 6 : index
    %c0_37 = arith.constant 0 : index
    %c0_38 = arith.constant 0 : index
    %42 = vector.load %arg2[%c6, %c0_37, %c0_38] : memref<9x128x64xf32, #tpu.memory_space<vmem>>, vector<1x128x64xf32>
    %43 = vector.shape_cast %42 : vector<1x128x64xf32> to vector<128x64xf32>
    %cst_39 = arith.constant dense<0.000000e+00> : vector<288x64xf32>
    %44 = tpu.matmul %41, %43, %cst_39 {dimension_numbers = #tpu.dot_dimension_numbers<[1], [0], [0], [1], [0, 0, 1, 1], [], []>} : vector<288x128xf32>, vector<128x64xf32>, vector<288x64xf32> -> vector<288x64xf32>
    %45 = arith.addf %39, %44 : vector<288x64xf32>
    %c0_40 = arith.constant 0 : index
    %c37 = arith.constant 37 : index
    %c0_41 = arith.constant 0 : index
    %46 = vector.load %arg1[%c0_40, %c37, %c0_41] : memref<1x332x128xf32, #tpu.memory_space<vmem>>, vector<1x288x128xf32>
    %47 = vector.shape_cast %46 : vector<1x288x128xf32> to vector<288x128xf32>
    %c7 = arith.constant 7 : index
    %c0_42 = arith.constant 0 : index
    %c0_43 = arith.constant 0 : index
    %48 = vector.load %arg2[%c7, %c0_42, %c0_43] : memref<9x128x64xf32, #tpu.memory_space<vmem>>, vector<1x128x64xf32>
    %49 = vector.shape_cast %48 : vector<1x128x64xf32> to vector<128x64xf32>
    %cst_44 = arith.constant dense<0.000000e+00> : vector<288x64xf32>
    %50 = tpu.matmul %47, %49, %cst_44 {dimension_numbers = #tpu.dot_dimension_numbers<[1], [0], [0], [1], [0, 0, 1, 1], [], []>} : vector<288x128xf32>, vector<128x64xf32>, vector<288x64xf32> -> vector<288x64xf32>
    %51 = arith.addf %45, %50 : vector<288x64xf32>
    %c0_45 = arith.constant 0 : index
    %c38 = arith.constant 38 : index
    %c0_46 = arith.constant 0 : index
    %52 = vector.load %arg1[%c0_45, %c38, %c0_46] : memref<1x332x128xf32, #tpu.memory_space<vmem>>, vector<1x288x128xf32>
    %53 = vector.shape_cast %52 : vector<1x288x128xf32> to vector<288x128xf32>
    %c8 = arith.constant 8 : index
    %c0_47 = arith.constant 0 : index
    %c0_48 = arith.constant 0 : index
    %54 = vector.load %arg2[%c8, %c0_47, %c0_48] : memref<9x128x64xf32, #tpu.memory_space<vmem>>, vector<1x128x64xf32>
    %55 = vector.shape_cast %54 : vector<1x128x64xf32> to vector<128x64xf32>
    %cst_49 = arith.constant dense<0.000000e+00> : vector<288x64xf32>
    %56 = tpu.matmul %53, %55, %cst_49 {dimension_numbers = #tpu.dot_dimension_numbers<[1], [0], [0], [1], [0, 0, 1, 1], [], []>} : vector<288x128xf32>, vector<128x64xf32>, vector<288x64xf32> -> vector<288x64xf32>
    %57 = arith.addf %51, %56 : vector<288x64xf32>
    %cst_50 = arith.constant 0.000000e+00 : f32
    %58 = vector.broadcast %cst_50 : f32 to vector<288x64xf32>
    %59 = arith.maximumf %57, %58 : vector<288x64xf32>
    %c0_51 = arith.constant 0 : index
    %c0_52 = arith.constant 0 : index
    %c0_53 = arith.constant 0 : index
    %60 = vector.load %arg4[%c0_51, %c0_52, %c0_53] : memref<1x288x64xf32, #tpu.memory_space<vmem>>, vector<1x288x64xf32>
    %61 = vector.shape_cast %60 : vector<1x288x64xf32> to vector<288x64xf32>
    %62 = vector.shape_cast %59 : vector<288x64xf32> to vector<1x288x64xf32>
    tpu.vector_store %arg4[%c0_51, %c0_52, %c0_53], %62 {strides = array<i32>} : memref<1x288x64xf32, #tpu.memory_space<vmem>>, vector<1x288x64xf32>,
    return
  }
  func.func @transform_0(%arg0: i32) -> (i32, i32, i32) {
    %c0_i32 = arith.constant 0 : i32
    %c0_i32_0 = arith.constant 0 : i32
    %c0_i32_1 = arith.constant 0 : i32
    return %arg0, %c0_i32, %c0_i32_0 : i32, i32, i32
  }
  func.func @transform_1(%arg0: i32) -> (i32, i32, i32) {
    %c0_i32 = arith.constant 0 : i32
    %c0_i32_0 = arith.constant 0 : i32
    %c0_i32_1 = arith.constant 0 : i32
    %c0_i32_2 = arith.constant 0 : i32
    return %c0_i32, %c0_i32_0, %c0_i32_1 : i32, i32, i32
  }
  func.func @transform_2(%arg0: i32) -> (i32, i32) {
    %c0_i32 = arith.constant 0 : i32
    %c0_i32_0 = arith.constant 0 : i32
    %c0_i32_1 = arith.constant 0 : i32
    return %c0_i32, %c0_i32_0 : i32, i32
  }
  func.func @transform_3(%arg0: i32) -> (i32, i32, i32) {
    %c0_i32 = arith.constant 0 : i32
    %c0_i32_0 = arith.constant 0 : i32
    %c0_i32_1 = arith.constant 0 : i32
    return %arg0, %c0_i32, %c0_i32_0 : i32, i32, i32
  }
}

module attributes {stable_mosaic.version = 11 : i64} {
  func.func @_conv3x3_relu_kernel(%arg0: i32, %arg1: memref<1x332x64xf32, #tpu.memory_space<vmem>>, %arg2: memref<9x64x64xf32, #tpu.memory_space<vmem>>, %arg3: memref<1x64xf32, #tpu.memory_space<vmem>>, %arg4: memref<1x288x64xf32, #tpu.memory_space<vmem>>) attributes {dimension_semantics = [#tpu.dimension_semantics<parallel>], iteration_bounds = array<i64: 2>, scalar_prefetch = 0 : i64, scratch_operands = 0 : i64, tpu.core_type = #tpu.core_type<tc>, window_params = [{transform_indices = @transform_0, window_bounds = array<i64: 1, 332, 64>}, {pipeline_mode = #tpu.pipeline_mode<synchronous>, transform_indices = @transform_1, window_bounds = array<i64: 9, 64, 64>}, {pipeline_mode = #tpu.pipeline_mode<synchronous>, transform_indices = @transform_2, window_bounds = array<i64: 1, 64>}, {transform_indices = @transform_3, window_bounds = array<i64: 1, 288, 64>}]} {
    %cst = arith.constant 0.000000e+00 : f32
    %0 = vector.broadcast %cst : f32 to vector<288x64xf32>
    %c0 = arith.constant 0 : index
    %c0_0 = arith.constant 0 : index
    %1 = vector.load %arg3[%c0, %c0_0] : memref<1x64xf32, #tpu.memory_space<vmem>>, vector<1x64xf32>
    %2 = vector.broadcast %1 : vector<1x64xf32> to vector<288x64xf32>
    %3 = arith.addf %0, %2 : vector<288x64xf32>
    %c0_1 = arith.constant 0 : index
    %c0_2 = arith.constant 0 : index
    %c0_3 = arith.constant 0 : index
    %4 = vector.load %arg1[%c0_1, %c0_2, %c0_3] : memref<1x332x64xf32, #tpu.memory_space<vmem>>, vector<1x288x64xf32>
    %5 = vector.shape_cast %4 : vector<1x288x64xf32> to vector<288x64xf32>
    %c0_4 = arith.constant 0 : index
    %c0_5 = arith.constant 0 : index
    %c0_6 = arith.constant 0 : index
    %6 = vector.load %arg2[%c0_4, %c0_5, %c0_6] : memref<9x64x64xf32, #tpu.memory_space<vmem>>, vector<1x64x64xf32>
    %7 = vector.shape_cast %6 : vector<1x64x64xf32> to vector<64x64xf32>
    %cst_7 = arith.constant dense<0.000000e+00> : vector<288x64xf32>
    %8 = tpu.matmul %5, %7, %cst_7 {dimension_numbers = #tpu.dot_dimension_numbers<[1], [0], [0], [1], [0, 0, 1, 1], [], []>} : vector<288x64xf32>, vector<64x64xf32>, vector<288x64xf32> -> vector<288x64xf32>
    %9 = arith.addf %3, %8 : vector<288x64xf32>
    %c0_8 = arith.constant 0 : index
    %c1 = arith.constant 1 : index
    %c0_9 = arith.constant 0 : index
    %10 = vector.load %arg1[%c0_8, %c1, %c0_9] : memref<1x332x64xf32, #tpu.memory_space<vmem>>, vector<1x288x64xf32>
    %11 = vector.shape_cast %10 : vector<1x288x64xf32> to vector<288x64xf32>
    %c1_10 = arith.constant 1 : index
    %c0_11 = arith.constant 0 : index
    %c0_12 = arith.constant 0 : index
    %12 = vector.load %arg2[%c1_10, %c0_11, %c0_12] : memref<9x64x64xf32, #tpu.memory_space<vmem>>, vector<1x64x64xf32>
    %13 = vector.shape_cast %12 : vector<1x64x64xf32> to vector<64x64xf32>
    %cst_13 = arith.constant dense<0.000000e+00> : vector<288x64xf32>
    %14 = tpu.matmul %11, %13, %cst_13 {dimension_numbers = #tpu.dot_dimension_numbers<[1], [0], [0], [1], [0, 0, 1, 1], [], []>} : vector<288x64xf32>, vector<64x64xf32>, vector<288x64xf32> -> vector<288x64xf32>
    %15 = arith.addf %9, %14 : vector<288x64xf32>
    %c0_14 = arith.constant 0 : index
    %c2 = arith.constant 2 : index
    %c0_15 = arith.constant 0 : index
    %16 = vector.load %arg1[%c0_14, %c2, %c0_15] : memref<1x332x64xf32, #tpu.memory_space<vmem>>, vector<1x288x64xf32>
    %17 = vector.shape_cast %16 : vector<1x288x64xf32> to vector<288x64xf32>
    %c2_16 = arith.constant 2 : index
    %c0_17 = arith.constant 0 : index
    %c0_18 = arith.constant 0 : index
    %18 = vector.load %arg2[%c2_16, %c0_17, %c0_18] : memref<9x64x64xf32, #tpu.memory_space<vmem>>, vector<1x64x64xf32>
    %19 = vector.shape_cast %18 : vector<1x64x64xf32> to vector<64x64xf32>
    %cst_19 = arith.constant dense<0.000000e+00> : vector<288x64xf32>
    %20 = tpu.matmul %17, %19, %cst_19 {dimension_numbers = #tpu.dot_dimension_numbers<[1], [0], [0], [1], [0, 0, 1, 1], [], []>} : vector<288x64xf32>, vector<64x64xf32>, vector<288x64xf32> -> vector<288x64xf32>
    %21 = arith.addf %15, %20 : vector<288x64xf32>
    %c0_20 = arith.constant 0 : index
    %c18 = arith.constant 18 : index
    %c0_21 = arith.constant 0 : index
    %22 = vector.load %arg1[%c0_20, %c18, %c0_21] : memref<1x332x64xf32, #tpu.memory_space<vmem>>, vector<1x288x64xf32>
    %23 = vector.shape_cast %22 : vector<1x288x64xf32> to vector<288x64xf32>
    %c3 = arith.constant 3 : index
    %c0_22 = arith.constant 0 : index
    %c0_23 = arith.constant 0 : index
    %24 = vector.load %arg2[%c3, %c0_22, %c0_23] : memref<9x64x64xf32, #tpu.memory_space<vmem>>, vector<1x64x64xf32>
    %25 = vector.shape_cast %24 : vector<1x64x64xf32> to vector<64x64xf32>
    %cst_24 = arith.constant dense<0.000000e+00> : vector<288x64xf32>
    %26 = tpu.matmul %23, %25, %cst_24 {dimension_numbers = #tpu.dot_dimension_numbers<[1], [0], [0], [1], [0, 0, 1, 1], [], []>} : vector<288x64xf32>, vector<64x64xf32>, vector<288x64xf32> -> vector<288x64xf32>
    %27 = arith.addf %21, %26 : vector<288x64xf32>
    %c0_25 = arith.constant 0 : index
    %c19 = arith.constant 19 : index
    %c0_26 = arith.constant 0 : index
    %28 = vector.load %arg1[%c0_25, %c19, %c0_26] : memref<1x332x64xf32, #tpu.memory_space<vmem>>, vector<1x288x64xf32>
    %29 = vector.shape_cast %28 : vector<1x288x64xf32> to vector<288x64xf32>
    %c4 = arith.constant 4 : index
    %c0_27 = arith.constant 0 : index
    %c0_28 = arith.constant 0 : index
    %30 = vector.load %arg2[%c4, %c0_27, %c0_28] : memref<9x64x64xf32, #tpu.memory_space<vmem>>, vector<1x64x64xf32>
    %31 = vector.shape_cast %30 : vector<1x64x64xf32> to vector<64x64xf32>
    %cst_29 = arith.constant dense<0.000000e+00> : vector<288x64xf32>
    %32 = tpu.matmul %29, %31, %cst_29 {dimension_numbers = #tpu.dot_dimension_numbers<[1], [0], [0], [1], [0, 0, 1, 1], [], []>} : vector<288x64xf32>, vector<64x64xf32>, vector<288x64xf32> -> vector<288x64xf32>
    %33 = arith.addf %27, %32 : vector<288x64xf32>
    %c0_30 = arith.constant 0 : index
    %c20 = arith.constant 20 : index
    %c0_31 = arith.constant 0 : index
    %34 = vector.load %arg1[%c0_30, %c20, %c0_31] : memref<1x332x64xf32, #tpu.memory_space<vmem>>, vector<1x288x64xf32>
    %35 = vector.shape_cast %34 : vector<1x288x64xf32> to vector<288x64xf32>
    %c5 = arith.constant 5 : index
    %c0_32 = arith.constant 0 : index
    %c0_33 = arith.constant 0 : index
    %36 = vector.load %arg2[%c5, %c0_32, %c0_33] : memref<9x64x64xf32, #tpu.memory_space<vmem>>, vector<1x64x64xf32>
    %37 = vector.shape_cast %36 : vector<1x64x64xf32> to vector<64x64xf32>
    %cst_34 = arith.constant dense<0.000000e+00> : vector<288x64xf32>
    %38 = tpu.matmul %35, %37, %cst_34 {dimension_numbers = #tpu.dot_dimension_numbers<[1], [0], [0], [1], [0, 0, 1, 1], [], []>} : vector<288x64xf32>, vector<64x64xf32>, vector<288x64xf32> -> vector<288x64xf32>
    %39 = arith.addf %33, %38 : vector<288x64xf32>
    %c0_35 = arith.constant 0 : index
    %c36 = arith.constant 36 : index
    %c0_36 = arith.constant 0 : index
    %40 = vector.load %arg1[%c0_35, %c36, %c0_36] : memref<1x332x64xf32, #tpu.memory_space<vmem>>, vector<1x288x64xf32>
    %41 = vector.shape_cast %40 : vector<1x288x64xf32> to vector<288x64xf32>
    %c6 = arith.constant 6 : index
    %c0_37 = arith.constant 0 : index
    %c0_38 = arith.constant 0 : index
    %42 = vector.load %arg2[%c6, %c0_37, %c0_38] : memref<9x64x64xf32, #tpu.memory_space<vmem>>, vector<1x64x64xf32>
    %43 = vector.shape_cast %42 : vector<1x64x64xf32> to vector<64x64xf32>
    %cst_39 = arith.constant dense<0.000000e+00> : vector<288x64xf32>
    %44 = tpu.matmul %41, %43, %cst_39 {dimension_numbers = #tpu.dot_dimension_numbers<[1], [0], [0], [1], [0, 0, 1, 1], [], []>} : vector<288x64xf32>, vector<64x64xf32>, vector<288x64xf32> -> vector<288x64xf32>
    %45 = arith.addf %39, %44 : vector<288x64xf32>
    %c0_40 = arith.constant 0 : index
    %c37 = arith.constant 37 : index
    %c0_41 = arith.constant 0 : index
    %46 = vector.load %arg1[%c0_40, %c37, %c0_41] : memref<1x332x64xf32, #tpu.memory_space<vmem>>, vector<1x288x64xf32>
    %47 = vector.shape_cast %46 : vector<1x288x64xf32> to vector<288x64xf32>
    %c7 = arith.constant 7 : index
    %c0_42 = arith.constant 0 : index
    %c0_43 = arith.constant 0 : index
    %48 = vector.load %arg2[%c7, %c0_42, %c0_43] : memref<9x64x64xf32, #tpu.memory_space<vmem>>, vector<1x64x64xf32>
    %49 = vector.shape_cast %48 : vector<1x64x64xf32> to vector<64x64xf32>
    %cst_44 = arith.constant dense<0.000000e+00> : vector<288x64xf32>
    %50 = tpu.matmul %47, %49, %cst_44 {dimension_numbers = #tpu.dot_dimension_numbers<[1], [0], [0], [1], [0, 0, 1, 1], [], []>} : vector<288x64xf32>, vector<64x64xf32>, vector<288x64xf32> -> vector<288x64xf32>
    %51 = arith.addf %45, %50 : vector<288x64xf32>
    %c0_45 = arith.constant 0 : index
    %c38 = arith.constant 38 : index
    %c0_46 = arith.constant 0 : index
    %52 = vector.load %arg1[%c0_45, %c38, %c0_46] : memref<1x332x64xf32, #tpu.memory_space<vmem>>, vector<1x288x64xf32>
    %53 = vector.shape_cast %52 : vector<1x288x64xf32> to vector<288x64xf32>
    %c8 = arith.constant 8 : index
    %c0_47 = arith.constant 0 : index
    %c0_48 = arith.constant 0 : index
    %54 = vector.load %arg2[%c8, %c0_47, %c0_48] : memref<9x64x64xf32, #tpu.memory_space<vmem>>, vector<1x64x64xf32>
    %55 = vector.shape_cast %54 : vector<1x64x64xf32> to vector<64x64xf32>
    %cst_49 = arith.constant dense<0.000000e+00> : vector<288x64xf32>
    %56 = tpu.matmul %53, %55, %cst_49 {dimension_numbers = #tpu.dot_dimension_numbers<[1], [0], [0], [1], [0, 0, 1, 1], [], []>} : vector<288x64xf32>, vector<64x64xf32>, vector<288x64xf32> -> vector<288x64xf32>
    %57 = arith.addf %51, %56 : vector<288x64xf32>
    %cst_50 = arith.constant 0.000000e+00 : f32
    %58 = vector.broadcast %cst_50 : f32 to vector<288x64xf32>
    %59 = arith.maximumf %57, %58 : vector<288x64xf32>
    %c0_51 = arith.constant 0 : index
    %c0_52 = arith.constant 0 : index
    %c0_53 = arith.constant 0 : index
    %60 = vector.load %arg4[%c0_51, %c0_52, %c0_53] : memref<1x288x64xf32, #tpu.memory_space<vmem>>, vector<1x288x64xf32>
    %61 = vector.shape_cast %60 : vector<1x288x64xf32> to vector<288x64xf32>
    %62 = vector.shape_cast %59 : vector<288x64xf32> to vector<1x288x64xf32>
    tpu.vector_store %arg4[%c0_51, %c0_52, %c0_53], %62 {strides = array<i32>} : memref<1x288x64xf32, #tpu.memory_space<vmem>>, vector<1x288x64xf32>,
    return
  }
  func.func @transform_0(%arg0: i32) -> (i32, i32, i32) {
    %c0_i32 = arith.constant 0 : i32
    %c0_i32_0 = arith.constant 0 : i32
    %c0_i32_1 = arith.constant 0 : i32
    return %arg0, %c0_i32, %c0_i32_0 : i32, i32, i32
  }
  func.func @transform_1(%arg0: i32) -> (i32, i32, i32) {
    %c0_i32 = arith.constant 0 : i32
    %c0_i32_0 = arith.constant 0 : i32
    %c0_i32_1 = arith.constant 0 : i32
    %c0_i32_2 = arith.constant 0 : i32
    return %c0_i32, %c0_i32_0, %c0_i32_1 : i32, i32, i32
  }
  func.func @transform_2(%arg0: i32) -> (i32, i32) {
    %c0_i32 = arith.constant 0 : i32
    %c0_i32_0 = arith.constant 0 : i32
    %c0_i32_1 = arith.constant 0 : i32
    return %c0_i32, %c0_i32_0 : i32, i32
  }
  func.func @transform_3(%arg0: i32) -> (i32, i32, i32) {
    %c0_i32 = arith.constant 0 : i32
    %c0_i32_0 = arith.constant 0 : i32
    %c0_i32_1 = arith.constant 0 : i32
    return %arg0, %c0_i32, %c0_i32_0 : i32, i32, i32
  }
}

module attributes {stable_mosaic.version = 11 : i64} {
  func.func @_attn_gate_kernel(%arg0: i32, %arg1: memref<256x64xf32, #tpu.memory_space<vmem>>, %arg2: memref<256x8xf32, #tpu.memory_space<vmem>>, %arg3: memref<1x64xf32, #tpu.memory_space<vmem>>, %arg4: memref<1x1xf32, #tpu.memory_space<vmem>>, %arg5: memref<256x8xf32, #tpu.memory_space<vmem>>) attributes {dimension_semantics = [#tpu.dimension_semantics<parallel>], iteration_bounds = array<i64: 2>, scalar_prefetch = 0 : i64, scratch_operands = 0 : i64, tpu.core_type = #tpu.core_type<tc>, window_params = [{transform_indices = @transform_0, window_bounds = array<i64: 256, 64>}, {transform_indices = @transform_1, window_bounds = array<i64: 256, 8>}, {pipeline_mode = #tpu.pipeline_mode<synchronous>, transform_indices = @transform_2, window_bounds = array<i64: 1, 64>}, {pipeline_mode = #tpu.pipeline_mode<synchronous>, transform_indices = @transform_3, window_bounds = array<i64: 1, 1>}, {transform_indices = @transform_4, window_bounds = array<i64: 256, 8>}]} {
    %c0 = arith.constant 0 : index
    %c0_0 = arith.constant 0 : index
    %0 = vector.load %arg1[%c0, %c0_0] : memref<256x64xf32, #tpu.memory_space<vmem>>, vector<256x64xf32>
    %c0_1 = arith.constant 0 : index
    %c0_2 = arith.constant 0 : index
    %1 = vector.load %arg3[%c0_1, %c0_2] : memref<1x64xf32, #tpu.memory_space<vmem>>, vector<1x64xf32>
    %2 = vector.broadcast %1 : vector<1x64xf32> to vector<256x64xf32>
    %3 = arith.mulf %0, %2 : vector<256x64xf32>
    %cst = arith.constant dense<0.000000e+00> : vector<256xf32>
    %4 = vector.multi_reduction <add>, %3, %cst [1] : vector<256x64xf32> to vector<256xf32>
    %5 = vector.shape_cast %4 : vector<256xf32> to vector<256x1xf32>
    %c0_3 = arith.constant 0 : index
    %c0_4 = arith.constant 0 : index
    %6 = vector.load %arg4[%c0_3, %c0_4] : memref<1x1xf32, #tpu.memory_space<vmem>>, vector<1x1xf32>
    %7 = vector.broadcast %6 : vector<1x1xf32> to vector<256x1xf32>
    %8 = arith.addf %5, %7 : vector<256x1xf32>
    %cst_5 = arith.constant 0.000000e+00 : f32
    %9 = vector.broadcast %cst_5 : f32 to vector<256x1xf32>
    %10 = arith.subf %9, %8 : vector<256x1xf32>
    %11 = math.exp %10 : vector<256x1xf32>
    %cst_6 = arith.constant 1.000000e+00 : f32
    %12 = vector.broadcast %cst_6 : f32 to vector<256x1xf32>
    %13 = arith.addf %12, %11 : vector<256x1xf32>
    %cst_7 = arith.constant 1.000000e+00 : f32
    %14 = vector.broadcast %cst_7 : f32 to vector<256x1xf32>
    %15 = arith.divf %14, %13 : vector<256x1xf32>
    %c0_8 = arith.constant 0 : index
    %c0_9 = arith.constant 0 : index
    %16 = vector.load %arg2[%c0_8, %c0_9] : memref<256x8xf32, #tpu.memory_space<vmem>>, vector<256x8xf32>
    %17 = vector.broadcast %15 : vector<256x1xf32> to vector<256x8xf32>
    %18 = arith.mulf %16, %17 : vector<256x8xf32>
    %c0_10 = arith.constant 0 : index
    %c0_11 = arith.constant 0 : index
    %19 = vector.load %arg5[%c0_10, %c0_11] : memref<256x8xf32, #tpu.memory_space<vmem>>, vector<256x8xf32>
    tpu.vector_store %arg5[%c0_10, %c0_11], %18 {strides = array<i32>} : memref<256x8xf32, #tpu.memory_space<vmem>>, vector<256x8xf32>,
    return
  }
  func.func @transform_0(%arg0: i32) -> (i32, i32) {
    %c0_i32 = arith.constant 0 : i32
    %c0_i32_0 = arith.constant 0 : i32
    return %arg0, %c0_i32 : i32, i32
  }
  func.func @transform_1(%arg0: i32) -> (i32, i32) {
    %c0_i32 = arith.constant 0 : i32
    %c0_i32_0 = arith.constant 0 : i32
    return %arg0, %c0_i32 : i32, i32
  }
  func.func @transform_2(%arg0: i32) -> (i32, i32) {
    %c0_i32 = arith.constant 0 : i32
    %c0_i32_0 = arith.constant 0 : i32
    %c0_i32_1 = arith.constant 0 : i32
    return %c0_i32, %c0_i32_0 : i32, i32
  }
  func.func @transform_3(%arg0: i32) -> (i32, i32) {
    %c0_i32 = arith.constant 0 : i32
    %c0_i32_0 = arith.constant 0 : i32
    %c0_i32_1 = arith.constant 0 : i32
    return %c0_i32, %c0_i32_0 : i32, i32
  }
  func.func @transform_4(%arg0: i32) -> (i32, i32) {
    %c0_i32 = arith.constant 0 : i32
    %c0_i32_0 = arith.constant 0 : i32
    return %arg0, %c0_i32 : i32, i32
  }
}

</mosaic_0001>

<llo_original>
// kernel: qkplus_forward.4
$region0: #{qkplus_forward.4}
  #allocation0 [shape = 'u32[]', space=smem, size = 0x4, offset = 0x4, fixed_abs, tag = 'smem constant byte address 0x4 - core index']
  #allocation1 [shape = 'u32[144,128]{1,0:T(1,128)}', space=vmem, size = 0x12000, scoped, tag = 'internal scratch']
  %s0 = inlined_call_operand.vmem [shape: f32[512,8], index: 0, kind: input, shape index: {}]
  %s1 = inlined_call_operand.vmem [shape: f32[512,8], index: 1, kind: input, shape index: {}]
  %s2 = inlined_call_operand.vmem [shape: f32[8,64], index: 2, kind: input, shape index: {}]
  %s3 = inlined_call_operand.vmem [shape: f32[1,64], index: 3, kind: input, shape index: {}]
  %s4 = inlined_call_operand.vmem [shape: f32[8,64], index: 4, kind: input, shape index: {}]
  %s5 = inlined_call_operand.vmem [shape: f32[1,64], index: 5, kind: input, shape index: {}]
  %s6 = inlined_call_operand.vmem [shape: f32[512,128], index: 6, kind: output, shape index: {}]
  %s7 = sld [smem:[#allocation0]]
  $region57: #{qkplus_forward.4} parent=0
    _
  %s9 = ssub.s32 1, %s7
  %s10 = scalar_select 0, %s9, %s7
  loop: start=0, step=1, limit=4
  $region2: #{qkplus_forward.4} parent=0 // loop_pre_header
    _
  $region3: #{qkplus_forward.4} parent=0 // loop_header
    %s12 = sphi 0, %s16
    %p13 = scmp.ge.s32.totalorder %s12, 4
    %s22 = sphi 0, %s24
    %s25 = sphi 0, %s22
    %s26 = sphi 0, %s25
    %s42 = sphi 0, %s26
    %s48 = sphi 0, %s50
    %s51 = sphi 0, %s48
    %s52 = sphi 0, %s51
    %s68 = sphi 0, %s52
    %s72 = sphi 0, %s72
    %s74 = sphi 0, %s72
    %s75 = sphi 0, %s74
    %s89 = sphi 0, %s75
    %s93 = sphi 0, %s93
    %s95 = sphi 0, %s93
    %s96 = sphi 0, %s95
    %s110 = sphi 0, %s96
    %s114 = sphi 0, %s114
    %s116 = sphi 0, %s114
    %s117 = sphi 0, %s116
    %s131 = sphi 0, %s117
    %s135 = sphi 0, %s135
    %s137 = sphi 0, %s135
    %s138 = sphi 0, %s137
    %s152 = sphi 0, %s138
    %s158 = sphi 0, %s160
    %s161 = sphi 0, %s158
    %s162 = sphi 0, %s161
    %s178 = sphi 0, %s162
  $region4: #{qkplus_forward.4} parent=0 // loop_header_branch
    %15 = sbr.rel (%p13) target = $region8
  $region5: #{qkplus_forward.4} parent=0 // loop_body
    %s17 = ssub.s32 %s12, 1
    %s18 = ssub.s32 %s12, 2
    %s19 = sadd.s32 %s12, 1
    %s20 = ssub.s32 %s12, %s19
    %p21 = scmp.eq.s32.totalorder %s20, 0
    %s23 = sadd.s32 %s22, 1
    %s24 = scalar_select %p21, %s22, %s23
    %p27 = pneg %p21
    %p28 = scmp.eq.s32.totalorder %s12, 1
    %p29 = por %p27, %p28
    %p30 = scmp.ne.s32.totalorder %s22, %s25
    %p31 = scmp.eq.s32.totalorder %s12, 0
    %p32 = por %p30, %p31
    %p33 = scmp.ne.s32.totalorder %s22, %s25
    %p34 = scmp.eq.s32.totalorder %s17, 1
    %p35 = por %p33, %p34
    %p36 = scmp.ne.s32.totalorder %s25, %s26
    %p37 = scmp.eq.s32.totalorder %s17, 0
    %p38 = por %p36, %p37
    %p39 = scmp.ne.s32.totalorder %s25, %s26
    %p40 = scmp.eq.s32.totalorder %s18, 1
    %p41 = por %p39, %p40
    %p43 = scmp.ne.s32.totalorder %s26, %s42
    %p44 = scmp.eq.s32.totalorder %s18, 0
    %p45 = por %p43, %p44
    %s46 = ssub.s32 %s12, %s19
    %p47 = scmp.eq.s32.totalorder %s46, 0
    %s49 = sadd.s32 %s48, 1
    %s50 = scalar_select %p47, %s48, %s49
    %p53 = pneg %p47
    %p54 = scmp.eq.s32.totalorder %s12, 1
    %p55 = por %p53, %p54
    %p56 = scmp.ne.s32.totalorder %s48, %s51
    %p57 = scmp.eq.s32.totalorder %s12, 0
    %p58 = por %p56, %p57
    %p59 = scmp.ne.s32.totalorder %s48, %s51
    %p60 = scmp.eq.s32.totalorder %s17, 1
    %p61 = por %p59, %p60
    %p62 = scmp.ne.s32.totalorder %s51, %s52
    %p63 = scmp.eq.s32.totalorder %s17, 0
    %p64 = por %p62, %p63
    %p65 = scmp.ne.s32.totalorder %s51, %s52
    %p66 = scmp.eq.s32.totalorder %s18, 1
    %p67 = por %p65, %p66
    %p69 = scmp.ne.s32.totalorder %s52, %s68
    %p70 = scmp.eq.s32.totalorder %s18, 0
    %p71 = por %p69, %p70
    %s73 = sadd.s32 %s72, 1
    %p76 = scmp.eq.s32.totalorder %s12, 1
    %p77 = scmp.ne.s32.totalorder %s72, %s74
    %p78 = scmp.eq.s32.totalorder %s12, 0
    %p79 = por %p77, %p78
    %p80 = scmp.ne.s32.totalorder %s72, %s74
    %p81 = scmp.eq.s32.totalorder %s17, 1
    %p82 = por %p80, %p81
    %p83 = scmp.ne.s32.totalorder %s74, %s75
    %p84 = scmp.eq.s32.totalorder %s17, 0
    %p85 = por %p83, %p84
    %p86 = scmp.ne.s32.totalorder %s74, %s75
    %p87 = scmp.eq.s32.totalorder %s18, 1
    %p88 = por %p86, %p87
    %p90 = scmp.ne.s32.totalorder %s75, %s89
    %p91 = scmp.eq.s32.totalorder %s18, 0
    %p92 = por %p90, %p91
    %s94 = sadd.s32 %s93, 1
    %p97 = scmp.eq.s32.totalorder %s12, 1
    %p98 = scmp.ne.s32.totalorder %s93, %s95
    %p99 = scmp.eq.s32.totalorder %s12, 0
    %p100 = por %p98, %p99
    %p101 = scmp.ne.s32.totalorder %s93, %s95
    %p102 = scmp.eq.s32.totalorder %s17, 1
    %p103 = por %p101, %p102
    %p104 = scmp.ne.s32.totalorder %s95, %s96
    %p105 = scmp.eq.s32.totalorder %s17, 0
    %p106 = por %p104, %p105
    %p107 = scmp.ne.s32.totalorder %s95, %s96
    %p108 = scmp.eq.s32.totalorder %s18, 1
    %p109 = por %p107, %p108
    %p111 = scmp.ne.s32.totalorder %s96, %s110
    %p112 = scmp.eq.s32.totalorder %s18, 0
    %p113 = por %p111, %p112
    %s115 = sadd.s32 %s114, 1
    %p118 = scmp.eq.s32.totalorder %s12, 1
    %p119 = scmp.ne.s32.totalorder %s114, %s116
    %p120 = scmp.eq.s32.totalorder %s12, 0
    %p121 = por %p119, %p120
    %p122 = scmp.ne.s32.totalorder %s114, %s116
    %p123 = scmp.eq.s32.totalorder %s17, 1
    %p124 = por %p122, %p123
    %p125 = scmp.ne.s32.totalorder %s116, %s117
    %p126 = scmp.eq.s32.totalorder %s17, 0
    %p127 = por %p125, %p126
    %p128 = scmp.ne.s32.totalorder %s116, %s117
    %p129 = scmp.eq.s32.totalorder %s18, 1
    %p130 = por %p128, %p129
    %p132 = scmp.ne.s32.totalorder %s117, %s131
    %p133 = scmp.eq.s32.totalorder %s18, 0
    %p134 = por %p132, %p133
    %s136 = sadd.s32 %s135, 1
    %p139 = scmp.eq.s32.totalorder %s12, 1
    %p140 = scmp.ne.s32.totalorder %s135, %s137
    %p141 = scmp.eq.s32.totalorder %s12, 0
    %p142 = por %p140, %p141
    %p143 = scmp.ne.s32.totalorder %s135, %s137
    %p144 = scmp.eq.s32.totalorder %s17, 1
    %p145 = por %p143, %p144
    %p146 = scmp.ne.s32.totalorder %s137, %s138
    %p147 = scmp.eq.s32.totalorder %s17, 0
    %p148 = por %p146, %p147
    %p149 = scmp.ne.s32.totalorder %s137, %s138
    %p150 = scmp.eq.s32.totalorder %s18, 1
    %p151 = por %p149, %p150
    %p153 = scmp.ne.s32.totalorder %s138, %s152
    %p154 = scmp.eq.s32.totalorder %s18, 0
    %p155 = por %p153, %p154
    %s156 = ssub.s32 %s12, %s19
    %p157 = scmp.eq.s32.totalorder %s156, 0
    %s159 = sadd.s32 %s158, 1
    %s160 = scalar_select %p157, %s158, %s159
    %p163 = pneg %p157
    %p164 = scmp.eq.s32.totalorder %s12, 1
    %p165 = por %p163, %p164
    %p166 = scmp.ne.s32.totalorder %s158, %s161
    %p167 = scmp.eq.s32.totalorder %s12, 0
    %p168 = por %p166, %p167
    %p169 = scmp.ne.s32.totalorder %s158, %s161
    %p170 = scmp.eq.s32.totalorder %s17, 1
    %p171 = por %p169, %p170
    %p172 = scmp.ne.s32.totalorder %s161, %s162
    %p173 = scmp.eq.s32.totalorder %s17, 0
    %p174 = por %p172, %p173
    %p175 = scmp.ne.s32.totalorder %s161, %s162
    %p176 = scmp.eq.s32.totalorder %s18, 1
    %p177 = por %p175, %p176
    %p179 = scmp.ne.s32.totalorder %s162, %s178
    %p180 = scmp.eq.s32.totalorder %s18, 0
    %p181 = por %p179, %p180
    %p182 = scmp.le.s32.totalorder 1, %s12
    %p183 = scmp.lt.s32.totalorder %s12, 3
    %p184 = pnand %p182, %p183
    %p185 = pneg %p184
    // Predicated region
    $region9: #{qkplus_forward.4} parent=5 // pred_check
      _
    $region10: #{qkplus_forward.4} parent=5 // pred_check_branch
      %187 = sbr.rel (%p184) target = $region12
    $region11: #{qkplus_forward.4} parent=5 // pred_region
      %s188 = ssub.s32 %s12, 1
      // Predicated region
      $region13: #{qkplus_forward.4} parent=11 // pred_check
        %p189 = pneg %p85
      $region14: #{qkplus_forward.4} parent=11 // pred_check_branch
        %191 = sbr.rel (%p189) target = $region16
      $region15: #{qkplus_forward.4} parent=11 // pred_region
        _
      $region16: #{qkplus_forward.4} parent=11 // pred_fallthru
        _
      // Predicated region
      $region17: #{qkplus_forward.4} parent=11 // pred_check
        %p192 = pneg %p106
      $region18: #{qkplus_forward.4} parent=11 // pred_check_branch
        %194 = sbr.rel (%p192) target = $region20
      $region19: #{qkplus_forward.4} parent=11 // pred_region
        _
      $region20: #{qkplus_forward.4} parent=11 // pred_fallthru
        _
      // Predicated region
      $region21: #{qkplus_forward.4} parent=11 // pred_check
        %p195 = pneg %p127
      $region22: #{qkplus_forward.4} parent=11 // pred_check_branch
        %197 = sbr.rel (%p195) target = $region24
      $region23: #{qkplus_forward.4} parent=11 // pred_region
        _
      $region24: #{qkplus_forward.4} parent=11 // pred_fallthru
        _
      // Predicated region
      $region25: #{qkplus_forward.4} parent=11 // pred_check
        %p198 = pneg %p148
      $region26: #{qkplus_forward.4} parent=11 // pred_check_branch
        %200 = sbr.rel (%p198) target = $region28
      $region27: #{qkplus_forward.4} parent=11 // pred_region
        _
      $region28: #{qkplus_forward.4} parent=11 // pred_fallthru
        _
    $region12: #{qkplus_forward.4} parent=5 // pred_fallthru
      _
    %p201 = scmp.lt.s32.totalorder %s12, 2
    // Predicated region
    $region29: #{qkplus_forward.4} parent=5 // pred_check
      %p202 = pneg %p201
    $region30: #{qkplus_forward.4} parent=5 // pred_check_branch
      %204 = sbr.rel (%p202) target = $region32
    $region31: #{qkplus_forward.4} parent=5 // pred_region
      // Predicated region
      $region33: #{qkplus_forward.4} parent=31 // pred_check
        %p205 = pneg %p32
      $region34: #{qkplus_forward.4} parent=31 // pred_check_branch
        %207 = sbr.rel (%p205) target = $region36
      $region35: #{qkplus_forward.4} parent=31 // pred_region
        %s208 = smul.u32 32, %s12
        %p209 = scmp.lt.s32.totalorder %s208, 63
        %s210 = scalar_select %p209, %s208, 63
        %s211 = smul.addr %s210, 8
        %s212 = scalar_lea.vmem %s0, %s211
        %s213 = smul.u32 32, %s12
      $region36: #{qkplus_forward.4} parent=31 // pred_fallthru
        _
      // Predicated region
      $region37: #{qkplus_forward.4} parent=31 // pred_check
        %p214 = pneg %p58
      $region38: #{qkplus_forward.4} parent=31 // pred_check_branch
        %216 = sbr.rel (%p214) target = $region40
      $region39: #{qkplus_forward.4} parent=31 // pred_region
        %s217 = smul.u32 32, %s12
        %p218 = scmp.lt.s32.totalorder %s217, 63
        %s219 = scalar_select %p218, %s217, 63
        %s220 = smul.addr %s219, 8
        %s221 = scalar_lea.vmem %s1, %s220
        %s222 = smul.u32 32, %s12
      $region40: #{qkplus_forward.4} parent=31 // pred_fallthru
        _
    $region32: #{qkplus_forward.4} parent=5 // pred_fallthru
      _
    %p223 = scmp.le.s32.totalorder 1, %s12
    %p224 = scmp.lt.s32.totalorder %s12, 3
    %p225 = pnand %p223, %p224
    %p226 = pneg %p225
    // Predicated region
    $region41: #{qkplus_forward.4} parent=5 // pred_check
      _
    $region42: #{qkplus_forward.4} parent=5 // pred_check_branch
      %228 = sbr.rel (%p225) target = $region44
    $region43: #{qkplus_forward.4} parent=5 // pred_region
      %s229 = ssub.s32 %s12, 1
      %s230 = smul.u32 32, %s17
      %p231 = scmp.lt.s32.totalorder %s230, 63
      %s232 = scalar_select %p231, %s230, 63
      %s233 = smul.addr %s232, 8
      %s234 = scalar_lea.vmem %s0, %s233
      %p235 = pneg %p38
      %p236 = pneg %p35
      %s237 = smul.u32 32, %s17
      %p238 = scmp.lt.s32.totalorder %s237, 63
      %s239 = scalar_select %p238, %s237, 63
      %s240 = smul.addr %s239, 8
      %s241 = scalar_lea.vmem %s1, %s240
      %p242 = pneg %p64
      %p243 = pneg %p61
      %p244 = pneg %p85
      %p245 = pneg %p82
      %p246 = pneg %p106
      %p247 = pneg %p103
      %p248 = pneg %p127
      %p249 = pneg %p124
      %p250 = pneg %p148
      %p251 = pneg %p145
      %p252 = pneg %p174
      %p253 = pneg %p171
      %s254 = smul.u32 32, %s17
      %p255 = scmp.lt.s32.totalorder %s254, 63
      %s256 = scalar_select %p255, %s254, 63
      %s257 = smul.addr %s256, 8
      %s258 = scalar_lea.vmem %s6, %s257
      %s259 = smul.u32 32, %s17
      %p260 = scmp.lt.s32.totalorder %s259, 63
      %s261 = scalar_select %p260, %s259, 63
      %s262 = smul.addr %s261, 8
      %s263 = scalar_lea.vmem %s0, %s262
      %s264 = smul.u32 32, %s17
      %s265 = smul.u32 32, %s17
      %p266 = scmp.lt.s32.totalorder %s265, 63
      %s267 = scalar_select %p266, %s265, 63
      %s268 = smul.addr %s267, 8
      %s269 = scalar_lea.vmem %s1, %s268
      %s270 = smul.u32 32, %s17
      %s271 = smul.u32 32, %s17
      %p272 = scmp.lt.s32.totalorder %s271, 63
      %s273 = scalar_select %p272, %s271, 63
      %s274 = smul.addr %s273, 8
      %s275 = scalar_lea.vmem %s6, %s274
      %s276 = smul.u32 32, %s17
      %v277 = vld [vmem:[%s263] sm:$0xff]
      %v278 = vld [vmem:[%s263 + $0x8] sm:$0xff]
      %v279 = vld [vmem:[%s263 + $0x10] sm:$0xff]
      %v280 = vld [vmem:[%s263 + $0x18] sm:$0xff]
      %v281 = vld [vmem:[%s263 + $0x20] sm:$0xff]
      %v282 = vld [vmem:[%s263 + $0x28] sm:$0xff]
      %v283 = vld [vmem:[%s263 + $0x30] sm:$0xff]
      %v284 = vld [vmem:[%s263 + $0x38] sm:$0xff]
      %v285 = vld [vmem:[%s263 + $0x40] sm:$0xff]
      %v286 = vld [vmem:[%s263 + $0x48] sm:$0xff]
      %v287 = vld [vmem:[%s263 + $0x50] sm:$0xff]
      %v288 = vld [vmem:[%s263 + $0x58] sm:$0xff]
      %v289 = vld [vmem:[%s263 + $0x60] sm:$0xff]
      %v290 = vld [vmem:[%s263 + $0x68] sm:$0xff]
      %v291 = vld [vmem:[%s263 + $0x70] sm:$0xff]
      %v292 = vld [vmem:[%s263 + $0x78] sm:$0xff]
      %v293 = vld [vmem:[%s263 + $0x80] sm:$0xff]
      %v294 = vld [vmem:[%s263 + $0x88] sm:$0xff]
      %v295 = vld [vmem:[%s263 + $0x90] sm:$0xff]
      %v296 = vld [vmem:[%s263 + $0x98] sm:$0xff]
      %v297 = vld [vmem:[%s263 + $0xa0] sm:$0xff]
      %v298 = vld [vmem:[%s263 + $0xa8] sm:$0xff]
      %v299 = vld [vmem:[%s263 + $0xb0] sm:$0xff]
      %v300 = vld [vmem:[%s263 + $0xb8] sm:$0xff]
      %v301 = vld [vmem:[%s263 + $0xc0] sm:$0xff]
      %v302 = vld [vmem:[%s263 + $0xc8] sm:$0xff]
      %v303 = vld [vmem:[%s263 + $0xd0] sm:$0xff]
      %v304 = vld [vmem:[%s263 + $0xd8] sm:$0xff]
      %v305 = vld [vmem:[%s263 + $0xe0] sm:$0xff]
      %v306 = vld [vmem:[%s263 + $0xe8] sm:$0xff]
      %v307 = vld [vmem:[%s263 + $0xf0] sm:$0xff]
      %v308 = vld [vmem:[%s263 + $0xf8] sm:$0xff]
      %v309 = vld [vmem:[%s2] sm:$0xff]
      %v310 = vld [vmem:[%s3] sm:$0x1]
      %v312 = vlaneseq
      %v313 = vshrl.u32 %v312, 7
      %v314 = vsub.s32 0, %v313
      %v315 = vrot.slane %v310, %v314
      %vm317 = vcmask 64512
      %v319 = vsel %vm317, %v277, 0
      %v322 = vsel %vm317, %v278, 0
      %v325 = vsel %vm317, %v279, 0
      %v328 = vsel %vm317, %v280, 0
      %v331 = vsel %vm317, %v281, 0
      %v334 = vsel %vm317, %v282, 0
      %v337 = vsel %vm317, %v283, 0
      %v340 = vsel %vm317, %v284, 0
      %v343 = vsel %vm317, %v285, 0
      %v346 = vsel %vm317, %v286, 0
      %v349 = vsel %vm317, %v287, 0
      %v352 = vsel %vm317, %v288, 0
      %v355 = vsel %vm317, %v289, 0
      %v358 = vsel %vm317, %v290, 0
      %v361 = vsel %vm317, %v291, 0
      %v364 = vsel %vm317, %v292, 0
      %v367 = vsel %vm317, %v293, 0
      %v370 = vsel %vm317, %v294, 0
      %v373 = vsel %vm317, %v295, 0
      %v376 = vsel %vm317, %v296, 0
      %v379 = vsel %vm317, %v297, 0
      %v382 = vsel %vm317, %v298, 0
      %v385 = vsel %vm317, %v299, 0
      %v388 = vsel %vm317, %v300, 0
      %v391 = vsel %vm317, %v301, 0
      %v394 = vsel %vm317, %v302, 0
      %v397 = vsel %vm317, %v303, 0
      %v400 = vsel %vm317, %v304, 0
      %v403 = vsel %vm317, %v305, 0
      %v406 = vsel %vm317, %v306, 0
      %v409 = vsel %vm317, %v307, 0
      %v412 = vsel %vm317, %v308, 0
      %414 = vmatprep.subr.mxu0 0.0
      %415 = vmatpush1.msra.mxu0 %v309
      %416 = vmatprep.subr.mxu0 0.0
      %417 = vmatpush1.msra.mxu0 0.0
      %418 = vmatprep.subr.mxu0 0.0
      %419 = vmatpush1.msra.mxu0 0.0
      %420 = vmatprep.subr.mxu0 0.0
      %421 = vmatpush1.msra.mxu0 0.0
      %422 = vmatprep.subr.mxu0 0.0
      %423 = vmatpush1.msra.mxu0 0.0
      %424 = vmatprep.subr.mxu0 0.0
      %425 = vmatpush1.msra.mxu0 0.0
      %426 = vmatprep.subr.mxu0 0.0
      %427 = vmatpush1.msra.mxu0 0.0
      %428 = vmatprep.subr.mxu0 0.0
      %429 = vmatpush1.msra.mxu0 0.0
      %430 = vmatprep.subr.mxu0 0.0
      %431 = vmatpush1.msra.mxu0 0.0
      %432 = vmatprep.subr.mxu0 0.0
      %433 = vmatpush1.msra.mxu0 0.0
      %434 = vmatprep.subr.mxu0 0.0
      %435 = vmatpush1.msra.mxu0 0.0
      %436 = vmatprep.subr.mxu0 0.0
      %437 = vmatpush1.msra.mxu0 0.0
      %438 = vmatprep.subr.mxu0 0.0
      %439 = vmatpush1.msra.mxu0 0.0
      %440 = vmatprep.subr.mxu0 0.0
      %441 = vmatpush1.msra.mxu0 0.0
      %442 = vmatprep.subr.mxu0 0.0
      %443 = vmatpush1.msra.mxu0 0.0
      %444 = vmatprep.subr.mxu0 0.0
      %445 = vmatpush1.msra.mxu0 0.0
      %446 = vmatprep.subr.mxu0 0.0
      %447 = vmatpush1.msra.mxu0 0.0
      %448 = vmatprep.subr.mxu0 0.0
      %449 = vmatpush1.msra.mxu0 0.0
      %450 = vmatprep.subr.mxu0 0.0
      %451 = vmatpush1.msra.mxu0 0.0
      %452 = vmatprep.subr.mxu0 0.0
      %453 = vmatpush1.msra.mxu0 0.0
      %454 = vmatprep.subr.mxu0 0.0
      %455 = vmatpush1.msra.mxu0 0.0
      %456 = vmatprep.subr.mxu0 0.0
      %457 = vmatpush1.msra.mxu0 0.0
      %458 = vmatprep.subr.mxu0 0.0
      %459 = vmatpush1.msra.mxu0 0.0
      %460 = vmatprep.subr.mxu0 0.0
      %461 = vmatpush1.msra.mxu0 0.0
      %462 = vmatprep.subr.mxu0 0.0
      %463 = vmatpush1.msra.mxu0 0.0
      %464 = vmatprep.subr.mxu0 0.0
      %465 = vmatpush1.msra.mxu0 0.0
      %466 = vmatprep.subr.mxu0 0.0
      %467 = vmatpush1.msra.mxu0 0.0
      %468 = vmatprep.subr.mxu0 0.0
      %469 = vmatpush1.msra.mxu0 0.0
      %470 = vmatprep.subr.mxu0 0.0
      %471 = vmatpush1.msra.mxu0 0.0
      %472 = vmatprep.subr.mxu0 0.0
      %473 = vmatpush1.msra.mxu0 0.0
      %474 = vmatprep.subr.mxu0 0.0
      %475 = vmatpush1.msra.mxu0 0.0
      %476 = vmatprep.subr.mxu0 0.0
      %477 = vmatpush1.msra.mxu0 0.0
      %478 = vmatprep.mubr.f32.mxu0 0.0
      %479 = vmatmul.mubr.f32.gmra.mrb[0].mxu0 %v319
      %v480 = vpop.f32.mrb[0].mxu0
      %v481 = vadd.f32 %v315, %v480
      %v482 = vpop.f32.mrb[0].mxu0
      %483 = vmatprep.mubr.f32.mxu0 0.0
      %484 = vmatmul.mubr.f32.gmra.mrb[0].mxu0 %v322
      %v485 = vpop.f32.mrb[0].mxu0
      %v486 = vadd.f32 %v315, %v485
      %v487 = vpop.f32.mrb[0].mxu0
      %488 = vmatprep.mubr.f32.mxu0 0.0
      %489 = vmatmul.mubr.f32.gmra.mrb[0].mxu0 %v325
      %v490 = vpop.f32.mrb[0].mxu0
      %v491 = vadd.f32 %v315, %v490
      %v492 = vpop.f32.mrb[0].mxu0
      %493 = vmatprep.mubr.f32.mxu0 0.0
      %494 = vmatmul.mubr.f32.gmra.mrb[0].mxu0 %v328
      %v495 = vpop.f32.mrb[0].mxu0
      %v496 = vadd.f32 %v315, %v495
      %v497 = vpop.f32.mrb[0].mxu0
      %498 = vmatprep.mubr.f32.mxu0 0.0
      %499 = vmatmul.mubr.f32.gmra.mrb[0].mxu0 %v331
      %v500 = vpop.f32.mrb[0].mxu0
      %v501 = vadd.f32 %v315, %v500
      %v502 = vpop.f32.mrb[0].mxu0
      %503 = vmatprep.mubr.f32.mxu0 0.0
      %504 = vmatmul.mubr.f32.gmra.mrb[0].mxu0 %v334
      %v505 = vpop.f32.mrb[0].mxu0
      %v506 = vadd.f32 %v315, %v505
      %v507 = vpop.f32.mrb[0].mxu0
      %508 = vmatprep.mubr.f32.mxu0 0.0
      %509 = vmatmul.mubr.f32.gmra.mrb[0].mxu0 %v337
      %v510 = vpop.f32.mrb[0].mxu0
      %v511 = vadd.f32 %v315, %v510
      %v512 = vpop.f32.mrb[0].mxu0
      %513 = vmatprep.mubr.f32.mxu0 0.0
      %514 = vmatmul.mubr.f32.gmra.mrb[0].mxu0 %v340
      %v515 = vpop.f32.mrb[0].mxu0
      %v516 = vadd.f32 %v315, %v515
      %v517 = vpop.f32.mrb[0].mxu0
      %518 = vmatprep.mubr.f32.mxu0 0.0
      %519 = vmatmul.mubr.f32.gmra.mrb[0].mxu0 %v343
      %v520 = vpop.f32.mrb[0].mxu0
      %v521 = vadd.f32 %v315, %v520
      %v522 = vpop.f32.mrb[0].mxu0
      %523 = vmatprep.mubr.f32.mxu0 0.0
      %524 = vmatmul.mubr.f32.gmra.mrb[0].mxu0 %v346
      %v525 = vpop.f32.mrb[0].mxu0
      %v526 = vadd.f32 %v315, %v525
      %v527 = vpop.f32.mrb[0].mxu0
      %528 = vmatprep.mubr.f32.mxu0 0.0
      %529 = vmatmul.mubr.f32.gmra.mrb[0].mxu0 %v349
      %v530 = vpop.f32.mrb[0].mxu0
      %v531 = vadd.f32 %v315, %v530
      %v532 = vpop.f32.mrb[0].mxu0
      %533 = vmatprep.mubr.f32.mxu0 0.0
      %534 = vmatmul.mubr.f32.gmra.mrb[0].mxu0 %v352
      %v535 = vpop.f32.mrb[0].mxu0
      %v536 = vadd.f32 %v315, %v535
      %v537 = vpop.f32.mrb[0].mxu0
      %538 = vmatprep.mubr.f32.mxu0 0.0
      %539 = vmatmul.mubr.f32.gmra.mrb[0].mxu0 %v355
      %v540 = vpop.f32.mrb[0].mxu0
      %v541 = vadd.f32 %v315, %v540
      %v542 = vpop.f32.mrb[0].mxu0
      %543 = vmatprep.mubr.f32.mxu0 0.0
      %544 = vmatmul.mubr.f32.gmra.mrb[0].mxu0 %v358
      %v545 = vpop.f32.mrb[0].mxu0
      %v546 = vadd.f32 %v315, %v545
      %v547 = vpop.f32.mrb[0].mxu0
      %548 = vmatprep.mubr.f32.mxu0 0.0
      %549 = vmatmul.mubr.f32.gmra.mrb[0].mxu0 %v361
      %v550 = vpop.f32.mrb[0].mxu0
      %v551 = vadd.f32 %v315, %v550
      %v552 = vpop.f32.mrb[0].mxu0
      %553 = vmatprep.mubr.f32.mxu0 0.0
      %554 = vmatmul.mubr.f32.gmra.mrb[0].mxu0 %v364
      %v555 = vpop.f32.mrb[0].mxu0
      %v556 = vadd.f32 %v315, %v555
      %v557 = vpop.f32.mrb[0].mxu0
      %558 = vmatprep.mubr.f32.mxu0 0.0
      %559 = vmatmul.mubr.f32.gmra.mrb[0].mxu0 %v367
      %v560 = vpop.f32.mrb[0].mxu0
      %v561 = vadd.f32 %v315, %v560
      %v562 = vpop.f32.mrb[0].mxu0
      %563 = vmatprep.mubr.f32.mxu0 0.0
      %564 = vmatmul.mubr.f32.gmra.mrb[0].mxu0 %v370
      %v565 = vpop.f32.mrb[0].mxu0
      %v566 = vadd.f32 %v315, %v565
      %v567 = vpop.f32.mrb[0].mxu0
      %568 = vmatprep.mubr.f32.mxu0 0.0
      %569 = vmatmul.mubr.f32.gmra.mrb[0].mxu0 %v373
      %v570 = vpop.f32.mrb[0].mxu0
      %v571 = vadd.f32 %v315, %v570
      %v572 = vpop.f32.mrb[0].mxu0
      %573 = vmatprep.mubr.f32.mxu0 0.0
      %574 = vmatmul.mubr.f32.gmra.mrb[0].mxu0 %v376
      %v575 = vpop.f32.mrb[0].mxu0
      %v576 = vadd.f32 %v315, %v575
      %v577 = vpop.f32.mrb[0].mxu0
      %578 = vmatprep.mubr.f32.mxu0 0.0
      %579 = vmatmul.mubr.f32.gmra.mrb[0].mxu0 %v379
      %v580 = vpop.f32.mrb[0].mxu0
      %v581 = vadd.f32 %v315, %v580
      %v582 = vpop.f32.mrb[0].mxu0
      %583 = vmatprep.mubr.f32.mxu0 0.0
      %584 = vmatmul.mubr.f32.gmra.mrb[0].mxu0 %v382
      %v585 = vpop.f32.mrb[0].mxu0
      %v586 = vadd.f32 %v315, %v585
      %v587 = vpop.f32.mrb[0].mxu0
      %588 = vmatprep.mubr.f32.mxu0 0.0
      %589 = vmatmul.mubr.f32.gmra.mrb[0].mxu0 %v385
      %v590 = vpop.f32.mrb[0].mxu0
      %v591 = vadd.f32 %v315, %v590
      %v592 = vpop.f32.mrb[0].mxu0
      %593 = vmatprep.mubr.f32.mxu0 0.0
      %594 = vmatmul.mubr.f32.gmra.mrb[0].mxu0 %v388
      %v595 = vpop.f32.mrb[0].mxu0
      %v596 = vadd.f32 %v315, %v595
      %v597 = vpop.f32.mrb[0].mxu0
      %598 = vmatprep.mubr.f32.mxu0 0.0
      %599 = vmatmul.mubr.f32.gmra.mrb[0].mxu0 %v391
      %v600 = vpop.f32.mrb[0].mxu0
      %v601 = vadd.f32 %v315, %v600
      %v602 = vpop.f32.mrb[0].mxu0
      %603 = vmatprep.mubr.f32.mxu0 0.0
      %604 = vmatmul.mubr.f32.gmra.mrb[0].mxu0 %v394
      %v605 = vpop.f32.mrb[0].mxu0
      %v606 = vadd.f32 %v315, %v605
      %v607 = vpop.f32.mrb[0].mxu0
      %608 = vmatprep.mubr.f32.mxu0 0.0
      %609 = vmatmul.mubr.f32.gmra.mrb[0].mxu0 %v397
      %v610 = vpop.f32.mrb[0].mxu0
      %v611 = vadd.f32 %v315, %v610
      %v612 = vpop.f32.mrb[0].mxu0
      %613 = vmatprep.mubr.f32.mxu0 0.0
      %614 = vmatmul.mubr.f32.gmra.mrb[0].mxu0 %v400
      %v615 = vpop.f32.mrb[0].mxu0
      %v616 = vadd.f32 %v315, %v615
      %v617 = vpop.f32.mrb[0].mxu0
      %618 = vmatprep.mubr.f32.mxu0 0.0
      %619 = vmatmul.mubr.f32.gmra.mrb[0].mxu0 %v403
      %v620 = vpop.f32.mrb[0].mxu0
      %v621 = vadd.f32 %v315, %v620
      %v622 = vpop.f32.mrb[0].mxu0
      %623 = vmatprep.mubr.f32.mxu0 0.0
      %624 = vmatmul.mubr.f32.gmra.mrb[0].mxu0 %v406
      %v625 = vpop.f32.mrb[0].mxu0
      %v626 = vadd.f32 %v315, %v625
      %v627 = vpop.f32.mrb[0].mxu0
      %628 = vmatprep.mubr.f32.mxu0 0.0
      %629 = vmatmul.mubr.f32.gmra.mrb[0].mxu0 %v409
      %v630 = vpop.f32.mrb[0].mxu0
      %v631 = vadd.f32 %v315, %v630
      %v632 = vpop.f32.mrb[0].mxu0
      %633 = vmatprep.mubr.f32.mxu0 0.0
      %634 = vmatmul.mubr.f32.gmra.mrb[0].mxu0 %v412
      %v635 = vpop.f32.mrb[0].mxu0
      %v636 = vadd.f32 %v315, %v635
      %v637 = vpop.f32.mrb[0].mxu0
      %638 = vdwg.mxu0
      %v639 = vld [vmem:[%s269] sm:$0xff]
      %v640 = vld [vmem:[%s269 + $0x8] sm:$0xff]
      %v641 = vld [vmem:[%s269 + $0x10] sm:$0xff]
      %v642 = vld [vmem:[%s269 + $0x18] sm:$0xff]
      %v643 = vld [vmem:[%s269 + $0x20] sm:$0xff]
      %v644 = vld [vmem:[%s269 + $0x28] sm:$0xff]
      %v645 = vld [vmem:[%s269 + $0x30] sm:$0xff]
      %v646 = vld [vmem:[%s269 + $0x38] sm:$0xff]
      %v647 = vld [vmem:[%s269 + $0x40] sm:$0xff]
      %v648 = vld [vmem:[%s269 + $0x48] sm:$0xff]
      %v649 = vld [vmem:[%s269 + $0x50] sm:$0xff]
      %v650 = vld [vmem:[%s269 + $0x58] sm:$0xff]
      %v651 = vld [vmem:[%s269 + $0x60] sm:$0xff]
      %v652 = vld [vmem:[%s269 + $0x68] sm:$0xff]
      %v653 = vld [vmem:[%s269 + $0x70] sm:$0xff]
      %v654 = vld [vmem:[%s269 + $0x78] sm:$0xff]
      %v655 = vld [vmem:[%s269 + $0x80] sm:$0xff]
      %v656 = vld [vmem:[%s269 + $0x88] sm:$0xff]
      %v657 = vld [vmem:[%s269 + $0x90] sm:$0xff]
      %v658 = vld [vmem:[%s269 + $0x98] sm:$0xff]
      %v659 = vld [vmem:[%s269 + $0xa0] sm:$0xff]
      %v660 = vld [vmem:[%s269 + $0xa8] sm:$0xff]
      %v661 = vld [vmem:[%s269 + $0xb0] sm:$0xff]
      %v662 = vld [vmem:[%s269 + $0xb8] sm:$0xff]
      %v663 = vld [vmem:[%s269 + $0xc0] sm:$0xff]
      %v664 = vld [vmem:[%s269 + $0xc8] sm:$0xff]
      %v665 = vld [vmem:[%s269 + $0xd0] sm:$0xff]
      %v666 = vld [vmem:[%s269 + $0xd8] sm:$0xff]
      %v667 = vld [vmem:[%s269 + $0xe0] sm:$0xff]
      %v668 = vld [vmem:[%s269 + $0xe8] sm:$0xff]
      %v669 = vld [vmem:[%s269 + $0xf0] sm:$0xff]
      %v670 = vld [vmem:[%s269 + $0xf8] sm:$0xff]
      %v671 = vld [vmem:[%s4] sm:$0xff]
      %v672 = vld [vmem:[%s5] sm:$0x1]
      %v674 = vlaneseq
      %v675 = vshrl.u32 %v674, 7
      %v676 = vsub.s32 0, %v675
      %v677 = vrot.slane %v672, %v676
      %v680 = vsel %vm317, %v639, 0
      %v683 = vsel %vm317, %v640, 0
      %v686 = vsel %vm317, %v641, 0
      %v689 = vsel %vm317, %v642, 0
      %v692 = vsel %vm317, %v643, 0
      %v695 = vsel %vm317, %v644, 0
      %v698 = vsel %vm317, %v645, 0
      %v701 = vsel %vm317, %v646, 0
      %v704 = vsel %vm317, %v647, 0
      %v707 = vsel %vm317, %v648, 0
      %v710 = vsel %vm317, %v649, 0
      %v713 = vsel %vm317, %v650, 0
      %v716 = vsel %vm317, %v651, 0
      %v719 = vsel %vm317, %v652, 0
      %v722 = vsel %vm317, %v653, 0
      %v725 = vsel %vm317, %v654, 0
      %v728 = vsel %vm317, %v655, 0
      %v731 = vsel %vm317, %v656, 0
      %v734 = vsel %vm317, %v657, 0
      %v737 = vsel %vm317, %v658, 0
      %v740 = vsel %vm317, %v659, 0
      %v743 = vsel %vm317, %v660, 0
      %v746 = vsel %vm317, %v661, 0
      %v749 = vsel %vm317, %v662, 0
      %v752 = vsel %vm317, %v663, 0
      %v755 = vsel %vm317, %v664, 0
      %v758 = vsel %vm317, %v665, 0
      %v761 = vsel %vm317, %v666, 0
      %v764 = vsel %vm317, %v667, 0
      %v767 = vsel %vm317, %v668, 0
      %v770 = vsel %vm317, %v669, 0
      %v773 = vsel %vm317, %v670, 0
      %775 = vmatprep.subr.mxu0 0.0
      %776 = vmatpush1.msra.mxu0 %v671
      %777 = vmatprep.subr.mxu0 0.0
      %778 = vmatpush1.msra.mxu0 0.0
      %779 = vmatprep.subr.mxu0 0.0
      %780 = vmatpush1.msra.mxu0 0.0
      %781 = vmatprep.subr.mxu0 0.0
      %782 = vmatpush1.msra.mxu0 0.0
      %783 = vmatprep.subr.mxu0 0.0
      %784 = vmatpush1.msra.mxu0 0.0
      %785 = vmatprep.subr.mxu0 0.0
      %786 = vmatpush1.msra.mxu0 0.0
      %787 = vmatprep.subr.mxu0 0.0
      %788 = vmatpush1.msra.mxu0 0.0
      %789 = vmatprep.subr.mxu0 0.0
      %790 = vmatpush1.msra.mxu0 0.0
      %791 = vmatprep.subr.mxu0 0.0
      %792 = vmatpush1.msra.mxu0 0.0
      %793 = vmatprep.subr.mxu0 0.0
      %794 = vmatpush1.msra.mxu0 0.0
      %795 = vmatprep.subr.mxu0 0.0
      %796 = vmatpush1.msra.mxu0 0.0
      %797 = vmatprep.subr.mxu0 0.0
      %798 = vmatpush1.msra.mxu0 0.0
      %799 = vmatprep.subr.mxu0 0.0
      %800 = vmatpush1.msra.mxu0 0.0
      %801 = vmatprep.subr.mxu0 0.0
      %802 = vmatpush1.msra.mxu0 0.0
      %803 = vmatprep.subr.mxu0 0.0
      %804 = vmatpush1.msra.mxu0 0.0
      %805 = vmatprep.subr.mxu0 0.0
      %806 = vmatpush1.msra.mxu0 0.0
      %807 = vmatprep.subr.mxu0 0.0
      %808 = vmatpush1.msra.mxu0 0.0
      %809 = vmatprep.subr.mxu0 0.0
      %810 = vmatpush1.msra.mxu0 0.0
      %811 = vmatprep.subr.mxu0 0.0
      %812 = vmatpush1.msra.mxu0 0.0
      %813 = vmatprep.subr.mxu0 0.0
      %814 = vmatpush1.msra.mxu0 0.0
      %815 = vmatprep.subr.mxu0 0.0
      %816 = vmatpush1.msra.mxu0 0.0
      %817 = vmatprep.subr.mxu0 0.0
      %818 = vmatpush1.msra.mxu0 0.0
      %819 = vmatprep.subr.mxu0 0.0
      %820 = vmatpush1.msra.mxu0 0.0
      %821 = vmatprep.subr.mxu0 0.0
      %822 = vmatpush1.msra.mxu0 0.0
      %823 = vmatprep.subr.mxu0 0.0
      %824 = vmatpush1.msra.mxu0 0.0
      %825 = vmatprep.subr.mxu0 0.0
      %826 = vmatpush1.msra.mxu0 0.0
      %827 = vmatprep.subr.mxu0 0.0
      %828 = vmatpush1.msra.mxu0 0.0
      %829 = vmatprep.subr.mxu0 0.0
      %830 = vmatpush1.msra.mxu0 0.0
      %831 = vmatprep.subr.mxu0 0.0
      %832 = vmatpush1.msra.mxu0 0.0
      %833 = vmatprep.subr.mxu0 0.0
      %834 = vmatpush1.msra.mxu0 0.0
      %835 = vmatprep.subr.mxu0 0.0
      %836 = vmatpush1.msra.mxu0 0.0
      %837 = vmatprep.subr.mxu0 0.0
      %838 = vmatpush1.msra.mxu0 0.0
      %839 = vmatprep.mubr.f32.mxu0 0.0
      %840 = vmatmul.mubr.f32.gmra.mrb[0].mxu0 %v680
      %v841 = vpop.f32.mrb[0].mxu0
      %v842 = vadd.f32 %v677, %v841
      %v843 = vpop.f32.mrb[0].mxu0
      %844 = vmatprep.mubr.f32.mxu0 0.0
      %845 = vmatmul.mubr.f32.gmra.mrb[0].mxu0 %v683
      %v846 = vpop.f32.mrb[0].mxu0
      %v847 = vadd.f32 %v677, %v846
      %v848 = vpop.f32.mrb[0].mxu0
      %849 = vmatprep.mubr.f32.mxu0 0.0
      %850 = vmatmul.mubr.f32.gmra.mrb[0].mxu0 %v686
      %v851 = vpop.f32.mrb[0].mxu0
      %v852 = vadd.f32 %v677, %v851
      %v853 = vpop.f32.mrb[0].mxu0
      %854 = vmatprep.mubr.f32.mxu0 0.0
      %855 = vmatmul.mubr.f32.gmra.mrb[0].mxu0 %v689
      %v856 = vpop.f32.mrb[0].mxu0
      %v857 = vadd.f32 %v677, %v856
      %v858 = vpop.f32.mrb[0].mxu0
      %859 = vmatprep.mubr.f32.mxu0 0.0
      %860 = vmatmul.mubr.f32.gmra.mrb[0].mxu0 %v692
      %v861 = vpop.f32.mrb[0].mxu0
      %v862 = vadd.f32 %v677, %v861
      %v863 = vpop.f32.mrb[0].mxu0
      %864 = vmatprep.mubr.f32.mxu0 0.0
      %865 = vmatmul.mubr.f32.gmra.mrb[0].mxu0 %v695
      %v866 = vpop.f32.mrb[0].mxu0
      %v867 = vadd.f32 %v677, %v866
      %v868 = vpop.f32.mrb[0].mxu0
      %869 = vmatprep.mubr.f32.mxu0 0.0
      %870 = vmatmul.mubr.f32.gmra.mrb[0].mxu0 %v698
      %v871 = vpop.f32.mrb[0].mxu0
      %v872 = vadd.f32 %v677, %v871
      %v873 = vpop.f32.mrb[0].mxu0
      %874 = vmatprep.mubr.f32.mxu0 0.0
      %875 = vmatmul.mubr.f32.gmra.mrb[0].mxu0 %v701
      %v876 = vpop.f32.mrb[0].mxu0
      %v877 = vadd.f32 %v677, %v876
      %v878 = vpop.f32.mrb[0].mxu0
      %879 = vmatprep.mubr.f32.mxu0 0.0
      %880 = vmatmul.mubr.f32.gmra.mrb[0].mxu0 %v704
      %v881 = vpop.f32.mrb[0].mxu0
      %v882 = vadd.f32 %v677, %v881
      %v883 = vpop.f32.mrb[0].mxu0
      %884 = vmatprep.mubr.f32.mxu0 0.0
      %885 = vmatmul.mubr.f32.gmra.mrb[0].mxu0 %v707
      %v886 = vpop.f32.mrb[0].mxu0
      %v887 = vadd.f32 %v677, %v886
      %v888 = vpop.f32.mrb[0].mxu0
      %889 = vmatprep.mubr.f32.mxu0 0.0
      %890 = vmatmul.mubr.f32.gmra.mrb[0].mxu0 %v710
      %v891 = vpop.f32.mrb[0].mxu0
      %v892 = vadd.f32 %v677, %v891
      %v893 = vpop.f32.mrb[0].mxu0
      %894 = vmatprep.mubr.f32.mxu0 0.0
      %895 = vmatmul.mubr.f32.gmra.mrb[0].mxu0 %v713
      %v896 = vpop.f32.mrb[0].mxu0
      %v897 = vadd.f32 %v677, %v896
      %v898 = vpop.f32.mrb[0].mxu0
      %899 = vmatprep.mubr.f32.mxu0 0.0
      %900 = vmatmul.mubr.f32.gmra.mrb[0].mxu0 %v716
      %v901 = vpop.f32.mrb[0].mxu0
      %v902 = vadd.f32 %v677, %v901
      %v903 = vpop.f32.mrb[0].mxu0
      %904 = vmatprep.mubr.f32.mxu0 0.0
      %905 = vmatmul.mubr.f32.gmra.mrb[0].mxu0 %v719
      %v906 = vpop.f32.mrb[0].mxu0
      %v907 = vadd.f32 %v677, %v906
      %v908 = vpop.f32.mrb[0].mxu0
      %909 = vmatprep.mubr.f32.mxu0 0.0
      %910 = vmatmul.mubr.f32.gmra.mrb[0].mxu0 %v722
      %v911 = vpop.f32.mrb[0].mxu0
      %v912 = vadd.f32 %v677, %v911
      %v913 = vpop.f32.mrb[0].mxu0
      %914 = vmatprep.mubr.f32.mxu0 0.0
      %915 = vmatmul.mubr.f32.gmra.mrb[0].mxu0 %v725
      %v916 = vpop.f32.mrb[0].mxu0
      %v917 = vadd.f32 %v677, %v916
      %v918 = vpop.f32.mrb[0].mxu0
      %919 = vmatprep.mubr.f32.mxu0 0.0
      %920 = vmatmul.mubr.f32.gmra.mrb[0].mxu0 %v728
      %v921 = vpop.f32.mrb[0].mxu0
      %v922 = vadd.f32 %v677, %v921
      %v923 = vpop.f32.mrb[0].mxu0
      %924 = vmatprep.mubr.f32.mxu0 0.0
      %925 = vmatmul.mubr.f32.gmra.mrb[0].mxu0 %v731
      %v926 = vpop.f32.mrb[0].mxu0
      %v927 = vadd.f32 %v677, %v926
      %v928 = vpop.f32.mrb[0].mxu0
      %929 = vmatprep.mubr.f32.mxu0 0.0
      %930 = vmatmul.mubr.f32.gmra.mrb[0].mxu0 %v734
      %v931 = vpop.f32.mrb[0].mxu0
      %v932 = vadd.f32 %v677, %v931
      %v933 = vpop.f32.mrb[0].mxu0
      %934 = vmatprep.mubr.f32.mxu0 0.0
      %935 = vmatmul.mubr.f32.gmra.mrb[0].mxu0 %v737
      %v936 = vpop.f32.mrb[0].mxu0
      %v937 = vadd.f32 %v677, %v936
      %v938 = vpop.f32.mrb[0].mxu0
      %939 = vmatprep.mubr.f32.mxu0 0.0
      %940 = vmatmul.mubr.f32.gmra.mrb[0].mxu0 %v740
      %v941 = vpop.f32.mrb[0].mxu0
      %v942 = vadd.f32 %v677, %v941
      %v943 = vpop.f32.mrb[0].mxu0
      %944 = vmatprep.mubr.f32.mxu0 0.0
      %945 = vmatmul.mubr.f32.gmra.mrb[0].mxu0 %v743
      %v946 = vpop.f32.mrb[0].mxu0
      %v947 = vadd.f32 %v677, %v946
      %v948 = vpop.f32.mrb[0].mxu0
      %949 = vmatprep.mubr.f32.mxu0 0.0
      %950 = vmatmul.mubr.f32.gmra.mrb[0].mxu0 %v746
      %v951 = vpop.f32.mrb[0].mxu0
      %v952 = vadd.f32 %v677, %v951
      %v953 = vpop.f32.mrb[0].mxu0
      %954 = vmatprep.mubr.f32.mxu0 0.0
      %955 = vmatmul.mubr.f32.gmra.mrb[0].mxu0 %v749
      %v956 = vpop.f32.mrb[0].mxu0
      %v957 = vadd.f32 %v677, %v956
      %v958 = vpop.f32.mrb[0].mxu0
      %959 = vmatprep.mubr.f32.mxu0 0.0
      %960 = vmatmul.mubr.f32.gmra.mrb[0].mxu0 %v752
      %v961 = vpop.f32.mrb[0].mxu0
      %v962 = vadd.f32 %v677, %v961
      %v963 = vpop.f32.mrb[0].mxu0
      %964 = vmatprep.mubr.f32.mxu0 0.0
      %965 = vmatmul.mubr.f32.gmra.mrb[0].mxu0 %v755
      %v966 = vpop.f32.mrb[0].mxu0
      %v967 = vadd.f32 %v677, %v966
      %v968 = vpop.f32.mrb[0].mxu0
      %969 = vmatprep.mubr.f32.mxu0 0.0
      %970 = vmatmul.mubr.f32.gmra.mrb[0].mxu0 %v758
      %v971 = vpop.f32.mrb[0].mxu0
      %v972 = vadd.f32 %v677, %v971
      %v973 = vpop.f32.mrb[0].mxu0
      %974 = vmatprep.mubr.f32.mxu0 0.0
      %975 = vmatmul.mubr.f32.gmra.mrb[0].mxu0 %v761
      %v976 = vpop.f32.mrb[0].mxu0
      %v977 = vadd.f32 %v677, %v976
      %v978 = vpop.f32.mrb[0].mxu0
      %979 = vmatprep.mubr.f32.mxu0 0.0
      %980 = vmatmul.mubr.f32.gmra.mrb[0].mxu0 %v764
      %v981 = vpop.f32.mrb[0].mxu0
      %v982 = vadd.f32 %v677, %v981
      %v983 = vpop.f32.mrb[0].mxu0
      %984 = vmatprep.mubr.f32.mxu0 0.0
      %985 = vmatmul.mubr.f32.gmra.mrb[0].mxu0 %v767
      %v986 = vpop.f32.mrb[0].mxu0
      %v987 = vadd.f32 %v677, %v986
      %v988 = vpop.f32.mrb[0].mxu0
      %989 = vmatprep.mubr.f32.mxu0 0.0
      %990 = vmatmul.mubr.f32.gmra.mrb[0].mxu0 %v770
      %v991 = vpop.f32.mrb[0].mxu0
      %v992 = vadd.f32 %v677, %v991
      %v993 = vpop.f32.mrb[0].mxu0
      %994 = vmatprep.mubr.f32.mxu0 0.0
      %995 = vmatmul.mubr.f32.gmra.mrb[0].mxu0 %v773
      %v996 = vpop.f32.mrb[0].mxu0
      %v997 = vadd.f32 %v677, %v996
      %v998 = vpop.f32.mrb[0].mxu0
      %999 = vdwg.mxu0
      %vm1000 = vcmask 523264
      %1001 = vst.msk [vmem:[%s275] sm:$0xff] %vm1000, %v481
      %1002 = vst.msk [vmem:[%s275 + $0x8] sm:$0xff] %vm1000, %v486
      %1003 = vst.msk [vmem:[%s275 + $0x10] sm:$0xff] %vm1000, %v491
      %1004 = vst.msk [vmem:[%s275 + $0x18] sm:$0xff] %vm1000, %v496
      %1005 = vst.msk [vmem:[%s275 + $0x20] sm:$0xff] %vm1000, %v501
      %1006 = vst.msk [vmem:[%s275 + $0x28] sm:$0xff] %vm1000, %v506
      %1007 = vst.msk [vmem:[%s275 + $0x30] sm:$0xff] %vm1000, %v511
      %1008 = vst.msk [vmem:[%s275 + $0x38] sm:$0xff] %vm1000, %v516
      %1009 = vst.msk [vmem:[%s275 + $0x40] sm:$0xff] %vm1000, %v521
      %1010 = vst.msk [vmem:[%s275 + $0x48] sm:$0xff] %vm1000, %v526
      %1011 = vst.msk [vmem:[%s275 + $0x50] sm:$0xff] %vm1000, %v531
      %1012 = vst.msk [vmem:[%s275 + $0x58] sm:$0xff] %vm1000, %v536
      %1013 = vst.msk [vmem:[%s275 + $0x60] sm:$0xff] %vm1000, %v541
      %1014 = vst.msk [vmem:[%s275 + $0x68] sm:$0xff] %vm1000, %v546
      %1015 = vst.msk [vmem:[%s275 + $0x70] sm:$0xff] %vm1000, %v551
      %1016 = vst.msk [vmem:[%s275 + $0x78] sm:$0xff] %vm1000, %v556
      %1017 = vst.msk [vmem:[%s275 + $0x80] sm:$0xff] %vm1000, %v561
      %1018 = vst.msk [vmem:[%s275 + $0x88] sm:$0xff] %vm1000, %v566
      %1019 = vst.msk [vmem:[%s275 + $0x90] sm:$0xff] %vm1000, %v571
      %1020 = vst.msk [vmem:[%s275 + $0x98] sm:$0xff] %vm1000, %v576
      %1021 = vst.msk [vmem:[%s275 + $0xa0] sm:$0xff] %vm1000, %v581
      %1022 = vst.msk [vmem:[%s275 + $0xa8] sm:$0xff] %vm1000, %v586
      %1023 = vst.msk [vmem:[%s275 + $0xb0] sm:$0xff] %vm1000, %v591
      %1024 = vst.msk [vmem:[%s275 + $0xb8] sm:$0xff] %vm1000, %v596
      %1025 = vst.msk [vmem:[%s275 + $0xc0] sm:$0xff] %vm1000, %v601
      %1026 = vst.msk [vmem:[%s275 + $0xc8] sm:$0xff] %vm1000, %v606
      %1027 = vst.msk [vmem:[%s275 + $0xd0] sm:$0xff] %vm1000, %v611
      %1028 = vst.msk [vmem:[%s275 + $0xd8] sm:$0xff] %vm1000, %v616
      %1029 = vst.msk [vmem:[%s275 + $0xe0] sm:$0xff] %vm1000, %v621
      %1030 = vst.msk [vmem:[%s275 + $0xe8] sm:$0xff] %vm1000, %v626
      %1031 = vst.msk [vmem:[%s275 + $0xf0] sm:$0xff] %vm1000, %v631
      %1032 = vst.msk [vmem:[%s275 + $0xf8] sm:$0xff] %vm1000, %v636
      %1065 = vrot.lane.b32.xlu0 %v842, 64
      %v1066 = vpop.permute.xlu0 %1065
      %1067 = vrot.lane.b32.xlu0 %v847, 64
      %v1068 = vpop.permute.xlu0 %1067
      %1069 = vrot.lane.b32.xlu0 %v852, 64
      %v1070 = vpop.permute.xlu0 %1069
      %1071 = vrot.lane.b32.xlu0 %v857, 64
      %v1072 = vpop.permute.xlu0 %1071
      %1073 = vrot.lane.b32.xlu0 %v862, 64
      %v1074 = vpop.permute.xlu0 %1073
      %1075 = vrot.lane.b32.xlu0 %v867, 64
      %v1076 = vpop.permute.xlu0 %1075
      %1077 = vrot.lane.b32.xlu0 %v872, 64
      %v1078 = vpop.permute.xlu0 %1077
      %1079 = vrot.lane.b32.xlu0 %v877, 64
      %v1080 = vpop.permute.xlu0 %1079
      %1081 = vrot.lane.b32.xlu0 %v882, 64
      %v1082 = vpop.permute.xlu0 %1081
      %1083 = vrot.lane.b32.xlu0 %v887, 64
      %v1084 = vpop.permute.xlu0 %1083
      %1085 = vrot.lane.b32.xlu0 %v892, 64
      %v1086 = vpop.permute.xlu0 %1085
      %1087 = vrot.lane.b32.xlu0 %v897, 64
      %v1088 = vpop.permute.xlu0 %1087
      %1089 = vrot.lane.b32.xlu0 %v902, 64
      %v1090 = vpop.permute.xlu0 %1089
      %1091 = vrot.lane.b32.xlu0 %v907, 64
      %v1092 = vpop.permute.xlu0 %1091
      %1093 = vrot.lane.b32.xlu0 %v912, 64
      %v1094 = vpop.permute.xlu0 %1093
      %1095 = vrot.lane.b32.xlu0 %v917, 64
      %v1096 = vpop.permute.xlu0 %1095
      %1097 = vrot.lane.b32.xlu0 %v922, 64
      %v1098 = vpop.permute.xlu0 %1097
      %1099 = vrot.lane.b32.xlu0 %v927, 64
      %v1100 = vpop.permute.xlu0 %1099
      %1101 = vrot.lane.b32.xlu0 %v932, 64
      %v1102 = vpop.permute.xlu0 %1101
      %1103 = vrot.lane.b32.xlu0 %v937, 64
      %v1104 = vpop.permute.xlu0 %1103
      %1105 = vrot.lane.b32.xlu0 %v942, 64
      %v1106 = vpop.permute.xlu0 %1105
      %1107 = vrot.lane.b32.xlu0 %v947, 64
      %v1108 = vpop.permute.xlu0 %1107
      %1109 = vrot.lane.b32.xlu0 %v952, 64
      %v1110 = vpop.permute.xlu0 %1109
      %1111 = vrot.lane.b32.xlu0 %v957, 64
      %v1112 = vpop.permute.xlu0 %1111
      %1113 = vrot.lane.b32.xlu0 %v962, 64
      %v1114 = vpop.permute.xlu0 %1113
      %1115 = vrot.lane.b32.xlu0 %v967, 64
      %v1116 = vpop.permute.xlu0 %1115
      %1117 = vrot.lane.b32.xlu0 %v972, 64
      %v1118 = vpop.permute.xlu0 %1117
      %1119 = vrot.lane.b32.xlu0 %v977, 64
      %v1120 = vpop.permute.xlu0 %1119
      %1121 = vrot.lane.b32.xlu0 %v982, 64
      %v1122 = vpop.permute.xlu0 %1121
      %1123 = vrot.lane.b32.xlu0 %v987, 64
      %v1124 = vpop.permute.xlu0 %1123
      %1125 = vrot.lane.b32.xlu0 %v992, 64
      %v1126 = vpop.permute.xlu0 %1125
      %1127 = vrot.lane.b32.xlu0 %v997, 64
      %v1128 = vpop.permute.xlu0 %1127
      %vm1161 = vcmask 1048064
      %1162 = vst.msk [vmem:[%s275] sm:$0xff] %vm1161, %v1066
      %1163 = vst.msk [vmem:[%s275 + $0x8] sm:$0xff] %vm1161, %v1068
      %1164 = vst.msk [vmem:[%s275 + $0x10] sm:$0xff] %vm1161, %v1070
      %1165 = vst.msk [vmem:[%s275 + $0x18] sm:$0xff] %vm1161, %v1072
      %1166 = vst.msk [vmem:[%s275 + $0x20] sm:$0xff] %vm1161, %v1074
      %1167 = vst.msk [vmem:[%s275 + $0x28] sm:$0xff] %vm1161, %v1076
      %1168 = vst.msk [vmem:[%s275 + $0x30] sm:$0xff] %vm1161, %v1078
      %1169 = vst.msk [vmem:[%s275 + $0x38] sm:$0xff] %vm1161, %v1080
      %1170 = vst.msk [vmem:[%s275 + $0x40] sm:$0xff] %vm1161, %v1082
      %1171 = vst.msk [vmem:[%s275 + $0x48] sm:$0xff] %vm1161, %v1084
      %1172 = vst.msk [vmem:[%s275 + $0x50] sm:$0xff] %vm1161, %v1086
      %1173 = vst.msk [vmem:[%s275 + $0x58] sm:$0xff] %vm1161, %v1088
      %1174 = vst.msk [vmem:[%s275 + $0x60] sm:$0xff] %vm1161, %v1090
      %1175 = vst.msk [vmem:[%s275 + $0x68] sm:$0xff] %vm1161, %v1092
      %1176 = vst.msk [vmem:[%s275 + $0x70] sm:$0xff] %vm1161, %v1094
      %1177 = vst.msk [vmem:[%s275 + $0x78] sm:$0xff] %vm1161, %v1096
      %1178 = vst.msk [vmem:[%s275 + $0x80] sm:$0xff] %vm1161, %v1098
      %1179 = vst.msk [vmem:[%s275 + $0x88] sm:$0xff] %vm1161, %v1100
      %1180 = vst.msk [vmem:[%s275 + $0x90] sm:$0xff] %vm1161, %v1102
      %1181 = vst.msk [vmem:[%s275 + $0x98] sm:$0xff] %vm1161, %v1104
      %1182 = vst.msk [vmem:[%s275 + $0xa0] sm:$0xff] %vm1161, %v1106
      %1183 = vst.msk [vmem:[%s275 + $0xa8] sm:$0xff] %vm1161, %v1108
      %1184 = vst.msk [vmem:[%s275 + $0xb0] sm:$0xff] %vm1161, %v1110
      %1185 = vst.msk [vmem:[%s275 + $0xb8] sm:$0xff] %vm1161, %v1112
      %1186 = vst.msk [vmem:[%s275 + $0xc0] sm:$0xff] %vm1161, %v1114
      %1187 = vst.msk [vmem:[%s275 + $0xc8] sm:$0xff] %vm1161, %v1116
      %1188 = vst.msk [vmem:[%s275 + $0xd0] sm:$0xff] %vm1161, %v1118
      %1189 = vst.msk [vmem:[%s275 + $0xd8] sm:$0xff] %vm1161, %v1120
      %1190 = vst.msk [vmem:[%s275 + $0xe0] sm:$0xff] %vm1161, %v1122
      %1191 = vst.msk [vmem:[%s275 + $0xe8] sm:$0xff] %vm1161, %v1124
      %1192 = vst.msk [vmem:[%s275 + $0xf0] sm:$0xff] %vm1161, %v1126
      %1193 = vst.msk [vmem:[%s275 + $0xf8] sm:$0xff] %vm1161, %v1128
      %s1194 = smul.u32 32, %s17
      %p1195 = scmp.lt.s32.totalorder %s1194, 63
      %s1196 = scalar_select %p1195, %s1194, 63
      %s1197 = smul.addr %s1196, 8
      %s1198 = scalar_lea.vmem %s6, %s1197
      // Predicated region
      $region45: #{qkplus_forward.4} parent=43 // pred_check
        %p1199 = pneg %p171
      $region46: #{qkplus_forward.4} parent=43 // pred_check_branch
        %1201 = sbr.rel (%p1199) target = $region48
      $region47: #{qkplus_forward.4} parent=43 // pred_region
        %s1202 = smul.u32 32, %s17
      $region48: #{qkplus_forward.4} parent=43 // pred_fallthru
        _
    $region44: #{qkplus_forward.4} parent=5 // pred_fallthru
      _
    %p1203 = scmp.le.s32.totalorder 2, %s12
    // Predicated region
    $region49: #{qkplus_forward.4} parent=5 // pred_check
      %p1204 = pneg %p1203
    $region50: #{qkplus_forward.4} parent=5 // pred_check_branch
      %1206 = sbr.rel (%p1204) target = $region52
    $region51: #{qkplus_forward.4} parent=5 // pred_region
      %s1207 = ssub.s32 %s12, 2
      // Predicated region
      $region53: #{qkplus_forward.4} parent=51 // pred_check
        %p1208 = pneg %p177
      $region54: #{qkplus_forward.4} parent=51 // pred_check_branch
        %1210 = sbr.rel (%p1208) target = $region56
      $region55: #{qkplus_forward.4} parent=51 // pred_region
        %s1211 = smul.u32 32, %s18
        %p1212 = scmp.lt.s32.totalorder %s1211, 63
        %s1213 = scalar_select %p1212, %s1211, 63
        %s1214 = smul.addr %s1213, 8
        %s1215 = scalar_lea.vmem %s6, %s1214
      $region56: #{qkplus_forward.4} parent=51 // pred_fallthru
        _
    $region52: #{qkplus_forward.4} parent=5 // pred_fallthru
      _
  $region6: #{qkplus_forward.4} parent=0 // loop_footer
    %s16 = sadd.s32 1, %s12
  $region7: #{qkplus_forward.4} parent=0 // loop_footer_branch
    %11 = sbr.rel target = $region3
  $region8: #{qkplus_forward.4} parent=0 // loop_exit
    _

// kernel: qkplus_forward.7
$region0: #{qkplus_forward.7}
  #allocation0 [shape = 'u32[]', space=smem, size = 0x4, offset = 0x4, fixed_abs, tag = 'smem constant byte address 0x4 - core index']
  #allocation1 [shape = 'u32[144,128]{1,0:T(1,128)}', space=vmem, size = 0x12000, scoped, tag = 'internal scratch']
  #allocation2 [shape = 'f32[1,1]{1,0:T(1,128)S(1)}', space=vmem, size = 0x200, scoped, tag = 'scoped memory for qkplus_forward.7']
  %s0 = inlined_call_operand.vmem [shape: f32[512,64], index: 0, kind: input, shape index: {}]
  %s1 = inlined_call_operand.vmem [shape: f32[512,8], index: 1, kind: input, shape index: {}]
  %s2 = inlined_call_operand.vmem [shape: f32[1,64], index: 2, kind: input, shape index: {}]
  %s3 = inlined_call_operand.<no memory space> [shape: f32[1,1], index: 3, kind: input, shape index: {}]
  %s4 = inlined_call_operand.vmem [shape: f32[512,8], index: 4, kind: output, shape index: {}]
  %s5 = sld [smem:[#allocation0]]
  $region49: #{qkplus_forward.7} parent=0
    _
  %s7 = ssub.s32 1, %s5
  %s8 = scalar_select 0, %s7, %s5
  %v9 = vstv %s3
  %10 = vst [vmem:[#allocation2] sm:$0x1] %v9
  loop: start=0, step=1, limit=4
  $region2: #{qkplus_forward.7} parent=0 // loop_pre_header
    _
  $region3: #{qkplus_forward.7} parent=0 // loop_header
    %s12 = sphi 0, %s16
    %p13 = scmp.ge.s32.totalorder %s12, 4
    %s22 = sphi 0, %s24
    %s25 = sphi 0, %s22
    %s26 = sphi 0, %s25
    %s42 = sphi 0, %s26
    %s48 = sphi 0, %s50
    %s51 = sphi 0, %s48
    %s52 = sphi 0, %s51
    %s68 = sphi 0, %s52
    %s72 = sphi 0, %s72
    %s74 = sphi 0, %s72
    %s75 = sphi 0, %s74
    %s89 = sphi 0, %s75
    %s93 = sphi 0, %s93
    %s95 = sphi 0, %s93
    %s96 = sphi 0, %s95
    %s110 = sphi 0, %s96
    %s116 = sphi 0, %s118
    %s119 = sphi 0, %s116
    %s120 = sphi 0, %s119
    %s136 = sphi 0, %s120
  $region4: #{qkplus_forward.7} parent=0 // loop_header_branch
    %15 = sbr.rel (%p13) target = $region8
  $region5: #{qkplus_forward.7} parent=0 // loop_body
    %s17 = ssub.s32 %s12, 1
    %s18 = ssub.s32 %s12, 2
    %s19 = sadd.s32 %s12, 1
    %s20 = ssub.s32 %s12, %s19
    %p21 = scmp.eq.s32.totalorder %s20, 0
    %s23 = sadd.s32 %s22, 1
    %s24 = scalar_select %p21, %s22, %s23
    %p27 = pneg %p21
    %p28 = scmp.eq.s32.totalorder %s12, 1
    %p29 = por %p27, %p28
    %p30 = scmp.ne.s32.totalorder %s22, %s25
    %p31 = scmp.eq.s32.totalorder %s12, 0
    %p32 = por %p30, %p31
    %p33 = scmp.ne.s32.totalorder %s22, %s25
    %p34 = scmp.eq.s32.totalorder %s17, 1
    %p35 = por %p33, %p34
    %p36 = scmp.ne.s32.totalorder %s25, %s26
    %p37 = scmp.eq.s32.totalorder %s17, 0
    %p38 = por %p36, %p37
    %p39 = scmp.ne.s32.totalorder %s25, %s26
    %p40 = scmp.eq.s32.totalorder %s18, 1
    %p41 = por %p39, %p40
    %p43 = scmp.ne.s32.totalorder %s26, %s42
    %p44 = scmp.eq.s32.totalorder %s18, 0
    %p45 = por %p43, %p44
    %s46 = ssub.s32 %s12, %s19
    %p47 = scmp.eq.s32.totalorder %s46, 0
    %s49 = sadd.s32 %s48, 1
    %s50 = scalar_select %p47, %s48, %s49
    %p53 = pneg %p47
    %p54 = scmp.eq.s32.totalorder %s12, 1
    %p55 = por %p53, %p54
    %p56 = scmp.ne.s32.totalorder %s48, %s51
    %p57 = scmp.eq.s32.totalorder %s12, 0
    %p58 = por %p56, %p57
    %p59 = scmp.ne.s32.totalorder %s48, %s51
    %p60 = scmp.eq.s32.totalorder %s17, 1
    %p61 = por %p59, %p60
    %p62 = scmp.ne.s32.totalorder %s51, %s52
    %p63 = scmp.eq.s32.totalorder %s17, 0
    %p64 = por %p62, %p63
    %p65 = scmp.ne.s32.totalorder %s51, %s52
    %p66 = scmp.eq.s32.totalorder %s18, 1
    %p67 = por %p65, %p66
    %p69 = scmp.ne.s32.totalorder %s52, %s68
    %p70 = scmp.eq.s32.totalorder %s18, 0
    %p71 = por %p69, %p70
    %s73 = sadd.s32 %s72, 1
    %p76 = scmp.eq.s32.totalorder %s12, 1
    %p77 = scmp.ne.s32.totalorder %s72, %s74
    %p78 = scmp.eq.s32.totalorder %s12, 0
    %p79 = por %p77, %p78
    %p80 = scmp.ne.s32.totalorder %s72, %s74
    %p81 = scmp.eq.s32.totalorder %s17, 1
    %p82 = por %p80, %p81
    %p83 = scmp.ne.s32.totalorder %s74, %s75
    %p84 = scmp.eq.s32.totalorder %s17, 0
    %p85 = por %p83, %p84
    %p86 = scmp.ne.s32.totalorder %s74, %s75
    %p87 = scmp.eq.s32.totalorder %s18, 1
    %p88 = por %p86, %p87
    %p90 = scmp.ne.s32.totalorder %s75, %s89
    %p91 = scmp.eq.s32.totalorder %s18, 0
    %p92 = por %p90, %p91
    %s94 = sadd.s32 %s93, 1
    %p97 = scmp.eq.s32.totalorder %s12, 1
    %p98 = scmp.ne.s32.totalorder %s93, %s95
    %p99 = scmp.eq.s32.totalorder %s12, 0
    %p100 = por %p98, %p99
    %p101 = scmp.ne.s32.totalorder %s93, %s95
    %p102 = scmp.eq.s32.totalorder %s17, 1
    %p103 = por %p101, %p102
    %p104 = scmp.ne.s32.totalorder %s95, %s96
    %p105 = scmp.eq.s32.totalorder %s17, 0
    %p106 = por %p104, %p105
    %p107 = scmp.ne.s32.totalorder %s95, %s96
    %p108 = scmp.eq.s32.totalorder %s18, 1
    %p109 = por %p107, %p108
    %p111 = scmp.ne.s32.totalorder %s96, %s110
    %p112 = scmp.eq.s32.totalorder %s18, 0
    %p113 = por %p111, %p112
    %s114 = ssub.s32 %s12, %s19
    %p115 = scmp.eq.s32.totalorder %s114, 0
    %s117 = sadd.s32 %s116, 1
    %s118 = scalar_select %p115, %s116, %s117
    %p121 = pneg %p115
    %p122 = scmp.eq.s32.totalorder %s12, 1
    %p123 = por %p121, %p122
    %p124 = scmp.ne.s32.totalorder %s116, %s119
    %p125 = scmp.eq.s32.totalorder %s12, 0
    %p126 = por %p124, %p125
    %p127 = scmp.ne.s32.totalorder %s116, %s119
    %p128 = scmp.eq.s32.totalorder %s17, 1
    %p129 = por %p127, %p128
    %p130 = scmp.ne.s32.totalorder %s119, %s120
    %p131 = scmp.eq.s32.totalorder %s17, 0
    %p132 = por %p130, %p131
    %p133 = scmp.ne.s32.totalorder %s119, %s120
    %p134 = scmp.eq.s32.totalorder %s18, 1
    %p135 = por %p133, %p134
    %p137 = scmp.ne.s32.totalorder %s120, %s136
    %p138 = scmp.eq.s32.totalorder %s18, 0
    %p139 = por %p137, %p138
    %p140 = scmp.le.s32.totalorder 1, %s12
    %p141 = scmp.lt.s32.totalorder %s12, 3
    %p142 = pnand %p140, %p141
    %p143 = pneg %p142
    // Predicated region
    $region9: #{qkplus_forward.7} parent=5 // pred_check
      _
    $region10: #{qkplus_forward.7} parent=5 // pred_check_branch
      %145 = sbr.rel (%p142) target = $region12
    $region11: #{qkplus_forward.7} parent=5 // pred_region
      %s146 = ssub.s32 %s12, 1
      // Predicated region
      $region13: #{qkplus_forward.7} parent=11 // pred_check
        %p147 = pneg %p85
      $region14: #{qkplus_forward.7} parent=11 // pred_check_branch
        %149 = sbr.rel (%p147) target = $region16
      $region15: #{qkplus_forward.7} parent=11 // pred_region
        _
      $region16: #{qkplus_forward.7} parent=11 // pred_fallthru
        _
      // Predicated region
      $region17: #{qkplus_forward.7} parent=11 // pred_check
        %p150 = pneg %p106
      $region18: #{qkplus_forward.7} parent=11 // pred_check_branch
        %152 = sbr.rel (%p150) target = $region20
      $region19: #{qkplus_forward.7} parent=11 // pred_region
        _
      $region20: #{qkplus_forward.7} parent=11 // pred_fallthru
        _
    $region12: #{qkplus_forward.7} parent=5 // pred_fallthru
      _
    %p153 = scmp.lt.s32.totalorder %s12, 2
    // Predicated region
    $region21: #{qkplus_forward.7} parent=5 // pred_check
      %p154 = pneg %p153
    $region22: #{qkplus_forward.7} parent=5 // pred_check_branch
      %156 = sbr.rel (%p154) target = $region24
    $region23: #{qkplus_forward.7} parent=5 // pred_region
      // Predicated region
      $region25: #{qkplus_forward.7} parent=23 // pred_check
        %p157 = pneg %p32
      $region26: #{qkplus_forward.7} parent=23 // pred_check_branch
        %159 = sbr.rel (%p157) target = $region28
      $region27: #{qkplus_forward.7} parent=23 // pred_region
        %s160 = smul.u32 32, %s12
        %p161 = scmp.lt.s32.totalorder %s160, 63
        %s162 = scalar_select %p161, %s160, 63
        %s163 = smul.addr %s162, 8
        %s164 = scalar_lea.vmem %s0, %s163
        %s165 = smul.u32 32, %s12
      $region28: #{qkplus_forward.7} parent=23 // pred_fallthru
        _
      // Predicated region
      $region29: #{qkplus_forward.7} parent=23 // pred_check
        %p166 = pneg %p58
      $region30: #{qkplus_forward.7} parent=23 // pred_check_branch
        %168 = sbr.rel (%p166) target = $region32
      $region31: #{qkplus_forward.7} parent=23 // pred_region
        %s169 = smul.u32 32, %s12
        %p170 = scmp.lt.s32.totalorder %s169, 63
        %s171 = scalar_select %p170, %s169, 63
        %s172 = smul.addr %s171, 8
        %s173 = scalar_lea.vmem %s1, %s172
        %s174 = smul.u32 32, %s12
      $region32: #{qkplus_forward.7} parent=23 // pred_fallthru
        _
    $region24: #{qkplus_forward.7} parent=5 // pred_fallthru
      _
    %p175 = scmp.le.s32.totalorder 1, %s12
    %p176 = scmp.lt.s32.totalorder %s12, 3
    %p177 = pnand %p175, %p176
    %p178 = pneg %p177
    // Predicated region
    $region33: #{qkplus_forward.7} parent=5 // pred_check
      _
    $region34: #{qkplus_forward.7} parent=5 // pred_check_branch
      %180 = sbr.rel (%p177) target = $region36
    $region35: #{qkplus_forward.7} parent=5 // pred_region
      %s181 = ssub.s32 %s12, 1
      %s182 = smul.u32 32, %s17
      %p183 = scmp.lt.s32.totalorder %s182, 63
      %s184 = scalar_select %p183, %s182, 63
      %s185 = smul.addr %s184, 8
      %s186 = scalar_lea.vmem %s0, %s185
      %p187 = pneg %p38
      %p188 = pneg %p35
      %s189 = smul.u32 32, %s17
      %p190 = scmp.lt.s32.totalorder %s189, 63
      %s191 = scalar_select %p190, %s189, 63
      %s192 = smul.addr %s191, 8
      %s193 = scalar_lea.vmem %s1, %s192
      %p194 = pneg %p64
      %p195 = pneg %p61
      %p196 = pneg %p85
      %p197 = pneg %p82
      %p198 = pneg %p106
      %p199 = pneg %p103
      %p200 = pneg %p132
      %p201 = pneg %p129
      %s202 = smul.u32 32, %s17
      %p203 = scmp.lt.s32.totalorder %s202, 63
      %s204 = scalar_select %p203, %s202, 63
      %s205 = smul.addr %s204, 8
      %s206 = scalar_lea.vmem %s4, %s205
      %s207 = smul.u32 32, %s17
      %p208 = scmp.lt.s32.totalorder %s207, 63
      %s209 = scalar_select %p208, %s207, 63
      %s210 = smul.addr %s209, 8
      %s211 = scalar_lea.vmem %s0, %s210
      %s212 = smul.u32 32, %s17
      %s213 = smul.u32 32, %s17
      %p214 = scmp.lt.s32.totalorder %s213, 63
      %s215 = scalar_select %p214, %s213, 63
      %s216 = smul.addr %s215, 8
      %s217 = scalar_lea.vmem %s1, %s216
      %s218 = smul.u32 32, %s17
      %s219 = smul.u32 32, %s17
      %p220 = scmp.lt.s32.totalorder %s219, 63
      %s221 = scalar_select %p220, %s219, 63
      %s222 = smul.addr %s221, 8
      %s223 = scalar_lea.vmem %s4, %s222
      %s224 = smul.u32 32, %s17
      %v225 = vld [vmem:[%s211] sm:$0xff]
      %v226 = vld [vmem:[%s211 + $0x8] sm:$0xff]
      %v227 = vld [vmem:[%s211 + $0x10] sm:$0xff]
      %v228 = vld [vmem:[%s211 + $0x18] sm:$0xff]
      %v229 = vld [vmem:[%s211 + $0x20] sm:$0xff]
      %v230 = vld [vmem:[%s211 + $0x28] sm:$0xff]
      %v231 = vld [vmem:[%s211 + $0x30] sm:$0xff]
      %v232 = vld [vmem:[%s211 + $0x38] sm:$0xff]
      %v233 = vld [vmem:[%s211 + $0x40] sm:$0xff]
      %v234 = vld [vmem:[%s211 + $0x48] sm:$0xff]
      %v235 = vld [vmem:[%s211 + $0x50] sm:$0xff]
      %v236 = vld [vmem:[%s211 + $0x58] sm:$0xff]
      %v237 = vld [vmem:[%s211 + $0x60] sm:$0xff]
      %v238 = vld [vmem:[%s211 + $0x68] sm:$0xff]
      %v239 = vld [vmem:[%s211 + $0x70] sm:$0xff]
      %v240 = vld [vmem:[%s211 + $0x78] sm:$0xff]
      %v241 = vld [vmem:[%s211 + $0x80] sm:$0xff]
      %v242 = vld [vmem:[%s211 + $0x88] sm:$0xff]
      %v243 = vld [vmem:[%s211 + $0x90] sm:$0xff]
      %v244 = vld [vmem:[%s211 + $0x98] sm:$0xff]
      %v245 = vld [vmem:[%s211 + $0xa0] sm:$0xff]
      %v246 = vld [vmem:[%s211 + $0xa8] sm:$0xff]
      %v247 = vld [vmem:[%s211 + $0xb0] sm:$0xff]
      %v248 = vld [vmem:[%s211 + $0xb8] sm:$0xff]
      %v249 = vld [vmem:[%s211 + $0xc0] sm:$0xff]
      %v250 = vld [vmem:[%s211 + $0xc8] sm:$0xff]
      %v251 = vld [vmem:[%s211 + $0xd0] sm:$0xff]
      %v252 = vld [vmem:[%s211 + $0xd8] sm:$0xff]
      %v253 = vld [vmem:[%s211 + $0xe0] sm:$0xff]
      %v254 = vld [vmem:[%s211 + $0xe8] sm:$0xff]
      %v255 = vld [vmem:[%s211 + $0xf0] sm:$0xff]
      %v256 = vld [vmem:[%s211 + $0xf8] sm:$0xff]
      %v257 = vld [vmem:[%s2] sm:$0x1]
      %v259 = vlaneseq
      %v260 = vshrl.u32 %v259, 7
      %v261 = vsub.s32 0, %v260
      %v262 = vrot.slane %v257, %v261
      %v264 = vmul.f32 %v225, %v262
      %v265 = vmul.f32 %v226, %v262
      %v266 = vmul.f32 %v227, %v262
      %v267 = vmul.f32 %v228, %v262
      %v268 = vmul.f32 %v229, %v262
      %v269 = vmul.f32 %v230, %v262
      %v270 = vmul.f32 %v231, %v262
      %v271 = vmul.f32 %v232, %v262
      %v272 = vmul.f32 %v233, %v262
      %v273 = vmul.f32 %v234, %v262
      %v274 = vmul.f32 %v235, %v262
      %v275 = vmul.f32 %v236, %v262
      %v276 = vmul.f32 %v237, %v262
      %v277 = vmul.f32 %v238, %v262
      %v278 = vmul.f32 %v239, %v262
      %v279 = vmul.f32 %v240, %v262
      %v280 = vmul.f32 %v241, %v262
      %v281 = vmul.f32 %v242, %v262
      %v282 = vmul.f32 %v243, %v262
      %v283 = vmul.f32 %v244, %v262
      %v284 = vmul.f32 %v245, %v262
      %v285 = vmul.f32 %v246, %v262
      %v286 = vmul.f32 %v247, %v262
      %v287 = vmul.f32 %v248, %v262
      %v288 = vmul.f32 %v249, %v262
      %v289 = vmul.f32 %v250, %v262
      %v290 = vmul.f32 %v251, %v262
      %v291 = vmul.f32 %v252, %v262
      %v292 = vmul.f32 %v253, %v262
      %v293 = vmul.f32 %v254, %v262
      %v294 = vmul.f32 %v255, %v262
      %v295 = vmul.f32 %v256, %v262
      %vm296 = vcmask 523264
      %v297 = vsel %vm296, %v264, 0.0
      %298 = vadd.xlane.f32.xlu0 %v297
      %v299 = vpop.xlane.xlu0 %298
      %v300 = vsel %vm296, %v265, 0.0
      %301 = vadd.xlane.f32.xlu0 %v300
      %v302 = vpop.xlane.xlu0 %301
      %v303 = vsel %vm296, %v266, 0.0
      %304 = vadd.xlane.f32.xlu0 %v303
      %v305 = vpop.xlane.xlu0 %304
      %v306 = vsel %vm296, %v267, 0.0
      %307 = vadd.xlane.f32.xlu0 %v306
      %v308 = vpop.xlane.xlu0 %307
      %v309 = vsel %vm296, %v268, 0.0
      %310 = vadd.xlane.f32.xlu0 %v309
      %v311 = vpop.xlane.xlu0 %310
      %v312 = vsel %vm296, %v269, 0.0
      %313 = vadd.xlane.f32.xlu0 %v312
      %v314 = vpop.xlane.xlu0 %313
      %v315 = vsel %vm296, %v270, 0.0
      %316 = vadd.xlane.f32.xlu0 %v315
      %v317 = vpop.xlane.xlu0 %316
      %v318 = vsel %vm296, %v271, 0.0
      %319 = vadd.xlane.f32.xlu0 %v318
      %v320 = vpop.xlane.xlu0 %319
      %v321 = vsel %vm296, %v272, 0.0
      %322 = vadd.xlane.f32.xlu0 %v321
      %v323 = vpop.xlane.xlu0 %322
      %v324 = vsel %vm296, %v273, 0.0
      %325 = vadd.xlane.f32.xlu0 %v324
      %v326 = vpop.xlane.xlu0 %325
      %v327 = vsel %vm296, %v274, 0.0
      %328 = vadd.xlane.f32.xlu0 %v327
      %v329 = vpop.xlane.xlu0 %328
      %v330 = vsel %vm296, %v275, 0.0
      %331 = vadd.xlane.f32.xlu0 %v330
      %v332 = vpop.xlane.xlu0 %331
      %v333 = vsel %vm296, %v276, 0.0
      %334 = vadd.xlane.f32.xlu0 %v333
      %v335 = vpop.xlane.xlu0 %334
      %v336 = vsel %vm296, %v277, 0.0
      %337 = vadd.xlane.f32.xlu0 %v336
      %v338 = vpop.xlane.xlu0 %337
      %v339 = vsel %vm296, %v278, 0.0
      %340 = vadd.xlane.f32.xlu0 %v339
      %v341 = vpop.xlane.xlu0 %340
      %v342 = vsel %vm296, %v279, 0.0
      %343 = vadd.xlane.f32.xlu0 %v342
      %v344 = vpop.xlane.xlu0 %343
      %v345 = vsel %vm296, %v280, 0.0
      %346 = vadd.xlane.f32.xlu0 %v345
      %v347 = vpop.xlane.xlu0 %346
      %v348 = vsel %vm296, %v281, 0.0
      %349 = vadd.xlane.f32.xlu0 %v348
      %v350 = vpop.xlane.xlu0 %349
      %v351 = vsel %vm296, %v282, 0.0
      %352 = vadd.xlane.f32.xlu0 %v351
      %v353 = vpop.xlane.xlu0 %352
      %v354 = vsel %vm296, %v283, 0.0
      %355 = vadd.xlane.f32.xlu0 %v354
      %v356 = vpop.xlane.xlu0 %355
      %v357 = vsel %vm296, %v284, 0.0
      %358 = vadd.xlane.f32.xlu0 %v357
      %v359 = vpop.xlane.xlu0 %358
      %v360 = vsel %vm296, %v285, 0.0
      %361 = vadd.xlane.f32.xlu0 %v360
      %v362 = vpop.xlane.xlu0 %361
      %v363 = vsel %vm296, %v286, 0.0
      %364 = vadd.xlane.f32.xlu0 %v363
      %v365 = vpop.xlane.xlu0 %364
      %v366 = vsel %vm296, %v287, 0.0
      %367 = vadd.xlane.f32.xlu0 %v366
      %v368 = vpop.xlane.xlu0 %367
      %v369 = vsel %vm296, %v288, 0.0
      %370 = vadd.xlane.f32.xlu0 %v369
      %v371 = vpop.xlane.xlu0 %370
      %v372 = vsel %vm296, %v289, 0.0
      %373 = vadd.xlane.f32.xlu0 %v372
      %v374 = vpop.xlane.xlu0 %373
      %v375 = vsel %vm296, %v290, 0.0
      %376 = vadd.xlane.f32.xlu0 %v375
      %v377 = vpop.xlane.xlu0 %376
      %v378 = vsel %vm296, %v291, 0.0
      %379 = vadd.xlane.f32.xlu0 %v378
      %v380 = vpop.xlane.xlu0 %379
      %v381 = vsel %vm296, %v292, 0.0
      %382 = vadd.xlane.f32.xlu0 %v381
      %v383 = vpop.xlane.xlu0 %382
      %v384 = vsel %vm296, %v293, 0.0
      %385 = vadd.xlane.f32.xlu0 %v384
      %v386 = vpop.xlane.xlu0 %385
      %v387 = vsel %vm296, %v294, 0.0
      %388 = vadd.xlane.f32.xlu0 %v387
      %v389 = vpop.xlane.xlu0 %388
      %v390 = vsel %vm296, %v295, 0.0
      %391 = vadd.xlane.f32.xlu0 %v390
      %v392 = vpop.xlane.xlu0 %391
      %v393 = vld [vmem:[#allocation2] sm:$0x1]
      %v395 = vlaneseq
      %v396 = vshrl.u32 %v395, 7
      %v397 = vsub.s32 0, %v396
      %v398 = vrot.slane %v393, %v397
      %v400 = vadd.f32 %v299, %v398
      %v401 = vadd.f32 %v302, %v398
      %v402 = vadd.f32 %v305, %v398
      %v403 = vadd.f32 %v308, %v398
      %v404 = vadd.f32 %v311, %v398
      %v405 = vadd.f32 %v314, %v398
      %v406 = vadd.f32 %v317, %v398
      %v407 = vadd.f32 %v320, %v398
      %v408 = vadd.f32 %v323, %v398
      %v409 = vadd.f32 %v326, %v398
      %v410 = vadd.f32 %v329, %v398
      %v411 = vadd.f32 %v332, %v398
      %v412 = vadd.f32 %v335, %v398
      %v413 = vadd.f32 %v338, %v398
      %v414 = vadd.f32 %v341, %v398
      %v415 = vadd.f32 %v344, %v398
      %v416 = vadd.f32 %v347, %v398
      %v417 = vadd.f32 %v350, %v398
      %v418 = vadd.f32 %v353, %v398
      %v419 = vadd.f32 %v356, %v398
      %v420 = vadd.f32 %v359, %v398
      %v421 = vadd.f32 %v362, %v398
      %v422 = vadd.f32 %v365, %v398
      %v423 = vadd.f32 %v368, %v398
      %v424 = vadd.f32 %v371, %v398
      %v425 = vadd.f32 %v374, %v398
      %v426 = vadd.f32 %v377, %v398
      %v427 = vadd.f32 %v380, %v398
      %v428 = vadd.f32 %v383, %v398
      %v429 = vadd.f32 %v386, %v398
      %v430 = vadd.f32 %v389, %v398
      %v431 = vadd.f32 %v392, %v398
      %v432 = vsub.f32 0.0, %v400
      %v433 = vsub.f32 0.0, %v401
      %v434 = vsub.f32 0.0, %v402
      %v435 = vsub.f32 0.0, %v403
      %v436 = vsub.f32 0.0, %v404
      %v437 = vsub.f32 0.0, %v405
      %v438 = vsub.f32 0.0, %v406
      %v439 = vsub.f32 0.0, %v407
      %v440 = vsub.f32 0.0, %v408
      %v441 = vsub.f32 0.0, %v409
      %v442 = vsub.f32 0.0, %v410
      %v443 = vsub.f32 0.0, %v411
      %v444 = vsub.f32 0.0, %v412
      %v445 = vsub.f32 0.0, %v413
      %v446 = vsub.f32 0.0, %v414
      %v447 = vsub.f32 0.0, %v415
      %v448 = vsub.f32 0.0, %v416
      %v449 = vsub.f32 0.0, %v417
      %v450 = vsub.f32 0.0, %v418
      %v451 = vsub.f32 0.0, %v419
      %v452 = vsub.f32 0.0, %v420
      %v453 = vsub.f32 0.0, %v421
      %v454 = vsub.f32 0.0, %v422
      %v455 = vsub.f32 0.0, %v423
      %v456 = vsub.f32 0.0, %v424
      %v457 = vsub.f32 0.0, %v425
      %v458 = vsub.f32 0.0, %v426
      %v459 = vsub.f32 0.0, %v427
      %v460 = vsub.f32 0.0, %v428
      %v461 = vsub.f32 0.0, %v429
      %v462 = vsub.f32 0.0, %v430
      %v463 = vsub.f32 0.0, %v431
      %v464 = vmul.f32 %v432, 1.442695
      %v465 = vpow.pop %v464
      %v466 = vmul.f32 %v433, 1.442695
      %v467 = vpow.pop %v466
      %v468 = vmul.f32 %v434, 1.442695
      %v469 = vpow.pop %v468
      %v470 = vmul.f32 %v435, 1.442695
      %v471 = vpow.pop %v470
      %v472 = vmul.f32 %v436, 1.442695
      %v473 = vpow.pop %v472
      %v474 = vmul.f32 %v437, 1.442695
      %v475 = vpow.pop %v474
      %v476 = vmul.f32 %v438, 1.442695
      %v477 = vpow.pop %v476
      %v478 = vmul.f32 %v439, 1.442695
      %v479 = vpow.pop %v478
      %v480 = vmul.f32 %v440, 1.442695
      %v481 = vpow.pop %v480
      %v482 = vmul.f32 %v441, 1.442695
      %v483 = vpow.pop %v482
      %v484 = vmul.f32 %v442, 1.442695
      %v485 = vpow.pop %v484
      %v486 = vmul.f32 %v443, 1.442695
      %v487 = vpow.pop %v486
      %v488 = vmul.f32 %v444, 1.442695
      %v489 = vpow.pop %v488
      %v490 = vmul.f32 %v445, 1.442695
      %v491 = vpow.pop %v490
      %v492 = vmul.f32 %v446, 1.442695
      %v493 = vpow.pop %v492
      %v494 = vmul.f32 %v447, 1.442695
      %v495 = vpow.pop %v494
      %v496 = vmul.f32 %v448, 1.442695
      %v497 = vpow.pop %v496
      %v498 = vmul.f32 %v449, 1.442695
      %v499 = vpow.pop %v498
      %v500 = vmul.f32 %v450, 1.442695
      %v501 = vpow.pop %v500
      %v502 = vmul.f32 %v451, 1.442695
      %v503 = vpow.pop %v502
      %v504 = vmul.f32 %v452, 1.442695
      %v505 = vpow.pop %v504
      %v506 = vmul.f32 %v453, 1.442695
      %v507 = vpow.pop %v506
      %v508 = vmul.f32 %v454, 1.442695
      %v509 = vpow.pop %v508
      %v510 = vmul.f32 %v455, 1.442695
      %v511 = vpow.pop %v510
      %v512 = vmul.f32 %v456, 1.442695
      %v513 = vpow.pop %v512
      %v514 = vmul.f32 %v457, 1.442695
      %v515 = vpow.pop %v514
      %v516 = vmul.f32 %v458, 1.442695
      %v517 = vpow.pop %v516
      %v518 = vmul.f32 %v459, 1.442695
      %v519 = vpow.pop %v518
      %v520 = vmul.f32 %v460, 1.442695
      %v521 = vpow.pop %v520
      %v522 = vmul.f32 %v461, 1.442695
      %v523 = vpow.pop %v522
      %v524 = vmul.f32 %v462, 1.442695
      %v525 = vpow.pop %v524
      %v526 = vmul.f32 %v463, 1.442695
      %v527 = vpow.pop %v526
      %v528 = vadd.f32 %v465, 1.0
      %v529 = vadd.f32 %v467, 1.0
      %v530 = vadd.f32 %v469, 1.0
      %v531 = vadd.f32 %v471, 1.0
      %v532 = vadd.f32 %v473, 1.0
      %v533 = vadd.f32 %v475, 1.0
      %v534 = vadd.f32 %v477, 1.0
      %v535 = vadd.f32 %v479, 1.0
      %v536 = vadd.f32 %v481, 1.0
      %v537 = vadd.f32 %v483, 1.0
      %v538 = vadd.f32 %v485, 1.0
      %v539 = vadd.f32 %v487, 1.0
      %v540 = vadd.f32 %v489, 1.0
      %v541 = vadd.f32 %v491, 1.0
      %v542 = vadd.f32 %v493, 1.0
      %v543 = vadd.f32 %v495, 1.0
      %v544 = vadd.f32 %v497, 1.0
      %v545 = vadd.f32 %v499, 1.0
      %v546 = vadd.f32 %v501, 1.0
      %v547 = vadd.f32 %v503, 1.0
      %v548 = vadd.f32 %v505, 1.0
      %v549 = vadd.f32 %v507, 1.0
      %v550 = vadd.f32 %v509, 1.0
      %v551 = vadd.f32 %v511, 1.0
      %v552 = vadd.f32 %v513, 1.0
      %v553 = vadd.f32 %v515, 1.0
      %v554 = vadd.f32 %v517, 1.0
      %v555 = vadd.f32 %v519, 1.0
      %v556 = vadd.f32 %v521, 1.0
      %v557 = vadd.f32 %v523, 1.0
      %v558 = vadd.f32 %v525, 1.0
      %v559 = vadd.f32 %v527, 1.0
      %v560 = vrcp.pop %v528
      %v561 = vmul.f32 1.0, %v560
      %v562 = vrcp.pop %v529
      %v563 = vmul.f32 1.0, %v562
      %v564 = vrcp.pop %v530
      %v565 = vmul.f32 1.0, %v564
      %v566 = vrcp.pop %v531
      %v567 = vmul.f32 1.0, %v566
      %v568 = vrcp.pop %v532
      %v569 = vmul.f32 1.0, %v568
      %v570 = vrcp.pop %v533
      %v571 = vmul.f32 1.0, %v570
      %v572 = vrcp.pop %v534
      %v573 = vmul.f32 1.0, %v572
      %v574 = vrcp.pop %v535
      %v575 = vmul.f32 1.0, %v574
      %v576 = vrcp.pop %v536
      %v577 = vmul.f32 1.0, %v576
      %v578 = vrcp.pop %v537
      %v579 = vmul.f32 1.0, %v578
      %v580 = vrcp.pop %v538
      %v581 = vmul.f32 1.0, %v580
      %v582 = vrcp.pop %v539
      %v583 = vmul.f32 1.0, %v582
      %v584 = vrcp.pop %v540
      %v585 = vmul.f32 1.0, %v584
      %v586 = vrcp.pop %v541
      %v587 = vmul.f32 1.0, %v586
      %v588 = vrcp.pop %v542
      %v589 = vmul.f32 1.0, %v588
      %v590 = vrcp.pop %v543
      %v591 = vmul.f32 1.0, %v590
      %v592 = vrcp.pop %v544
      %v593 = vmul.f32 1.0, %v592
      %v594 = vrcp.pop %v545
      %v595 = vmul.f32 1.0, %v594
      %v596 = vrcp.pop %v546
      %v597 = vmul.f32 1.0, %v596
      %v598 = vrcp.pop %v547
      %v599 = vmul.f32 1.0, %v598
      %v600 = vrcp.pop %v548
      %v601 = vmul.f32 1.0, %v600
      %v602 = vrcp.pop %v549
      %v603 = vmul.f32 1.0, %v602
      %v604 = vrcp.pop %v550
      %v605 = vmul.f32 1.0, %v604
      %v606 = vrcp.pop %v551
      %v607 = vmul.f32 1.0, %v606
      %v608 = vrcp.pop %v552
      %v609 = vmul.f32 1.0, %v608
      %v610 = vrcp.pop %v553
      %v611 = vmul.f32 1.0, %v610
      %v612 = vrcp.pop %v554
      %v613 = vmul.f32 1.0, %v612
      %v614 = vrcp.pop %v555
      %v615 = vmul.f32 1.0, %v614
      %v616 = vrcp.pop %v556
      %v617 = vmul.f32 1.0, %v616
      %v618 = vrcp.pop %v557
      %v619 = vmul.f32 1.0, %v618
      %v620 = vrcp.pop %v558
      %v621 = vmul.f32 1.0, %v620
      %v622 = vrcp.pop %v559
      %v623 = vmul.f32 1.0, %v622
      %v624 = vld [vmem:[%s217] sm:$0xff]
      %v625 = vld [vmem:[%s217 + $0x8] sm:$0xff]
      %v626 = vld [vmem:[%s217 + $0x10] sm:$0xff]
      %v627 = vld [vmem:[%s217 + $0x18] sm:$0xff]
      %v628 = vld [vmem:[%s217 + $0x20] sm:$0xff]
      %v629 = vld [vmem:[%s217 + $0x28] sm:$0xff]
      %v630 = vld [vmem:[%s217 + $0x30] sm:$0xff]
      %v631 = vld [vmem:[%s217 + $0x38] sm:$0xff]
      %v632 = vld [vmem:[%s217 + $0x40] sm:$0xff]
      %v633 = vld [vmem:[%s217 + $0x48] sm:$0xff]
      %v634 = vld [vmem:[%s217 + $0x50] sm:$0xff]
      %v635 = vld [vmem:[%s217 + $0x58] sm:$0xff]
      %v636 = vld [vmem:[%s217 + $0x60] sm:$0xff]
      %v637 = vld [vmem:[%s217 + $0x68] sm:$0xff]
      %v638 = vld [vmem:[%s217 + $0x70] sm:$0xff]
      %v639 = vld [vmem:[%s217 + $0x78] sm:$0xff]
      %v640 = vld [vmem:[%s217 + $0x80] sm:$0xff]
      %v641 = vld [vmem:[%s217 + $0x88] sm:$0xff]
      %v642 = vld [vmem:[%s217 + $0x90] sm:$0xff]
      %v643 = vld [vmem:[%s217 + $0x98] sm:$0xff]
      %v644 = vld [vmem:[%s217 + $0xa0] sm:$0xff]
      %v645 = vld [vmem:[%s217 + $0xa8] sm:$0xff]
      %v646 = vld [vmem:[%s217 + $0xb0] sm:$0xff]
      %v647 = vld [vmem:[%s217 + $0xb8] sm:$0xff]
      %v648 = vld [vmem:[%s217 + $0xc0] sm:$0xff]
      %v649 = vld [vmem:[%s217 + $0xc8] sm:$0xff]
      %v650 = vld [vmem:[%s217 + $0xd0] sm:$0xff]
      %v651 = vld [vmem:[%s217 + $0xd8] sm:$0xff]
      %v652 = vld [vmem:[%s217 + $0xe0] sm:$0xff]
      %v653 = vld [vmem:[%s217 + $0xe8] sm:$0xff]
      %v654 = vld [vmem:[%s217 + $0xf0] sm:$0xff]
      %v655 = vld [vmem:[%s217 + $0xf8] sm:$0xff]
      %657 = vset.pattern.permute.xlu0 0
      %658 = vperm.xlu0 %657, %v561
      %v659 = vpop.permute.xlu0 %658
      %662 = vset.pattern.permute.xlu0 0
      %663 = vperm.xlu0 %662, %v563
      %v664 = vpop.permute.xlu0 %663
      %667 = vset.pattern.permute.xlu0 0
      %668 = vperm.xlu0 %667, %v565
      %v669 = vpop.permute.xlu0 %668
      %672 = vset.pattern.permute.xlu0 0
      %673 = vperm.xlu0 %672, %v567
      %v674 = vpop.permute.xlu0 %673
      %677 = vset.pattern.permute.xlu0 0
      %678 = vperm.xlu0 %677, %v569
      %v679 = vpop.permute.xlu0 %678
      %682 = vset.pattern.permute.xlu0 0
      %683 = vperm.xlu0 %682, %v571
      %v684 = vpop.permute.xlu0 %683
      %687 = vset.pattern.permute.xlu0 0
      %688 = vperm.xlu0 %687, %v573
      %v689 = vpop.permute.xlu0 %688
      %692 = vset.pattern.permute.xlu0 0
      %693 = vperm.xlu0 %692, %v575
      %v694 = vpop.permute.xlu0 %693
      %697 = vset.pattern.permute.xlu0 0
      %698 = vperm.xlu0 %697, %v577
      %v699 = vpop.permute.xlu0 %698
      %702 = vset.pattern.permute.xlu0 0
      %703 = vperm.xlu0 %702, %v579
      %v704 = vpop.permute.xlu0 %703
      %707 = vset.pattern.permute.xlu0 0
      %708 = vperm.xlu0 %707, %v581
      %v709 = vpop.permute.xlu0 %708
      %712 = vset.pattern.permute.xlu0 0
      %713 = vperm.xlu0 %712, %v583
      %v714 = vpop.permute.xlu0 %713
      %717 = vset.pattern.permute.xlu0 0
      %718 = vperm.xlu0 %717, %v585
      %v719 = vpop.permute.xlu0 %718
      %722 = vset.pattern.permute.xlu0 0
      %723 = vperm.xlu0 %722, %v587
      %v724 = vpop.permute.xlu0 %723
      %727 = vset.pattern.permute.xlu0 0
      %728 = vperm.xlu0 %727, %v589
      %v729 = vpop.permute.xlu0 %728
      %732 = vset.pattern.permute.xlu0 0
      %733 = vperm.xlu0 %732, %v591
      %v734 = vpop.permute.xlu0 %733
      %737 = vset.pattern.permute.xlu0 0
      %738 = vperm.xlu0 %737, %v593
      %v739 = vpop.permute.xlu0 %738
      %742 = vset.pattern.permute.xlu0 0
      %743 = vperm.xlu0 %742, %v595
      %v744 = vpop.permute.xlu0 %743
      %747 = vset.pattern.permute.xlu0 0
      %748 = vperm.xlu0 %747, %v597
      %v749 = vpop.permute.xlu0 %748
      %752 = vset.pattern.permute.xlu0 0
      %753 = vperm.xlu0 %752, %v599
      %v754 = vpop.permute.xlu0 %753
      %757 = vset.pattern.permute.xlu0 0
      %758 = vperm.xlu0 %757, %v601
      %v759 = vpop.permute.xlu0 %758
      %762 = vset.pattern.permute.xlu0 0
      %763 = vperm.xlu0 %762, %v603
      %v764 = vpop.permute.xlu0 %763
      %767 = vset.pattern.permute.xlu0 0
      %768 = vperm.xlu0 %767, %v605
      %v769 = vpop.permute.xlu0 %768
      %772 = vset.pattern.permute.xlu0 0
      %773 = vperm.xlu0 %772, %v607
      %v774 = vpop.permute.xlu0 %773
      %777 = vset.pattern.permute.xlu0 0
      %778 = vperm.xlu0 %777, %v609
      %v779 = vpop.permute.xlu0 %778
      %782 = vset.pattern.permute.xlu0 0
      %783 = vperm.xlu0 %782, %v611
      %v784 = vpop.permute.xlu0 %783
      %787 = vset.pattern.permute.xlu0 0
      %788 = vperm.xlu0 %787, %v613
      %v789 = vpop.permute.xlu0 %788
      %792 = vset.pattern.permute.xlu0 0
      %793 = vperm.xlu0 %792, %v615
      %v794 = vpop.permute.xlu0 %793
      %797 = vset.pattern.permute.xlu0 0
      %798 = vperm.xlu0 %797, %v617
      %v799 = vpop.permute.xlu0 %798
      %802 = vset.pattern.permute.xlu0 0
      %803 = vperm.xlu0 %802, %v619
      %v804 = vpop.permute.xlu0 %803
      %807 = vset.pattern.permute.xlu0 0
      %808 = vperm.xlu0 %807, %v621
      %v809 = vpop.permute.xlu0 %808
      %812 = vset.pattern.permute.xlu0 0
      %813 = vperm.xlu0 %812, %v623
      %v814 = vpop.permute.xlu0 %813
      %v816 = vmul.f32 %v624, %v659
      %v817 = vmul.f32 %v625, %v664
      %v818 = vmul.f32 %v626, %v669
      %v819 = vmul.f32 %v627, %v674
      %v820 = vmul.f32 %v628, %v679
      %v821 = vmul.f32 %v629, %v684
      %v822 = vmul.f32 %v630, %v689
      %v823 = vmul.f32 %v631, %v694
      %v824 = vmul.f32 %v632, %v699
      %v825 = vmul.f32 %v633, %v704
      %v826 = vmul.f32 %v634, %v709
      %v827 = vmul.f32 %v635, %v714
      %v828 = vmul.f32 %v636, %v719
      %v829 = vmul.f32 %v637, %v724
      %v830 = vmul.f32 %v638, %v729
      %v831 = vmul.f32 %v639, %v734
      %v832 = vmul.f32 %v640, %v739
      %v833 = vmul.f32 %v641, %v744
      %v834 = vmul.f32 %v642, %v749
      %v835 = vmul.f32 %v643, %v754
      %v836 = vmul.f32 %v644, %v759
      %v837 = vmul.f32 %v645, %v764
      %v838 = vmul.f32 %v646, %v769
      %v839 = vmul.f32 %v647, %v774
      %v840 = vmul.f32 %v648, %v779
      %v841 = vmul.f32 %v649, %v784
      %v842 = vmul.f32 %v650, %v789
      %v843 = vmul.f32 %v651, %v794
      %v844 = vmul.f32 %v652, %v799
      %v845 = vmul.f32 %v653, %v804
      %v846 = vmul.f32 %v654, %v809
      %v847 = vmul.f32 %v655, %v814
      %vm848 = vcmask 64512
      %849 = vst.msk [vmem:[%s223] sm:$0xff] %vm848, %v816
      %850 = vst.msk [vmem:[%s223 + $0x8] sm:$0xff] %vm848, %v817
      %851 = vst.msk [vmem:[%s223 + $0x10] sm:$0xff] %vm848, %v818
      %852 = vst.msk [vmem:[%s223 + $0x18] sm:$0xff] %vm848, %v819
      %853 = vst.msk [vmem:[%s223 + $0x20] sm:$0xff] %vm848, %v820
      %854 = vst.msk [vmem:[%s223 + $0x28] sm:$0xff] %vm848, %v821
      %855 = vst.msk [vmem:[%s223 + $0x30] sm:$0xff] %vm848, %v822
      %856 = vst.msk [vmem:[%s223 + $0x38] sm:$0xff] %vm848, %v823
      %857 = vst.msk [vmem:[%s223 + $0x40] sm:$0xff] %vm848, %v824
      %858 = vst.msk [vmem:[%s223 + $0x48] sm:$0xff] %vm848, %v825
      %859 = vst.msk [vmem:[%s223 + $0x50] sm:$0xff] %vm848, %v826
      %860 = vst.msk [vmem:[%s223 + $0x58] sm:$0xff] %vm848, %v827
      %861 = vst.msk [vmem:[%s223 + $0x60] sm:$0xff] %vm848, %v828
      %862 = vst.msk [vmem:[%s223 + $0x68] sm:$0xff] %vm848, %v829
      %863 = vst.msk [vmem:[%s223 + $0x70] sm:$0xff] %vm848, %v830
      %864 = vst.msk [vmem:[%s223 + $0x78] sm:$0xff] %vm848, %v831
      %865 = vst.msk [vmem:[%s223 + $0x80] sm:$0xff] %vm848, %v832
      %866 = vst.msk [vmem:[%s223 + $0x88] sm:$0xff] %vm848, %v833
      %867 = vst.msk [vmem:[%s223 + $0x90] sm:$0xff] %vm848, %v834
      %868 = vst.msk [vmem:[%s223 + $0x98] sm:$0xff] %vm848, %v835
      %869 = vst.msk [vmem:[%s223 + $0xa0] sm:$0xff] %vm848, %v836
      %870 = vst.msk [vmem:[%s223 + $0xa8] sm:$0xff] %vm848, %v837
      %871 = vst.msk [vmem:[%s223 + $0xb0] sm:$0xff] %vm848, %v838
      %872 = vst.msk [vmem:[%s223 + $0xb8] sm:$0xff] %vm848, %v839
      %873 = vst.msk [vmem:[%s223 + $0xc0] sm:$0xff] %vm848, %v840
      %874 = vst.msk [vmem:[%s223 + $0xc8] sm:$0xff] %vm848, %v841
      %875 = vst.msk [vmem:[%s223 + $0xd0] sm:$0xff] %vm848, %v842
      %876 = vst.msk [vmem:[%s223 + $0xd8] sm:$0xff] %vm848, %v843
      %877 = vst.msk [vmem:[%s223 + $0xe0] sm:$0xff] %vm848, %v844
      %878 = vst.msk [vmem:[%s223 + $0xe8] sm:$0xff] %vm848, %v845
      %879 = vst.msk [vmem:[%s223 + $0xf0] sm:$0xff] %vm848, %v846
      %880 = vst.msk [vmem:[%s223 + $0xf8] sm:$0xff] %vm848, %v847
      %s881 = smul.u32 32, %s17
      %p882 = scmp.lt.s32.totalorder %s881, 63
      %s883 = scalar_select %p882, %s881, 63
      %s884 = smul.addr %s883, 8
      %s885 = scalar_lea.vmem %s4, %s884
      // Predicated region
      $region37: #{qkplus_forward.7} parent=35 // pred_check
        %p886 = pneg %p129
      $region38: #{qkplus_forward.7} parent=35 // pred_check_branch
        %888 = sbr.rel (%p886) target = $region40
      $region39: #{qkplus_forward.7} parent=35 // pred_region
        %s889 = smul.u32 32, %s17
      $region40: #{qkplus_forward.7} parent=35 // pred_fallthru
        _
    $region36: #{qkplus_forward.7} parent=5 // pred_fallthru
      _
    %p890 = scmp.le.s32.totalorder 2, %s12
    // Predicated region
    $region41: #{qkplus_forward.7} parent=5 // pred_check
      %p891 = pneg %p890
    $region42: #{qkplus_forward.7} parent=5 // pred_check_branch
      %893 = sbr.rel (%p891) target = $region44
    $region43: #{qkplus_forward.7} parent=5 // pred_region
      %s894 = ssub.s32 %s12, 2
      // Predicated region
      $region45: #{qkplus_forward.7} parent=43 // pred_check
        %p895 = pneg %p135
      $region46: #{qkplus_forward.7} parent=43 // pred_check_branch
        %897 = sbr.rel (%p895) target = $region48
      $region47: #{qkplus_forward.7} parent=43 // pred_region
        %s898 = smul.u32 32, %s18
        %p899 = scmp.lt.s32.totalorder %s898, 63
        %s900 = scalar_select %p899, %s898, 63
        %s901 = smul.addr %s900, 8
        %s902 = scalar_lea.vmem %s4, %s901
      $region48: #{qkplus_forward.7} parent=43 // pred_fallthru
        _
    $region44: #{qkplus_forward.7} parent=5 // pred_fallthru
      _
  $region6: #{qkplus_forward.7} parent=0 // loop_footer
    %s16 = sadd.s32 1, %s12
  $region7: #{qkplus_forward.7} parent=0 // loop_footer_branch
    %11 = sbr.rel target = $region3
  $region8: #{qkplus_forward.7} parent=0 // loop_exit
    _

// kernel: qkplus_forward.5
$region0: #{qkplus_forward.5}
  #allocation0 [shape = 'u32[]', space=smem, size = 0x4, offset = 0x4, fixed_abs, tag = 'smem constant byte address 0x4 - core index']
  #allocation1 [shape = 'u32[144,128]{1,0:T(1,128)}', space=vmem, size = 0x12000, scoped, tag = 'internal scratch']
  %s0 = inlined_call_operand.vmem [shape: f32[2,332,128], index: 0, kind: input, shape index: {}]
  %s1 = inlined_call_operand.vmem [shape: f32[9,128,64], index: 1, kind: input, shape index: {}]
  %s2 = inlined_call_operand.vmem [shape: f32[1,64], index: 2, kind: input, shape index: {}]
  %s3 = inlined_call_operand.vmem [shape: f32[2,288,64], index: 3, kind: output, shape index: {}]
  %s4 = sld [smem:[#allocation0]]
  $region45: #{qkplus_forward.5} parent=0
    _
  %s6 = ssub.s32 1, %s4
  %s7 = scalar_select 0, %s6, %s4
  loop: start=0, step=1, limit=4
  $region2: #{qkplus_forward.5} parent=0 // loop_pre_header
    _
  $region3: #{qkplus_forward.5} parent=0 // loop_header
    %s9 = sphi 0, %s13
    %p10 = scmp.ge.s32.totalorder %s9, 4
    %s19 = sphi 0, %s21
    %s22 = sphi 0, %s19
    %s23 = sphi 0, %s22
    %s39 = sphi 0, %s23
    %s43 = sphi 0, %s43
    %s45 = sphi 0, %s43
    %s46 = sphi 0, %s45
    %s60 = sphi 0, %s46
    %s64 = sphi 0, %s64
    %s66 = sphi 0, %s64
    %s67 = sphi 0, %s66
    %s81 = sphi 0, %s67
    %s87 = sphi 0, %s89
    %s90 = sphi 0, %s87
    %s91 = sphi 0, %s90
    %s107 = sphi 0, %s91
  $region4: #{qkplus_forward.5} parent=0 // loop_header_branch
    %12 = sbr.rel (%p10) target = $region8
  $region5: #{qkplus_forward.5} parent=0 // loop_body
    %s14 = ssub.s32 %s9, 1
    %s15 = ssub.s32 %s9, 2
    %s16 = sadd.s32 %s9, 1
    %s17 = ssub.s32 %s9, %s16
    %p18 = scmp.eq.s32.totalorder %s17, 0
    %s20 = sadd.s32 %s19, 1
    %s21 = scalar_select %p18, %s19, %s20
    %p24 = pneg %p18
    %p25 = scmp.eq.s32.totalorder %s9, 1
    %p26 = por %p24, %p25
    %p27 = scmp.ne.s32.totalorder %s19, %s22
    %p28 = scmp.eq.s32.totalorder %s9, 0
    %p29 = por %p27, %p28
    %p30 = scmp.ne.s32.totalorder %s19, %s22
    %p31 = scmp.eq.s32.totalorder %s14, 1
    %p32 = por %p30, %p31
    %p33 = scmp.ne.s32.totalorder %s22, %s23
    %p34 = scmp.eq.s32.totalorder %s14, 0
    %p35 = por %p33, %p34
    %p36 = scmp.ne.s32.totalorder %s22, %s23
    %p37 = scmp.eq.s32.totalorder %s15, 1
    %p38 = por %p36, %p37
    %p40 = scmp.ne.s32.totalorder %s23, %s39
    %p41 = scmp.eq.s32.totalorder %s15, 0
    %p42 = por %p40, %p41
    %s44 = sadd.s32 %s43, 1
    %p47 = scmp.eq.s32.totalorder %s9, 1
    %p48 = scmp.ne.s32.totalorder %s43, %s45
    %p49 = scmp.eq.s32.totalorder %s9, 0
    %p50 = por %p48, %p49
    %p51 = scmp.ne.s32.totalorder %s43, %s45
    %p52 = scmp.eq.s32.totalorder %s14, 1
    %p53 = por %p51, %p52
    %p54 = scmp.ne.s32.totalorder %s45, %s46
    %p55 = scmp.eq.s32.totalorder %s14, 0
    %p56 = por %p54, %p55
    %p57 = scmp.ne.s32.totalorder %s45, %s46
    %p58 = scmp.eq.s32.totalorder %s15, 1
    %p59 = por %p57, %p58
    %p61 = scmp.ne.s32.totalorder %s46, %s60
    %p62 = scmp.eq.s32.totalorder %s15, 0
    %p63 = por %p61, %p62
    %s65 = sadd.s32 %s64, 1
    %p68 = scmp.eq.s32.totalorder %s9, 1
    %p69 = scmp.ne.s32.totalorder %s64, %s66
    %p70 = scmp.eq.s32.totalorder %s9, 0
    %p71 = por %p69, %p70
    %p72 = scmp.ne.s32.totalorder %s64, %s66
    %p73 = scmp.eq.s32.totalorder %s14, 1
    %p74 = por %p72, %p73
    %p75 = scmp.ne.s32.totalorder %s66, %s67
    %p76 = scmp.eq.s32.totalorder %s14, 0
    %p77 = por %p75, %p76
    %p78 = scmp.ne.s32.totalorder %s66, %s67
    %p79 = scmp.eq.s32.totalorder %s15, 1
    %p80 = por %p78, %p79
    %p82 = scmp.ne.s32.totalorder %s67, %s81
    %p83 = scmp.eq.s32.totalorder %s15, 0
    %p84 = por %p82, %p83
    %s85 = ssub.s32 %s9, %s16
    %p86 = scmp.eq.s32.totalorder %s85, 0
    %s88 = sadd.s32 %s87, 1
    %s89 = scalar_select %p86, %s87, %s88
    %p92 = pneg %p86
    %p93 = scmp.eq.s32.totalorder %s9, 1
    %p94 = por %p92, %p93
    %p95 = scmp.ne.s32.totalorder %s87, %s90
    %p96 = scmp.eq.s32.totalorder %s9, 0
    %p97 = por %p95, %p96
    %p98 = scmp.ne.s32.totalorder %s87, %s90
    %p99 = scmp.eq.s32.totalorder %s14, 1
    %p100 = por %p98, %p99
    %p101 = scmp.ne.s32.totalorder %s90, %s91
    %p102 = scmp.eq.s32.totalorder %s14, 0
    %p103 = por %p101, %p102
    %p104 = scmp.ne.s32.totalorder %s90, %s91
    %p105 = scmp.eq.s32.totalorder %s15, 1
    %p106 = por %p104, %p105
    %p108 = scmp.ne.s32.totalorder %s91, %s107
    %p109 = scmp.eq.s32.totalorder %s15, 0
    %p110 = por %p108, %p109
    %p111 = scmp.le.s32.totalorder 1, %s9
    %p112 = scmp.lt.s32.totalorder %s9, 3
    %p113 = pnand %p111, %p112
    %p114 = pneg %p113
    // Predicated region
    $region9: #{qkplus_forward.5} parent=5 // pred_check
      _
    $region10: #{qkplus_forward.5} parent=5 // pred_check_branch
      %116 = sbr.rel (%p113) target = $region12
    $region11: #{qkplus_forward.5} parent=5 // pred_region
      %s117 = ssub.s32 %s9, 1
      // Predicated region
      $region13: #{qkplus_forward.5} parent=11 // pred_check
        %p118 = pneg %p56
      $region14: #{qkplus_forward.5} parent=11 // pred_check_branch
        %120 = sbr.rel (%p118) target = $region16
      $region15: #{qkplus_forward.5} parent=11 // pred_region
        _
      $region16: #{qkplus_forward.5} parent=11 // pred_fallthru
        _
      // Predicated region
      $region17: #{qkplus_forward.5} parent=11 // pred_check
        %p121 = pneg %p77
      $region18: #{qkplus_forward.5} parent=11 // pred_check_branch
        %123 = sbr.rel (%p121) target = $region20
      $region19: #{qkplus_forward.5} parent=11 // pred_region
        _
      $region20: #{qkplus_forward.5} parent=11 // pred_fallthru
        _
    $region12: #{qkplus_forward.5} parent=5 // pred_fallthru
      _
    %p124 = scmp.lt.s32.totalorder %s9, 2
    // Predicated region
    $region21: #{qkplus_forward.5} parent=5 // pred_check
      %p125 = pneg %p124
    $region22: #{qkplus_forward.5} parent=5 // pred_check_branch
      %127 = sbr.rel (%p125) target = $region24
    $region23: #{qkplus_forward.5} parent=5 // pred_region
      // Predicated region
      $region25: #{qkplus_forward.5} parent=23 // pred_check
        %p128 = pneg %p29
      $region26: #{qkplus_forward.5} parent=23 // pred_check_branch
        %130 = sbr.rel (%p128) target = $region28
      $region27: #{qkplus_forward.5} parent=23 // pred_region
        %p131 = scmp.lt.s32.totalorder %s9, 1
        %s132 = scalar_select %p131, %s9, 1
        %s133 = smul.addr %s132, 42
        %s134 = smul.addr %s133, 8
        %s135 = scalar_lea.vmem %s0, %s134
      $region28: #{qkplus_forward.5} parent=23 // pred_fallthru
        _
    $region24: #{qkplus_forward.5} parent=5 // pred_fallthru
      _
    %p136 = scmp.le.s32.totalorder 1, %s9
    %p137 = scmp.lt.s32.totalorder %s9, 3
    %p138 = pnand %p136, %p137
    %p139 = pneg %p138
    // Predicated region
    $region29: #{qkplus_forward.5} parent=5 // pred_check
      _
    $region30: #{qkplus_forward.5} parent=5 // pred_check_branch
      %141 = sbr.rel (%p138) target = $region32
    $region31: #{qkplus_forward.5} parent=5 // pred_region
      %s142 = ssub.s32 %s9, 1
      %p143 = scmp.lt.s32.totalorder %s14, 1
      %s144 = scalar_select %p143, %s14, 1
      %s145 = smul.addr %s144, 42
      %s146 = smul.addr %s145, 8
      %s147 = scalar_lea.vmem %s0, %s146
      %p148 = pneg %p35
      %p149 = pneg %p32
      %p150 = pneg %p56
      %p151 = pneg %p53
      %p152 = pneg %p77
      %p153 = pneg %p74
      %p154 = pneg %p103
      %p155 = pneg %p100
      %p156 = scmp.lt.s32.totalorder %s14, 1
      %s157 = scalar_select %p156, %s14, 1
      %s158 = smul.addr %s157, 36
      %s159 = smul.addr %s158, 8
      %s160 = scalar_lea.vmem %s3, %s159
      %p161 = scmp.lt.s32.totalorder %s14, 1
      %s162 = scalar_select %p161, %s14, 1
      %s163 = smul.addr %s162, 42
      %s164 = smul.addr %s163, 8
      %s165 = scalar_lea.vmem %s0, %s164
      %p166 = scmp.lt.s32.totalorder %s14, 1
      %s167 = scalar_select %p166, %s14, 1
      %s168 = smul.addr %s167, 36
      %s169 = smul.addr %s168, 8
      %s170 = scalar_lea.vmem %s3, %s169
      %v171 = vld [vmem:[%s2] sm:$0x1]
      %v173 = vlaneseq
      %v174 = vshrl.u32 %v173, 7
      %v175 = vsub.s32 0, %v174
      %v176 = vrot.slane %v171, %v175
      %v178 = vadd.f32 %v176, 0.0
      %v179 = vld [vmem:[%s165] sm:$0xff]
      %v180 = vld [vmem:[%s165 + $0x8] sm:$0xff]
      %v181 = vld [vmem:[%s165 + $0x10] sm:$0xff]
      %v182 = vld [vmem:[%s165 + $0x18] sm:$0xff]
      %v183 = vld [vmem:[%s165 + $0x20] sm:$0xff]
      %v184 = vld [vmem:[%s165 + $0x28] sm:$0xff]
      %v185 = vld [vmem:[%s165 + $0x30] sm:$0xff]
      %v186 = vld [vmem:[%s165 + $0x38] sm:$0xff]
      %v187 = vld [vmem:[%s165 + $0x40] sm:$0xff]
      %v188 = vld [vmem:[%s165 + $0x48] sm:$0xff]
      %v189 = vld [vmem:[%s165 + $0x50] sm:$0xff]
      %v190 = vld [vmem:[%s165 + $0x58] sm:$0xff]
      %v191 = vld [vmem:[%s165 + $0x60] sm:$0xff]
      %v192 = vld [vmem:[%s165 + $0x68] sm:$0xff]
      %v193 = vld [vmem:[%s165 + $0x70] sm:$0xff]
      %v194 = vld [vmem:[%s165 + $0x78] sm:$0xff]
      %v195 = vld [vmem:[%s165 + $0x80] sm:$0xff]
      %v196 = vld [vmem:[%s165 + $0x88] sm:$0xff]
      %v197 = vld [vmem:[%s165 + $0x90] sm:$0xff]
      %v198 = vld [vmem:[%s165 + $0x98] sm:$0xff]
      %v199 = vld [vmem:[%s165 + $0xa0] sm:$0xff]
      %v200 = vld [vmem:[%s165 + $0xa8] sm:$0xff]
      %v201 = vld [vmem:[%s165 + $0xb0] sm:$0xff]
      %v202 = vld [vmem:[%s165 + $0xb8] sm:$0xff]
      %v203 = vld [vmem:[%s165 + $0xc0] sm:$0xff]
      %v204 = vld [vmem:[%s165 + $0xc8] sm:$0xff]
      %v205 = vld [vmem:[%s165 + $0xd0] sm:$0xff]
      %v206 = vld [vmem:[%s165 + $0xd8] sm:$0xff]
      %v207 = vld [vmem:[%s165 + $0xe0] sm:$0xff]
      %v208 = vld [vmem:[%s165 + $0xe8] sm:$0xff]
      %v209 = vld [vmem:[%s165 + $0xf0] sm:$0xff]
      %v210 = vld [vmem:[%s165 + $0xf8] sm:$0xff]
      %v211 = vld [vmem:[%s165 + $0x100] sm:$0xff]
      %v212 = vld [vmem:[%s165 + $0x108] sm:$0xff]
      %v213 = vld [vmem:[%s165 + $0x110] sm:$0xff]
      %v214 = vld [vmem:[%s165 + $0x118] sm:$0xff]
      %v215 = vld [vmem:[%s1] sm:$0xff]
      %v216 = vld [vmem:[%s1 + $0x8] sm:$0xff]
      %v217 = vld [vmem:[%s1 + $0x10] sm:$0xff]
      %v218 = vld [vmem:[%s1 + $0x18] sm:$0xff]
      %v219 = vld [vmem:[%s1 + $0x20] sm:$0xff]
      %v220 = vld [vmem:[%s1 + $0x28] sm:$0xff]
      %v221 = vld [vmem:[%s1 + $0x30] sm:$0xff]
      %v222 = vld [vmem:[%s1 + $0x38] sm:$0xff]
      %v223 = vld [vmem:[%s1 + $0x40] sm:$0xff]
      %v224 = vld [vmem:[%s1 + $0x48] sm:$0xff]
      %v225 = vld [vmem:[%s1 + $0x50] sm:$0xff]
      %v226 = vld [vmem:[%s1 + $0x58] sm:$0xff]
      %v227 = vld [vmem:[%s1 + $0x60] sm:$0xff]
      %v228 = vld [vmem:[%s1 + $0x68] sm:$0xff]
      %v229 = vld [vmem:[%s1 + $0x70] sm:$0xff]
      %v230 = vld [vmem:[%s1 + $0x78] sm:$0xff]
      %231 = vmatprep.subr.mxu0 0.0
      %232 = vmatpush1.msra.mxu0 %v215
      %233 = vmatprep.subr.mxu0 0.0
      %234 = vmatpush1.msra.mxu0 %v216
      %235 = vmatprep.subr.mxu0 0.0
      %236 = vmatpush1.msra.mxu0 %v217
      %237 = vmatprep.subr.mxu0 0.0
      %238 = vmatpush1.msra.mxu0 %v218
      %239 = vmatprep.subr.mxu0 0.0
      %240 = vmatpush1.msra.mxu0 %v219
      %241 = vmatprep.subr.mxu0 0.0
      %242 = vmatpush1.msra.mxu0 %v220
      %243 = vmatprep.subr.mxu0 0.0
      %244 = vmatpush1.msra.mxu0 %v221
      %245 = vmatprep.subr.mxu0 0.0
      %246 = vmatpush1.msra.mxu0 %v222
      %247 = vmatprep.subr.mxu0 0.0
      %248 = vmatpush1.msra.mxu0 %v223
      %249 = vmatprep.subr.mxu0 0.0
      %250 = vmatpush1.msra.mxu0 %v224
      %251 = vmatprep.subr.mxu0 0.0
      %252 = vmatpush1.msra.mxu0 %v225
      %253 = vmatprep.subr.mxu0 0.0
      %254 = vmatpush1.msra.mxu0 %v226
      %255 = vmatprep.subr.mxu0 0.0
      %256 = vmatpush1.msra.mxu0 %v227
      %257 = vmatprep.subr.mxu0 0.0
      %258 = vmatpush1.msra.mxu0 %v228
      %259 = vmatprep.subr.mxu0 0.0
      %260 = vmatpush1.msra.mxu0 %v229
      %261 = vmatprep.subr.mxu0 0.0
      %262 = vmatpush1.msra.mxu0 %v230
      %263 = vmatprep.subr.mxu0 0.0
      %264 = vmatpush1.msra.mxu0 0.0
      %265 = vmatprep.subr.mxu0 0.0
      %266 = vmatpush1.msra.mxu0 0.0
      %267 = vmatprep.subr.mxu0 0.0
      %268 = vmatpush1.msra.mxu0 0.0
      %269 = vmatprep.subr.mxu0 0.0
      %270 = vmatpush1.msra.mxu0 0.0
      %271 = vmatprep.subr.mxu0 0.0
      %272 = vmatpush1.msra.mxu0 0.0
      %273 = vmatprep.subr.mxu0 0.0
      %274 = vmatpush1.msra.mxu0 0.0
      %275 = vmatprep.subr.mxu0 0.0
      %276 = vmatpush1.msra.mxu0 0.0
      %277 = vmatprep.subr.mxu0 0.0
      %278 = vmatpush1.msra.mxu0 0.0
      %279 = vmatprep.subr.mxu0 0.0
      %280 = vmatpush1.msra.mxu0 0.0
      %281 = vmatprep.subr.mxu0 0.0
      %282 = vmatpush1.msra.mxu0 0.0
      %283 = vmatprep.subr.mxu0 0.0
      %284 = vmatpush1.msra.mxu0 0.0
      %285 = vmatprep.subr.mxu0 0.0
      %286 = vmatpush1.msra.mxu0 0.0
      %287 = vmatprep.subr.mxu0 0.0
      %288 = vmatpush1.msra.mxu0 0.0
      %289 = vmatprep.subr.mxu0 0.0
      %290 = vmatpush1.msra.mxu0 0.0
      %291 = vmatprep.subr.mxu0 0.0
      %292 = vmatpush1.msra.mxu0 0.0
      %293 = vmatprep.subr.mxu0 0.0
      %294 = vmatpush1.msra.mxu0 0.0
      %295 = vmatprep.mubr.f32.mxu0 0.0
      %296 = vmatmul.mubr.f32.gmra.mrb[0].mxu0 %v179
      %v297 = vpop.f32.mrb[0].mxu0
      %v298 = vadd.f32 0.0, %v297
      %v299 = vpop.f32.mrb[0].mxu0
      %300 = vmatprep.mubr.f32.mxu0 0.0
      %301 = vmatmul.mubr.f32.gmra.mrb[0].mxu0 %v180
      %v302 = vpop.f32.mrb[0].mxu0
      %v303 = vadd.f32 0.0, %v302
      %v304 = vpop.f32.mrb[0].mxu0
      %305 = vmatprep.mubr.f32.mxu0 0.0
      %306 = vmatmul.mubr.f32.gmra.mrb[0].mxu0 %v181
      %v307 = vpop.f32.mrb[0].mxu0
      %v308 = vadd.f32 0.0, %v307
      %v309 = vpop.f32.mrb[0].mxu0
      %310 = vmatprep.mubr.f32.mxu0 0.0
      %311 = vmatmul.mubr.f32.gmra.mrb[0].mxu0 %v182
      %v312 = vpop.f32.mrb[0].mxu0
      %v313 = vadd.f32 0.0, %v312
      %v314 = vpop.f32.mrb[0].mxu0
      %315 = vmatprep.mubr.f32.mxu0 0.0
      %316 = vmatmul.mubr.f32.gmra.mrb[0].mxu0 %v183
      %v317 = vpop.f32.mrb[0].mxu0
      %v318 = vadd.f32 0.0, %v317
      %v319 = vpop.f32.mrb[0].mxu0
      %320 = vmatprep.mubr.f32.mxu0 0.0
      %321 = vmatmul.mubr.f32.gmra.mrb[0].mxu0 %v184
      %v322 = vpop.f32.mrb[0].mxu0
      %v323 = vadd.f32 0.0, %v322
      %v324 = vpop.f32.mrb[0].mxu0
      %325 = vmatprep.mubr.f32.mxu0 0.0
      %326 = vmatmul.mubr.f32.gmra.mrb[0].mxu0 %v185
      %v327 = vpop.f32.mrb[0].mxu0
      %v328 = vadd.f32 0.0, %v327
      %v329 = vpop.f32.mrb[0].mxu0
      %330 = vmatprep.mubr.f32.mxu0 0.0
      %331 = vmatmul.mubr.f32.gmra.mrb[0].mxu0 %v186
      %v332 = vpop.f32.mrb[0].mxu0
      %v333 = vadd.f32 0.0, %v332
      %v334 = vpop.f32.mrb[0].mxu0
      %335 = vmatprep.mubr.f32.mxu0 0.0
      %336 = vmatmul.mubr.f32.gmra.mrb[0].mxu0 %v187
      %v337 = vpop.f32.mrb[0].mxu0
      %v338 = vadd.f32 0.0, %v337
      %v339 = vpop.f32.mrb[0].mxu0
      %340 = vmatprep.mubr.f32.mxu0 0.0
      %341 = vmatmul.mubr.f32.gmra.mrb[0].mxu0 %v188
      %v342 = vpop.f32.mrb[0].mxu0
      %v343 = vadd.f32 0.0, %v342
      %v344 = vpop.f32.mrb[0].mxu0
      %345 = vmatprep.mubr.f32.mxu0 0.0
      %346 = vmatmul.mubr.f32.gmra.mrb[0].mxu0 %v189
      %v347 = vpop.f32.mrb[0].mxu0
      %v348 = vadd.f32 0.0, %v347
      %v349 = vpop.f32.mrb[0].mxu0
      %350 = vmatprep.mubr.f32.mxu0 0.0
      %351 = vmatmul.mubr.f32.gmra.mrb[0].mxu0 %v190
      %v352 = vpop.f32.mrb[0].mxu0
      %v353 = vadd.f32 0.0, %v352
      %v354 = vpop.f32.mrb[0].mxu0
      %355 = vmatprep.mubr.f32.mxu0 0.0
      %356 = vmatmul.mubr.f32.gmra.mrb[0].mxu0 %v191
      %v357 = vpop.f32.mrb[0].mxu0
      %v358 = vadd.f32 0.0, %v357
      %v359 = vpop.f32.mrb[0].mxu0
      %360 = vmatprep.mubr.f32.mxu0 0.0
      %361 = vmatmul.mubr.f32.gmra.mrb[0].mxu0 %v192
      %v362 = vpop.f32.mrb[0].mxu0
      %v363 = vadd.f32 0.0, %v362
      %v364 = vpop.f32.mrb[0].mxu0
      %365 = vmatprep.mubr.f32.mxu0 0.0
      %366 = vmatmul.mubr.f32.gmra.mrb[0].mxu0 %v193
      %v367 = vpop.f32.mrb[0].mxu0
      %v368 = vadd.f32 0.0, %v367
      %v369 = vpop.f32.mrb[0].mxu0
      %370 = vmatprep.mubr.f32.mxu0 0.0
      %371 = vmatmul.mubr.f32.gmra.mrb[0].mxu0 %v194
      %v372 = vpop.f32.mrb[0].mxu0
      %v373 = vadd.f32 0.0, %v372
      %v374 = vpop.f32.mrb[0].mxu0
      %375 = vmatprep.mubr.f32.mxu0 0.0
      %376 = vmatmul.mubr.f32.gmra.mrb[0].mxu0 %v195
      %v377 = vpop.f32.mrb[0].mxu0
      %v378 = vadd.f32 0.0, %v377
      %v379 = vpop.f32.mrb[0].mxu0
      %380 = vmatprep.mubr.f32.mxu0 0.0
      %381 = vmatmul.mubr.f32.gmra.mrb[0].mxu0 %v196
      %v382 = vpop.f32.mrb[0].mxu0
      %v383 = vadd.f32 0.0, %v382
      %v384 = vpop.f32.mrb[0].mxu0
      %385 = vmatprep.mubr.f32.mxu0 0.0
      %386 = vmatmul.mubr.f32.gmra.mrb[0].mxu0 %v197
      %v387 = vpop.f32.mrb[0].mxu0
      %v388 = vadd.f32 0.0, %v387
      %v389 = vpop.f32.mrb[0].mxu0
      %390 = vmatprep.mubr.f32.mxu0 0.0
      %391 = vmatmul.mubr.f32.gmra.mrb[0].mxu0 %v198
      %v392 = vpop.f32.mrb[0].mxu0
      %v393 = vadd.f32 0.0, %v392
      %v394 = vpop.f32.mrb[0].mxu0
      %395 = vmatprep.mubr.f32.mxu0 0.0
      %396 = vmatmul.mubr.f32.gmra.mrb[0].mxu0 %v199
      %v397 = vpop.f32.mrb[0].mxu0
      %v398 = vadd.f32 0.0, %v397
      %v399 = vpop.f32.mrb[0].mxu0
      %400 = vmatprep.mubr.f32.mxu0 0.0
      %401 = vmatmul.mubr.f32.gmra.mrb[0].mxu0 %v200
      %v402 = vpop.f32.mrb[0].mxu0
      %v403 = vadd.f32 0.0, %v402
      %v404 = vpop.f32.mrb[0].mxu0
      %405 = vmatprep.mubr.f32.mxu0 0.0
      %406 = vmatmul.mubr.f32.gmra.mrb[0].mxu0 %v201
      %v407 = vpop.f32.mrb[0].mxu0
      %v408 = vadd.f32 0.0, %v407
      %v409 = vpop.f32.mrb[0].mxu0
      %410 = vmatprep.mubr.f32.mxu0 0.0
      %411 = vmatmul.mubr.f32.gmra.mrb[0].mxu0 %v202
      %v412 = vpop.f32.mrb[0].mxu0
      %v413 = vadd.f32 0.0, %v412
      %v414 = vpop.f32.mrb[0].mxu0
      %415 = vmatprep.mubr.f32.mxu0 0.0
      %416 = vmatmul.mubr.f32.gmra.mrb[0].mxu0 %v203
      %v417 = vpop.f32.mrb[0].mxu0
      %v418 = vadd.f32 0.0, %v417
      %v419 = vpop.f32.mrb[0].mxu0
      %420 = vmatprep.mubr.f32.mxu0 0.0
      %421 = vmatmul.mubr.f32.gmra.mrb[0].mxu0 %v204
      %v422 = vpop.f32.mrb[0].mxu0
      %v423 = vadd.f32 0.0, %v422
      %v424 = vpop.f32.mrb[0].mxu0
      %425 = vmatprep.mubr.f32.mxu0 0.0
      %426 = vmatmul.mubr.f32.gmra.mrb[0].mxu0 %v205
      %v427 = vpop.f32.mrb[0].mxu0
      %v428 = vadd.f32 0.0, %v427
      %v429 = vpop.f32.mrb[0].mxu0
      %430 = vmatprep.mubr.f32.mxu0 0.0
      %431 = vmatmul.mubr.f32.gmra.mrb[0].mxu0 %v206
      %v432 = vpop.f32.mrb[0].mxu0
      %v433 = vadd.f32 0.0, %v432
      %v434 = vpop.f32.mrb[0].mxu0
      %435 = vmatprep.mubr.f32.mxu0 0.0
      %436 = vmatmul.mubr.f32.gmra.mrb[0].mxu0 %v207
      %v437 = vpop.f32.mrb[0].mxu0
      %v438 = vadd.f32 0.0, %v437
      %v439 = vpop.f32.mrb[0].mxu0
      %440 = vmatprep.mubr.f32.mxu0 0.0
      %441 = vmatmul.mubr.f32.gmra.mrb[0].mxu0 %v208
      %v442 = vpop.f32.mrb[0].mxu0
      %v443 = vadd.f32 0.0, %v442
      %v444 = vpop.f32.mrb[0].mxu0
      %445 = vmatprep.mubr.f32.mxu0 0.0
      %446 = vmatmul.mubr.f32.gmra.mrb[0].mxu0 %v209
      %v447 = vpop.f32.mrb[0].mxu0
      %v448 = vadd.f32 0.0, %v447
      %v449 = vpop.f32.mrb[0].mxu0
      %450 = vmatprep.mubr.f32.mxu0 0.0
      %451 = vmatmul.mubr.f32.gmra.mrb[0].mxu0 %v210
      %v452 = vpop.f32.mrb[0].mxu0
      %v453 = vadd.f32 0.0, %v452
      %v454 = vpop.f32.mrb[0].mxu0
      %455 = vmatprep.mubr.f32.mxu0 0.0
      %456 = vmatmul.mubr.f32.gmra.mrb[0].mxu0 %v211
      %v457 = vpop.f32.mrb[0].mxu0
      %v458 = vadd.f32 0.0, %v457
      %v459 = vpop.f32.mrb[0].mxu0
      %460 = vmatprep.mubr.f32.mxu0 0.0
      %461 = vmatmul.mubr.f32.gmra.mrb[0].mxu0 %v212
      %v462 = vpop.f32.mrb[0].mxu0
      %v463 = vadd.f32 0.0, %v462
      %v464 = vpop.f32.mrb[0].mxu0
      %465 = vmatprep.mubr.f32.mxu0 0.0
      %466 = vmatmul.mubr.f32.gmra.mrb[0].mxu0 %v213
      %v467 = vpop.f32.mrb[0].mxu0
      %v468 = vadd.f32 0.0, %v467
      %v469 = vpop.f32.mrb[0].mxu0
      %470 = vmatprep.mubr.f32.mxu0 0.0
      %471 = vmatmul.mubr.f32.gmra.mrb[0].mxu0 %v214
      %v472 = vpop.f32.mrb[0].mxu0
      %v473 = vadd.f32 0.0, %v472
      %v474 = vpop.f32.mrb[0].mxu0
      %475 = vdwg.mxu0
      %v476 = vadd.f32 %v178, %v298
      %v477 = vadd.f32 %v178, %v303
      %v478 = vadd.f32 %v178, %v308
      %v479 = vadd.f32 %v178, %v313
      %v480 = vadd.f32 %v178, %v318
      %v481 = vadd.f32 %v178, %v323
      %v482 = vadd.f32 %v178, %v328
      %v483 = vadd.f32 %v178, %v333
      %v484 = vadd.f32 %v178, %v338
      %v485 = vadd.f32 %v178, %v343
      %v486 = vadd.f32 %v178, %v348
      %v487 = vadd.f32 %v178, %v353
      %v488 = vadd.f32 %v178, %v358
      %v489 = vadd.f32 %v178, %v363
      %v490 = vadd.f32 %v178, %v368
      %v491 = vadd.f32 %v178, %v373
      %v492 = vadd.f32 %v178, %v378
      %v493 = vadd.f32 %v178, %v383
      %v494 = vadd.f32 %v178, %v388
      %v495 = vadd.f32 %v178, %v393
      %v496 = vadd.f32 %v178, %v398
      %v497 = vadd.f32 %v178, %v403
      %v498 = vadd.f32 %v178, %v408
      %v499 = vadd.f32 %v178, %v413
      %v500 = vadd.f32 %v178, %v418
      %v501 = vadd.f32 %v178, %v423
      %v502 = vadd.f32 %v178, %v428
      %v503 = vadd.f32 %v178, %v433
      %v504 = vadd.f32 %v178, %v438
      %v505 = vadd.f32 %v178, %v443
      %v506 = vadd.f32 %v178, %v448
      %v507 = vadd.f32 %v178, %v453
      %v508 = vadd.f32 %v178, %v458
      %v509 = vadd.f32 %v178, %v463
      %v510 = vadd.f32 %v178, %v468
      %v511 = vadd.f32 %v178, %v473
      %v512 = vld [vmem:[%s165 + $0x1] sm:$0xff]
      %v513 = vld [vmem:[%s165 + $0x9] sm:$0xff]
      %v514 = vld [vmem:[%s165 + $0x11] sm:$0xff]
      %v515 = vld [vmem:[%s165 + $0x19] sm:$0xff]
      %v516 = vld [vmem:[%s165 + $0x21] sm:$0xff]
      %v517 = vld [vmem:[%s165 + $0x29] sm:$0xff]
      %v518 = vld [vmem:[%s165 + $0x31] sm:$0xff]
      %v519 = vld [vmem:[%s165 + $0x39] sm:$0xff]
      %v520 = vld [vmem:[%s165 + $0x41] sm:$0xff]
      %v521 = vld [vmem:[%s165 + $0x49] sm:$0xff]
      %v522 = vld [vmem:[%s165 + $0x51] sm:$0xff]
      %v523 = vld [vmem:[%s165 + $0x59] sm:$0xff]
      %v524 = vld [vmem:[%s165 + $0x61] sm:$0xff]
      %v525 = vld [vmem:[%s165 + $0x69] sm:$0xff]
      %v526 = vld [vmem:[%s165 + $0x71] sm:$0xff]
      %v527 = vld [vmem:[%s165 + $0x79] sm:$0xff]
      %v528 = vld [vmem:[%s165 + $0x81] sm:$0xff]
      %v529 = vld [vmem:[%s165 + $0x89] sm:$0xff]
      %v530 = vld [vmem:[%s165 + $0x91] sm:$0xff]
      %v531 = vld [vmem:[%s165 + $0x99] sm:$0xff]
      %v532 = vld [vmem:[%s165 + $0xa1] sm:$0xff]
      %v533 = vld [vmem:[%s165 + $0xa9] sm:$0xff]
      %v534 = vld [vmem:[%s165 + $0xb1] sm:$0xff]
      %v535 = vld [vmem:[%s165 + $0xb9] sm:$0xff]
      %v536 = vld [vmem:[%s165 + $0xc1] sm:$0xff]
      %v537 = vld [vmem:[%s165 + $0xc9] sm:$0xff]
      %v538 = vld [vmem:[%s165 + $0xd1] sm:$0xff]
      %v539 = vld [vmem:[%s165 + $0xd9] sm:$0xff]
      %v540 = vld [vmem:[%s165 + $0xe1] sm:$0xff]
      %v541 = vld [vmem:[%s165 + $0xe9] sm:$0xff]
      %v542 = vld [vmem:[%s165 + $0xf1] sm:$0xff]
      %v543 = vld [vmem:[%s165 + $0xf9] sm:$0xff]
      %v544 = vld [vmem:[%s165 + $0x101] sm:$0xff]
      %v545 = vld [vmem:[%s165 + $0x109] sm:$0xff]
      %v546 = vld [vmem:[%s165 + $0x111] sm:$0xff]
      %v547 = vld [vmem:[%s165 + $0x119] sm:$0xff]
      %s548 = scalar_lea.vmem %s1, 128
      %v549 = vld [vmem:[%s548] sm:$0xff]
      %v550 = vld [vmem:[%s548 + $0x8] sm:$0xff]
      %v551 = vld [vmem:[%s548 + $0x10] sm:$0xff]
      %v552 = vld [vmem:[%s548 + $0x18] sm:$0xff]
      %v553 = vld [vmem:[%s548 + $0x20] sm:$0xff]
      %v554 = vld [vmem:[%s548 + $0x28] sm:$0xff]
      %v555 = vld [vmem:[%s548 + $0x30] sm:$0xff]
      %v556 = vld [vmem:[%s548 + $0x38] sm:$0xff]
      %v557 = vld [vmem:[%s548 + $0x40] sm:$0xff]
      %v558 = vld [vmem:[%s548 + $0x48] sm:$0xff]
      %v559 = vld [vmem:[%s548 + $0x50] sm:$0xff]
      %v560 = vld [vmem:[%s548 + $0x58] sm:$0xff]
      %v561 = vld [vmem:[%s548 + $0x60] sm:$0xff]
      %v562 = vld [vmem:[%s548 + $0x68] sm:$0xff]
      %v563 = vld [vmem:[%s548 + $0x70] sm:$0xff]
      %v564 = vld [vmem:[%s548 + $0x78] sm:$0xff]
      %565 = vmatprep.subr.mxu0 0.0
      %566 = vmatpush1.msra.mxu0 %v549
      %567 = vmatprep.subr.mxu0 0.0
      %568 = vmatpush1.msra.mxu0 %v550
      %569 = vmatprep.subr.mxu0 0.0
      %570 = vmatpush1.msra.mxu0 %v551
      %571 = vmatprep.subr.mxu0 0.0
      %572 = vmatpush1.msra.mxu0 %v552
      %573 = vmatprep.subr.mxu0 0.0
      %574 = vmatpush1.msra.mxu0 %v553
      %575 = vmatprep.subr.mxu0 0.0
      %576 = vmatpush1.msra.mxu0 %v554
      %577 = vmatprep.subr.mxu0 0.0
      %578 = vmatpush1.msra.mxu0 %v555
      %579 = vmatprep.subr.mxu0 0.0
      %580 = vmatpush1.msra.mxu0 %v556
      %581 = vmatprep.subr.mxu0 0.0
      %582 = vmatpush1.msra.mxu0 %v557
      %583 = vmatprep.subr.mxu0 0.0
      %584 = vmatpush1.msra.mxu0 %v558
      %585 = vmatprep.subr.mxu0 0.0
      %586 = vmatpush1.msra.mxu0 %v559
      %587 = vmatprep.subr.mxu0 0.0
      %588 = vmatpush1.msra.mxu0 %v560
      %589 = vmatprep.subr.mxu0 0.0
      %590 = vmatpush1.msra.mxu0 %v561
      %591 = vmatprep.subr.mxu0 0.0
      %592 = vmatpush1.msra.mxu0 %v562
      %593 = vmatprep.subr.mxu0 0.0
      %594 = vmatpush1.msra.mxu0 %v563
      %595 = vmatprep.subr.mxu0 0.0
      %596 = vmatpush1.msra.mxu0 %v564
      %597 = vmatprep.subr.mxu0 0.0
      %598 = vmatpush1.msra.mxu0 0.0
      %599 = vmatprep.subr.mxu0 0.0
      %600 = vmatpush1.msra.mxu0 0.0
      %601 = vmatprep.subr.mxu0 0.0
      %602 = vmatpush1.msra.mxu0 0.0
      %603 = vmatprep.subr.mxu0 0.0
      %604 = vmatpush1.msra.mxu0 0.0
      %605 = vmatprep.subr.mxu0 0.0
      %606 = vmatpush1.msra.mxu0 0.0
      %607 = vmatprep.subr.mxu0 0.0
      %608 = vmatpush1.msra.mxu0 0.0
      %609 = vmatprep.subr.mxu0 0.0
      %610 = vmatpush1.msra.mxu0 0.0
      %611 = vmatprep.subr.mxu0 0.0
      %612 = vmatpush1.msra.mxu0 0.0
      %613 = vmatprep.subr.mxu0 0.0
      %614 = vmatpush1.msra.mxu0 0.0
      %615 = vmatprep.subr.mxu0 0.0
      %616 = vmatpush1.msra.mxu0 0.0
      %617 = vmatprep.subr.mxu0 0.0
      %618 = vmatpush1.msra.mxu0 0.0
      %619 = vmatprep.subr.mxu0 0.0
      %620 = vmatpush1.msra.mxu0 0.0
      %621 = vmatprep.subr.mxu0 0.0
      %622 = vmatpush1.msra.mxu0 0.0
      %623 = vmatprep.subr.mxu0 0.0
      %624 = vmatpush1.msra.mxu0 0.0
      %625 = vmatprep.subr.mxu0 0.0
      %626 = vmatpush1.msra.mxu0 0.0
      %627 = vmatprep.subr.mxu0 0.0
      %628 = vmatpush1.msra.mxu0 0.0
      %629 = vmatprep.mubr.f32.mxu0 0.0
      %630 = vmatmul.mubr.f32.gmra.mrb[0].mxu0 %v512
      %v631 = vpop.f32.mrb[0].mxu0
      %v632 = vadd.f32 0.0, %v631
      %v633 = vpop.f32.mrb[0].mxu0
      %634 = vmatprep.mubr.f32.mxu0 0.0
      %635 = vmatmul.mubr.f32.gmra.mrb[0].mxu0 %v513
      %v636 = vpop.f32.mrb[0].mxu0
      %v637 = vadd.f32 0.0, %v636
      %v638 = vpop.f32.mrb[0].mxu0
      %639 = vmatprep.mubr.f32.mxu0 0.0
      %640 = vmatmul.mubr.f32.gmra.mrb[0].mxu0 %v514
      %v641 = vpop.f32.mrb[0].mxu0
      %v642 = vadd.f32 0.0, %v641
      %v643 = vpop.f32.mrb[0].mxu0
      %644 = vmatprep.mubr.f32.mxu0 0.0
      %645 = vmatmul.mubr.f32.gmra.mrb[0].mxu0 %v515
      %v646 = vpop.f32.mrb[0].mxu0
      %v647 = vadd.f32 0.0, %v646
      %v648 = vpop.f32.mrb[0].mxu0
      %649 = vmatprep.mubr.f32.mxu0 0.0
      %650 = vmatmul.mubr.f32.gmra.mrb[0].mxu0 %v516
      %v651 = vpop.f32.mrb[0].mxu0
      %v652 = vadd.f32 0.0, %v651
      %v653 = vpop.f32.mrb[0].mxu0
      %654 = vmatprep.mubr.f32.mxu0 0.0
      %655 = vmatmul.mubr.f32.gmra.mrb[0].mxu0 %v517
      %v656 = vpop.f32.mrb[0].mxu0
      %v657 = vadd.f32 0.0, %v656
      %v658 = vpop.f32.mrb[0].mxu0
      %659 = vmatprep.mubr.f32.mxu0 0.0
      %660 = vmatmul.mubr.f32.gmra.mrb[0].mxu0 %v518
      %v661 = vpop.f32.mrb[0].mxu0
      %v662 = vadd.f32 0.0, %v661
      %v663 = vpop.f32.mrb[0].mxu0
      %664 = vmatprep.mubr.f32.mxu0 0.0
      %665 = vmatmul.mubr.f32.gmra.mrb[0].mxu0 %v519
      %v666 = vpop.f32.mrb[0].mxu0
      %v667 = vadd.f32 0.0, %v666
      %v668 = vpop.f32.mrb[0].mxu0
      %669 = vmatprep.mubr.f32.mxu0 0.0
      %670 = vmatmul.mubr.f32.gmra.mrb[0].mxu0 %v520
      %v671 = vpop.f32.mrb[0].mxu0
      %v672 = vadd.f32 0.0, %v671
      %v673 = vpop.f32.mrb[0].mxu0
      %674 = vmatprep.mubr.f32.mxu0 0.0
      %675 = vmatmul.mubr.f32.gmra.mrb[0].mxu0 %v521
      %v676 = vpop.f32.mrb[0].mxu0
      %v677 = vadd.f32 0.0, %v676
      %v678 = vpop.f32.mrb[0].mxu0
      %679 = vmatprep.mubr.f32.mxu0 0.0
      %680 = vmatmul.mubr.f32.gmra.mrb[0].mxu0 %v522
      %v681 = vpop.f32.mrb[0].mxu0
      %v682 = vadd.f32 0.0, %v681
      %v683 = vpop.f32.mrb[0].mxu0
      %684 = vmatprep.mubr.f32.mxu0 0.0
      %685 = vmatmul.mubr.f32.gmra.mrb[0].mxu0 %v523
      %v686 = vpop.f32.mrb[0].mxu0
      %v687 = vadd.f32 0.0, %v686
      %v688 = vpop.f32.mrb[0].mxu0
      %689 = vmatprep.mubr.f32.mxu0 0.0
      %690 = vmatmul.mubr.f32.gmra.mrb[0].mxu0 %v524
      %v691 = vpop.f32.mrb[0].mxu0
      %v692 = vadd.f32 0.0, %v691
      %v693 = vpop.f32.mrb[0].mxu0
      %694 = vmatprep.mubr.f32.mxu0 0.0
      %695 = vmatmul.mubr.f32.gmra.mrb[0].mxu0 %v525
      %v696 = vpop.f32.mrb[0].mxu0
      %v697 = vadd.f32 0.0, %v696
      %v698 = vpop.f32.mrb[0].mxu0
      %699 = vmatprep.mubr.f32.mxu0 0.0
      %700 = vmatmul.mubr.f32.gmra.mrb[0].mxu0 %v526
      %v701 = vpop.f32.mrb[0].mxu0
      %v702 = vadd.f32 0.0, %v701
      %v703 = vpop.f32.mrb[0].mxu0
      %704 = vmatprep.mubr.f32.mxu0 0.0
      %705 = vmatmul.mubr.f32.gmra.mrb[0].mxu0 %v527
      %v706 = vpop.f32.mrb[0].mxu0
      %v707 = vadd.f32 0.0, %v706
      %v708 = vpop.f32.mrb[0].mxu0
      %709 = vmatprep.mubr.f32.mxu0 0.0
      %710 = vmatmul.mubr.f32.gmra.mrb[0].mxu0 %v528
      %v711 = vpop.f32.mrb[0].mxu0
      %v712 = vadd.f32 0.0, %v711
      %v713 = vpop.f32.mrb[0].mxu0
      %714 = vmatprep.mubr.f32.mxu0 0.0
      %715 = vmatmul.mubr.f32.gmra.mrb[0].mxu0 %v529
      %v716 = vpop.f32.mrb[0].mxu0
      %v717 = vadd.f32 0.0, %v716
      %v718 = vpop.f32.mrb[0].mxu0
      %719 = vmatprep.mubr.f32.mxu0 0.0
      %720 = vmatmul.mubr.f32.gmra.mrb[0].mxu0 %v530
      %v721 = vpop.f32.mrb[0].mxu0
      %v722 = vadd.f32 0.0, %v721
      %v723 = vpop.f32.mrb[0].mxu0
      %724 = vmatprep.mubr.f32.mxu0 0.0
      %725 = vmatmul.mubr.f32.gmra.mrb[0].mxu0 %v531
      %v726 = vpop.f32.mrb[0].mxu0
      %v727 = vadd.f32 0.0, %v726
      %v728 = vpop.f32.mrb[0].mxu0
      %729 = vmatprep.mubr.f32.mxu0 0.0
      %730 = vmatmul.mubr.f32.gmra.mrb[0].mxu0 %v532
      %v731 = vpop.f32.mrb[0].mxu0
      %v732 = vadd.f32 0.0, %v731
      %v733 = vpop.f32.mrb[0].mxu0
      %734 = vmatprep.mubr.f32.mxu0 0.0
      %735 = vmatmul.mubr.f32.gmra.mrb[0].mxu0 %v533
      %v736 = vpop.f32.mrb[0].mxu0
      %v737 = vadd.f32 0.0, %v736
      %v738 = vpop.f32.mrb[0].mxu0
      %739 = vmatprep.mubr.f32.mxu0 0.0
      %740 = vmatmul.mubr.f32.gmra.mrb[0].mxu0 %v534
      %v741 = vpop.f32.mrb[0].mxu0
      %v742 = vadd.f32 0.0, %v741
      %v743 = vpop.f32.mrb[0].mxu0
      %744 = vmatprep.mubr.f32.mxu0 0.0
      %745 = vmatmul.mubr.f32.gmra.mrb[0].mxu0 %v535
      %v746 = vpop.f32.mrb[0].mxu0
      %v747 = vadd.f32 0.0, %v746
      %v748 = vpop.f32.mrb[0].mxu0
      %749 = vmatprep.mubr.f32.mxu0 0.0
      %750 = vmatmul.mubr.f32.gmra.mrb[0].mxu0 %v536
      %v751 = vpop.f32.mrb[0].mxu0
      %v752 = vadd.f32 0.0, %v751
      %v753 = vpop.f32.mrb[0].mxu0
      %754 = vmatprep.mubr.f32.mxu0 0.0
      %755 = vmatmul.mubr.f32.gmra.mrb[0].mxu0 %v537
      %v756 = vpop.f32.mrb[0].mxu0
      %v757 = vadd.f32 0.0, %v756
      %v758 = vpop.f32.mrb[0].mxu0
      %759 = vmatprep.mubr.f32.mxu0 0.0
      %760 = vmatmul.mubr.f32.gmra.mrb[0].mxu0 %v538
      %v761 = vpop.f32.mrb[0].mxu0
      %v762 = vadd.f32 0.0, %v761
      %v763 = vpop.f32.mrb[0].mxu0
      %764 = vmatprep.mubr.f32.mxu0 0.0
      %765 = vmatmul.mubr.f32.gmra.mrb[0].mxu0 %v539
      %v766 = vpop.f32.mrb[0].mxu0
      %v767 = vadd.f32 0.0, %v766
      %v768 = vpop.f32.mrb[0].mxu0
      %769 = vmatprep.mubr.f32.mxu0 0.0
      %770 = vmatmul.mubr.f32.gmra.mrb[0].mxu0 %v540
      %v771 = vpop.f32.mrb[0].mxu0
      %v772 = vadd.f32 0.0, %v771
      %v773 = vpop.f32.mrb[0].mxu0
      %774 = vmatprep.mubr.f32.mxu0 0.0
      %775 = vmatmul.mubr.f32.gmra.mrb[0].mxu0 %v541
      %v776 = vpop.f32.mrb[0].mxu0
      %v777 = vadd.f32 0.0, %v776
      %v778 = vpop.f32.mrb[0].mxu0
      %779 = vmatprep.mubr.f32.mxu0 0.0
      %780 = vmatmul.mubr.f32.gmra.mrb[0].mxu0 %v542
      %v781 = vpop.f32.mrb[0].mxu0
      %v782 = vadd.f32 0.0, %v781
      %v783 = vpop.f32.mrb[0].mxu0
      %784 = vmatprep.mubr.f32.mxu0 0.0
      %785 = vmatmul.mubr.f32.gmra.mrb[0].mxu0 %v543
      %v786 = vpop.f32.mrb[0].mxu0
      %v787 = vadd.f32 0.0, %v786
      %v788 = vpop.f32.mrb[0].mxu0
      %789 = vmatprep.mubr.f32.mxu0 0.0
      %790 = vmatmul.mubr.f32.gmra.mrb[0].mxu0 %v544
      %v791 = vpop.f32.mrb[0].mxu0
      %v792 = vadd.f32 0.0, %v791
      %v793 = vpop.f32.mrb[0].mxu0
      %794 = vmatprep.mubr.f32.mxu0 0.0
      %795 = vmatmul.mubr.f32.gmra.mrb[0].mxu0 %v545
      %v796 = vpop.f32.mrb[0].mxu0
      %v797 = vadd.f32 0.0, %v796
      %v798 = vpop.f32.mrb[0].mxu0
      %799 = vmatprep.mubr.f32.mxu0 0.0
      %800 = vmatmul.mubr.f32.gmra.mrb[0].mxu0 %v546
      %v801 = vpop.f32.mrb[0].mxu0
      %v802 = vadd.f32 0.0, %v801
      %v803 = vpop.f32.mrb[0].mxu0
      %804 = vmatprep.mubr.f32.mxu0 0.0
      %805 = vmatmul.mubr.f32.gmra.mrb[0].mxu0 %v547
      %v806 = vpop.f32.mrb[0].mxu0
      %v807 = vadd.f32 0.0, %v806
      %v808 = vpop.f32.mrb[0].mxu0
      %809 = vdwg.mxu0
      %v810 = vadd.f32 %v476, %v632
      %v811 = vadd.f32 %v477, %v637
      %v812 = vadd.f32 %v478, %v642
      %v813 = vadd.f32 %v479, %v647
      %v814 = vadd.f32 %v480, %v652
      %v815 = vadd.f32 %v481, %v657
      %v816 = vadd.f32 %v482, %v662
      %v817 = vadd.f32 %v483, %v667
      %v818 = vadd.f32 %v484, %v672
      %v819 = vadd.f32 %v485, %v677
      %v820 = vadd.f32 %v486, %v682
      %v821 = vadd.f32 %v487, %v687
      %v822 = vadd.f32 %v488, %v692
      %v823 = vadd.f32 %v489, %v697
      %v824 = vadd.f32 %v490, %v702
      %v825 = vadd.f32 %v491, %v707
      %v826 = vadd.f32 %v492, %v712
      %v827 = vadd.f32 %v493, %v717
      %v828 = vadd.f32 %v494, %v722
      %v829 = vadd.f32 %v495, %v727
      %v830 = vadd.f32 %v496, %v732
      %v831 = vadd.f32 %v497, %v737
      %v832 = vadd.f32 %v498, %v742
      %v833 = vadd.f32 %v499, %v747
      %v834 = vadd.f32 %v500, %v752
      %v835 = vadd.f32 %v501, %v757
      %v836 = vadd.f32 %v502, %v762
      %v837 = vadd.f32 %v503, %v767
      %v838 = vadd.f32 %v504, %v772
      %v839 = vadd.f32 %v505, %v777
      %v840 = vadd.f32 %v506, %v782
      %v841 = vadd.f32 %v507, %v787
      %v842 = vadd.f32 %v508, %v792
      %v843 = vadd.f32 %v509, %v797
      %v844 = vadd.f32 %v510, %v802
      %v845 = vadd.f32 %v511, %v807
      %v846 = vld [vmem:[%s165 + $0x2] sm:$0xff]
      %v847 = vld [vmem:[%s165 + $0xa] sm:$0xff]
      %v848 = vld [vmem:[%s165 + $0x12] sm:$0xff]
      %v849 = vld [vmem:[%s165 + $0x1a] sm:$0xff]
      %v850 = vld [vmem:[%s165 + $0x22] sm:$0xff]
      %v851 = vld [vmem:[%s165 + $0x2a] sm:$0xff]
      %v852 = vld [vmem:[%s165 + $0x32] sm:$0xff]
      %v853 = vld [vmem:[%s165 + $0x3a] sm:$0xff]
      %v854 = vld [vmem:[%s165 + $0x42] sm:$0xff]
      %v855 = vld [vmem:[%s165 + $0x4a] sm:$0xff]
      %v856 = vld [vmem:[%s165 + $0x52] sm:$0xff]
      %v857 = vld [vmem:[%s165 + $0x5a] sm:$0xff]
      %v858 = vld [vmem:[%s165 + $0x62] sm:$0xff]
      %v859 = vld [vmem:[%s165 + $0x6a] sm:$0xff]
      %v860 = vld [vmem:[%s165 + $0x72] sm:$0xff]
      %v861 = vld [vmem:[%s165 + $0x7a] sm:$0xff]
      %v862 = vld [vmem:[%s165 + $0x82] sm:$0xff]
      %v863 = vld [vmem:[%s165 + $0x8a] sm:$0xff]
      %v864 = vld [vmem:[%s165 + $0x92] sm:$0xff]
      %v865 = vld [vmem:[%s165 + $0x9a] sm:$0xff]
      %v866 = vld [vmem:[%s165 + $0xa2] sm:$0xff]
      %v867 = vld [vmem:[%s165 + $0xaa] sm:$0xff]
      %v868 = vld [vmem:[%s165 + $0xb2] sm:$0xff]
      %v869 = vld [vmem:[%s165 + $0xba] sm:$0xff]
      %v870 = vld [vmem:[%s165 + $0xc2] sm:$0xff]
      %v871 = vld [vmem:[%s165 + $0xca] sm:$0xff]
      %v872 = vld [vmem:[%s165 + $0xd2] sm:$0xff]
      %v873 = vld [vmem:[%s165 + $0xda] sm:$0xff]
      %v874 = vld [vmem:[%s165 + $0xe2] sm:$0xff]
      %v875 = vld [vmem:[%s165 + $0xea] sm:$0xff]
      %v876 = vld [vmem:[%s165 + $0xf2] sm:$0xff]
      %v877 = vld [vmem:[%s165 + $0xfa] sm:$0xff]
      %v878 = vld [vmem:[%s165 + $0x102] sm:$0xff]
      %v879 = vld [vmem:[%s165 + $0x10a] sm:$0xff]
      %v880 = vld [vmem:[%s165 + $0x112] sm:$0xff]
      %v881 = vld [vmem:[%s165 + $0x11a] sm:$0xff]
      %s882 = scalar_lea.vmem %s1, 256
      %v883 = vld [vmem:[%s882] sm:$0xff]
      %v884 = vld [vmem:[%s882 + $0x8] sm:$0xff]
      %v885 = vld [vmem:[%s882 + $0x10] sm:$0xff]
      %v886 = vld [vmem:[%s882 + $0x18] sm:$0xff]
      %v887 = vld [vmem:[%s882 + $0x20] sm:$0xff]
      %v888 = vld [vmem:[%s882 + $0x28] sm:$0xff]
      %v889 = vld [vmem:[%s882 + $0x30] sm:$0xff]
      %v890 = vld [vmem:[%s882 + $0x38] sm:$0xff]
      %v891 = vld [vmem:[%s882 + $0x40] sm:$0xff]
      %v892 = vld [vmem:[%s882 + $0x48] sm:$0xff]
      %v893 = vld [vmem:[%s882 + $0x50] sm:$0xff]
      %v894 = vld [vmem:[%s882 + $0x58] sm:$0xff]
      %v895 = vld [vmem:[%s882 + $0x60] sm:$0xff]
      %v896 = vld [vmem:[%s882 + $0x68] sm:$0xff]
      %v897 = vld [vmem:[%s882 + $0x70] sm:$0xff]
      %v898 = vld [vmem:[%s882 + $0x78] sm:$0xff]
      %899 = vmatprep.subr.mxu0 0.0
      %900 = vmatpush1.msra.mxu0 %v883
      %901 = vmatprep.subr.mxu0 0.0
      %902 = vmatpush1.msra.mxu0 %v884
      %903 = vmatprep.subr.mxu0 0.0
      %904 = vmatpush1.msra.mxu0 %v885
      %905 = vmatprep.subr.mxu0 0.0
      %906 = vmatpush1.msra.mxu0 %v886
      %907 = vmatprep.subr.mxu0 0.0
      %908 = vmatpush1.msra.mxu0 %v887
      %909 = vmatprep.subr.mxu0 0.0
      %910 = vmatpush1.msra.mxu0 %v888
      %911 = vmatprep.subr.mxu0 0.0
      %912 = vmatpush1.msra.mxu0 %v889
      %913 = vmatprep.subr.mxu0 0.0
      %914 = vmatpush1.msra.mxu0 %v890
      %915 = vmatprep.subr.mxu0 0.0
      %916 = vmatpush1.msra.mxu0 %v891
      %917 = vmatprep.subr.mxu0 0.0
      %918 = vmatpush1.msra.mxu0 %v892
      %919 = vmatprep.subr.mxu0 0.0
      %920 = vmatpush1.msra.mxu0 %v893
      %921 = vmatprep.subr.mxu0 0.0
      %922 = vmatpush1.msra.mxu0 %v894
      %923 = vmatprep.subr.mxu0 0.0
      %924 = vmatpush1.msra.mxu0 %v895
      %925 = vmatprep.subr.mxu0 0.0
      %926 = vmatpush1.msra.mxu0 %v896
      %927 = vmatprep.subr.mxu0 0.0
      %928 = vmatpush1.msra.mxu0 %v897
      %929 = vmatprep.subr.mxu0 0.0
      %930 = vmatpush1.msra.mxu0 %v898
      %931 = vmatprep.subr.mxu0 0.0
      %932 = vmatpush1.msra.mxu0 0.0
      %933 = vmatprep.subr.mxu0 0.0
      %934 = vmatpush1.msra.mxu0 0.0
      %935 = vmatprep.subr.mxu0 0.0
      %936 = vmatpush1.msra.mxu0 0.0
      %937 = vmatprep.subr.mxu0 0.0
      %938 = vmatpush1.msra.mxu0 0.0
      %939 = vmatprep.subr.mxu0 0.0
      %940 = vmatpush1.msra.mxu0 0.0
      %941 = vmatprep.subr.mxu0 0.0
      %942 = vmatpush1.msra.mxu0 0.0
      %943 = vmatprep.subr.mxu0 0.0
      %944 = vmatpush1.msra.mxu0 0.0
      %945 = vmatprep.subr.mxu0 0.0
      %946 = vmatpush1.msra.mxu0 0.0
      %947 = vmatprep.subr.mxu0 0.0
      %948 = vmatpush1.msra.mxu0 0.0
      %949 = vmatprep.subr.mxu0 0.0
      %950 = vmatpush1.msra.mxu0 0.0
      %951 = vmatprep.subr.mxu0 0.0
      %952 = vmatpush1.msra.mxu0 0.0
      %953 = vmatprep.subr.mxu0 0.0
      %954 = vmatpush1.msra.mxu0 0.0
      %955 = vmatprep.subr.mxu0 0.0
      %956 = vmatpush1.msra.mxu0 0.0
      %957 = vmatprep.subr.mxu0 0.0
      %958 = vmatpush1.msra.mxu0 0.0
      %959 = vmatprep.subr.mxu0 0.0
      %960 = vmatpush1.msra.mxu0 0.0
      %961 = vmatprep.subr.mxu0 0.0
      %962 = vmatpush1.msra.mxu0 0.0
      %963 = vmatprep.mubr.f32.mxu0 0.0
      %964 = vmatmul.mubr.f32.gmra.mrb[0].mxu0 %v846
      %v965 = vpop.f32.mrb[0].mxu0
      %v966 = vadd.f32 0.0, %v965
      %v967 = vpop.f32.mrb[0].mxu0
      %968 = vmatprep.mubr.f32.mxu0 0.0
      %969 = vmatmul.mubr.f32.gmra.mrb[0].mxu0 %v847
      %v970 = vpop.f32.mrb[0].mxu0
      %v971 = vadd.f32 0.0, %v970
      %v972 = vpop.f32.mrb[0].mxu0
      %973 = vmatprep.mubr.f32.mxu0 0.0
      %974 = vmatmul.mubr.f32.gmra.mrb[0].mxu0 %v848
      %v975 = vpop.f32.mrb[0].mxu0
      %v976 = vadd.f32 0.0, %v975
      %v977 = vpop.f32.mrb[0].mxu0
      %978 = vmatprep.mubr.f32.mxu0 0.0
      %979 = vmatmul.mubr.f32.gmra.mrb[0].mxu0 %v849
      %v980 = vpop.f32.mrb[0].mxu0
      %v981 = vadd.f32 0.0, %v980
      %v982 = vpop.f32.mrb[0].mxu0
      %983 = vmatprep.mubr.f32.mxu0 0.0
      %984 = vmatmul.mubr.f32.gmra.mrb[0].mxu0 %v850
      %v985 = vpop.f32.mrb[0].mxu0
      %v986 = vadd.f32 0.0, %v985
      %v987 = vpop.f32.mrb[0].mxu0
      %988 = vmatprep.mubr.f32.mxu0 0.0
      %989 = vmatmul.mubr.f32.gmra.mrb[0].mxu0 %v851
      %v990 = vpop.f32.mrb[0].mxu0
      %v991 = vadd.f32 0.0, %v990
      %v992 = vpop.f32.mrb[0].mxu0
      %993 = vmatprep.mubr.f32.mxu0 0.0
      %994 = vmatmul.mubr.f32.gmra.mrb[0].mxu0 %v852
      %v995 = vpop.f32.mrb[0].mxu0
      %v996 = vadd.f32 0.0, %v995
      %v997 = vpop.f32.mrb[0].mxu0
      %998 = vmatprep.mubr.f32.mxu0 0.0
      %999 = vmatmul.mubr.f32.gmra.mrb[0].mxu0 %v853
      %v1000 = vpop.f32.mrb[0].mxu0
      %v1001 = vadd.f32 0.0, %v1000
      %v1002 = vpop.f32.mrb[0].mxu0
      %1003 = vmatprep.mubr.f32.mxu0 0.0
      %1004 = vmatmul.mubr.f32.gmra.mrb[0].mxu0 %v854
      %v1005 = vpop.f32.mrb[0].mxu0
      %v1006 = vadd.f32 0.0, %v1005
      %v1007 = vpop.f32.mrb[0].mxu0
      %1008 = vmatprep.mubr.f32.mxu0 0.0
      %1009 = vmatmul.mubr.f32.gmra.mrb[0].mxu0 %v855
      %v1010 = vpop.f32.mrb[0].mxu0
      %v1011 = vadd.f32 0.0, %v1010
      %v1012 = vpop.f32.mrb[0].mxu0
      %1013 = vmatprep.mubr.f32.mxu0 0.0
      %1014 = vmatmul.mubr.f32.gmra.mrb[0].mxu0 %v856
      %v1015 = vpop.f32.mrb[0].mxu0
      %v1016 = vadd.f32 0.0, %v1015
      %v1017 = vpop.f32.mrb[0].mxu0
      %1018 = vmatprep.mubr.f32.mxu0 0.0
      %1019 = vmatmul.mubr.f32.gmra.mrb[0].mxu0 %v857
      %v1020 = vpop.f32.mrb[0].mxu0
      %v1021 = vadd.f32 0.0, %v1020
      %v1022 = vpop.f32.mrb[0].mxu0
      %1023 = vmatprep.mubr.f32.mxu0 0.0
      %1024 = vmatmul.mubr.f32.gmra.mrb[0].mxu0 %v858
      %v1025 = vpop.f32.mrb[0].mxu0
      %v1026 = vadd.f32 0.0, %v1025
      %v1027 = vpop.f32.mrb[0].mxu0
      %1028 = vmatprep.mubr.f32.mxu0 0.0
      %1029 = vmatmul.mubr.f32.gmra.mrb[0].mxu0 %v859
      %v1030 = vpop.f32.mrb[0].mxu0
      %v1031 = vadd.f32 0.0, %v1030
      %v1032 = vpop.f32.mrb[0].mxu0
      %1033 = vmatprep.mubr.f32.mxu0 0.0
      %1034 = vmatmul.mubr.f32.gmra.mrb[0].mxu0 %v860
      %v1035 = vpop.f32.mrb[0].mxu0
      %v1036 = vadd.f32 0.0, %v1035
      %v1037 = vpop.f32.mrb[0].mxu0
      %1038 = vmatprep.mubr.f32.mxu0 0.0
      %1039 = vmatmul.mubr.f32.gmra.mrb[0].mxu0 %v861
      %v1040 = vpop.f32.mrb[0].mxu0
      %v1041 = vadd.f32 0.0, %v1040
      %v1042 = vpop.f32.mrb[0].mxu0
      %1043 = vmatprep.mubr.f32.mxu0 0.0
      %1044 = vmatmul.mubr.f32.gmra.mrb[0].mxu0 %v862
      %v1045 = vpop.f32.mrb[0].mxu0
      %v1046 = vadd.f32 0.0, %v1045
      %v1047 = vpop.f32.mrb[0].mxu0
      %1048 = vmatprep.mubr.f32.mxu0 0.0
      %1049 = vmatmul.mubr.f32.gmra.mrb[0].mxu0 %v863
      %v1050 = vpop.f32.mrb[0].mxu0
      %v1051 = vadd.f32 0.0, %v1050
      %v1052 = vpop.f32.mrb[0].mxu0
      %1053 = vmatprep.mubr.f32.mxu0 0.0
      %1054 = vmatmul.mubr.f32.gmra.mrb[0].mxu0 %v864
      %v1055 = vpop.f32.mrb[0].mxu0
      %v1056 = vadd.f32 0.0, %v1055
      %v1057 = vpop.f32.mrb[0].mxu0
      %1058 = vmatprep.mubr.f32.mxu0 0.0
      %1059 = vmatmul.mubr.f32.gmra.mrb[0].mxu0 %v865
      %v1060 = vpop.f32.mrb[0].mxu0
      %v1061 = vadd.f32 0.0, %v1060
      %v1062 = vpop.f32.mrb[0].mxu0
      %1063 = vmatprep.mubr.f32.mxu0 0.0
      %1064 = vmatmul.mubr.f32.gmra.mrb[0].mxu0 %v866
      %v1065 = vpop.f32.mrb[0].mxu0
      %v1066 = vadd.f32 0.0, %v1065
      %v1067 = vpop.f32.mrb[0].mxu0
      %1068 = vmatprep.mubr.f32.mxu0 0.0
      %1069 = vmatmul.mubr.f32.gmra.mrb[0].mxu0 %v867
      %v1070 = vpop.f32.mrb[0].mxu0
      %v1071 = vadd.f32 0.0, %v1070
      %v1072 = vpop.f32.mrb[0].mxu0
      %1073 = vmatprep.mubr.f32.mxu0 0.0
      %1074 = vmatmul.mubr.f32.gmra.mrb[0].mxu0 %v868
      %v1075 = vpop.f32.mrb[0].mxu0
      %v1076 = vadd.f32 0.0, %v1075
      %v1077 = vpop.f32.mrb[0].mxu0
      %1078 = vmatprep.mubr.f32.mxu0 0.0
      %1079 = vmatmul.mubr.f32.gmra.mrb[0].mxu0 %v869
      %v1080 = vpop.f32.mrb[0].mxu0
      %v1081 = vadd.f32 0.0, %v1080
      %v1082 = vpop.f32.mrb[0].mxu0
      %1083 = vmatprep.mubr.f32.mxu0 0.0
      %1084 = vmatmul.mubr.f32.gmra.mrb[0].mxu0 %v870
      %v1085 = vpop.f32.mrb[0].mxu0
      %v1086 = vadd.f32 0.0, %v1085
      %v1087 = vpop.f32.mrb[0].mxu0
      %1088 = vmatprep.mubr.f32.mxu0 0.0
      %1089 = vmatmul.mubr.f32.gmra.mrb[0].mxu0 %v871
      %v1090 = vpop.f32.mrb[0].mxu0
      %v1091 = vadd.f32 0.0, %v1090
      %v1092 = vpop.f32.mrb[0].mxu0
      %1093 = vmatprep.mubr.f32.mxu0 0.0
      %1094 = vmatmul.mubr.f32.gmra.mrb[0].mxu0 %v872
      %v1095 = vpop.f32.mrb[0].mxu0
      %v1096 = vadd.f32 0.0, %v1095
      %v1097 = vpop.f32.mrb[0].mxu0
      %1098 = vmatprep.mubr.f32.mxu0 0.0
      %1099 = vmatmul.mubr.f32.gmra.mrb[0].mxu0 %v873
      %v1100 = vpop.f32.mrb[0].mxu0
      %v1101 = vadd.f32 0.0, %v1100
      %v1102 = vpop.f32.mrb[0].mxu0
      %1103 = vmatprep.mubr.f32.mxu0 0.0
      %1104 = vmatmul.mubr.f32.gmra.mrb[0].mxu0 %v874
      %v1105 = vpop.f32.mrb[0].mxu0
      %v1106 = vadd.f32 0.0, %v1105
      %v1107 = vpop.f32.mrb[0].mxu0
      %1108 = vmatprep.mubr.f32.mxu0 0.0
      %1109 = vmatmul.mubr.f32.gmra.mrb[0].mxu0 %v875
      %v1110 = vpop.f32.mrb[0].mxu0
      %v1111 = vadd.f32 0.0, %v1110
      %v1112 = vpop.f32.mrb[0].mxu0
      %1113 = vmatprep.mubr.f32.mxu0 0.0
      %1114 = vmatmul.mubr.f32.gmra.mrb[0].mxu0 %v876
      %v1115 = vpop.f32.mrb[0].mxu0
      %v1116 = vadd.f32 0.0, %v1115
      %v1117 = vpop.f32.mrb[0].mxu0
      %1118 = vmatprep.mubr.f32.mxu0 0.0
      %1119 = vmatmul.mubr.f32.gmra.mrb[0].mxu0 %v877
      %v1120 = vpop.f32.mrb[0].mxu0
      %v1121 = vadd.f32 0.0, %v1120
      %v1122 = vpop.f32.mrb[0].mxu0
      %1123 = vmatprep.mubr.f32.mxu0 0.0
      %1124 = vmatmul.mubr.f32.gmra.mrb[0].mxu0 %v878
      %v1125 = vpop.f32.mrb[0].mxu0
      %v1126 = vadd.f32 0.0, %v1125
      %v1127 = vpop.f32.mrb[0].mxu0
      %1128 = vmatprep.mubr.f32.mxu0 0.0
      %1129 = vmatmul.mubr.f32.gmra.mrb[0].mxu0 %v879
      %v1130 = vpop.f32.mrb[0].mxu0
      %v1131 = vadd.f32 0.0, %v1130
      %v1132 = vpop.f32.mrb[0].mxu0
      %1133 = vmatprep.mubr.f32.mxu0 0.0
      %1134 = vmatmul.mubr.f32.gmra.mrb[0].mxu0 %v880
      %v1135 = vpop.f32.mrb[0].mxu0
      %v1136 = vadd.f32 0.0, %v1135
      %v1137 = vpop.f32.mrb[0].mxu0
      %1138 = vmatprep.mubr.f32.mxu0 0.0
      %1139 = vmatmul.mubr.f32.gmra.mrb[0].mxu0 %v881
      %v1140 = vpop.f32.mrb[0].mxu0
      %v1141 = vadd.f32 0.0, %v1140
      %v1142 = vpop.f32.mrb[0].mxu0
      %1143 = vdwg.mxu0
      %v1144 = vadd.f32 %v810, %v966
      %v1145 = vadd.f32 %v811, %v971
      %v1146 = vadd.f32 %v812, %v976
      %v1147 = vadd.f32 %v813, %v981
      %v1148 = vadd.f32 %v814, %v986
      %v1149 = vadd.f32 %v815, %v991
      %v1150 = vadd.f32 %v816, %v996
      %v1151 = vadd.f32 %v817, %v1001
      %v1152 = vadd.f32 %v818, %v1006
      %v1153 = vadd.f32 %v819, %v1011
      %v1154 = vadd.f32 %v820, %v1016
      %v1155 = vadd.f32 %v821, %v1021
      %v1156 = vadd.f32 %v822, %v1026
      %v1157 = vadd.f32 %v823, %v1031
      %v1158 = vadd.f32 %v824, %v1036
      %v1159 = vadd.f32 %v825, %v1041
      %v1160 = vadd.f32 %v826, %v1046
      %v1161 = vadd.f32 %v827, %v1051
      %v1162 = vadd.f32 %v828, %v1056
      %v1163 = vadd.f32 %v829, %v1061
      %v1164 = vadd.f32 %v830, %v1066
      %v1165 = vadd.f32 %v831, %v1071
      %v1166 = vadd.f32 %v832, %v1076
      %v1167 = vadd.f32 %v833, %v1081
      %v1168 = vadd.f32 %v834, %v1086
      %v1169 = vadd.f32 %v835, %v1091
      %v1170 = vadd.f32 %v836, %v1096
      %v1171 = vadd.f32 %v837, %v1101
      %v1172 = vadd.f32 %v838, %v1106
      %v1173 = vadd.f32 %v839, %v1111
      %v1174 = vadd.f32 %v840, %v1116
      %v1175 = vadd.f32 %v841, %v1121
      %v1176 = vadd.f32 %v842, %v1126
      %v1177 = vadd.f32 %v843, %v1131
      %v1178 = vadd.f32 %v844, %v1136
      %v1179 = vadd.f32 %v845, %v1141
      %v1180 = vld [vmem:[%s165 + $0x12] sm:$0xff]
      %v1181 = vld [vmem:[%s165 + $0x1a] sm:$0xff]
      %v1182 = vld [vmem:[%s165 + $0x22] sm:$0xff]
      %v1183 = vld [vmem:[%s165 + $0x2a] sm:$0xff]
      %v1184 = vld [vmem:[%s165 + $0x32] sm:$0xff]
      %v1185 = vld [vmem:[%s165 + $0x3a] sm:$0xff]
      %v1186 = vld [vmem:[%s165 + $0x42] sm:$0xff]
      %v1187 = vld [vmem:[%s165 + $0x4a] sm:$0xff]
      %v1188 = vld [vmem:[%s165 + $0x52] sm:$0xff]
      %v1189 = vld [vmem:[%s165 + $0x5a] sm:$0xff]
      %v1190 = vld [vmem:[%s165 + $0x62] sm:$0xff]
      %v1191 = vld [vmem:[%s165 + $0x6a] sm:$0xff]
      %v1192 = vld [vmem:[%s165 + $0x72] sm:$0xff]
      %v1193 = vld [vmem:[%s165 + $0x7a] sm:$0xff]
      %v1194 = vld [vmem:[%s165 + $0x82] sm:$0xff]
      %v1195 = vld [vmem:[%s165 + $0x8a] sm:$0xff]
      %v1196 = vld [vmem:[%s165 + $0x92] sm:$0xff]
      %v1197 = vld [vmem:[%s165 + $0x9a] sm:$0xff]
      %v1198 = vld [vmem:[%s165 + $0xa2] sm:$0xff]
      %v1199 = vld [vmem:[%s165 + $0xaa] sm:$0xff]
      %v1200 = vld [vmem:[%s165 + $0xb2] sm:$0xff]
      %v1201 = vld [vmem:[%s165 + $0xba] sm:$0xff]
      %v1202 = vld [vmem:[%s165 + $0xc2] sm:$0xff]
      %v1203 = vld [vmem:[%s165 + $0xca] sm:$0xff]
      %v1204 = vld [vmem:[%s165 + $0xd2] sm:$0xff]
      %v1205 = vld [vmem:[%s165 + $0xda] sm:$0xff]
      %v1206 = vld [vmem:[%s165 + $0xe2] sm:$0xff]
      %v1207 = vld [vmem:[%s165 + $0xea] sm:$0xff]
      %v1208 = vld [vmem:[%s165 + $0xf2] sm:$0xff]
      %v1209 = vld [vmem:[%s165 + $0xfa] sm:$0xff]
      %v1210 = vld [vmem:[%s165 + $0x102] sm:$0xff]
      %v1211 = vld [vmem:[%s165 + $0x10a] sm:$0xff]
      %v1212 = vld [vmem:[%s165 + $0x112] sm:$0xff]
      %v1213 = vld [vmem:[%s165 + $0x11a] sm:$0xff]
      %v1214 = vld [vmem:[%s165 + $0x122] sm:$0xff]
      %v1215 = vld [vmem:[%s165 + $0x12a] sm:$0xff]
      %s1216 = scalar_lea.vmem %s1, 384
      %v1217 = vld [vmem:[%s1216] sm:$0xff]
      %v1218 = vld [vmem:[%s1216 + $0x8] sm:$0xff]
      %v1219 = vld [vmem:[%s1216 + $0x10] sm:$0xff]
      %v1220 = vld [vmem:[%s1216 + $0x18] sm:$0xff]
      %v1221 = vld [vmem:[%s1216 + $0x20] sm:$0xff]
      %v1222 = vld [vmem:[%s1216 + $0x28] sm:$0xff]
      %v1223 = vld [vmem:[%s1216 + $0x30] sm:$0xff]
      %v1224 = vld [vmem:[%s1216 + $0x38] sm:$0xff]
      %v1225 = vld [vmem:[%s1216 + $0x40] sm:$0xff]
      %v1226 = vld [vmem:[%s1216 + $0x48] sm:$0xff]
      %v1227 = vld [vmem:[%s1216 + $0x50] sm:$0xff]
      %v1228 = vld [vmem:[%s1216 + $0x58] sm:$0xff]
      %v1229 = vld [vmem:[%s1216 + $0x60] sm:$0xff]
      %v1230 = vld [vmem:[%s1216 + $0x68] sm:$0xff]
      %v1231 = vld [vmem:[%s1216 + $0x70] sm:$0xff]
      %v1232 = vld [vmem:[%s1216 + $0x78] sm:$0xff]
      %1233 = vmatprep.subr.mxu0 0.0
      %1234 = vmatpush1.msra.mxu0 %v1217
      %1235 = vmatprep.subr.mxu0 0.0
      %1236 = vmatpush1.msra.mxu0 %v1218
      %1237 = vmatprep.subr.mxu0 0.0
      %1238 = vmatpush1.msra.mxu0 %v1219
      %1239 = vmatprep.subr.mxu0 0.0
      %1240 = vmatpush1.msra.mxu0 %v1220
      %1241 = vmatprep.subr.mxu0 0.0
      %1242 = vmatpush1.msra.mxu0 %v1221
      %1243 = vmatprep.subr.mxu0 0.0
      %1244 = vmatpush1.msra.mxu0 %v1222
      %1245 = vmatprep.subr.mxu0 0.0
      %1246 = vmatpush1.msra.mxu0 %v1223
      %1247 = vmatprep.subr.mxu0 0.0
      %1248 = vmatpush1.msra.mxu0 %v1224
      %1249 = vmatprep.subr.mxu0 0.0
      %1250 = vmatpush1.msra.mxu0 %v1225
      %1251 = vmatprep.subr.mxu0 0.0
      %1252 = vmatpush1.msra.mxu0 %v1226
      %1253 = vmatprep.subr.mxu0 0.0
      %1254 = vmatpush1.msra.mxu0 %v1227
      %1255 = vmatprep.subr.mxu0 0.0
      %1256 = vmatpush1.msra.mxu0 %v1228
      %1257 = vmatprep.subr.mxu0 0.0
      %1258 = vmatpush1.msra.mxu0 %v1229
      %1259 = vmatprep.subr.mxu0 0.0
      %1260 = vmatpush1.msra.mxu0 %v1230
      %1261 = vmatprep.subr.mxu0 0.0
      %1262 = vmatpush1.msra.mxu0 %v1231
      %1263 = vmatprep.subr.mxu0 0.0
      %1264 = vmatpush1.msra.mxu0 %v1232
      %1265 = vmatprep.subr.mxu0 0.0
      %1266 = vmatpush1.msra.mxu0 0.0
      %1267 = vmatprep.subr.mxu0 0.0
      %1268 = vmatpush1.msra.mxu0 0.0
      %1269 = vmatprep.subr.mxu0 0.0
      %1270 = vmatpush1.msra.mxu0 0.0
      %1271 = vmatprep.subr.mxu0 0.0
      %1272 = vmatpush1.msra.mxu0 0.0
      %1273 = vmatprep.subr.mxu0 0.0
      %1274 = vmatpush1.msra.mxu0 0.0
      %1275 = vmatprep.subr.mxu0 0.0
      %1276 = vmatpush1.msra.mxu0 0.0
      %1277 = vmatprep.subr.mxu0 0.0
      %1278 = vmatpush1.msra.mxu0 0.0
      %1279 = vmatprep.subr.mxu0 0.0
      %1280 = vmatpush1.msra.mxu0 0.0
      %1281 = vmatprep.subr.mxu0 0.0
      %1282 = vmatpush1.msra.mxu0 0.0
      %1283 = vmatprep.subr.mxu0 0.0
      %1284 = vmatpush1.msra.mxu0 0.0
      %1285 = vmatprep.subr.mxu0 0.0
      %1286 = vmatpush1.msra.mxu0 0.0
      %1287 = vmatprep.subr.mxu0 0.0
      %1288 = vmatpush1.msra.mxu0 0.0
      %1289 = vmatprep.subr.mxu0 0.0
      %1290 = vmatpush1.msra.mxu0 0.0
      %1291 = vmatprep.subr.mxu0 0.0
      %1292 = vmatpush1.msra.mxu0 0.0
      %1293 = vmatprep.subr.mxu0 0.0
      %1294 = vmatpush1.msra.mxu0 0.0
      %1295 = vmatprep.subr.mxu0 0.0
      %1296 = vmatpush1.msra.mxu0 0.0
      %1297 = vmatprep.mubr.f32.mxu0 0.0
      %1298 = vmatmul.mubr.f32.gmra.mrb[0].mxu0 %v1180
      %v1299 = vpop.f32.mrb[0].mxu0
      %v1300 = vadd.f32 0.0, %v1299
      %v1301 = vpop.f32.mrb[0].mxu0
      %1302 = vmatprep.mubr.f32.mxu0 0.0
      %1303 = vmatmul.mubr.f32.gmra.mrb[0].mxu0 %v1181
      %v1304 = vpop.f32.mrb[0].mxu0
      %v1305 = vadd.f32 0.0, %v1304
      %v1306 = vpop.f32.mrb[0].mxu0
      %1307 = vmatprep.mubr.f32.mxu0 0.0
      %1308 = vmatmul.mubr.f32.gmra.mrb[0].mxu0 %v1182
      %v1309 = vpop.f32.mrb[0].mxu0
      %v1310 = vadd.f32 0.0, %v1309
      %v1311 = vpop.f32.mrb[0].mxu0
      %1312 = vmatprep.mubr.f32.mxu0 0.0
      %1313 = vmatmul.mubr.f32.gmra.mrb[0].mxu0 %v1183
      %v1314 = vpop.f32.mrb[0].mxu0
      %v1315 = vadd.f32 0.0, %v1314
      %v1316 = vpop.f32.mrb[0].mxu0
      %1317 = vmatprep.mubr.f32.mxu0 0.0
      %1318 = vmatmul.mubr.f32.gmra.mrb[0].mxu0 %v1184
      %v1319 = vpop.f32.mrb[0].mxu0
      %v1320 = vadd.f32 0.0, %v1319
      %v1321 = vpop.f32.mrb[0].mxu0
      %1322 = vmatprep.mubr.f32.mxu0 0.0
      %1323 = vmatmul.mubr.f32.gmra.mrb[0].mxu0 %v1185
      %v1324 = vpop.f32.mrb[0].mxu0
      %v1325 = vadd.f32 0.0, %v1324
      %v1326 = vpop.f32.mrb[0].mxu0
      %1327 = vmatprep.mubr.f32.mxu0 0.0
      %1328 = vmatmul.mubr.f32.gmra.mrb[0].mxu0 %v1186
      %v1329 = vpop.f32.mrb[0].mxu0
      %v1330 = vadd.f32 0.0, %v1329
      %v1331 = vpop.f32.mrb[0].mxu0
      %1332 = vmatprep.mubr.f32.mxu0 0.0
      %1333 = vmatmul.mubr.f32.gmra.mrb[0].mxu0 %v1187
      %v1334 = vpop.f32.mrb[0].mxu0
      %v1335 = vadd.f32 0.0, %v1334
      %v1336 = vpop.f32.mrb[0].mxu0
      %1337 = vmatprep.mubr.f32.mxu0 0.0
      %1338 = vmatmul.mubr.f32.gmra.mrb[0].mxu0 %v1188
      %v1339 = vpop.f32.mrb[0].mxu0
      %v1340 = vadd.f32 0.0, %v1339
      %v1341 = vpop.f32.mrb[0].mxu0
      %1342 = vmatprep.mubr.f32.mxu0 0.0
      %1343 = vmatmul.mubr.f32.gmra.mrb[0].mxu0 %v1189
      %v1344 = vpop.f32.mrb[0].mxu0
      %v1345 = vadd.f32 0.0, %v1344
      %v1346 = vpop.f32.mrb[0].mxu0
      %1347 = vmatprep.mubr.f32.mxu0 0.0
      %1348 = vmatmul.mubr.f32.gmra.mrb[0].mxu0 %v1190
      %v1349 = vpop.f32.mrb[0].mxu0
      %v1350 = vadd.f32 0.0, %v1349
      %v1351 = vpop.f32.mrb[0].mxu0
      %1352 = vmatprep.mubr.f32.mxu0 0.0
      %1353 = vmatmul.mubr.f32.gmra.mrb[0].mxu0 %v1191
      %v1354 = vpop.f32.mrb[0].mxu0
      %v1355 = vadd.f32 0.0, %v1354
      %v1356 = vpop.f32.mrb[0].mxu0
      %1357 = vmatprep.mubr.f32.mxu0 0.0
      %1358 = vmatmul.mubr.f32.gmra.mrb[0].mxu0 %v1192
      %v1359 = vpop.f32.mrb[0].mxu0
      %v1360 = vadd.f32 0.0, %v1359
      %v1361 = vpop.f32.mrb[0].mxu0
      %1362 = vmatprep.mubr.f32.mxu0 0.0
      %1363 = vmatmul.mubr.f32.gmra.mrb[0].mxu0 %v1193
      %v1364 = vpop.f32.mrb[0].mxu0
      %v1365 = vadd.f32 0.0, %v1364
      %v1366 = vpop.f32.mrb[0].mxu0
      %1367 = vmatprep.mubr.f32.mxu0 0.0
      %1368 = vmatmul.mubr.f32.gmra.mrb[0].mxu0 %v1194
      %v1369 = vpop.f32.mrb[0].mxu0
      %v1370 = vadd.f32 0.0, %v1369
      %v1371 = vpop.f32.mrb[0].mxu0
      %1372 = vmatprep.mubr.f32.mxu0 0.0
      %1373 = vmatmul.mubr.f32.gmra.mrb[0].mxu0 %v1195
      %v1374 = vpop.f32.mrb[0].mxu0
      %v1375 = vadd.f32 0.0, %v1374
      %v1376 = vpop.f32.mrb[0].mxu0
      %1377 = vmatprep.mubr.f32.mxu0 0.0
      %1378 = vmatmul.mubr.f32.gmra.mrb[0].mxu0 %v1196
      %v1379 = vpop.f32.mrb[0].mxu0
      %v1380 = vadd.f32 0.0, %v1379
      %v1381 = vpop.f32.mrb[0].mxu0
      %1382 = vmatprep.mubr.f32.mxu0 0.0
      %1383 = vmatmul.mubr.f32.gmra.mrb[0].mxu0 %v1197
      %v1384 = vpop.f32.mrb[0].mxu0
      %v1385 = vadd.f32 0.0, %v1384
      %v1386 = vpop.f32.mrb[0].mxu0
      %1387 = vmatprep.mubr.f32.mxu0 0.0
      %1388 = vmatmul.mubr.f32.gmra.mrb[0].mxu0 %v1198
      %v1389 = vpop.f32.mrb[0].mxu0
      %v1390 = vadd.f32 0.0, %v1389
      %v1391 = vpop.f32.mrb[0].mxu0
      %1392 = vmatprep.mubr.f32.mxu0 0.0
      %1393 = vmatmul.mubr.f32.gmra.mrb[0].mxu0 %v1199
      %v1394 = vpop.f32.mrb[0].mxu0
      %v1395 = vadd.f32 0.0, %v1394
      %v1396 = vpop.f32.mrb[0].mxu0
      %1397 = vmatprep.mubr.f32.mxu0 0.0
      %1398 = vmatmul.mubr.f32.gmra.mrb[0].mxu0 %v1200
      %v1399 = vpop.f32.mrb[0].mxu0
      %v1400 = vadd.f32 0.0, %v1399
      %v1401 = vpop.f32.mrb[0].mxu0
      %1402 = vmatprep.mubr.f32.mxu0 0.0
      %1403 = vmatmul.mubr.f32.gmra.mrb[0].mxu0 %v1201
      %v1404 = vpop.f32.mrb[0].mxu0
      %v1405 = vadd.f32 0.0, %v1404
      %v1406 = vpop.f32.mrb[0].mxu0
      %1407 = vmatprep.mubr.f32.mxu0 0.0
      %1408 = vmatmul.mubr.f32.gmra.mrb[0].mxu0 %v1202
      %v1409 = vpop.f32.mrb[0].mxu0
      %v1410 = vadd.f32 0.0, %v1409
      %v1411 = vpop.f32.mrb[0].mxu0
      %1412 = vmatprep.mubr.f32.mxu0 0.0
      %1413 = vmatmul.mubr.f32.gmra.mrb[0].mxu0 %v1203
      %v1414 = vpop.f32.mrb[0].mxu0
      %v1415 = vadd.f32 0.0, %v1414
      %v1416 = vpop.f32.mrb[0].mxu0
      %1417 = vmatprep.mubr.f32.mxu0 0.0
      %1418 = vmatmul.mubr.f32.gmra.mrb[0].mxu0 %v1204
      %v1419 = vpop.f32.mrb[0].mxu0
      %v1420 = vadd.f32 0.0, %v1419
      %v1421 = vpop.f32.mrb[0].mxu0
      %1422 = vmatprep.mubr.f32.mxu0 0.0
      %1423 = vmatmul.mubr.f32.gmra.mrb[0].mxu0 %v1205
      %v1424 = vpop.f32.mrb[0].mxu0
      %v1425 = vadd.f32 0.0, %v1424
      %v1426 = vpop.f32.mrb[0].mxu0
      %1427 = vmatprep.mubr.f32.mxu0 0.0
      %1428 = vmatmul.mubr.f32.gmra.mrb[0].mxu0 %v1206
      %v1429 = vpop.f32.mrb[0].mxu0
      %v1430 = vadd.f32 0.0, %v1429
      %v1431 = vpop.f32.mrb[0].mxu0
      %1432 = vmatprep.mubr.f32.mxu0 0.0
      %1433 = vmatmul.mubr.f32.gmra.mrb[0].mxu0 %v1207
      %v1434 = vpop.f32.mrb[0].mxu0
      %v1435 = vadd.f32 0.0, %v1434
      %v1436 = vpop.f32.mrb[0].mxu0
      %1437 = vmatprep.mubr.f32.mxu0 0.0
      %1438 = vmatmul.mubr.f32.gmra.mrb[0].mxu0 %v1208
      %v1439 = vpop.f32.mrb[0].mxu0
      %v1440 = vadd.f32 0.0, %v1439
      %v1441 = vpop.f32.mrb[0].mxu0
      %1442 = vmatprep.mubr.f32.mxu0 0.0
      %1443 = vmatmul.mubr.f32.gmra.mrb[0].mxu0 %v1209
      %v1444 = vpop.f32.mrb[0].mxu0
      %v1445 = vadd.f32 0.0, %v1444
      %v1446 = vpop.f32.mrb[0].mxu0
      %1447 = vmatprep.mubr.f32.mxu0 0.0
      %1448 = vmatmul.mubr.f32.gmra.mrb[0].mxu0 %v1210
      %v1449 = vpop.f32.mrb[0].mxu0
      %v1450 = vadd.f32 0.0, %v1449
      %v1451 = vpop.f32.mrb[0].mxu0
      %1452 = vmatprep.mubr.f32.mxu0 0.0
      %1453 = vmatmul.mubr.f32.gmra.mrb[0].mxu0 %v1211
      %v1454 = vpop.f32.mrb[0].mxu0
      %v1455 = vadd.f32 0.0, %v1454
      %v1456 = vpop.f32.mrb[0].mxu0
      %1457 = vmatprep.mubr.f32.mxu0 0.0
      %1458 = vmatmul.mubr.f32.gmra.mrb[0].mxu0 %v1212
      %v1459 = vpop.f32.mrb[0].mxu0
      %v1460 = vadd.f32 0.0, %v1459
      %v1461 = vpop.f32.mrb[0].mxu0
      %1462 = vmatprep.mubr.f32.mxu0 0.0
      %1463 = vmatmul.mubr.f32.gmra.mrb[0].mxu0 %v1213
      %v1464 = vpop.f32.mrb[0].mxu0
      %v1465 = vadd.f32 0.0, %v1464
      %v1466 = vpop.f32.mrb[0].mxu0
      %1467 = vmatprep.mubr.f32.mxu0 0.0
      %1468 = vmatmul.mubr.f32.gmra.mrb[0].mxu0 %v1214
      %v1469 = vpop.f32.mrb[0].mxu0
      %v1470 = vadd.f32 0.0, %v1469
      %v1471 = vpop.f32.mrb[0].mxu0
      %1472 = vmatprep.mubr.f32.mxu0 0.0
      %1473 = vmatmul.mubr.f32.gmra.mrb[0].mxu0 %v1215
      %v1474 = vpop.f32.mrb[0].mxu0
      %v1475 = vadd.f32 0.0, %v1474
      %v1476 = vpop.f32.mrb[0].mxu0
      %1477 = vdwg.mxu0
      %v1478 = vadd.f32 %v1144, %v1300
      %v1479 = vadd.f32 %v1145, %v1305
      %v1480 = vadd.f32 %v1146, %v1310
      %v1481 = vadd.f32 %v1147, %v1315
      %v1482 = vadd.f32 %v1148, %v1320
      %v1483 = vadd.f32 %v1149, %v1325
      %v1484 = vadd.f32 %v1150, %v1330
      %v1485 = vadd.f32 %v1151, %v1335
      %v1486 = vadd.f32 %v1152, %v1340
      %v1487 = vadd.f32 %v1153, %v1345
      %v1488 = vadd.f32 %v1154, %v1350
      %v1489 = vadd.f32 %v1155, %v1355
      %v1490 = vadd.f32 %v1156, %v1360
      %v1491 = vadd.f32 %v1157, %v1365
      %v1492 = vadd.f32 %v1158, %v1370
      %v1493 = vadd.f32 %v1159, %v1375
      %v1494 = vadd.f32 %v1160, %v1380
      %v1495 = vadd.f32 %v1161, %v1385
      %v1496 = vadd.f32 %v1162, %v1390
      %v1497 = vadd.f32 %v1163, %v1395
      %v1498 = vadd.f32 %v1164, %v1400
      %v1499 = vadd.f32 %v1165, %v1405
      %v1500 = vadd.f32 %v1166, %v1410
      %v1501 = vadd.f32 %v1167, %v1415
      %v1502 = vadd.f32 %v1168, %v1420
      %v1503 = vadd.f32 %v1169, %v1425
      %v1504 = vadd.f32 %v1170, %v1430
      %v1505 = vadd.f32 %v1171, %v1435
      %v1506 = vadd.f32 %v1172, %v1440
      %v1507 = vadd.f32 %v1173, %v1445
      %v1508 = vadd.f32 %v1174, %v1450
      %v1509 = vadd.f32 %v1175, %v1455
      %v1510 = vadd.f32 %v1176, %v1460
      %v1511 = vadd.f32 %v1177, %v1465
      %v1512 = vadd.f32 %v1178, %v1470
      %v1513 = vadd.f32 %v1179, %v1475
      %v1514 = vld [vmem:[%s165 + $0x13] sm:$0xff]
      %v1515 = vld [vmem:[%s165 + $0x1b] sm:$0xff]
      %v1516 = vld [vmem:[%s165 + $0x23] sm:$0xff]
      %v1517 = vld [vmem:[%s165 + $0x2b] sm:$0xff]
      %v1518 = vld [vmem:[%s165 + $0x33] sm:$0xff]
      %v1519 = vld [vmem:[%s165 + $0x3b] sm:$0xff]
      %v1520 = vld [vmem:[%s165 + $0x43] sm:$0xff]
      %v1521 = vld [vmem:[%s165 + $0x4b] sm:$0xff]
      %v1522 = vld [vmem:[%s165 + $0x53] sm:$0xff]
      %v1523 = vld [vmem:[%s165 + $0x5b] sm:$0xff]
      %v1524 = vld [vmem:[%s165 + $0x63] sm:$0xff]
      %v1525 = vld [vmem:[%s165 + $0x6b] sm:$0xff]
      %v1526 = vld [vmem:[%s165 + $0x73] sm:$0xff]
      %v1527 = vld [vmem:[%s165 + $0x7b] sm:$0xff]
      %v1528 = vld [vmem:[%s165 + $0x83] sm:$0xff]
      %v1529 = vld [vmem:[%s165 + $0x8b] sm:$0xff]
      %v1530 = vld [vmem:[%s165 + $0x93] sm:$0xff]
      %v1531 = vld [vmem:[%s165 + $0x9b] sm:$0xff]
      %v1532 = vld [vmem:[%s165 + $0xa3] sm:$0xff]
      %v1533 = vld [vmem:[%s165 + $0xab] sm:$0xff]
      %v1534 = vld [vmem:[%s165 + $0xb3] sm:$0xff]
      %v1535 = vld [vmem:[%s165 + $0xbb] sm:$0xff]
      %v1536 = vld [vmem:[%s165 + $0xc3] sm:$0xff]
      %v1537 = vld [vmem:[%s165 + $0xcb] sm:$0xff]
      %v1538 = vld [vmem:[%s165 + $0xd3] sm:$0xff]
      %v1539 = vld [vmem:[%s165 + $0xdb] sm:$0xff]
      %v1540 = vld [vmem:[%s165 + $0xe3] sm:$0xff]
      %v1541 = vld [vmem:[%s165 + $0xeb] sm:$0xff]
      %v1542 = vld [vmem:[%s165 + $0xf3] sm:$0xff]
      %v1543 = vld [vmem:[%s165 + $0xfb] sm:$0xff]
      %v1544 = vld [vmem:[%s165 + $0x103] sm:$0xff]
      %v1545 = vld [vmem:[%s165 + $0x10b] sm:$0xff]
      %v1546 = vld [vmem:[%s165 + $0x113] sm:$0xff]
      %v1547 = vld [vmem:[%s165 + $0x11b] sm:$0xff]
      %v1548 = vld [vmem:[%s165 + $0x123] sm:$0xff]
      %v1549 = vld [vmem:[%s165 + $0x12b] sm:$0xff]
      %s1550 = scalar_lea.vmem %s1, 512
      %v1551 = vld [vmem:[%s1550] sm:$0xff]
      %v1552 = vld [vmem:[%s1550 + $0x8] sm:$0xff]
      %v1553 = vld [vmem:[%s1550 + $0x10] sm:$0xff]
      %v1554 = vld [vmem:[%s1550 + $0x18] sm:$0xff]
      %v1555 = vld [vmem:[%s1550 + $0x20] sm:$0xff]
      %v1556 = vld [vmem:[%s1550 + $0x28] sm:$0xff]
      %v1557 = vld [vmem:[%s1550 + $0x30] sm:$0xff]
      %v1558 = vld [vmem:[%s1550 + $0x38] sm:$0xff]
      %v1559 = vld [vmem:[%s1550 + $0x40] sm:$0xff]
      %v1560 = vld [vmem:[%s1550 + $0x48] sm:$0xff]
      %v1561 = vld [vmem:[%s1550 + $0x50] sm:$0xff]
      %v1562 = vld [vmem:[%s1550 + $0x58] sm:$0xff]
      %v1563 = vld [vmem:[%s1550 + $0x60] sm:$0xff]
      %v1564 = vld [vmem:[%s1550 + $0x68] sm:$0xff]
      %v1565 = vld [vmem:[%s1550 + $0x70] sm:$0xff]
      %v1566 = vld [vmem:[%s1550 + $0x78] sm:$0xff]
      %1567 = vmatprep.subr.mxu0 0.0
      %1568 = vmatpush1.msra.mxu0 %v1551
      %1569 = vmatprep.subr.mxu0 0.0
      %1570 = vmatpush1.msra.mxu0 %v1552
      %1571 = vmatprep.subr.mxu0 0.0
      %1572 = vmatpush1.msra.mxu0 %v1553
      %1573 = vmatprep.subr.mxu0 0.0
      %1574 = vmatpush1.msra.mxu0 %v1554
      %1575 = vmatprep.subr.mxu0 0.0
      %1576 = vmatpush1.msra.mxu0 %v1555
      %1577 = vmatprep.subr.mxu0 0.0
      %1578 = vmatpush1.msra.mxu0 %v1556
      %1579 = vmatprep.subr.mxu0 0.0
      %1580 = vmatpush1.msra.mxu0 %v1557
      %1581 = vmatprep.subr.mxu0 0.0
      %1582 = vmatpush1.msra.mxu0 %v1558
      %1583 = vmatprep.subr.mxu0 0.0
      %1584 = vmatpush1.msra.mxu0 %v1559
      %1585 = vmatprep.subr.mxu0 0.0
      %1586 = vmatpush1.msra.mxu0 %v1560
      %1587 = vmatprep.subr.mxu0 0.0
      %1588 = vmatpush1.msra.mxu0 %v1561
      %1589 = vmatprep.subr.mxu0 0.0
      %1590 = vmatpush1.msra.mxu0 %v1562
      %1591 = vmatprep.subr.mxu0 0.0
      %1592 = vmatpush1.msra.mxu0 %v1563
      %1593 = vmatprep.subr.mxu0 0.0
      %1594 = vmatpush1.msra.mxu0 %v1564
      %1595 = vmatprep.subr.mxu0 0.0
      %1596 = vmatpush1.msra.mxu0 %v1565
      %1597 = vmatprep.subr.mxu0 0.0
      %1598 = vmatpush1.msra.mxu0 %v1566
      %1599 = vmatprep.subr.mxu0 0.0
      %1600 = vmatpush1.msra.mxu0 0.0
      %1601 = vmatprep.subr.mxu0 0.0
      %1602 = vmatpush1.msra.mxu0 0.0
      %1603 = vmatprep.subr.mxu0 0.0
      %1604 = vmatpush1.msra.mxu0 0.0
      %1605 = vmatprep.subr.mxu0 0.0
      %1606 = vmatpush1.msra.mxu0 0.0
      %1607 = vmatprep.subr.mxu0 0.0
      %1608 = vmatpush1.msra.mxu0 0.0
      %1609 = vmatprep.subr.mxu0 0.0
      %1610 = vmatpush1.msra.mxu0 0.0
      %1611 = vmatprep.subr.mxu0 0.0
      %1612 = vmatpush1.msra.mxu0 0.0
      %1613 = vmatprep.subr.mxu0 0.0
      %1614 = vmatpush1.msra.mxu0 0.0
      %1615 = vmatprep.subr.mxu0 0.0
      %1616 = vmatpush1.msra.mxu0 0.0
      %1617 = vmatprep.subr.mxu0 0.0
      %1618 = vmatpush1.msra.mxu0 0.0
      %1619 = vmatprep.subr.mxu0 0.0
      %1620 = vmatpush1.msra.mxu0 0.0
      %1621 = vmatprep.subr.mxu0 0.0
      %1622 = vmatpush1.msra.mxu0 0.0
      %1623 = vmatprep.subr.mxu0 0.0
      %1624 = vmatpush1.msra.mxu0 0.0
      %1625 = vmatprep.subr.mxu0 0.0
      %1626 = vmatpush1.msra.mxu0 0.0
      %1627 = vmatprep.subr.mxu0 0.0
      %1628 = vmatpush1.msra.mxu0 0.0
      %1629 = vmatprep.subr.mxu0 0.0
      %1630 = vmatpush1.msra.mxu0 0.0
      %1631 = vmatprep.mubr.f32.mxu0 0.0
      %1632 = vmatmul.mubr.f32.gmra.mrb[0].mxu0 %v1514
      %v1633 = vpop.f32.mrb[0].mxu0
      %v1634 = vadd.f32 0.0, %v1633
      %v1635 = vpop.f32.mrb[0].mxu0
      %1636 = vmatprep.mubr.f32.mxu0 0.0
      %1637 = vmatmul.mubr.f32.gmra.mrb[0].mxu0 %v1515
      %v1638 = vpop.f32.mrb[0].mxu0
      %v1639 = vadd.f32 0.0, %v1638
      %v1640 = vpop.f32.mrb[0].mxu0
      %1641 = vmatprep.mubr.f32.mxu0 0.0
      %1642 = vmatmul.mubr.f32.gmra.mrb[0].mxu0 %v1516
      %v1643 = vpop.f32.mrb[0].mxu0
      %v1644 = vadd.f32 0.0, %v1643
      %v1645 = vpop.f32.mrb[0].mxu0
      %1646 = vmatprep.mubr.f32.mxu0 0.0
      %1647 = vmatmul.mubr.f32.gmra.mrb[0].mxu0 %v1517
      %v1648 = vpop.f32.mrb[0].mxu0
      %v1649 = vadd.f32 0.0, %v1648
      %v1650 = vpop.f32.mrb[0].mxu0
      %1651 = vmatprep.mubr.f32.mxu0 0.0
      %1652 = vmatmul.mubr.f32.gmra.mrb[0].mxu0 %v1518
      %v1653 = vpop.f32.mrb[0].mxu0
      %v1654 = vadd.f32 0.0, %v1653
      %v1655 = vpop.f32.mrb[0].mxu0
      %1656 = vmatprep.mubr.f32.mxu0 0.0
      %1657 = vmatmul.mubr.f32.gmra.mrb[0].mxu0 %v1519
      %v1658 = vpop.f32.mrb[0].mxu0
      %v1659 = vadd.f32 0.0, %v1658
      %v1660 = vpop.f32.mrb[0].mxu0
      %1661 = vmatprep.mubr.f32.mxu0 0.0
      %1662 = vmatmul.mubr.f32.gmra.mrb[0].mxu0 %v1520
      %v1663 = vpop.f32.mrb[0].mxu0
      %v1664 = vadd.f32 0.0, %v1663
      %v1665 = vpop.f32.mrb[0].mxu0
      %1666 = vmatprep.mubr.f32.mxu0 0.0
      %1667 = vmatmul.mubr.f32.gmra.mrb[0].mxu0 %v1521
      %v1668 = vpop.f32.mrb[0].mxu0
      %v1669 = vadd.f32 0.0, %v1668
      %v1670 = vpop.f32.mrb[0].mxu0
      %1671 = vmatprep.mubr.f32.mxu0 0.0
      %1672 = vmatmul.mubr.f32.gmra.mrb[0].mxu0 %v1522
      %v1673 = vpop.f32.mrb[0].mxu0
      %v1674 = vadd.f32 0.0, %v1673
      %v1675 = vpop.f32.mrb[0].mxu0
      %1676 = vmatprep.mubr.f32.mxu0 0.0
      %1677 = vmatmul.mubr.f32.gmra.mrb[0].mxu0 %v1523
      %v1678 = vpop.f32.mrb[0].mxu0
      %v1679 = vadd.f32 0.0, %v1678
      %v1680 = vpop.f32.mrb[0].mxu0
      %1681 = vmatprep.mubr.f32.mxu0 0.0
      %1682 = vmatmul.mubr.f32.gmra.mrb[0].mxu0 %v1524
      %v1683 = vpop.f32.mrb[0].mxu0
      %v1684 = vadd.f32 0.0, %v1683
      %v1685 = vpop.f32.mrb[0].mxu0
      %1686 = vmatprep.mubr.f32.mxu0 0.0
      %1687 = vmatmul.mubr.f32.gmra.mrb[0].mxu0 %v1525
      %v1688 = vpop.f32.mrb[0].mxu0
      %v1689 = vadd.f32 0.0, %v1688
      %v1690 = vpop.f32.mrb[0].mxu0
      %1691 = vmatprep.mubr.f32.mxu0 0.0
      %1692 = vmatmul.mubr.f32.gmra.mrb[0].mxu0 %v1526
      %v1693 = vpop.f32.mrb[0].mxu0
      %v1694 = vadd.f32 0.0, %v1693
      %v1695 = vpop.f32.mrb[0].mxu0
      %1696 = vmatprep.mubr.f32.mxu0 0.0
      %1697 = vmatmul.mubr.f32.gmra.mrb[0].mxu0 %v1527
      %v1698 = vpop.f32.mrb[0].mxu0
      %v1699 = vadd.f32 0.0, %v1698
      %v1700 = vpop.f32.mrb[0].mxu0
      %1701 = vmatprep.mubr.f32.mxu0 0.0
      %1702 = vmatmul.mubr.f32.gmra.mrb[0].mxu0 %v1528
      %v1703 = vpop.f32.mrb[0].mxu0
      %v1704 = vadd.f32 0.0, %v1703
      %v1705 = vpop.f32.mrb[0].mxu0
      %1706 = vmatprep.mubr.f32.mxu0 0.0
      %1707 = vmatmul.mubr.f32.gmra.mrb[0].mxu0 %v1529
      %v1708 = vpop.f32.mrb[0].mxu0
      %v1709 = vadd.f32 0.0, %v1708
      %v1710 = vpop.f32.mrb[0].mxu0
      %1711 = vmatprep.mubr.f32.mxu0 0.0
      %1712 = vmatmul.mubr.f32.gmra.mrb[0].mxu0 %v1530
      %v1713 = vpop.f32.mrb[0].mxu0
      %v1714 = vadd.f32 0.0, %v1713
      %v1715 = vpop.f32.mrb[0].mxu0
      %1716 = vmatprep.mubr.f32.mxu0 0.0
      %1717 = vmatmul.mubr.f32.gmra.mrb[0].mxu0 %v1531
      %v1718 = vpop.f32.mrb[0].mxu0
      %v1719 = vadd.f32 0.0, %v1718
      %v1720 = vpop.f32.mrb[0].mxu0
      %1721 = vmatprep.mubr.f32.mxu0 0.0
      %1722 = vmatmul.mubr.f32.gmra.mrb[0].mxu0 %v1532
      %v1723 = vpop.f32.mrb[0].mxu0
      %v1724 = vadd.f32 0.0, %v1723
      %v1725 = vpop.f32.mrb[0].mxu0
      %1726 = vmatprep.mubr.f32.mxu0 0.0
      %1727 = vmatmul.mubr.f32.gmra.mrb[0].mxu0 %v1533
      %v1728 = vpop.f32.mrb[0].mxu0
      %v1729 = vadd.f32 0.0, %v1728
      %v1730 = vpop.f32.mrb[0].mxu0
      %1731 = vmatprep.mubr.f32.mxu0 0.0
      %1732 = vmatmul.mubr.f32.gmra.mrb[0].mxu0 %v1534
      %v1733 = vpop.f32.mrb[0].mxu0
      %v1734 = vadd.f32 0.0, %v1733
      %v1735 = vpop.f32.mrb[0].mxu0
      %1736 = vmatprep.mubr.f32.mxu0 0.0
      %1737 = vmatmul.mubr.f32.gmra.mrb[0].mxu0 %v1535
      %v1738 = vpop.f32.mrb[0].mxu0
      %v1739 = vadd.f32 0.0, %v1738
      %v1740 = vpop.f32.mrb[0].mxu0
      %1741 = vmatprep.mubr.f32.mxu0 0.0
      %1742 = vmatmul.mubr.f32.gmra.mrb[0].mxu0 %v1536
      %v1743 = vpop.f32.mrb[0].mxu0
      %v1744 = vadd.f32 0.0, %v1743
      %v1745 = vpop.f32.mrb[0].mxu0
      %1746 = vmatprep.mubr.f32.mxu0 0.0
      %1747 = vmatmul.mubr.f32.gmra.mrb[0].mxu0 %v1537
      %v1748 = vpop.f32.mrb[0].mxu0
      %v1749 = vadd.f32 0.0, %v1748
      %v1750 = vpop.f32.mrb[0].mxu0
      %1751 = vmatprep.mubr.f32.mxu0 0.0
      %1752 = vmatmul.mubr.f32.gmra.mrb[0].mxu0 %v1538
      %v1753 = vpop.f32.mrb[0].mxu0
      %v1754 = vadd.f32 0.0, %v1753
      %v1755 = vpop.f32.mrb[0].mxu0
      %1756 = vmatprep.mubr.f32.mxu0 0.0
      %1757 = vmatmul.mubr.f32.gmra.mrb[0].mxu0 %v1539
      %v1758 = vpop.f32.mrb[0].mxu0
      %v1759 = vadd.f32 0.0, %v1758
      %v1760 = vpop.f32.mrb[0].mxu0
      %1761 = vmatprep.mubr.f32.mxu0 0.0
      %1762 = vmatmul.mubr.f32.gmra.mrb[0].mxu0 %v1540
      %v1763 = vpop.f32.mrb[0].mxu0
      %v1764 = vadd.f32 0.0, %v1763
      %v1765 = vpop.f32.mrb[0].mxu0
      %1766 = vmatprep.mubr.f32.mxu0 0.0
      %1767 = vmatmul.mubr.f32.gmra.mrb[0].mxu0 %v1541
      %v1768 = vpop.f32.mrb[0].mxu0
      %v1769 = vadd.f32 0.0, %v1768
      %v1770 = vpop.f32.mrb[0].mxu0
      %1771 = vmatprep.mubr.f32.mxu0 0.0
      %1772 = vmatmul.mubr.f32.gmra.mrb[0].mxu0 %v1542
      %v1773 = vpop.f32.mrb[0].mxu0
      %v1774 = vadd.f32 0.0, %v1773
      %v1775 = vpop.f32.mrb[0].mxu0
      %1776 = vmatprep.mubr.f32.mxu0 0.0
      %1777 = vmatmul.mubr.f32.gmra.mrb[0].mxu0 %v1543
      %v1778 = vpop.f32.mrb[0].mxu0
      %v1779 = vadd.f32 0.0, %v1778
      %v1780 = vpop.f32.mrb[0].mxu0
      %1781 = vmatprep.mubr.f32.mxu0 0.0
      %1782 = vmatmul.mubr.f32.gmra.mrb[0].mxu0 %v1544
      %v1783 = vpop.f32.mrb[0].mxu0
      %v1784 = vadd.f32 0.0, %v1783
      %v1785 = vpop.f32.mrb[0].mxu0
      %1786 = vmatprep.mubr.f32.mxu0 0.0
      %1787 = vmatmul.mubr.f32.gmra.mrb[0].mxu0 %v1545
      %v1788 = vpop.f32.mrb[0].mxu0
      %v1789 = vadd.f32 0.0, %v1788
      %v1790 = vpop.f32.mrb[0].mxu0
      %1791 = vmatprep.mubr.f32.mxu0 0.0
      %1792 = vmatmul.mubr.f32.gmra.mrb[0].mxu0 %v1546
      %v1793 = vpop.f32.mrb[0].mxu0
      %v1794 = vadd.f32 0.0, %v1793
      %v1795 = vpop.f32.mrb[0].mxu0
      %1796 = vmatprep.mubr.f32.mxu0 0.0
      %1797 = vmatmul.mubr.f32.gmra.mrb[0].mxu0 %v1547
      %v1798 = vpop.f32.mrb[0].mxu0
      %v1799 = vadd.f32 0.0, %v1798
      %v1800 = vpop.f32.mrb[0].mxu0
      %1801 = vmatprep.mubr.f32.mxu0 0.0
      %1802 = vmatmul.mubr.f32.gmra.mrb[0].mxu0 %v1548
      %v1803 = vpop.f32.mrb[0].mxu0
      %v1804 = vadd.f32 0.0, %v1803
      %v1805 = vpop.f32.mrb[0].mxu0
      %1806 = vmatprep.mubr.f32.mxu0 0.0
      %1807 = vmatmul.mubr.f32.gmra.mrb[0].mxu0 %v1549
      %v1808 = vpop.f32.mrb[0].mxu0
      %v1809 = vadd.f32 0.0, %v1808
      %v1810 = vpop.f32.mrb[0].mxu0
      %1811 = vdwg.mxu0
      %v1812 = vadd.f32 %v1478, %v1634
      %v1813 = vadd.f32 %v1479, %v1639
      %v1814 = vadd.f32 %v1480, %v1644
      %v1815 = vadd.f32 %v1481, %v1649
      %v1816 = vadd.f32 %v1482, %v1654
      %v1817 = vadd.f32 %v1483, %v1659
      %v1818 = vadd.f32 %v1484, %v1664
      %v1819 = vadd.f32 %v1485, %v1669
      %v1820 = vadd.f32 %v1486, %v1674
      %v1821 = vadd.f32 %v1487, %v1679
      %v1822 = vadd.f32 %v1488, %v1684
      %v1823 = vadd.f32 %v1489, %v1689
      %v1824 = vadd.f32 %v1490, %v1694
      %v1825 = vadd.f32 %v1491, %v1699
      %v1826 = vadd.f32 %v1492, %v1704
      %v1827 = vadd.f32 %v1493, %v1709
      %v1828 = vadd.f32 %v1494, %v1714
      %v1829 = vadd.f32 %v1495, %v1719
      %v1830 = vadd.f32 %v1496, %v1724
      %v1831 = vadd.f32 %v1497, %v1729
      %v1832 = vadd.f32 %v1498, %v1734
      %v1833 = vadd.f32 %v1499, %v1739
      %v1834 = vadd.f32 %v1500, %v1744
      %v1835 = vadd.f32 %v1501, %v1749
      %v1836 = vadd.f32 %v1502, %v1754
      %v1837 = vadd.f32 %v1503, %v1759
      %v1838 = vadd.f32 %v1504, %v1764
      %v1839 = vadd.f32 %v1505, %v1769
      %v1840 = vadd.f32 %v1506, %v1774
      %v1841 = vadd.f32 %v1507, %v1779
      %v1842 = vadd.f32 %v1508, %v1784
      %v1843 = vadd.f32 %v1509, %v1789
      %v1844 = vadd.f32 %v1510, %v1794
      %v1845 = vadd.f32 %v1511, %v1799
      %v1846 = vadd.f32 %v1512, %v1804
      %v1847 = vadd.f32 %v1513, %v1809
      %v1848 = vld [vmem:[%s165 + $0x14] sm:$0xff]
      %v1849 = vld [vmem:[%s165 + $0x1c] sm:$0xff]
      %v1850 = vld [vmem:[%s165 + $0x24] sm:$0xff]
      %v1851 = vld [vmem:[%s165 + $0x2c] sm:$0xff]
      %v1852 = vld [vmem:[%s165 + $0x34] sm:$0xff]
      %v1853 = vld [vmem:[%s165 + $0x3c] sm:$0xff]
      %v1854 = vld [vmem:[%s165 + $0x44] sm:$0xff]
      %v1855 = vld [vmem:[%s165 + $0x4c] sm:$0xff]
      %v1856 = vld [vmem:[%s165 + $0x54] sm:$0xff]
      %v1857 = vld [vmem:[%s165 + $0x5c] sm:$0xff]
      %v1858 = vld [vmem:[%s165 + $0x64] sm:$0xff]
      %v1859 = vld [vmem:[%s165 + $0x6c] sm:$0xff]
      %v1860 = vld [vmem:[%s165 + $0x74] sm:$0xff]
      %v1861 = vld [vmem:[%s165 + $0x7c] sm:$0xff]
      %v1862 = vld [vmem:[%s165 + $0x84] sm:$0xff]
      %v1863 = vld [vmem:[%s165 + $0x8c] sm:$0xff]
      %v1864 = vld [vmem:[%s165 + $0x94] sm:$0xff]
      %v1865 = vld [vmem:[%s165 + $0x9c] sm:$0xff]
      %v1866 = vld [vmem:[%s165 + $0xa4] sm:$0xff]
      %v1867 = vld [vmem:[%s165 + $0xac] sm:$0xff]
      %v1868 = vld [vmem:[%s165 + $0xb4] sm:$0xff]
      %v1869 = vld [vmem:[%s165 + $0xbc] sm:$0xff]
      %v1870 = vld [vmem:[%s165 + $0xc4] sm:$0xff]
      %v1871 = vld [vmem:[%s165 + $0xcc] sm:$0xff]
      %v1872 = vld [vmem:[%s165 + $0xd4] sm:$0xff]
      %v1873 = vld [vmem:[%s165 + $0xdc] sm:$0xff]
      %v1874 = vld [vmem:[%s165 + $0xe4] sm:$0xff]
      %v1875 = vld [vmem:[%s165 + $0xec] sm:$0xff]
      %v1876 = vld [vmem:[%s165 + $0xf4] sm:$0xff]
      %v1877 = vld [vmem:[%s165 + $0xfc] sm:$0xff]
      %v1878 = vld [vmem:[%s165 + $0x104] sm:$0xff]
      %v1879 = vld [vmem:[%s165 + $0x10c] sm:$0xff]
      %v1880 = vld [vmem:[%s165 + $0x114] sm:$0xff]
      %v1881 = vld [vmem:[%s165 + $0x11c] sm:$0xff]
      %v1882 = vld [vmem:[%s165 + $0x124] sm:$0xff]
      %v1883 = vld [vmem:[%s165 + $0x12c] sm:$0xff]
      %s1884 = scalar_lea.vmem %s1, 640
      %v1885 = vld [vmem:[%s1884] sm:$0xff]
      %v1886 = vld [vmem:[%s1884 + $0x8] sm:$0xff]
      %v1887 = vld [vmem:[%s1884 + $0x10] sm:$0xff]
      %v1888 = vld [vmem:[%s1884 + $0x18] sm:$0xff]
      %v1889 = vld [vmem:[%s1884 + $0x20] sm:$0xff]
      %v1890 = vld [vmem:[%s1884 + $0x28] sm:$0xff]
      %v1891 = vld [vmem:[%s1884 + $0x30] sm:$0xff]
      %v1892 = vld [vmem:[%s1884 + $0x38] sm:$0xff]
      %v1893 = vld [vmem:[%s1884 + $0x40] sm:$0xff]
      %v1894 = vld [vmem:[%s1884 + $0x48] sm:$0xff]
      %v1895 = vld [vmem:[%s1884 + $0x50] sm:$0xff]
      %v1896 = vld [vmem:[%s1884 + $0x58] sm:$0xff]
      %v1897 = vld [vmem:[%s1884 + $0x60] sm:$0xff]
      %v1898 = vld [vmem:[%s1884 + $0x68] sm:$0xff]
      %v1899 = vld [vmem:[%s1884 + $0x70] sm:$0xff]
      %v1900 = vld [vmem:[%s1884 + $0x78] sm:$0xff]
      %1901 = vmatprep.subr.mxu0 0.0
      %1902 = vmatpush1.msra.mxu0 %v1885
      %1903 = vmatprep.subr.mxu0 0.0
      %1904 = vmatpush1.msra.mxu0 %v1886
      %1905 = vmatprep.subr.mxu0 0.0
      %1906 = vmatpush1.msra.mxu0 %v1887
      %1907 = vmatprep.subr.mxu0 0.0
      %1908 = vmatpush1.msra.mxu0 %v1888
      %1909 = vmatprep.subr.mxu0 0.0
      %1910 = vmatpush1.msra.mxu0 %v1889
      %1911 = vmatprep.subr.mxu0 0.0
      %1912 = vmatpush1.msra.mxu0 %v1890
      %1913 = vmatprep.subr.mxu0 0.0
      %1914 = vmatpush1.msra.mxu0 %v1891
      %1915 = vmatprep.subr.mxu0 0.0
      %1916 = vmatpush1.msra.mxu0 %v1892
      %1917 = vmatprep.subr.mxu0 0.0
      %1918 = vmatpush1.msra.mxu0 %v1893
      %1919 = vmatprep.subr.mxu0 0.0
      %1920 = vmatpush1.msra.mxu0 %v1894
      %1921 = vmatprep.subr.mxu0 0.0
      %1922 = vmatpush1.msra.mxu0 %v1895
      %1923 = vmatprep.subr.mxu0 0.0
      %1924 = vmatpush1.msra.mxu0 %v1896
      %1925 = vmatprep.subr.mxu0 0.0
      %1926 = vmatpush1.msra.mxu0 %v1897
      %1927 = vmatprep.subr.mxu0 0.0
      %1928 = vmatpush1.msra.mxu0 %v1898
      %1929 = vmatprep.subr.mxu0 0.0
      %1930 = vmatpush1.msra.mxu0 %v1899
      %1931 = vmatprep.subr.mxu0 0.0
      %1932 = vmatpush1.msra.mxu0 %v1900
      %1933 = vmatprep.subr.mxu0 0.0
      %1934 = vmatpush1.msra.mxu0 0.0
      %1935 = vmatprep.subr.mxu0 0.0
      %1936 = vmatpush1.msra.mxu0 0.0
      %1937 = vmatprep.subr.mxu0 0.0
      %1938 = vmatpush1.msra.mxu0 0.0
      %1939 = vmatprep.subr.mxu0 0.0
      %1940 = vmatpush1.msra.mxu0 0.0
      %1941 = vmatprep.subr.mxu0 0.0
      %1942 = vmatpush1.msra.mxu0 0.0
      %1943 = vmatprep.subr.mxu0 0.0
      %1944 = vmatpush1.msra.mxu0 0.0
      %1945 = vmatprep.subr.mxu0 0.0
      %1946 = vmatpush1.msra.mxu0 0.0
      %1947 = vmatprep.subr.mxu0 0.0
      %1948 = vmatpush1.msra.mxu0 0.0
      %1949 = vmatprep.subr.mxu0 0.0
      %1950 = vmatpush1.msra.mxu0 0.0
      %1951 = vmatprep.subr.mxu0 0.0
      %1952 = vmatpush1.msra.mxu0 0.0
      %1953 = vmatprep.subr.mxu0 0.0
      %1954 = vmatpush1.msra.mxu0 0.0
      %1955 = vmatprep.subr.mxu0 0.0
      %1956 = vmatpush1.msra.mxu0 0.0
      %1957 = vmatprep.subr.mxu0 0.0
      %1958 = vmatpush1.msra.mxu0 0.0
      %1959 = vmatprep.subr.mxu0 0.0
      %1960 = vmatpush1.msra.mxu0 0.0
      %1961 = vmatprep.subr.mxu0 0.0
      %1962 = vmatpush1.msra.mxu0 0.0
      %1963 = vmatprep.subr.mxu0 0.0
      %1964 = vmatpush1.msra.mxu0 0.0
      %1965 = vmatprep.mubr.f32.mxu0 0.0
      %1966 = vmatmul.mubr.f32.gmra.mrb[0].mxu0 %v1848
      %v1967 = vpop.f32.mrb[0].mxu0
      %v1968 = vadd.f32 0.0, %v1967
      %v1969 = vpop.f32.mrb[0].mxu0
      %1970 = vmatprep.mubr.f32.mxu0 0.0
      %1971 = vmatmul.mubr.f32.gmra.mrb[0].mxu0 %v1849
      %v1972 = vpop.f32.mrb[0].mxu0
      %v1973 = vadd.f32 0.0, %v1972
      %v1974 = vpop.f32.mrb[0].mxu0
      %1975 = vmatprep.mubr.f32.mxu0 0.0
      %1976 = vmatmul.mubr.f32.gmra.mrb[0].mxu0 %v1850
      %v1977 = vpop.f32.mrb[0].mxu0
      %v1978 = vadd.f32 0.0, %v1977
      %v1979 = vpop.f32.mrb[0].mxu0
      %1980 = vmatprep.mubr.f32.mxu0 0.0
      %1981 = vmatmul.mubr.f32.gmra.mrb[0].mxu0 %v1851
      %v1982 = vpop.f32.mrb[0].mxu0
      %v1983 = vadd.f32 0.0, %v1982
      %v1984 = vpop.f32.mrb[0].mxu0
      %1985 = vmatprep.mubr.f32.mxu0 0.0
      %1986 = vmatmul.mubr.f32.gmra.mrb[0].mxu0 %v1852
      %v1987 = vpop.f32.mrb[0].mxu0
      %v1988 = vadd.f32 0.0, %v1987
      %v1989 = vpop.f32.mrb[0].mxu0
      %1990 = vmatprep.mubr.f32.mxu0 0.0
      %1991 = vmatmul.mubr.f32.gmra.mrb[0].mxu0 %v1853
      %v1992 = vpop.f32.mrb[0].mxu0
      %v1993 = vadd.f32 0.0, %v1992
      %v1994 = vpop.f32.mrb[0].mxu0
      %1995 = vmatprep.mubr.f32.mxu0 0.0
      %1996 = vmatmul.mubr.f32.gmra.mrb[0].mxu0 %v1854
      %v1997 = vpop.f32.mrb[0].mxu0
      %v1998 = vadd.f32 0.0, %v1997
      %v1999 = vpop.f32.mrb[0].mxu0
      %2000 = vmatprep.mubr.f32.mxu0 0.0
      %2001 = vmatmul.mubr.f32.gmra.mrb[0].mxu0 %v1855
      %v2002 = vpop.f32.mrb[0].mxu0
      %v2003 = vadd.f32 0.0, %v2002
      %v2004 = vpop.f32.mrb[0].mxu0
      %2005 = vmatprep.mubr.f32.mxu0 0.0
      %2006 = vmatmul.mubr.f32.gmra.mrb[0].mxu0 %v1856
      %v2007 = vpop.f32.mrb[0].mxu0
      %v2008 = vadd.f32 0.0, %v2007
      %v2009 = vpop.f32.mrb[0].mxu0
      %2010 = vmatprep.mubr.f32.mxu0 0.0
      %2011 = vmatmul.mubr.f32.gmra.mrb[0].mxu0 %v1857
      %v2012 = vpop.f32.mrb[0].mxu0
      %v2013 = vadd.f32 0.0, %v2012
      %v2014 = vpop.f32.mrb[0].mxu0
      %2015 = vmatprep.mubr.f32.mxu0 0.0
      %2016 = vmatmul.mubr.f32.gmra.mrb[0].mxu0 %v1858
      %v2017 = vpop.f32.mrb[0].mxu0
      %v2018 = vadd.f32 0.0, %v2017
      %v2019 = vpop.f32.mrb[0].mxu0
      %2020 = vmatprep.mubr.f32.mxu0 0.0
      %2021 = vmatmul.mubr.f32.gmra.mrb[0].mxu0 %v1859
      %v2022 = vpop.f32.mrb[0].mxu0
      %v2023 = vadd.f32 0.0, %v2022
      %v2024 = vpop.f32.mrb[0].mxu0
      %2025 = vmatprep.mubr.f32.mxu0 0.0
      %2026 = vmatmul.mubr.f32.gmra.mrb[0].mxu0 %v1860
      %v2027 = vpop.f32.mrb[0].mxu0
      %v2028 = vadd.f32 0.0, %v2027
      %v2029 = vpop.f32.mrb[0].mxu0
      %2030 = vmatprep.mubr.f32.mxu0 0.0
      %2031 = vmatmul.mubr.f32.gmra.mrb[0].mxu0 %v1861
      %v2032 = vpop.f32.mrb[0].mxu0
      %v2033 = vadd.f32 0.0, %v2032
      %v2034 = vpop.f32.mrb[0].mxu0
      %2035 = vmatprep.mubr.f32.mxu0 0.0
      %2036 = vmatmul.mubr.f32.gmra.mrb[0].mxu0 %v1862
      %v2037 = vpop.f32.mrb[0].mxu0
      %v2038 = vadd.f32 0.0, %v2037
      %v2039 = vpop.f32.mrb[0].mxu0
      %2040 = vmatprep.mubr.f32.mxu0 0.0
      %2041 = vmatmul.mubr.f32.gmra.mrb[0].mxu0 %v1863
      %v2042 = vpop.f32.mrb[0].mxu0
      %v2043 = vadd.f32 0.0, %v2042
      %v2044 = vpop.f32.mrb[0].mxu0
      %2045 = vmatprep.mubr.f32.mxu0 0.0
      %2046 = vmatmul.mubr.f32.gmra.mrb[0].mxu0 %v1864
      %v2047 = vpop.f32.mrb[0].mxu0
      %v2048 = vadd.f32 0.0, %v2047
      %v2049 = vpop.f32.mrb[0].mxu0
      %2050 = vmatprep.mubr.f32.mxu0 0.0
      %2051 = vmatmul.mubr.f32.gmra.mrb[0].mxu0 %v1865
      %v2052 = vpop.f32.mrb[0].mxu0
      %v2053 = vadd.f32 0.0, %v2052
      %v2054 = vpop.f32.mrb[0].mxu0
      %2055 = vmatprep.mubr.f32.mxu0 0.0
      %2056 = vmatmul.mubr.f32.gmra.mrb[0].mxu0 %v1866
      %v2057 = vpop.f32.mrb[0].mxu0
      %v2058 = vadd.f32 0.0, %v2057
      %v2059 = vpop.f32.mrb[0].mxu0
      %2060 = vmatprep.mubr.f32.mxu0 0.0
      %2061 = vmatmul.mubr.f32.gmra.mrb[0].mxu0 %v1867
      %v2062 = vpop.f32.mrb[0].mxu0
      %v2063 = vadd.f32 0.0, %v2062
      %v2064 = vpop.f32.mrb[0].mxu0
      %2065 = vmatprep.mubr.f32.mxu0 0.0
      %2066 = vmatmul.mubr.f32.gmra.mrb[0].mxu0 %v1868
      %v2067 = vpop.f32.mrb[0].mxu0
      %v2068 = vadd.f32 0.0, %v2067
      %v2069 = vpop.f32.mrb[0].mxu0
      %2070 = vmatprep.mubr.f32.mxu0 0.0
      %2071 = vmatmul.mubr.f32.gmra.mrb[0].mxu0 %v1869
      %v2072 = vpop.f32.mrb[0].mxu0
      %v2073 = vadd.f32 0.0, %v2072
      %v2074 = vpop.f32.mrb[0].mxu0
      %2075 = vmatprep.mubr.f32.mxu0 0.0
      %2076 = vmatmul.mubr.f32.gmra.mrb[0].mxu0 %v1870
      %v2077 = vpop.f32.mrb[0].mxu0
      %v2078 = vadd.f32 0.0, %v2077
      %v2079 = vpop.f32.mrb[0].mxu0
      %2080 = vmatprep.mubr.f32.mxu0 0.0
      %2081 = vmatmul.mubr.f32.gmra.mrb[0].mxu0 %v1871
      %v2082 = vpop.f32.mrb[0].mxu0
      %v2083 = vadd.f32 0.0, %v2082
      %v2084 = vpop.f32.mrb[0].mxu0
      %2085 = vmatprep.mubr.f32.mxu0 0.0
      %2086 = vmatmul.mubr.f32.gmra.mrb[0].mxu0 %v1872
      %v2087 = vpop.f32.mrb[0].mxu0
      %v2088 = vadd.f32 0.0, %v2087
      %v2089 = vpop.f32.mrb[0].mxu0
      %2090 = vmatprep.mubr.f32.mxu0 0.0
      %2091 = vmatmul.mubr.f32.gmra.mrb[0].mxu0 %v1873
      %v2092 = vpop.f32.mrb[0].mxu0
      %v2093 = vadd.f32 0.0, %v2092
      %v2094 = vpop.f32.mrb[0].mxu0
      %2095 = vmatprep.mubr.f32.mxu0 0.0
      %2096 = vmatmul.mubr.f32.gmra.mrb[0].mxu0 %v1874
      %v2097 = vpop.f32.mrb[0].mxu0
      %v2098 = vadd.f32 0.0, %v2097
      %v2099 = vpop.f32.mrb[0].mxu0
      %2100 = vmatprep.mubr.f32.mxu0 0.0
      %2101 = vmatmul.mubr.f32.gmra.mrb[0].mxu0 %v1875
      %v2102 = vpop.f32.mrb[0].mxu0
      %v2103 = vadd.f32 0.0, %v2102
      %v2104 = vpop.f32.mrb[0].mxu0
      %2105 = vmatprep.mubr.f32.mxu0 0.0
      %2106 = vmatmul.mubr.f32.gmra.mrb[0].mxu0 %v1876
      %v2107 = vpop.f32.mrb[0].mxu0
      %v2108 = vadd.f32 0.0, %v2107
      %v2109 = vpop.f32.mrb[0].mxu0
      %2110 = vmatprep.mubr.f32.mxu0 0.0
      %2111 = vmatmul.mubr.f32.gmra.mrb[0].mxu0 %v1877
      %v2112 = vpop.f32.mrb[0].mxu0
      %v2113 = vadd.f32 0.0, %v2112
      %v2114 = vpop.f32.mrb[0].mxu0
      %2115 = vmatprep.mubr.f32.mxu0 0.0
      %2116 = vmatmul.mubr.f32.gmra.mrb[0].mxu0 %v1878
      %v2117 = vpop.f32.mrb[0].mxu0
      %v2118 = vadd.f32 0.0, %v2117
      %v2119 = vpop.f32.mrb[0].mxu0
      %2120 = vmatprep.mubr.f32.mxu0 0.0
      %2121 = vmatmul.mubr.f32.gmra.mrb[0].mxu0 %v1879
      %v2122 = vpop.f32.mrb[0].mxu0
      %v2123 = vadd.f32 0.0, %v2122
      %v2124 = vpop.f32.mrb[0].mxu0
      %2125 = vmatprep.mubr.f32.mxu0 0.0
      %2126 = vmatmul.mubr.f32.gmra.mrb[0].mxu0 %v1880
      %v2127 = vpop.f32.mrb[0].mxu0
      %v2128 = vadd.f32 0.0, %v2127
      %v2129 = vpop.f32.mrb[0].mxu0
      %2130 = vmatprep.mubr.f32.mxu0 0.0
      %2131 = vmatmul.mubr.f32.gmra.mrb[0].mxu0 %v1881
      %v2132 = vpop.f32.mrb[0].mxu0
      %v2133 = vadd.f32 0.0, %v2132
      %v2134 = vpop.f32.mrb[0].mxu0
      %2135 = vmatprep.mubr.f32.mxu0 0.0
      %2136 = vmatmul.mubr.f32.gmra.mrb[0].mxu0 %v1882
      %v2137 = vpop.f32.mrb[0].mxu0
      %v2138 = vadd.f32 0.0, %v2137
      %v2139 = vpop.f32.mrb[0].mxu0
      %2140 = vmatprep.mubr.f32.mxu0 0.0
      %2141 = vmatmul.mubr.f32.gmra.mrb[0].mxu0 %v1883
      %v2142 = vpop.f32.mrb[0].mxu0
      %v2143 = vadd.f32 0.0, %v2142
      %v2144 = vpop.f32.mrb[0].mxu0
      %2145 = vdwg.mxu0
      %v2146 = vadd.f32 %v1812, %v1968
      %v2147 = vadd.f32 %v1813, %v1973
      %v2148 = vadd.f32 %v1814, %v1978
      %v2149 = vadd.f32 %v1815, %v1983
      %v2150 = vadd.f32 %v1816, %v1988
      %v2151 = vadd.f32 %v1817, %v1993
      %v2152 = vadd.f32 %v1818, %v1998
      %v2153 = vadd.f32 %v1819, %v2003
      %v2154 = vadd.f32 %v1820, %v2008
      %v2155 = vadd.f32 %v1821, %v2013
      %v2156 = vadd.f32 %v1822, %v2018
      %v2157 = vadd.f32 %v1823, %v2023
      %v2158 = vadd.f32 %v1824, %v2028
      %v2159 = vadd.f32 %v1825, %v2033
      %v2160 = vadd.f32 %v1826, %v2038
      %v2161 = vadd.f32 %v1827, %v2043
      %v2162 = vadd.f32 %v1828, %v2048
      %v2163 = vadd.f32 %v1829, %v2053
      %v2164 = vadd.f32 %v1830, %v2058
      %v2165 = vadd.f32 %v1831, %v2063
      %v2166 = vadd.f32 %v1832, %v2068
      %v2167 = vadd.f32 %v1833, %v2073
      %v2168 = vadd.f32 %v1834, %v2078
      %v2169 = vadd.f32 %v1835, %v2083
      %v2170 = vadd.f32 %v1836, %v2088
      %v2171 = vadd.f32 %v1837, %v2093
      %v2172 = vadd.f32 %v1838, %v2098
      %v2173 = vadd.f32 %v1839, %v2103
      %v2174 = vadd.f32 %v1840, %v2108
      %v2175 = vadd.f32 %v1841, %v2113
      %v2176 = vadd.f32 %v1842, %v2118
      %v2177 = vadd.f32 %v1843, %v2123
      %v2178 = vadd.f32 %v1844, %v2128
      %v2179 = vadd.f32 %v1845, %v2133
      %v2180 = vadd.f32 %v1846, %v2138
      %v2181 = vadd.f32 %v1847, %v2143
      %v2182 = vld [vmem:[%s165 + $0x24] sm:$0xff]
      %v2183 = vld [vmem:[%s165 + $0x2c] sm:$0xff]
      %v2184 = vld [vmem:[%s165 + $0x34] sm:$0xff]
      %v2185 = vld [vmem:[%s165 + $0x3c] sm:$0xff]
      %v2186 = vld [vmem:[%s165 + $0x44] sm:$0xff]
      %v2187 = vld [vmem:[%s165 + $0x4c] sm:$0xff]
      %v2188 = vld [vmem:[%s165 + $0x54] sm:$0xff]
      %v2189 = vld [vmem:[%s165 + $0x5c] sm:$0xff]
      %v2190 = vld [vmem:[%s165 + $0x64] sm:$0xff]
      %v2191 = vld [vmem:[%s165 + $0x6c] sm:$0xff]
      %v2192 = vld [vmem:[%s165 + $0x74] sm:$0xff]
      %v2193 = vld [vmem:[%s165 + $0x7c] sm:$0xff]
      %v2194 = vld [vmem:[%s165 + $0x84] sm:$0xff]
      %v2195 = vld [vmem:[%s165 + $0x8c] sm:$0xff]
      %v2196 = vld [vmem:[%s165 + $0x94] sm:$0xff]
      %v2197 = vld [vmem:[%s165 + $0x9c] sm:$0xff]
      %v2198 = vld [vmem:[%s165 + $0xa4] sm:$0xff]
      %v2199 = vld [vmem:[%s165 + $0xac] sm:$0xff]
      %v2200 = vld [vmem:[%s165 + $0xb4] sm:$0xff]
      %v2201 = vld [vmem:[%s165 + $0xbc] sm:$0xff]
      %v2202 = vld [vmem:[%s165 + $0xc4] sm:$0xff]
      %v2203 = vld [vmem:[%s165 + $0xcc] sm:$0xff]
      %v2204 = vld [vmem:[%s165 + $0xd4] sm:$0xff]
      %v2205 = vld [vmem:[%s165 + $0xdc] sm:$0xff]
      %v2206 = vld [vmem:[%s165 + $0xe4] sm:$0xff]
      %v2207 = vld [vmem:[%s165 + $0xec] sm:$0xff]
      %v2208 = vld [vmem:[%s165 + $0xf4] sm:$0xff]
      %v2209 = vld [vmem:[%s165 + $0xfc] sm:$0xff]
      %v2210 = vld [vmem:[%s165 + $0x104] sm:$0xff]
      %v2211 = vld [vmem:[%s165 + $0x10c] sm:$0xff]
      %v2212 = vld [vmem:[%s165 + $0x114] sm:$0xff]
      %v2213 = vld [vmem:[%s165 + $0x11c] sm:$0xff]
      %v2214 = vld [vmem:[%s165 + $0x124] sm:$0xff]
      %v2215 = vld [vmem:[%s165 + $0x12c] sm:$0xff]
      %v2216 = vld [vmem:[%s165 + $0x134] sm:$0xff]
      %v2217 = vld [vmem:[%s165 + $0x13c] sm:$0xff]
      %s2218 = scalar_lea.vmem %s1, 768
      %v2219 = vld [vmem:[%s2218] sm:$0xff]
      %v2220 = vld [vmem:[%s2218 + $0x8] sm:$0xff]
      %v2221 = vld [vmem:[%s2218 + $0x10] sm:$0xff]
      %v2222 = vld [vmem:[%s2218 + $0x18] sm:$0xff]
      %v2223 = vld [vmem:[%s2218 + $0x20] sm:$0xff]
      %v2224 = vld [vmem:[%s2218 + $0x28] sm:$0xff]
      %v2225 = vld [vmem:[%s2218 + $0x30] sm:$0xff]
      %v2226 = vld [vmem:[%s2218 + $0x38] sm:$0xff]
      %v2227 = vld [vmem:[%s2218 + $0x40] sm:$0xff]
      %v2228 = vld [vmem:[%s2218 + $0x48] sm:$0xff]
      %v2229 = vld [vmem:[%s2218 + $0x50] sm:$0xff]
      %v2230 = vld [vmem:[%s2218 + $0x58] sm:$0xff]
      %v2231 = vld [vmem:[%s2218 + $0x60] sm:$0xff]
      %v2232 = vld [vmem:[%s2218 + $0x68] sm:$0xff]
      %v2233 = vld [vmem:[%s2218 + $0x70] sm:$0xff]
      %v2234 = vld [vmem:[%s2218 + $0x78] sm:$0xff]
      %2235 = vmatprep.subr.mxu0 0.0
      %2236 = vmatpush1.msra.mxu0 %v2219
      %2237 = vmatprep.subr.mxu0 0.0
      %2238 = vmatpush1.msra.mxu0 %v2220
      %2239 = vmatprep.subr.mxu0 0.0
      %2240 = vmatpush1.msra.mxu0 %v2221
      %2241 = vmatprep.subr.mxu0 0.0
      %2242 = vmatpush1.msra.mxu0 %v2222
      %2243 = vmatprep.subr.mxu0 0.0
      %2244 = vmatpush1.msra.mxu0 %v2223
      %2245 = vmatprep.subr.mxu0 0.0
      %2246 = vmatpush1.msra.mxu0 %v2224
      %2247 = vmatprep.subr.mxu0 0.0
      %2248 = vmatpush1.msra.mxu0 %v2225
      %2249 = vmatprep.subr.mxu0 0.0
      %2250 = vmatpush1.msra.mxu0 %v2226
      %2251 = vmatprep.subr.mxu0 0.0
      %2252 = vmatpush1.msra.mxu0 %v2227
      %2253 = vmatprep.subr.mxu0 0.0
      %2254 = vmatpush1.msra.mxu0 %v2228
      %2255 = vmatprep.subr.mxu0 0.0
      %2256 = vmatpush1.msra.mxu0 %v2229
      %2257 = vmatprep.subr.mxu0 0.0
      %2258 = vmatpush1.msra.mxu0 %v2230
      %2259 = vmatprep.subr.mxu0 0.0
      %2260 = vmatpush1.msra.mxu0 %v2231
      %2261 = vmatprep.subr.mxu0 0.0
      %2262 = vmatpush1.msra.mxu0 %v2232
      %2263 = vmatprep.subr.mxu0 0.0
      %2264 = vmatpush1.msra.mxu0 %v2233
      %2265 = vmatprep.subr.mxu0 0.0
      %2266 = vmatpush1.msra.mxu0 %v2234
      %2267 = vmatprep.subr.mxu0 0.0
      %2268 = vmatpush1.msra.mxu0 0.0
      %2269 = vmatprep.subr.mxu0 0.0
      %2270 = vmatpush1.msra.mxu0 0.0
      %2271 = vmatprep.subr.mxu0 0.0
      %2272 = vmatpush1.msra.mxu0 0.0
      %2273 = vmatprep.subr.mxu0 0.0
      %2274 = vmatpush1.msra.mxu0 0.0
      %2275 = vmatprep.subr.mxu0 0.0
      %2276 = vmatpush1.msra.mxu0 0.0
      %2277 = vmatprep.subr.mxu0 0.0
      %2278 = vmatpush1.msra.mxu0 0.0
      %2279 = vmatprep.subr.mxu0 0.0
      %2280 = vmatpush1.msra.mxu0 0.0
      %2281 = vmatprep.subr.mxu0 0.0
      %2282 = vmatpush1.msra.mxu0 0.0
      %2283 = vmatprep.subr.mxu0 0.0
      %2284 = vmatpush1.msra.mxu0 0.0
      %2285 = vmatprep.subr.mxu0 0.0
      %2286 = vmatpush1.msra.mxu0 0.0
      %2287 = vmatprep.subr.mxu0 0.0
      %2288 = vmatpush1.msra.mxu0 0.0
      %2289 = vmatprep.subr.mxu0 0.0
      %2290 = vmatpush1.msra.mxu0 0.0
      %2291 = vmatprep.subr.mxu0 0.0
      %2292 = vmatpush1.msra.mxu0 0.0
      %2293 = vmatprep.subr.mxu0 0.0
      %2294 = vmatpush1.msra.mxu0 0.0
      %2295 = vmatprep.subr.mxu0 0.0
      %2296 = vmatpush1.msra.mxu0 0.0
      %2297 = vmatprep.subr.mxu0 0.0
      %2298 = vmatpush1.msra.mxu0 0.0
      %2299 = vmatprep.mubr.f32.mxu0 0.0
      %2300 = vmatmul.mubr.f32.gmra.mrb[0].mxu0 %v2182
      %v2301 = vpop.f32.mrb[0].mxu0
      %v2302 = vadd.f32 0.0, %v2301
      %v2303 = vpop.f32.mrb[0].mxu0
      %2304 = vmatprep.mubr.f32.mxu0 0.0
      %2305 = vmatmul.mubr.f32.gmra.mrb[0].mxu0 %v2183
      %v2306 = vpop.f32.mrb[0].mxu0
      %v2307 = vadd.f32 0.0, %v2306
      %v2308 = vpop.f32.mrb[0].mxu0
      %2309 = vmatprep.mubr.f32.mxu0 0.0
      %2310 = vmatmul.mubr.f32.gmra.mrb[0].mxu0 %v2184
      %v2311 = vpop.f32.mrb[0].mxu0
      %v2312 = vadd.f32 0.0, %v2311
      %v2313 = vpop.f32.mrb[0].mxu0
      %2314 = vmatprep.mubr.f32.mxu0 0.0
      %2315 = vmatmul.mubr.f32.gmra.mrb[0].mxu0 %v2185
      %v2316 = vpop.f32.mrb[0].mxu0
      %v2317 = vadd.f32 0.0, %v2316
      %v2318 = vpop.f32.mrb[0].mxu0
      %2319 = vmatprep.mubr.f32.mxu0 0.0
      %2320 = vmatmul.mubr.f32.gmra.mrb[0].mxu0 %v2186
      %v2321 = vpop.f32.mrb[0].mxu0
      %v2322 = vadd.f32 0.0, %v2321
      %v2323 = vpop.f32.mrb[0].mxu0
      %2324 = vmatprep.mubr.f32.mxu0 0.0
      %2325 = vmatmul.mubr.f32.gmra.mrb[0].mxu0 %v2187
      %v2326 = vpop.f32.mrb[0].mxu0
      %v2327 = vadd.f32 0.0, %v2326
      %v2328 = vpop.f32.mrb[0].mxu0
      %2329 = vmatprep.mubr.f32.mxu0 0.0
      %2330 = vmatmul.mubr.f32.gmra.mrb[0].mxu0 %v2188
      %v2331 = vpop.f32.mrb[0].mxu0
      %v2332 = vadd.f32 0.0, %v2331
      %v2333 = vpop.f32.mrb[0].mxu0
      %2334 = vmatprep.mubr.f32.mxu0 0.0
      %2335 = vmatmul.mubr.f32.gmra.mrb[0].mxu0 %v2189
      %v2336 = vpop.f32.mrb[0].mxu0
      %v2337 = vadd.f32 0.0, %v2336
      %v2338 = vpop.f32.mrb[0].mxu0
      %2339 = vmatprep.mubr.f32.mxu0 0.0
      %2340 = vmatmul.mubr.f32.gmra.mrb[0].mxu0 %v2190
      %v2341 = vpop.f32.mrb[0].mxu0
      %v2342 = vadd.f32 0.0, %v2341
      %v2343 = vpop.f32.mrb[0].mxu0
      %2344 = vmatprep.mubr.f32.mxu0 0.0
      %2345 = vmatmul.mubr.f32.gmra.mrb[0].mxu0 %v2191
      %v2346 = vpop.f32.mrb[0].mxu0
      %v2347 = vadd.f32 0.0, %v2346
      %v2348 = vpop.f32.mrb[0].mxu0
      %2349 = vmatprep.mubr.f32.mxu0 0.0
      %2350 = vmatmul.mubr.f32.gmra.mrb[0].mxu0 %v2192
      %v2351 = vpop.f32.mrb[0].mxu0
      %v2352 = vadd.f32 0.0, %v2351
      %v2353 = vpop.f32.mrb[0].mxu0
      %2354 = vmatprep.mubr.f32.mxu0 0.0
      %2355 = vmatmul.mubr.f32.gmra.mrb[0].mxu0 %v2193
      %v2356 = vpop.f32.mrb[0].mxu0
      %v2357 = vadd.f32 0.0, %v2356
      %v2358 = vpop.f32.mrb[0].mxu0
      %2359 = vmatprep.mubr.f32.mxu0 0.0
      %2360 = vmatmul.mubr.f32.gmra.mrb[0].mxu0 %v2194
      %v2361 = vpop.f32.mrb[0].mxu0
      %v2362 = vadd.f32 0.0, %v2361
      %v2363 = vpop.f32.mrb[0].mxu0
      %2364 = vmatprep.mubr.f32.mxu0 0.0
      %2365 = vmatmul.mubr.f32.gmra.mrb[0].mxu0 %v2195
      %v2366 = vpop.f32.mrb[0].mxu0
      %v2367 = vadd.f32 0.0, %v2366
      %v2368 = vpop.f32.mrb[0].mxu0
      %2369 = vmatprep.mubr.f32.mxu0 0.0
      %2370 = vmatmul.mubr.f32.gmra.mrb[0].mxu0 %v2196
      %v2371 = vpop.f32.mrb[0].mxu0
      %v2372 = vadd.f32 0.0, %v2371
      %v2373 = vpop.f32.mrb[0].mxu0
      %2374 = vmatprep.mubr.f32.mxu0 0.0
      %2375 = vmatmul.mubr.f32.gmra.mrb[0].mxu0 %v2197
      %v2376 = vpop.f32.mrb[0].mxu0
      %v2377 = vadd.f32 0.0, %v2376
      %v2378 = vpop.f32.mrb[0].mxu0
      %2379 = vmatprep.mubr.f32.mxu0 0.0
      %2380 = vmatmul.mubr.f32.gmra.mrb[0].mxu0 %v2198
      %v2381 = vpop.f32.mrb[0].mxu0
      %v2382 = vadd.f32 0.0, %v2381
      %v2383 = vpop.f32.mrb[0].mxu0
      %2384 = vmatprep.mubr.f32.mxu0 0.0
      %2385 = vmatmul.mubr.f32.gmra.mrb[0].mxu0 %v2199
      %v2386 = vpop.f32.mrb[0].mxu0
      %v2387 = vadd.f32 0.0, %v2386
      %v2388 = vpop.f32.mrb[0].mxu0
      %2389 = vmatprep.mubr.f32.mxu0 0.0
      %2390 = vmatmul.mubr.f32.gmra.mrb[0].mxu0 %v2200
      %v2391 = vpop.f32.mrb[0].mxu0
      %v2392 = vadd.f32 0.0, %v2391
      %v2393 = vpop.f32.mrb[0].mxu0
      %2394 = vmatprep.mubr.f32.mxu0 0.0
      %2395 = vmatmul.mubr.f32.gmra.mrb[0].mxu0 %v2201
      %v2396 = vpop.f32.mrb[0].mxu0
      %v2397 = vadd.f32 0.0, %v2396
      %v2398 = vpop.f32.mrb[0].mxu0
      %2399 = vmatprep.mubr.f32.mxu0 0.0
      %2400 = vmatmul.mubr.f32.gmra.mrb[0].mxu0 %v2202
      %v2401 = vpop.f32.mrb[0].mxu0
      %v2402 = vadd.f32 0.0, %v2401
      %v2403 = vpop.f32.mrb[0].mxu0
      %2404 = vmatprep.mubr.f32.mxu0 0.0
      %2405 = vmatmul.mubr.f32.gmra.mrb[0].mxu0 %v2203
      %v2406 = vpop.f32.mrb[0].mxu0
      %v2407 = vadd.f32 0.0, %v2406
      %v2408 = vpop.f32.mrb[0].mxu0
      %2409 = vmatprep.mubr.f32.mxu0 0.0
      %2410 = vmatmul.mubr.f32.gmra.mrb[0].mxu0 %v2204
      %v2411 = vpop.f32.mrb[0].mxu0
      %v2412 = vadd.f32 0.0, %v2411
      %v2413 = vpop.f32.mrb[0].mxu0
      %2414 = vmatprep.mubr.f32.mxu0 0.0
      %2415 = vmatmul.mubr.f32.gmra.mrb[0].mxu0 %v2205
      %v2416 = vpop.f32.mrb[0].mxu0
      %v2417 = vadd.f32 0.0, %v2416
      %v2418 = vpop.f32.mrb[0].mxu0
      %2419 = vmatprep.mubr.f32.mxu0 0.0
      %2420 = vmatmul.mubr.f32.gmra.mrb[0].mxu0 %v2206
      %v2421 = vpop.f32.mrb[0].mxu0
      %v2422 = vadd.f32 0.0, %v2421
      %v2423 = vpop.f32.mrb[0].mxu0
      %2424 = vmatprep.mubr.f32.mxu0 0.0
      %2425 = vmatmul.mubr.f32.gmra.mrb[0].mxu0 %v2207
      %v2426 = vpop.f32.mrb[0].mxu0
      %v2427 = vadd.f32 0.0, %v2426
      %v2428 = vpop.f32.mrb[0].mxu0
      %2429 = vmatprep.mubr.f32.mxu0 0.0
      %2430 = vmatmul.mubr.f32.gmra.mrb[0].mxu0 %v2208
      %v2431 = vpop.f32.mrb[0].mxu0
      %v2432 = vadd.f32 0.0, %v2431
      %v2433 = vpop.f32.mrb[0].mxu0
      %2434 = vmatprep.mubr.f32.mxu0 0.0
      %2435 = vmatmul.mubr.f32.gmra.mrb[0].mxu0 %v2209
      %v2436 = vpop.f32.mrb[0].mxu0
      %v2437 = vadd.f32 0.0, %v2436
      %v2438 = vpop.f32.mrb[0].mxu0
      %2439 = vmatprep.mubr.f32.mxu0 0.0
      %2440 = vmatmul.mubr.f32.gmra.mrb[0].mxu0 %v2210
      %v2441 = vpop.f32.mrb[0].mxu0
      %v2442 = vadd.f32 0.0, %v2441
      %v2443 = vpop.f32.mrb[0].mxu0
      %2444 = vmatprep.mubr.f32.mxu0 0.0
      %2445 = vmatmul.mubr.f32.gmra.mrb[0].mxu0 %v2211
      %v2446 = vpop.f32.mrb[0].mxu0
      %v2447 = vadd.f32 0.0, %v2446
      %v2448 = vpop.f32.mrb[0].mxu0
      %2449 = vmatprep.mubr.f32.mxu0 0.0
      %2450 = vmatmul.mubr.f32.gmra.mrb[0].mxu0 %v2212
      %v2451 = vpop.f32.mrb[0].mxu0
      %v2452 = vadd.f32 0.0, %v2451
      %v2453 = vpop.f32.mrb[0].mxu0
      %2454 = vmatprep.mubr.f32.mxu0 0.0
      %2455 = vmatmul.mubr.f32.gmra.mrb[0].mxu0 %v2213
      %v2456 = vpop.f32.mrb[0].mxu0
      %v2457 = vadd.f32 0.0, %v2456
      %v2458 = vpop.f32.mrb[0].mxu0
      %2459 = vmatprep.mubr.f32.mxu0 0.0
      %2460 = vmatmul.mubr.f32.gmra.mrb[0].mxu0 %v2214
      %v2461 = vpop.f32.mrb[0].mxu0
      %v2462 = vadd.f32 0.0, %v2461
      %v2463 = vpop.f32.mrb[0].mxu0
      %2464 = vmatprep.mubr.f32.mxu0 0.0
      %2465 = vmatmul.mubr.f32.gmra.mrb[0].mxu0 %v2215
      %v2466 = vpop.f32.mrb[0].mxu0
      %v2467 = vadd.f32 0.0, %v2466
      %v2468 = vpop.f32.mrb[0].mxu0
      %2469 = vmatprep.mubr.f32.mxu0 0.0
      %2470 = vmatmul.mubr.f32.gmra.mrb[0].mxu0 %v2216
      %v2471 = vpop.f32.mrb[0].mxu0
      %v2472 = vadd.f32 0.0, %v2471
      %v2473 = vpop.f32.mrb[0].mxu0
      %2474 = vmatprep.mubr.f32.mxu0 0.0
      %2475 = vmatmul.mubr.f32.gmra.mrb[0].mxu0 %v2217
      %v2476 = vpop.f32.mrb[0].mxu0
      %v2477 = vadd.f32 0.0, %v2476
      %v2478 = vpop.f32.mrb[0].mxu0
      %2479 = vdwg.mxu0
      %v2480 = vadd.f32 %v2146, %v2302
      %v2481 = vadd.f32 %v2147, %v2307
      %v2482 = vadd.f32 %v2148, %v2312
      %v2483 = vadd.f32 %v2149, %v2317
      %v2484 = vadd.f32 %v2150, %v2322
      %v2485 = vadd.f32 %v2151, %v2327
      %v2486 = vadd.f32 %v2152, %v2332
      %v2487 = vadd.f32 %v2153, %v2337
      %v2488 = vadd.f32 %v2154, %v2342
      %v2489 = vadd.f32 %v2155, %v2347
      %v2490 = vadd.f32 %v2156, %v2352
      %v2491 = vadd.f32 %v2157, %v2357
      %v2492 = vadd.f32 %v2158, %v2362
      %v2493 = vadd.f32 %v2159, %v2367
      %v2494 = vadd.f32 %v2160, %v2372
      %v2495 = vadd.f32 %v2161, %v2377
      %v2496 = vadd.f32 %v2162, %v2382
      %v2497 = vadd.f32 %v2163, %v2387
      %v2498 = vadd.f32 %v2164, %v2392
      %v2499 = vadd.f32 %v2165, %v2397
      %v2500 = vadd.f32 %v2166, %v2402
      %v2501 = vadd.f32 %v2167, %v2407
      %v2502 = vadd.f32 %v2168, %v2412
      %v2503 = vadd.f32 %v2169, %v2417
      %v2504 = vadd.f32 %v2170, %v2422
      %v2505 = vadd.f32 %v2171, %v2427
      %v2506 = vadd.f32 %v2172, %v2432
      %v2507 = vadd.f32 %v2173, %v2437
      %v2508 = vadd.f32 %v2174, %v2442
      %v2509 = vadd.f32 %v2175, %v2447
      %v2510 = vadd.f32 %v2176, %v2452
      %v2511 = vadd.f32 %v2177, %v2457
      %v2512 = vadd.f32 %v2178, %v2462
      %v2513 = vadd.f32 %v2179, %v2467
      %v2514 = vadd.f32 %v2180, %v2472
      %v2515 = vadd.f32 %v2181, %v2477
      %v2516 = vld [vmem:[%s165 + $0x25] sm:$0xff]
      %v2517 = vld [vmem:[%s165 + $0x2d] sm:$0xff]
      %v2518 = vld [vmem:[%s165 + $0x35] sm:$0xff]
      %v2519 = vld [vmem:[%s165 + $0x3d] sm:$0xff]
      %v2520 = vld [vmem:[%s165 + $0x45] sm:$0xff]
      %v2521 = vld [vmem:[%s165 + $0x4d] sm:$0xff]
      %v2522 = vld [vmem:[%s165 + $0x55] sm:$0xff]
      %v2523 = vld [vmem:[%s165 + $0x5d] sm:$0xff]
      %v2524 = vld [vmem:[%s165 + $0x65] sm:$0xff]
      %v2525 = vld [vmem:[%s165 + $0x6d] sm:$0xff]
      %v2526 = vld [vmem:[%s165 + $0x75] sm:$0xff]
      %v2527 = vld [vmem:[%s165 + $0x7d] sm:$0xff]
      %v2528 = vld [vmem:[%s165 + $0x85] sm:$0xff]
      %v2529 = vld [vmem:[%s165 + $0x8d] sm:$0xff]
      %v2530 = vld [vmem:[%s165 + $0x95] sm:$0xff]
      %v2531 = vld [vmem:[%s165 + $0x9d] sm:$0xff]
      %v2532 = vld [vmem:[%s165 + $0xa5] sm:$0xff]
      %v2533 = vld [vmem:[%s165 + $0xad] sm:$0xff]
      %v2534 = vld [vmem:[%s165 + $0xb5] sm:$0xff]
      %v2535 = vld [vmem:[%s165 + $0xbd] sm:$0xff]
      %v2536 = vld [vmem:[%s165 + $0xc5] sm:$0xff]
      %v2537 = vld [vmem:[%s165 + $0xcd] sm:$0xff]
      %v2538 = vld [vmem:[%s165 + $0xd5] sm:$0xff]
      %v2539 = vld [vmem:[%s165 + $0xdd] sm:$0xff]
      %v2540 = vld [vmem:[%s165 + $0xe5] sm:$0xff]
      %v2541 = vld [vmem:[%s165 + $0xed] sm:$0xff]
      %v2542 = vld [vmem:[%s165 + $0xf5] sm:$0xff]
      %v2543 = vld [vmem:[%s165 + $0xfd] sm:$0xff]
      %v2544 = vld [vmem:[%s165 + $0x105] sm:$0xff]
      %v2545 = vld [vmem:[%s165 + $0x10d] sm:$0xff]
      %v2546 = vld [vmem:[%s165 + $0x115] sm:$0xff]
      %v2547 = vld [vmem:[%s165 + $0x11d] sm:$0xff]
      %v2548 = vld [vmem:[%s165 + $0x125] sm:$0xff]
      %v2549 = vld [vmem:[%s165 + $0x12d] sm:$0xff]
      %v2550 = vld [vmem:[%s165 + $0x135] sm:$0xff]
      %v2551 = vld [vmem:[%s165 + $0x13d] sm:$0xff]
      %s2552 = scalar_lea.vmem %s1, 896
      %v2553 = vld [vmem:[%s2552] sm:$0xff]
      %v2554 = vld [vmem:[%s2552 + $0x8] sm:$0xff]
      %v2555 = vld [vmem:[%s2552 + $0x10] sm:$0xff]
      %v2556 = vld [vmem:[%s2552 + $0x18] sm:$0xff]
      %v2557 = vld [vmem:[%s2552 + $0x20] sm:$0xff]
      %v2558 = vld [vmem:[%s2552 + $0x28] sm:$0xff]
      %v2559 = vld [vmem:[%s2552 + $0x30] sm:$0xff]
      %v2560 = vld [vmem:[%s2552 + $0x38] sm:$0xff]
      %v2561 = vld [vmem:[%s2552 + $0x40] sm:$0xff]
      %v2562 = vld [vmem:[%s2552 + $0x48] sm:$0xff]
      %v2563 = vld [vmem:[%s2552 + $0x50] sm:$0xff]
      %v2564 = vld [vmem:[%s2552 + $0x58] sm:$0xff]
      %v2565 = vld [vmem:[%s2552 + $0x60] sm:$0xff]
      %v2566 = vld [vmem:[%s2552 + $0x68] sm:$0xff]
      %v2567 = vld [vmem:[%s2552 + $0x70] sm:$0xff]
      %v2568 = vld [vmem:[%s2552 + $0x78] sm:$0xff]
      %2569 = vmatprep.subr.mxu0 0.0
      %2570 = vmatpush1.msra.mxu0 %v2553
      %2571 = vmatprep.subr.mxu0 0.0
      %2572 = vmatpush1.msra.mxu0 %v2554
      %2573 = vmatprep.subr.mxu0 0.0
      %2574 = vmatpush1.msra.mxu0 %v2555
      %2575 = vmatprep.subr.mxu0 0.0
      %2576 = vmatpush1.msra.mxu0 %v2556
      %2577 = vmatprep.subr.mxu0 0.0
      %2578 = vmatpush1.msra.mxu0 %v2557
      %2579 = vmatprep.subr.mxu0 0.0
      %2580 = vmatpush1.msra.mxu0 %v2558
      %2581 = vmatprep.subr.mxu0 0.0
      %2582 = vmatpush1.msra.mxu0 %v2559
      %2583 = vmatprep.subr.mxu0 0.0
      %2584 = vmatpush1.msra.mxu0 %v2560
      %2585 = vmatprep.subr.mxu0 0.0
      %2586 = vmatpush1.msra.mxu0 %v2561
      %2587 = vmatprep.subr.mxu0 0.0
      %2588 = vmatpush1.msra.mxu0 %v2562
      %2589 = vmatprep.subr.mxu0 0.0
      %2590 = vmatpush1.msra.mxu0 %v2563
      %2591 = vmatprep.subr.mxu0 0.0
      %2592 = vmatpush1.msra.mxu0 %v2564
      %2593 = vmatprep.subr.mxu0 0.0
      %2594 = vmatpush1.msra.mxu0 %v2565
      %2595 = vmatprep.subr.mxu0 0.0
      %2596 = vmatpush1.msra.mxu0 %v2566
      %2597 = vmatprep.subr.mxu0 0.0
      %2598 = vmatpush1.msra.mxu0 %v2567
      %2599 = vmatprep.subr.mxu0 0.0
      %2600 = vmatpush1.msra.mxu0 %v2568
      %2601 = vmatprep.subr.mxu0 0.0
      %2602 = vmatpush1.msra.mxu0 0.0
      %2603 = vmatprep.subr.mxu0 0.0
      %2604 = vmatpush1.msra.mxu0 0.0
      %2605 = vmatprep.subr.mxu0 0.0
      %2606 = vmatpush1.msra.mxu0 0.0
      %2607 = vmatprep.subr.mxu0 0.0
      %2608 = vmatpush1.msra.mxu0 0.0
      %2609 = vmatprep.subr.mxu0 0.0
      %2610 = vmatpush1.msra.mxu0 0.0
      %2611 = vmatprep.subr.mxu0 0.0
      %2612 = vmatpush1.msra.mxu0 0.0
      %2613 = vmatprep.subr.mxu0 0.0
      %2614 = vmatpush1.msra.mxu0 0.0
      %2615 = vmatprep.subr.mxu0 0.0
      %2616 = vmatpush1.msra.mxu0 0.0
      %2617 = vmatprep.subr.mxu0 0.0
      %2618 = vmatpush1.msra.mxu0 0.0
      %2619 = vmatprep.subr.mxu0 0.0
      %2620 = vmatpush1.msra.mxu0 0.0
      %2621 = vmatprep.subr.mxu0 0.0
      %2622 = vmatpush1.msra.mxu0 0.0
      %2623 = vmatprep.subr.mxu0 0.0
      %2624 = vmatpush1.msra.mxu0 0.0
      %2625 = vmatprep.subr.mxu0 0.0
      %2626 = vmatpush1.msra.mxu0 0.0
      %2627 = vmatprep.subr.mxu0 0.0
      %2628 = vmatpush1.msra.mxu0 0.0
      %2629 = vmatprep.subr.mxu0 0.0
      %2630 = vmatpush1.msra.mxu0 0.0
      %2631 = vmatprep.subr.mxu0 0.0
      %2632 = vmatpush1.msra.mxu0 0.0
      %2633 = vmatprep.mubr.f32.mxu0 0.0
      %2634 = vmatmul.mubr.f32.gmra.mrb[0].mxu0 %v2516
      %v2635 = vpop.f32.mrb[0].mxu0
      %v2636 = vadd.f32 0.0, %v2635
      %v2637 = vpop.f32.mrb[0].mxu0
      %2638 = vmatprep.mubr.f32.mxu0 0.0
      %2639 = vmatmul.mubr.f32.gmra.mrb[0].mxu0 %v2517
      %v2640 = vpop.f32.mrb[0].mxu0
      %v2641 = vadd.f32 0.0, %v2640
      %v2642 = vpop.f32.mrb[0].mxu0
      %2643 = vmatprep.mubr.f32.mxu0 0.0
      %2644 = vmatmul.mubr.f32.gmra.mrb[0].mxu0 %v2518
      %v2645 = vpop.f32.mrb[0].mxu0
      %v2646 = vadd.f32 0.0, %v2645
      %v2647 = vpop.f32.mrb[0].mxu0
      %2648 = vmatprep.mubr.f32.mxu0 0.0
      %2649 = vmatmul.mubr.f32.gmra.mrb[0].mxu0 %v2519
      %v2650 = vpop.f32.mrb[0].mxu0
      %v2651 = vadd.f32 0.0, %v2650
      %v2652 = vpop.f32.mrb[0].mxu0
      %2653 = vmatprep.mubr.f32.mxu0 0.0
      %2654 = vmatmul.mubr.f32.gmra.mrb[0].mxu0 %v2520
      %v2655 = vpop.f32.mrb[0].mxu0
      %v2656 = vadd.f32 0.0, %v2655
      %v2657 = vpop.f32.mrb[0].mxu0
      %2658 = vmatprep.mubr.f32.mxu0 0.0
      %2659 = vmatmul.mubr.f32.gmra.mrb[0].mxu0 %v2521
      %v2660 = vpop.f32.mrb[0].mxu0
      %v2661 = vadd.f32 0.0, %v2660
      %v2662 = vpop.f32.mrb[0].mxu0
      %2663 = vmatprep.mubr.f32.mxu0 0.0
      %2664 = vmatmul.mubr.f32.gmra.mrb[0].mxu0 %v2522
      %v2665 = vpop.f32.mrb[0].mxu0
      %v2666 = vadd.f32 0.0, %v2665
      %v2667 = vpop.f32.mrb[0].mxu0
      %2668 = vmatprep.mubr.f32.mxu0 0.0
      %2669 = vmatmul.mubr.f32.gmra.mrb[0].mxu0 %v2523
      %v2670 = vpop.f32.mrb[0].mxu0
      %v2671 = vadd.f32 0.0, %v2670
      %v2672 = vpop.f32.mrb[0].mxu0
      %2673 = vmatprep.mubr.f32.mxu0 0.0
      %2674 = vmatmul.mubr.f32.gmra.mrb[0].mxu0 %v2524
      %v2675 = vpop.f32.mrb[0].mxu0
      %v2676 = vadd.f32 0.0, %v2675
      %v2677 = vpop.f32.mrb[0].mxu0
      %2678 = vmatprep.mubr.f32.mxu0 0.0
      %2679 = vmatmul.mubr.f32.gmra.mrb[0].mxu0 %v2525
      %v2680 = vpop.f32.mrb[0].mxu0
      %v2681 = vadd.f32 0.0, %v2680
      %v2682 = vpop.f32.mrb[0].mxu0
      %2683 = vmatprep.mubr.f32.mxu0 0.0
      %2684 = vmatmul.mubr.f32.gmra.mrb[0].mxu0 %v2526
      %v2685 = vpop.f32.mrb[0].mxu0
      %v2686 = vadd.f32 0.0, %v2685
      %v2687 = vpop.f32.mrb[0].mxu0
      %2688 = vmatprep.mubr.f32.mxu0 0.0
      %2689 = vmatmul.mubr.f32.gmra.mrb[0].mxu0 %v2527
      %v2690 = vpop.f32.mrb[0].mxu0
      %v2691 = vadd.f32 0.0, %v2690
      %v2692 = vpop.f32.mrb[0].mxu0
      %2693 = vmatprep.mubr.f32.mxu0 0.0
      %2694 = vmatmul.mubr.f32.gmra.mrb[0].mxu0 %v2528
      %v2695 = vpop.f32.mrb[0].mxu0
      %v2696 = vadd.f32 0.0, %v2695
      %v2697 = vpop.f32.mrb[0].mxu0
      %2698 = vmatprep.mubr.f32.mxu0 0.0
      %2699 = vmatmul.mubr.f32.gmra.mrb[0].mxu0 %v2529
      %v2700 = vpop.f32.mrb[0].mxu0
      %v2701 = vadd.f32 0.0, %v2700
      %v2702 = vpop.f32.mrb[0].mxu0
      %2703 = vmatprep.mubr.f32.mxu0 0.0
      %2704 = vmatmul.mubr.f32.gmra.mrb[0].mxu0 %v2530
      %v2705 = vpop.f32.mrb[0].mxu0
      %v2706 = vadd.f32 0.0, %v2705
      %v2707 = vpop.f32.mrb[0].mxu0
      %2708 = vmatprep.mubr.f32.mxu0 0.0
      %2709 = vmatmul.mubr.f32.gmra.mrb[0].mxu0 %v2531
      %v2710 = vpop.f32.mrb[0].mxu0
      %v2711 = vadd.f32 0.0, %v2710
      %v2712 = vpop.f32.mrb[0].mxu0
      %2713 = vmatprep.mubr.f32.mxu0 0.0
      %2714 = vmatmul.mubr.f32.gmra.mrb[0].mxu0 %v2532
      %v2715 = vpop.f32.mrb[0].mxu0
      %v2716 = vadd.f32 0.0, %v2715
      %v2717 = vpop.f32.mrb[0].mxu0
      %2718 = vmatprep.mubr.f32.mxu0 0.0
      %2719 = vmatmul.mubr.f32.gmra.mrb[0].mxu0 %v2533
      %v2720 = vpop.f32.mrb[0].mxu0
      %v2721 = vadd.f32 0.0, %v2720
      %v2722 = vpop.f32.mrb[0].mxu0
      %2723 = vmatprep.mubr.f32.mxu0 0.0
      %2724 = vmatmul.mubr.f32.gmra.mrb[0].mxu0 %v2534
      %v2725 = vpop.f32.mrb[0].mxu0
      %v2726 = vadd.f32 0.0, %v2725
      %v2727 = vpop.f32.mrb[0].mxu0
      %2728 = vmatprep.mubr.f32.mxu0 0.0
      %2729 = vmatmul.mubr.f32.gmra.mrb[0].mxu0 %v2535
      %v2730 = vpop.f32.mrb[0].mxu0
      %v2731 = vadd.f32 0.0, %v2730
      %v2732 = vpop.f32.mrb[0].mxu0
      %2733 = vmatprep.mubr.f32.mxu0 0.0
      %2734 = vmatmul.mubr.f32.gmra.mrb[0].mxu0 %v2536
      %v2735 = vpop.f32.mrb[0].mxu0
      %v2736 = vadd.f32 0.0, %v2735
      %v2737 = vpop.f32.mrb[0].mxu0
      %2738 = vmatprep.mubr.f32.mxu0 0.0
      %2739 = vmatmul.mubr.f32.gmra.mrb[0].mxu0 %v2537
      %v2740 = vpop.f32.mrb[0].mxu0
      %v2741 = vadd.f32 0.0, %v2740
      %v2742 = vpop.f32.mrb[0].mxu0
      %2743 = vmatprep.mubr.f32.mxu0 0.0
      %2744 = vmatmul.mubr.f32.gmra.mrb[0].mxu0 %v2538
      %v2745 = vpop.f32.mrb[0].mxu0
      %v2746 = vadd.f32 0.0, %v2745
      %v2747 = vpop.f32.mrb[0].mxu0
      %2748 = vmatprep.mubr.f32.mxu0 0.0
      %2749 = vmatmul.mubr.f32.gmra.mrb[0].mxu0 %v2539
      %v2750 = vpop.f32.mrb[0].mxu0
      %v2751 = vadd.f32 0.0, %v2750
      %v2752 = vpop.f32.mrb[0].mxu0
      %2753 = vmatprep.mubr.f32.mxu0 0.0
      %2754 = vmatmul.mubr.f32.gmra.mrb[0].mxu0 %v2540
      %v2755 = vpop.f32.mrb[0].mxu0
      %v2756 = vadd.f32 0.0, %v2755
      %v2757 = vpop.f32.mrb[0].mxu0
      %2758 = vmatprep.mubr.f32.mxu0 0.0
      %2759 = vmatmul.mubr.f32.gmra.mrb[0].mxu0 %v2541
      %v2760 = vpop.f32.mrb[0].mxu0
      %v2761 = vadd.f32 0.0, %v2760
      %v2762 = vpop.f32.mrb[0].mxu0
      %2763 = vmatprep.mubr.f32.mxu0 0.0
      %2764 = vmatmul.mubr.f32.gmra.mrb[0].mxu0 %v2542
      %v2765 = vpop.f32.mrb[0].mxu0
      %v2766 = vadd.f32 0.0, %v2765
      %v2767 = vpop.f32.mrb[0].mxu0
      %2768 = vmatprep.mubr.f32.mxu0 0.0
      %2769 = vmatmul.mubr.f32.gmra.mrb[0].mxu0 %v2543
      %v2770 = vpop.f32.mrb[0].mxu0
      %v2771 = vadd.f32 0.0, %v2770
      %v2772 = vpop.f32.mrb[0].mxu0
      %2773 = vmatprep.mubr.f32.mxu0 0.0
      %2774 = vmatmul.mubr.f32.gmra.mrb[0].mxu0 %v2544
      %v2775 = vpop.f32.mrb[0].mxu0
      %v2776 = vadd.f32 0.0, %v2775
      %v2777 = vpop.f32.mrb[0].mxu0
      %2778 = vmatprep.mubr.f32.mxu0 0.0
      %2779 = vmatmul.mubr.f32.gmra.mrb[0].mxu0 %v2545
      %v2780 = vpop.f32.mrb[0].mxu0
      %v2781 = vadd.f32 0.0, %v2780
      %v2782 = vpop.f32.mrb[0].mxu0
      %2783 = vmatprep.mubr.f32.mxu0 0.0
      %2784 = vmatmul.mubr.f32.gmra.mrb[0].mxu0 %v2546
      %v2785 = vpop.f32.mrb[0].mxu0
      %v2786 = vadd.f32 0.0, %v2785
      %v2787 = vpop.f32.mrb[0].mxu0
      %2788 = vmatprep.mubr.f32.mxu0 0.0
      %2789 = vmatmul.mubr.f32.gmra.mrb[0].mxu0 %v2547
      %v2790 = vpop.f32.mrb[0].mxu0
      %v2791 = vadd.f32 0.0, %v2790
      %v2792 = vpop.f32.mrb[0].mxu0
      %2793 = vmatprep.mubr.f32.mxu0 0.0
      %2794 = vmatmul.mubr.f32.gmra.mrb[0].mxu0 %v2548
      %v2795 = vpop.f32.mrb[0].mxu0
      %v2796 = vadd.f32 0.0, %v2795
      %v2797 = vpop.f32.mrb[0].mxu0
      %2798 = vmatprep.mubr.f32.mxu0 0.0
      %2799 = vmatmul.mubr.f32.gmra.mrb[0].mxu0 %v2549
      %v2800 = vpop.f32.mrb[0].mxu0
      %v2801 = vadd.f32 0.0, %v2800
      %v2802 = vpop.f32.mrb[0].mxu0
      %2803 = vmatprep.mubr.f32.mxu0 0.0
      %2804 = vmatmul.mubr.f32.gmra.mrb[0].mxu0 %v2550
      %v2805 = vpop.f32.mrb[0].mxu0
      %v2806 = vadd.f32 0.0, %v2805
      %v2807 = vpop.f32.mrb[0].mxu0
      %2808 = vmatprep.mubr.f32.mxu0 0.0
      %2809 = vmatmul.mubr.f32.gmra.mrb[0].mxu0 %v2551
      %v2810 = vpop.f32.mrb[0].mxu0
      %v2811 = vadd.f32 0.0, %v2810
      %v2812 = vpop.f32.mrb[0].mxu0
      %2813 = vdwg.mxu0
      %v2814 = vadd.f32 %v2480, %v2636
      %v2815 = vadd.f32 %v2481, %v2641
      %v2816 = vadd.f32 %v2482, %v2646
      %v2817 = vadd.f32 %v2483, %v2651
      %v2818 = vadd.f32 %v2484, %v2656
      %v2819 = vadd.f32 %v2485, %v2661
      %v2820 = vadd.f32 %v2486, %v2666
      %v2821 = vadd.f32 %v2487, %v2671
      %v2822 = vadd.f32 %v2488, %v2676
      %v2823 = vadd.f32 %v2489, %v2681
      %v2824 = vadd.f32 %v2490, %v2686
      %v2825 = vadd.f32 %v2491, %v2691
      %v2826 = vadd.f32 %v2492, %v2696
      %v2827 = vadd.f32 %v2493, %v2701
      %v2828 = vadd.f32 %v2494, %v2706
      %v2829 = vadd.f32 %v2495, %v2711
      %v2830 = vadd.f32 %v2496, %v2716
      %v2831 = vadd.f32 %v2497, %v2721
      %v2832 = vadd.f32 %v2498, %v2726
      %v2833 = vadd.f32 %v2499, %v2731
      %v2834 = vadd.f32 %v2500, %v2736
      %v2835 = vadd.f32 %v2501, %v2741
      %v2836 = vadd.f32 %v2502, %v2746
      %v2837 = vadd.f32 %v2503, %v2751
      %v2838 = vadd.f32 %v2504, %v2756
      %v2839 = vadd.f32 %v2505, %v2761
      %v2840 = vadd.f32 %v2506, %v2766
      %v2841 = vadd.f32 %v2507, %v2771
      %v2842 = vadd.f32 %v2508, %v2776
      %v2843 = vadd.f32 %v2509, %v2781
      %v2844 = vadd.f32 %v2510, %v2786
      %v2845 = vadd.f32 %v2511, %v2791
      %v2846 = vadd.f32 %v2512, %v2796
      %v2847 = vadd.f32 %v2513, %v2801
      %v2848 = vadd.f32 %v2514, %v2806
      %v2849 = vadd.f32 %v2515, %v2811
      %v2850 = vld [vmem:[%s165 + $0x26] sm:$0xff]
      %v2851 = vld [vmem:[%s165 + $0x2e] sm:$0xff]
      %v2852 = vld [vmem:[%s165 + $0x36] sm:$0xff]
      %v2853 = vld [vmem:[%s165 + $0x3e] sm:$0xff]
      %v2854 = vld [vmem:[%s165 + $0x46] sm:$0xff]
      %v2855 = vld [vmem:[%s165 + $0x4e] sm:$0xff]
      %v2856 = vld [vmem:[%s165 + $0x56] sm:$0xff]
      %v2857 = vld [vmem:[%s165 + $0x5e] sm:$0xff]
      %v2858 = vld [vmem:[%s165 + $0x66] sm:$0xff]
      %v2859 = vld [vmem:[%s165 + $0x6e] sm:$0xff]
      %v2860 = vld [vmem:[%s165 + $0x76] sm:$0xff]
      %v2861 = vld [vmem:[%s165 + $0x7e] sm:$0xff]
      %v2862 = vld [vmem:[%s165 + $0x86] sm:$0xff]
      %v2863 = vld [vmem:[%s165 + $0x8e] sm:$0xff]
      %v2864 = vld [vmem:[%s165 + $0x96] sm:$0xff]
      %v2865 = vld [vmem:[%s165 + $0x9e] sm:$0xff]
      %v2866 = vld [vmem:[%s165 + $0xa6] sm:$0xff]
      %v2867 = vld [vmem:[%s165 + $0xae] sm:$0xff]
      %v2868 = vld [vmem:[%s165 + $0xb6] sm:$0xff]
      %v2869 = vld [vmem:[%s165 + $0xbe] sm:$0xff]
      %v2870 = vld [vmem:[%s165 + $0xc6] sm:$0xff]
      %v2871 = vld [vmem:[%s165 + $0xce] sm:$0xff]
      %v2872 = vld [vmem:[%s165 + $0xd6] sm:$0xff]
      %v2873 = vld [vmem:[%s165 + $0xde] sm:$0xff]
      %v2874 = vld [vmem:[%s165 + $0xe6] sm:$0xff]
      %v2875 = vld [vmem:[%s165 + $0xee] sm:$0xff]
      %v2876 = vld [vmem:[%s165 + $0xf6] sm:$0xff]
      %v2877 = vld [vmem:[%s165 + $0xfe] sm:$0xff]
      %v2878 = vld [vmem:[%s165 + $0x106] sm:$0xff]
      %v2879 = vld [vmem:[%s165 + $0x10e] sm:$0xff]
      %v2880 = vld [vmem:[%s165 + $0x116] sm:$0xff]
      %v2881 = vld [vmem:[%s165 + $0x11e] sm:$0xff]
      %v2882 = vld [vmem:[%s165 + $0x126] sm:$0xff]
      %v2883 = vld [vmem:[%s165 + $0x12e] sm:$0xff]
      %v2884 = vld [vmem:[%s165 + $0x136] sm:$0xff]
      %v2885 = vld [vmem:[%s165 + $0x13e] sm:$0xff]
      %s2886 = scalar_lea.vmem %s1, 1024
      %v2887 = vld [vmem:[%s2886] sm:$0xff]
      %v2888 = vld [vmem:[%s2886 + $0x8] sm:$0xff]
      %v2889 = vld [vmem:[%s2886 + $0x10] sm:$0xff]
      %v2890 = vld [vmem:[%s2886 + $0x18] sm:$0xff]
      %v2891 = vld [vmem:[%s2886 + $0x20] sm:$0xff]
      %v2892 = vld [vmem:[%s2886 + $0x28] sm:$0xff]
      %v2893 = vld [vmem:[%s2886 + $0x30] sm:$0xff]
      %v2894 = vld [vmem:[%s2886 + $0x38] sm:$0xff]
      %v2895 = vld [vmem:[%s2886 + $0x40] sm:$0xff]
      %v2896 = vld [vmem:[%s2886 + $0x48] sm:$0xff]
      %v2897 = vld [vmem:[%s2886 + $0x50] sm:$0xff]
      %v2898 = vld [vmem:[%s2886 + $0x58] sm:$0xff]
      %v2899 = vld [vmem:[%s2886 + $0x60] sm:$0xff]
      %v2900 = vld [vmem:[%s2886 + $0x68] sm:$0xff]
      %v2901 = vld [vmem:[%s2886 + $0x70] sm:$0xff]
      %v2902 = vld [vmem:[%s2886 + $0x78] sm:$0xff]
      %2903 = vmatprep.subr.mxu0 0.0
      %2904 = vmatpush1.msra.mxu0 %v2887
      %2905 = vmatprep.subr.mxu0 0.0
      %2906 = vmatpush1.msra.mxu0 %v2888
      %2907 = vmatprep.subr.mxu0 0.0
      %2908 = vmatpush1.msra.mxu0 %v2889
      %2909 = vmatprep.subr.mxu0 0.0
      %2910 = vmatpush1.msra.mxu0 %v2890
      %2911 = vmatprep.subr.mxu0 0.0
      %2912 = vmatpush1.msra.mxu0 %v2891
      %2913 = vmatprep.subr.mxu0 0.0
      %2914 = vmatpush1.msra.mxu0 %v2892
      %2915 = vmatprep.subr.mxu0 0.0
      %2916 = vmatpush1.msra.mxu0 %v2893
      %2917 = vmatprep.subr.mxu0 0.0
      %2918 = vmatpush1.msra.mxu0 %v2894
      %2919 = vmatprep.subr.mxu0 0.0
      %2920 = vmatpush1.msra.mxu0 %v2895
      %2921 = vmatprep.subr.mxu0 0.0
      %2922 = vmatpush1.msra.mxu0 %v2896
      %2923 = vmatprep.subr.mxu0 0.0
      %2924 = vmatpush1.msra.mxu0 %v2897
      %2925 = vmatprep.subr.mxu0 0.0
      %2926 = vmatpush1.msra.mxu0 %v2898
      %2927 = vmatprep.subr.mxu0 0.0
      %2928 = vmatpush1.msra.mxu0 %v2899
      %2929 = vmatprep.subr.mxu0 0.0
      %2930 = vmatpush1.msra.mxu0 %v2900
      %2931 = vmatprep.subr.mxu0 0.0
      %2932 = vmatpush1.msra.mxu0 %v2901
      %2933 = vmatprep.subr.mxu0 0.0
      %2934 = vmatpush1.msra.mxu0 %v2902
      %2935 = vmatprep.subr.mxu0 0.0
      %2936 = vmatpush1.msra.mxu0 0.0
      %2937 = vmatprep.subr.mxu0 0.0
      %2938 = vmatpush1.msra.mxu0 0.0
      %2939 = vmatprep.subr.mxu0 0.0
      %2940 = vmatpush1.msra.mxu0 0.0
      %2941 = vmatprep.subr.mxu0 0.0
      %2942 = vmatpush1.msra.mxu0 0.0
      %2943 = vmatprep.subr.mxu0 0.0
      %2944 = vmatpush1.msra.mxu0 0.0
      %2945 = vmatprep.subr.mxu0 0.0
      %2946 = vmatpush1.msra.mxu0 0.0
      %2947 = vmatprep.subr.mxu0 0.0
      %2948 = vmatpush1.msra.mxu0 0.0
      %2949 = vmatprep.subr.mxu0 0.0
      %2950 = vmatpush1.msra.mxu0 0.0
      %2951 = vmatprep.subr.mxu0 0.0
      %2952 = vmatpush1.msra.mxu0 0.0
      %2953 = vmatprep.subr.mxu0 0.0
      %2954 = vmatpush1.msra.mxu0 0.0
      %2955 = vmatprep.subr.mxu0 0.0
      %2956 = vmatpush1.msra.mxu0 0.0
      %2957 = vmatprep.subr.mxu0 0.0
      %2958 = vmatpush1.msra.mxu0 0.0
      %2959 = vmatprep.subr.mxu0 0.0
      %2960 = vmatpush1.msra.mxu0 0.0
      %2961 = vmatprep.subr.mxu0 0.0
      %2962 = vmatpush1.msra.mxu0 0.0
      %2963 = vmatprep.subr.mxu0 0.0
      %2964 = vmatpush1.msra.mxu0 0.0
      %2965 = vmatprep.subr.mxu0 0.0
      %2966 = vmatpush1.msra.mxu0 0.0
      %2967 = vmatprep.mubr.f32.mxu0 0.0
      %2968 = vmatmul.mubr.f32.gmra.mrb[0].mxu0 %v2850
      %v2969 = vpop.f32.mrb[0].mxu0
      %v2970 = vadd.f32 0.0, %v2969
      %v2971 = vpop.f32.mrb[0].mxu0
      %2972 = vmatprep.mubr.f32.mxu0 0.0
      %2973 = vmatmul.mubr.f32.gmra.mrb[0].mxu0 %v2851
      %v2974 = vpop.f32.mrb[0].mxu0
      %v2975 = vadd.f32 0.0, %v2974
      %v2976 = vpop.f32.mrb[0].mxu0
      %2977 = vmatprep.mubr.f32.mxu0 0.0
      %2978 = vmatmul.mubr.f32.gmra.mrb[0].mxu0 %v2852
      %v2979 = vpop.f32.mrb[0].mxu0
      %v2980 = vadd.f32 0.0, %v2979
      %v2981 = vpop.f32.mrb[0].mxu0
      %2982 = vmatprep.mubr.f32.mxu0 0.0
      %2983 = vmatmul.mubr.f32.gmra.mrb[0].mxu0 %v2853
      %v2984 = vpop.f32.mrb[0].mxu0
      %v2985 = vadd.f32 0.0, %v2984
      %v2986 = vpop.f32.mrb[0].mxu0
      %2987 = vmatprep.mubr.f32.mxu0 0.0
      %2988 = vmatmul.mubr.f32.gmra.mrb[0].mxu0 %v2854
      %v2989 = vpop.f32.mrb[0].mxu0
      %v2990 = vadd.f32 0.0, %v2989
      %v2991 = vpop.f32.mrb[0].mxu0
      %2992 = vmatprep.mubr.f32.mxu0 0.0
      %2993 = vmatmul.mubr.f32.gmra.mrb[0].mxu0 %v2855
      %v2994 = vpop.f32.mrb[0].mxu0
      %v2995 = vadd.f32 0.0, %v2994
      %v2996 = vpop.f32.mrb[0].mxu0
      %2997 = vmatprep.mubr.f32.mxu0 0.0
      %2998 = vmatmul.mubr.f32.gmra.mrb[0].mxu0 %v2856
      %v2999 = vpop.f32.mrb[0].mxu0
      %v3000 = vadd.f32 0.0, %v2999
      %v3001 = vpop.f32.mrb[0].mxu0
      %3002 = vmatprep.mubr.f32.mxu0 0.0
      %3003 = vmatmul.mubr.f32.gmra.mrb[0].mxu0 %v2857
      %v3004 = vpop.f32.mrb[0].mxu0
      %v3005 = vadd.f32 0.0, %v3004
      %v3006 = vpop.f32.mrb[0].mxu0
      %3007 = vmatprep.mubr.f32.mxu0 0.0
      %3008 = vmatmul.mubr.f32.gmra.mrb[0].mxu0 %v2858
      %v3009 = vpop.f32.mrb[0].mxu0
      %v3010 = vadd.f32 0.0, %v3009
      %v3011 = vpop.f32.mrb[0].mxu0
      %3012 = vmatprep.mubr.f32.mxu0 0.0
      %3013 = vmatmul.mubr.f32.gmra.mrb[0].mxu0 %v2859
      %v3014 = vpop.f32.mrb[0].mxu0
      %v3015 = vadd.f32 0.0, %v3014
      %v3016 = vpop.f32.mrb[0].mxu0
      %3017 = vmatprep.mubr.f32.mxu0 0.0
      %3018 = vmatmul.mubr.f32.gmra.mrb[0].mxu0 %v2860
      %v3019 = vpop.f32.mrb[0].mxu0
      %v3020 = vadd.f32 0.0, %v3019
      %v3021 = vpop.f32.mrb[0].mxu0
      %3022 = vmatprep.mubr.f32.mxu0 0.0
      %3023 = vmatmul.mubr.f32.gmra.mrb[0].mxu0 %v2861
      %v3024 = vpop.f32.mrb[0].mxu0
      %v3025 = vadd.f32 0.0, %v3024
      %v3026 = vpop.f32.mrb[0].mxu0
      %3027 = vmatprep.mubr.f32.mxu0 0.0
      %3028 = vmatmul.mubr.f32.gmra.mrb[0].mxu0 %v2862
      %v3029 = vpop.f32.mrb[0].mxu0
      %v3030 = vadd.f32 0.0, %v3029
      %v3031 = vpop.f32.mrb[0].mxu0
      %3032 = vmatprep.mubr.f32.mxu0 0.0
      %3033 = vmatmul.mubr.f32.gmra.mrb[0].mxu0 %v2863
      %v3034 = vpop.f32.mrb[0].mxu0
      %v3035 = vadd.f32 0.0, %v3034
      %v3036 = vpop.f32.mrb[0].mxu0
      %3037 = vmatprep.mubr.f32.mxu0 0.0
      %3038 = vmatmul.mubr.f32.gmra.mrb[0].mxu0 %v2864
      %v3039 = vpop.f32.mrb[0].mxu0
      %v3040 = vadd.f32 0.0, %v3039
      %v3041 = vpop.f32.mrb[0].mxu0
      %3042 = vmatprep.mubr.f32.mxu0 0.0
      %3043 = vmatmul.mubr.f32.gmra.mrb[0].mxu0 %v2865
      %v3044 = vpop.f32.mrb[0].mxu0
      %v3045 = vadd.f32 0.0, %v3044
      %v3046 = vpop.f32.mrb[0].mxu0
      %3047 = vmatprep.mubr.f32.mxu0 0.0
      %3048 = vmatmul.mubr.f32.gmra.mrb[0].mxu0 %v2866
      %v3049 = vpop.f32.mrb[0].mxu0
      %v3050 = vadd.f32 0.0, %v3049
      %v3051 = vpop.f32.mrb[0].mxu0
      %3052 = vmatprep.mubr.f32.mxu0 0.0
      %3053 = vmatmul.mubr.f32.gmra.mrb[0].mxu0 %v2867
      %v3054 = vpop.f32.mrb[0].mxu0
      %v3055 = vadd.f32 0.0, %v3054
      %v3056 = vpop.f32.mrb[0].mxu0
      %3057 = vmatprep.mubr.f32.mxu0 0.0
      %3058 = vmatmul.mubr.f32.gmra.mrb[0].mxu0 %v2868
      %v3059 = vpop.f32.mrb[0].mxu0
      %v3060 = vadd.f32 0.0, %v3059
      %v3061 = vpop.f32.mrb[0].mxu0
      %3062 = vmatprep.mubr.f32.mxu0 0.0
      %3063 = vmatmul.mubr.f32.gmra.mrb[0].mxu0 %v2869
      %v3064 = vpop.f32.mrb[0].mxu0
      %v3065 = vadd.f32 0.0, %v3064
      %v3066 = vpop.f32.mrb[0].mxu0
      %3067 = vmatprep.mubr.f32.mxu0 0.0
      %3068 = vmatmul.mubr.f32.gmra.mrb[0].mxu0 %v2870
      %v3069 = vpop.f32.mrb[0].mxu0
      %v3070 = vadd.f32 0.0, %v3069
      %v3071 = vpop.f32.mrb[0].mxu0
      %3072 = vmatprep.mubr.f32.mxu0 0.0
      %3073 = vmatmul.mubr.f32.gmra.mrb[0].mxu0 %v2871
      %v3074 = vpop.f32.mrb[0].mxu0
      %v3075 = vadd.f32 0.0, %v3074
      %v3076 = vpop.f32.mrb[0].mxu0
      %3077 = vmatprep.mubr.f32.mxu0 0.0
      %3078 = vmatmul.mubr.f32.gmra.mrb[0].mxu0 %v2872
      %v3079 = vpop.f32.mrb[0].mxu0
      %v3080 = vadd.f32 0.0, %v3079
      %v3081 = vpop.f32.mrb[0].mxu0
      %3082 = vmatprep.mubr.f32.mxu0 0.0
      %3083 = vmatmul.mubr.f32.gmra.mrb[0].mxu0 %v2873
      %v3084 = vpop.f32.mrb[0].mxu0
      %v3085 = vadd.f32 0.0, %v3084
      %v3086 = vpop.f32.mrb[0].mxu0
      %3087 = vmatprep.mubr.f32.mxu0 0.0
      %3088 = vmatmul.mubr.f32.gmra.mrb[0].mxu0 %v2874
      %v3089 = vpop.f32.mrb[0].mxu0
      %v3090 = vadd.f32 0.0, %v3089
      %v3091 = vpop.f32.mrb[0].mxu0
      %3092 = vmatprep.mubr.f32.mxu0 0.0
      %3093 = vmatmul.mubr.f32.gmra.mrb[0].mxu0 %v2875
      %v3094 = vpop.f32.mrb[0].mxu0
      %v3095 = vadd.f32 0.0, %v3094
      %v3096 = vpop.f32.mrb[0].mxu0
      %3097 = vmatprep.mubr.f32.mxu0 0.0
      %3098 = vmatmul.mubr.f32.gmra.mrb[0].mxu0 %v2876
      %v3099 = vpop.f32.mrb[0].mxu0
      %v3100 = vadd.f32 0.0, %v3099
      %v3101 = vpop.f32.mrb[0].mxu0
      %3102 = vmatprep.mubr.f32.mxu0 0.0
      %3103 = vmatmul.mubr.f32.gmra.mrb[0].mxu0 %v2877
      %v3104 = vpop.f32.mrb[0].mxu0
      %v3105 = vadd.f32 0.0, %v3104
      %v3106 = vpop.f32.mrb[0].mxu0
      %3107 = vmatprep.mubr.f32.mxu0 0.0
      %3108 = vmatmul.mubr.f32.gmra.mrb[0].mxu0 %v2878
      %v3109 = vpop.f32.mrb[0].mxu0
      %v3110 = vadd.f32 0.0, %v3109
      %v3111 = vpop.f32.mrb[0].mxu0
      %3112 = vmatprep.mubr.f32.mxu0 0.0
      %3113 = vmatmul.mubr.f32.gmra.mrb[0].mxu0 %v2879
      %v3114 = vpop.f32.mrb[0].mxu0
      %v3115 = vadd.f32 0.0, %v3114
      %v3116 = vpop.f32.mrb[0].mxu0
      %3117 = vmatprep.mubr.f32.mxu0 0.0
      %3118 = vmatmul.mubr.f32.gmra.mrb[0].mxu0 %v2880
      %v3119 = vpop.f32.mrb[0].mxu0
      %v3120 = vadd.f32 0.0, %v3119
      %v3121 = vpop.f32.mrb[0].mxu0
      %3122 = vmatprep.mubr.f32.mxu0 0.0
      %3123 = vmatmul.mubr.f32.gmra.mrb[0].mxu0 %v2881
      %v3124 = vpop.f32.mrb[0].mxu0
      %v3125 = vadd.f32 0.0, %v3124
      %v3126 = vpop.f32.mrb[0].mxu0
      %3127 = vmatprep.mubr.f32.mxu0 0.0
      %3128 = vmatmul.mubr.f32.gmra.mrb[0].mxu0 %v2882
      %v3129 = vpop.f32.mrb[0].mxu0
      %v3130 = vadd.f32 0.0, %v3129
      %v3131 = vpop.f32.mrb[0].mxu0
      %3132 = vmatprep.mubr.f32.mxu0 0.0
      %3133 = vmatmul.mubr.f32.gmra.mrb[0].mxu0 %v2883
      %v3134 = vpop.f32.mrb[0].mxu0
      %v3135 = vadd.f32 0.0, %v3134
      %v3136 = vpop.f32.mrb[0].mxu0
      %3137 = vmatprep.mubr.f32.mxu0 0.0
      %3138 = vmatmul.mubr.f32.gmra.mrb[0].mxu0 %v2884
      %v3139 = vpop.f32.mrb[0].mxu0
      %v3140 = vadd.f32 0.0, %v3139
      %v3141 = vpop.f32.mrb[0].mxu0
      %3142 = vmatprep.mubr.f32.mxu0 0.0
      %3143 = vmatmul.mubr.f32.gmra.mrb[0].mxu0 %v2885
      %v3144 = vpop.f32.mrb[0].mxu0
      %v3145 = vadd.f32 0.0, %v3144
      %v3146 = vpop.f32.mrb[0].mxu0
      %3147 = vdwg.mxu0
      %v3148 = vadd.f32 %v2814, %v2970
      %v3149 = vadd.f32 %v2815, %v2975
      %v3150 = vadd.f32 %v2816, %v2980
      %v3151 = vadd.f32 %v2817, %v2985
      %v3152 = vadd.f32 %v2818, %v2990
      %v3153 = vadd.f32 %v2819, %v2995
      %v3154 = vadd.f32 %v2820, %v3000
      %v3155 = vadd.f32 %v2821, %v3005
      %v3156 = vadd.f32 %v2822, %v3010
      %v3157 = vadd.f32 %v2823, %v3015
      %v3158 = vadd.f32 %v2824, %v3020
      %v3159 = vadd.f32 %v2825, %v3025
      %v3160 = vadd.f32 %v2826, %v3030
      %v3161 = vadd.f32 %v2827, %v3035
      %v3162 = vadd.f32 %v2828, %v3040
      %v3163 = vadd.f32 %v2829, %v3045
      %v3164 = vadd.f32 %v2830, %v3050
      %v3165 = vadd.f32 %v2831, %v3055
      %v3166 = vadd.f32 %v2832, %v3060
      %v3167 = vadd.f32 %v2833, %v3065
      %v3168 = vadd.f32 %v2834, %v3070
      %v3169 = vadd.f32 %v2835, %v3075
      %v3170 = vadd.f32 %v2836, %v3080
      %v3171 = vadd.f32 %v2837, %v3085
      %v3172 = vadd.f32 %v2838, %v3090
      %v3173 = vadd.f32 %v2839, %v3095
      %v3174 = vadd.f32 %v2840, %v3100
      %v3175 = vadd.f32 %v2841, %v3105
      %v3176 = vadd.f32 %v2842, %v3110
      %v3177 = vadd.f32 %v2843, %v3115
      %v3178 = vadd.f32 %v2844, %v3120
      %v3179 = vadd.f32 %v2845, %v3125
      %v3180 = vadd.f32 %v2846, %v3130
      %v3181 = vadd.f32 %v2847, %v3135
      %v3182 = vadd.f32 %v2848, %v3140
      %v3183 = vadd.f32 %v2849, %v3145
      %v3184 = vmax.f32 %v3148, 0.0
      %v3185 = vmax.f32 %v3149, 0.0
      %v3186 = vmax.f32 %v3150, 0.0
      %v3187 = vmax.f32 %v3151, 0.0
      %v3188 = vmax.f32 %v3152, 0.0
      %v3189 = vmax.f32 %v3153, 0.0
      %v3190 = vmax.f32 %v3154, 0.0
      %v3191 = vmax.f32 %v3155, 0.0
      %v3192 = vmax.f32 %v3156, 0.0
      %v3193 = vmax.f32 %v3157, 0.0
      %v3194 = vmax.f32 %v3158, 0.0
      %v3195 = vmax.f32 %v3159, 0.0
      %v3196 = vmax.f32 %v3160, 0.0
      %v3197 = vmax.f32 %v3161, 0.0
      %v3198 = vmax.f32 %v3162, 0.0
      %v3199 = vmax.f32 %v3163, 0.0
      %v3200 = vmax.f32 %v3164, 0.0
      %v3201 = vmax.f32 %v3165, 0.0
      %v3202 = vmax.f32 %v3166, 0.0
      %v3203 = vmax.f32 %v3167, 0.0
      %v3204 = vmax.f32 %v3168, 0.0
      %v3205 = vmax.f32 %v3169, 0.0
      %v3206 = vmax.f32 %v3170, 0.0
      %v3207 = vmax.f32 %v3171, 0.0
      %v3208 = vmax.f32 %v3172, 0.0
      %v3209 = vmax.f32 %v3173, 0.0
      %v3210 = vmax.f32 %v3174, 0.0
      %v3211 = vmax.f32 %v3175, 0.0
      %v3212 = vmax.f32 %v3176, 0.0
      %v3213 = vmax.f32 %v3177, 0.0
      %v3214 = vmax.f32 %v3178, 0.0
      %v3215 = vmax.f32 %v3179, 0.0
      %v3216 = vmax.f32 %v3180, 0.0
      %v3217 = vmax.f32 %v3181, 0.0
      %v3218 = vmax.f32 %v3182, 0.0
      %v3219 = vmax.f32 %v3183, 0.0
      %vm3220 = vcmask 523264
      %3221 = vst.msk [vmem:[%s170] sm:$0xff] %vm3220, %v3184
      %3222 = vst.msk [vmem:[%s170 + $0x8] sm:$0xff] %vm3220, %v3185
      %3223 = vst.msk [vmem:[%s170 + $0x10] sm:$0xff] %vm3220, %v3186
      %3224 = vst.msk [vmem:[%s170 + $0x18] sm:$0xff] %vm3220, %v3187
      %3225 = vst.msk [vmem:[%s170 + $0x20] sm:$0xff] %vm3220, %v3188
      %3226 = vst.msk [vmem:[%s170 + $0x28] sm:$0xff] %vm3220, %v3189
      %3227 = vst.msk [vmem:[%s170 + $0x30] sm:$0xff] %vm3220, %v3190
      %3228 = vst.msk [vmem:[%s170 + $0x38] sm:$0xff] %vm3220, %v3191
      %3229 = vst.msk [vmem:[%s170 + $0x40] sm:$0xff] %vm3220, %v3192
      %3230 = vst.msk [vmem:[%s170 + $0x48] sm:$0xff] %vm3220, %v3193
      %3231 = vst.msk [vmem:[%s170 + $0x50] sm:$0xff] %vm3220, %v3194
      %3232 = vst.msk [vmem:[%s170 + $0x58] sm:$0xff] %vm3220, %v3195
      %3233 = vst.msk [vmem:[%s170 + $0x60] sm:$0xff] %vm3220, %v3196
      %3234 = vst.msk [vmem:[%s170 + $0x68] sm:$0xff] %vm3220, %v3197
      %3235 = vst.msk [vmem:[%s170 + $0x70] sm:$0xff] %vm3220, %v3198
      %3236 = vst.msk [vmem:[%s170 + $0x78] sm:$0xff] %vm3220, %v3199
      %3237 = vst.msk [vmem:[%s170 + $0x80] sm:$0xff] %vm3220, %v3200
      %3238 = vst.msk [vmem:[%s170 + $0x88] sm:$0xff] %vm3220, %v3201
      %3239 = vst.msk [vmem:[%s170 + $0x90] sm:$0xff] %vm3220, %v3202
      %3240 = vst.msk [vmem:[%s170 + $0x98] sm:$0xff] %vm3220, %v3203
      %3241 = vst.msk [vmem:[%s170 + $0xa0] sm:$0xff] %vm3220, %v3204
      %3242 = vst.msk [vmem:[%s170 + $0xa8] sm:$0xff] %vm3220, %v3205
      %3243 = vst.msk [vmem:[%s170 + $0xb0] sm:$0xff] %vm3220, %v3206
      %3244 = vst.msk [vmem:[%s170 + $0xb8] sm:$0xff] %vm3220, %v3207
      %3245 = vst.msk [vmem:[%s170 + $0xc0] sm:$0xff] %vm3220, %v3208
      %3246 = vst.msk [vmem:[%s170 + $0xc8] sm:$0xff] %vm3220, %v3209
      %3247 = vst.msk [vmem:[%s170 + $0xd0] sm:$0xff] %vm3220, %v3210
      %3248 = vst.msk [vmem:[%s170 + $0xd8] sm:$0xff] %vm3220, %v3211
      %3249 = vst.msk [vmem:[%s170 + $0xe0] sm:$0xff] %vm3220, %v3212
      %3250 = vst.msk [vmem:[%s170 + $0xe8] sm:$0xff] %vm3220, %v3213
      %3251 = vst.msk [vmem:[%s170 + $0xf0] sm:$0xff] %vm3220, %v3214
      %3252 = vst.msk [vmem:[%s170 + $0xf8] sm:$0xff] %vm3220, %v3215
      %3253 = vst.msk [vmem:[%s170 + $0x100] sm:$0xff] %vm3220, %v3216
      %3254 = vst.msk [vmem:[%s170 + $0x108] sm:$0xff] %vm3220, %v3217
      %3255 = vst.msk [vmem:[%s170 + $0x110] sm:$0xff] %vm3220, %v3218
      %3256 = vst.msk [vmem:[%s170 + $0x118] sm:$0xff] %vm3220, %v3219
      %p3257 = scmp.lt.s32.totalorder %s14, 1
      %s3258 = scalar_select %p3257, %s14, 1
      %s3259 = smul.addr %s3258, 36
      %s3260 = smul.addr %s3259, 8
      %s3261 = scalar_lea.vmem %s3, %s3260
      // Predicated region
      $region33: #{qkplus_forward.5} parent=31 // pred_check
        %p3262 = pneg %p100
      $region34: #{qkplus_forward.5} parent=31 // pred_check_branch
        %3264 = sbr.rel (%p3262) target = $region36
      $region35: #{qkplus_forward.5} parent=31 // pred_region
        _
      $region36: #{qkplus_forward.5} parent=31 // pred_fallthru
        _
    $region32: #{qkplus_forward.5} parent=5 // pred_fallthru
      _
    %p3265 = scmp.le.s32.totalorder 2, %s9
    // Predicated region
    $region37: #{qkplus_forward.5} parent=5 // pred_check
      %p3266 = pneg %p3265
    $region38: #{qkplus_forward.5} parent=5 // pred_check_branch
      %3268 = sbr.rel (%p3266) target = $region40
    $region39: #{qkplus_forward.5} parent=5 // pred_region
      %s3269 = ssub.s32 %s9, 2
      // Predicated region
      $region41: #{qkplus_forward.5} parent=39 // pred_check
        %p3270 = pneg %p106
      $region42: #{qkplus_forward.5} parent=39 // pred_check_branch
        %3272 = sbr.rel (%p3270) target = $region44
      $region43: #{qkplus_forward.5} parent=39 // pred_region
        %p3273 = scmp.lt.s32.totalorder %s15, 1
        %s3274 = scalar_select %p3273, %s15, 1
        %s3275 = smul.addr %s3274, 36
        %s3276 = smul.addr %s3275, 8
        %s3277 = scalar_lea.vmem %s3, %s3276
      $region44: #{qkplus_forward.5} parent=39 // pred_fallthru
        _
    $region40: #{qkplus_forward.5} parent=5 // pred_fallthru
      _
  $region6: #{qkplus_forward.5} parent=0 // loop_footer
    %s13 = sadd.s32 1, %s9
  $region7: #{qkplus_forward.5} parent=0 // loop_footer_branch
    %8 = sbr.rel target = $region3
  $region8: #{qkplus_forward.5} parent=0 // loop_exit
    _

// kernel: qkplus_forward.6
$region0: #{qkplus_forward.6}
  #allocation0 [shape = 'u32[]', space=smem, size = 0x4, offset = 0x4, fixed_abs, tag = 'smem constant byte address 0x4 - core index']
  #allocation1 [shape = 'u32[144,128]{1,0:T(1,128)}', space=vmem, size = 0x12000, scoped, tag = 'internal scratch']
  %s0 = inlined_call_operand.vmem [shape: f32[2,332,64], index: 0, kind: input, shape index: {}]
  %s1 = inlined_call_operand.vmem [shape: f32[9,64,64], index: 1, kind: input, shape index: {}]
  %s2 = inlined_call_operand.vmem [shape: f32[1,64], index: 2, kind: input, shape index: {}]
  %s3 = inlined_call_operand.vmem [shape: f32[2,288,64], index: 3, kind: output, shape index: {}]
  %s4 = sld [smem:[#allocation0]]
  $region45: #{qkplus_forward.6} parent=0
    _
  %s6 = ssub.s32 1, %s4
  %s7 = scalar_select 0, %s6, %s4
  loop: start=0, step=1, limit=4
  $region2: #{qkplus_forward.6} parent=0 // loop_pre_header
    _
  $region3: #{qkplus_forward.6} parent=0 // loop_header
    %s9 = sphi 0, %s13
    %p10 = scmp.ge.s32.totalorder %s9, 4
    %s19 = sphi 0, %s21
    %s22 = sphi 0, %s19
    %s23 = sphi 0, %s22
    %s39 = sphi 0, %s23
    %s43 = sphi 0, %s43
    %s45 = sphi 0, %s43
    %s46 = sphi 0, %s45
    %s60 = sphi 0, %s46
    %s64 = sphi 0, %s64
    %s66 = sphi 0, %s64
    %s67 = sphi 0, %s66
    %s81 = sphi 0, %s67
    %s87 = sphi 0, %s89
    %s90 = sphi 0, %s87
    %s91 = sphi 0, %s90
    %s107 = sphi 0, %s91
  $region4: #{qkplus_forward.6} parent=0 // loop_header_branch
    %12 = sbr.rel (%p10) target = $region8
  $region5: #{qkplus_forward.6} parent=0 // loop_body
    %s14 = ssub.s32 %s9, 1
    %s15 = ssub.s32 %s9, 2
    %s16 = sadd.s32 %s9, 1
    %s17 = ssub.s32 %s9, %s16
    %p18 = scmp.eq.s32.totalorder %s17, 0
    %s20 = sadd.s32 %s19, 1
    %s21 = scalar_select %p18, %s19, %s20
    %p24 = pneg %p18
    %p25 = scmp.eq.s32.totalorder %s9, 1
    %p26 = por %p24, %p25
    %p27 = scmp.ne.s32.totalorder %s19, %s22
    %p28 = scmp.eq.s32.totalorder %s9, 0
    %p29 = por %p27, %p28
    %p30 = scmp.ne.s32.totalorder %s19, %s22
    %p31 = scmp.eq.s32.totalorder %s14, 1
    %p32 = por %p30, %p31
    %p33 = scmp.ne.s32.totalorder %s22, %s23
    %p34 = scmp.eq.s32.totalorder %s14, 0
    %p35 = por %p33, %p34
    %p36 = scmp.ne.s32.totalorder %s22, %s23
    %p37 = scmp.eq.s32.totalorder %s15, 1
    %p38 = por %p36, %p37
    %p40 = scmp.ne.s32.totalorder %s23, %s39
    %p41 = scmp.eq.s32.totalorder %s15, 0
    %p42 = por %p40, %p41
    %s44 = sadd.s32 %s43, 1
    %p47 = scmp.eq.s32.totalorder %s9, 1
    %p48 = scmp.ne.s32.totalorder %s43, %s45
    %p49 = scmp.eq.s32.totalorder %s9, 0
    %p50 = por %p48, %p49
    %p51 = scmp.ne.s32.totalorder %s43, %s45
    %p52 = scmp.eq.s32.totalorder %s14, 1
    %p53 = por %p51, %p52
    %p54 = scmp.ne.s32.totalorder %s45, %s46
    %p55 = scmp.eq.s32.totalorder %s14, 0
    %p56 = por %p54, %p55
    %p57 = scmp.ne.s32.totalorder %s45, %s46
    %p58 = scmp.eq.s32.totalorder %s15, 1
    %p59 = por %p57, %p58
    %p61 = scmp.ne.s32.totalorder %s46, %s60
    %p62 = scmp.eq.s32.totalorder %s15, 0
    %p63 = por %p61, %p62
    %s65 = sadd.s32 %s64, 1
    %p68 = scmp.eq.s32.totalorder %s9, 1
    %p69 = scmp.ne.s32.totalorder %s64, %s66
    %p70 = scmp.eq.s32.totalorder %s9, 0
    %p71 = por %p69, %p70
    %p72 = scmp.ne.s32.totalorder %s64, %s66
    %p73 = scmp.eq.s32.totalorder %s14, 1
    %p74 = por %p72, %p73
    %p75 = scmp.ne.s32.totalorder %s66, %s67
    %p76 = scmp.eq.s32.totalorder %s14, 0
    %p77 = por %p75, %p76
    %p78 = scmp.ne.s32.totalorder %s66, %s67
    %p79 = scmp.eq.s32.totalorder %s15, 1
    %p80 = por %p78, %p79
    %p82 = scmp.ne.s32.totalorder %s67, %s81
    %p83 = scmp.eq.s32.totalorder %s15, 0
    %p84 = por %p82, %p83
    %s85 = ssub.s32 %s9, %s16
    %p86 = scmp.eq.s32.totalorder %s85, 0
    %s88 = sadd.s32 %s87, 1
    %s89 = scalar_select %p86, %s87, %s88
    %p92 = pneg %p86
    %p93 = scmp.eq.s32.totalorder %s9, 1
    %p94 = por %p92, %p93
    %p95 = scmp.ne.s32.totalorder %s87, %s90
    %p96 = scmp.eq.s32.totalorder %s9, 0
    %p97 = por %p95, %p96
    %p98 = scmp.ne.s32.totalorder %s87, %s90
    %p99 = scmp.eq.s32.totalorder %s14, 1
    %p100 = por %p98, %p99
    %p101 = scmp.ne.s32.totalorder %s90, %s91
    %p102 = scmp.eq.s32.totalorder %s14, 0
    %p103 = por %p101, %p102
    %p104 = scmp.ne.s32.totalorder %s90, %s91
    %p105 = scmp.eq.s32.totalorder %s15, 1
    %p106 = por %p104, %p105
    %p108 = scmp.ne.s32.totalorder %s91, %s107
    %p109 = scmp.eq.s32.totalorder %s15, 0
    %p110 = por %p108, %p109
    %p111 = scmp.le.s32.totalorder 1, %s9
    %p112 = scmp.lt.s32.totalorder %s9, 3
    %p113 = pnand %p111, %p112
    %p114 = pneg %p113
    // Predicated region
    $region9: #{qkplus_forward.6} parent=5 // pred_check
      _
    $region10: #{qkplus_forward.6} parent=5 // pred_check_branch
      %116 = sbr.rel (%p113) target = $region12
    $region11: #{qkplus_forward.6} parent=5 // pred_region
      %s117 = ssub.s32 %s9, 1
      // Predicated region
      $region13: #{qkplus_forward.6} parent=11 // pred_check
        %p118 = pneg %p56
      $region14: #{qkplus_forward.6} parent=11 // pred_check_branch
        %120 = sbr.rel (%p118) target = $region16
      $region15: #{qkplus_forward.6} parent=11 // pred_region
        _
      $region16: #{qkplus_forward.6} parent=11 // pred_fallthru
        _
      // Predicated region
      $region17: #{qkplus_forward.6} parent=11 // pred_check
        %p121 = pneg %p77
      $region18: #{qkplus_forward.6} parent=11 // pred_check_branch
        %123 = sbr.rel (%p121) target = $region20
      $region19: #{qkplus_forward.6} parent=11 // pred_region
        _
      $region20: #{qkplus_forward.6} parent=11 // pred_fallthru
        _
    $region12: #{qkplus_forward.6} parent=5 // pred_fallthru
      _
    %p124 = scmp.lt.s32.totalorder %s9, 2
    // Predicated region
    $region21: #{qkplus_forward.6} parent=5 // pred_check
      %p125 = pneg %p124
    $region22: #{qkplus_forward.6} parent=5 // pred_check_branch
      %127 = sbr.rel (%p125) target = $region24
    $region23: #{qkplus_forward.6} parent=5 // pred_region
      // Predicated region
      $region25: #{qkplus_forward.6} parent=23 // pred_check
        %p128 = pneg %p29
      $region26: #{qkplus_forward.6} parent=23 // pred_check_branch
        %130 = sbr.rel (%p128) target = $region28
      $region27: #{qkplus_forward.6} parent=23 // pred_region
        %p131 = scmp.lt.s32.totalorder %s9, 1
        %s132 = scalar_select %p131, %s9, 1
        %s133 = smul.addr %s132, 42
        %s134 = smul.addr %s133, 8
        %s135 = scalar_lea.vmem %s0, %s134
      $region28: #{qkplus_forward.6} parent=23 // pred_fallthru
        _
    $region24: #{qkplus_forward.6} parent=5 // pred_fallthru
      _
    %p136 = scmp.le.s32.totalorder 1, %s9
    %p137 = scmp.lt.s32.totalorder %s9, 3
    %p138 = pnand %p136, %p137
    %p139 = pneg %p138
    // Predicated region
    $region29: #{qkplus_forward.6} parent=5 // pred_check
      _
    $region30: #{qkplus_forward.6} parent=5 // pred_check_branch
      %141 = sbr.rel (%p138) target = $region32
    $region31: #{qkplus_forward.6} parent=5 // pred_region
      %s142 = ssub.s32 %s9, 1
      %p143 = scmp.lt.s32.totalorder %s14, 1
      %s144 = scalar_select %p143, %s14, 1
      %s145 = smul.addr %s144, 42
      %s146 = smul.addr %s145, 8
      %s147 = scalar_lea.vmem %s0, %s146
      %p148 = pneg %p35
      %p149 = pneg %p32
      %p150 = pneg %p56
      %p151 = pneg %p53
      %p152 = pneg %p77
      %p153 = pneg %p74
      %p154 = pneg %p103
      %p155 = pneg %p100
      %p156 = scmp.lt.s32.totalorder %s14, 1
      %s157 = scalar_select %p156, %s14, 1
      %s158 = smul.addr %s157, 36
      %s159 = smul.addr %s158, 8
      %s160 = scalar_lea.vmem %s3, %s159
      %p161 = scmp.lt.s32.totalorder %s14, 1
      %s162 = scalar_select %p161, %s14, 1
      %s163 = smul.addr %s162, 42
      %s164 = smul.addr %s163, 8
      %s165 = scalar_lea.vmem %s0, %s164
      %p166 = scmp.lt.s32.totalorder %s14, 1
      %s167 = scalar_select %p166, %s14, 1
      %s168 = smul.addr %s167, 36
      %s169 = smul.addr %s168, 8
      %s170 = scalar_lea.vmem %s3, %s169
      %v171 = vld [vmem:[%s2] sm:$0x1]
      %v173 = vlaneseq
      %v174 = vshrl.u32 %v173, 7
      %v175 = vsub.s32 0, %v174
      %v176 = vrot.slane %v171, %v175
      %v178 = vadd.f32 %v176, 0.0
      %v179 = vld [vmem:[%s165] sm:$0xff]
      %v180 = vld [vmem:[%s165 + $0x8] sm:$0xff]
      %v181 = vld [vmem:[%s165 + $0x10] sm:$0xff]
      %v182 = vld [vmem:[%s165 + $0x18] sm:$0xff]
      %v183 = vld [vmem:[%s165 + $0x20] sm:$0xff]
      %v184 = vld [vmem:[%s165 + $0x28] sm:$0xff]
      %v185 = vld [vmem:[%s165 + $0x30] sm:$0xff]
      %v186 = vld [vmem:[%s165 + $0x38] sm:$0xff]
      %v187 = vld [vmem:[%s165 + $0x40] sm:$0xff]
      %v188 = vld [vmem:[%s165 + $0x48] sm:$0xff]
      %v189 = vld [vmem:[%s165 + $0x50] sm:$0xff]
      %v190 = vld [vmem:[%s165 + $0x58] sm:$0xff]
      %v191 = vld [vmem:[%s165 + $0x60] sm:$0xff]
      %v192 = vld [vmem:[%s165 + $0x68] sm:$0xff]
      %v193 = vld [vmem:[%s165 + $0x70] sm:$0xff]
      %v194 = vld [vmem:[%s165 + $0x78] sm:$0xff]
      %v195 = vld [vmem:[%s165 + $0x80] sm:$0xff]
      %v196 = vld [vmem:[%s165 + $0x88] sm:$0xff]
      %v197 = vld [vmem:[%s165 + $0x90] sm:$0xff]
      %v198 = vld [vmem:[%s165 + $0x98] sm:$0xff]
      %v199 = vld [vmem:[%s165 + $0xa0] sm:$0xff]
      %v200 = vld [vmem:[%s165 + $0xa8] sm:$0xff]
      %v201 = vld [vmem:[%s165 + $0xb0] sm:$0xff]
      %v202 = vld [vmem:[%s165 + $0xb8] sm:$0xff]
      %v203 = vld [vmem:[%s165 + $0xc0] sm:$0xff]
      %v204 = vld [vmem:[%s165 + $0xc8] sm:$0xff]
      %v205 = vld [vmem:[%s165 + $0xd0] sm:$0xff]
      %v206 = vld [vmem:[%s165 + $0xd8] sm:$0xff]
      %v207 = vld [vmem:[%s165 + $0xe0] sm:$0xff]
      %v208 = vld [vmem:[%s165 + $0xe8] sm:$0xff]
      %v209 = vld [vmem:[%s165 + $0xf0] sm:$0xff]
      %v210 = vld [vmem:[%s165 + $0xf8] sm:$0xff]
      %v211 = vld [vmem:[%s165 + $0x100] sm:$0xff]
      %v212 = vld [vmem:[%s165 + $0x108] sm:$0xff]
      %v213 = vld [vmem:[%s165 + $0x110] sm:$0xff]
      %v214 = vld [vmem:[%s165 + $0x118] sm:$0xff]
      %v215 = vld [vmem:[%s1] sm:$0xff]
      %v216 = vld [vmem:[%s1 + $0x8] sm:$0xff]
      %v217 = vld [vmem:[%s1 + $0x10] sm:$0xff]
      %v218 = vld [vmem:[%s1 + $0x18] sm:$0xff]
      %v219 = vld [vmem:[%s1 + $0x20] sm:$0xff]
      %v220 = vld [vmem:[%s1 + $0x28] sm:$0xff]
      %v221 = vld [vmem:[%s1 + $0x30] sm:$0xff]
      %v222 = vld [vmem:[%s1 + $0x38] sm:$0xff]
      %vm223 = vcmask 523264
      %v225 = vsel %vm223, %v179, 0
      %v228 = vsel %vm223, %v180, 0
      %v231 = vsel %vm223, %v181, 0
      %v234 = vsel %vm223, %v182, 0
      %v237 = vsel %vm223, %v183, 0
      %v240 = vsel %vm223, %v184, 0
      %v243 = vsel %vm223, %v185, 0
      %v246 = vsel %vm223, %v186, 0
      %v249 = vsel %vm223, %v187, 0
      %v252 = vsel %vm223, %v188, 0
      %v255 = vsel %vm223, %v189, 0
      %v258 = vsel %vm223, %v190, 0
      %v261 = vsel %vm223, %v191, 0
      %v264 = vsel %vm223, %v192, 0
      %v267 = vsel %vm223, %v193, 0
      %v270 = vsel %vm223, %v194, 0
      %v273 = vsel %vm223, %v195, 0
      %v276 = vsel %vm223, %v196, 0
      %v279 = vsel %vm223, %v197, 0
      %v282 = vsel %vm223, %v198, 0
      %v285 = vsel %vm223, %v199, 0
      %v288 = vsel %vm223, %v200, 0
      %v291 = vsel %vm223, %v201, 0
      %v294 = vsel %vm223, %v202, 0
      %v297 = vsel %vm223, %v203, 0
      %v300 = vsel %vm223, %v204, 0
      %v303 = vsel %vm223, %v205, 0
      %v306 = vsel %vm223, %v206, 0
      %v309 = vsel %vm223, %v207, 0
      %v312 = vsel %vm223, %v208, 0
      %v315 = vsel %vm223, %v209, 0
      %v318 = vsel %vm223, %v210, 0
      %v321 = vsel %vm223, %v211, 0
      %v324 = vsel %vm223, %v212, 0
      %v327 = vsel %vm223, %v213, 0
      %v330 = vsel %vm223, %v214, 0
      %332 = vmatprep.subr.mxu0 0.0
      %333 = vmatpush1.msra.mxu0 %v215
      %334 = vmatprep.subr.mxu0 0.0
      %335 = vmatpush1.msra.mxu0 %v216
      %336 = vmatprep.subr.mxu0 0.0
      %337 = vmatpush1.msra.mxu0 %v217
      %338 = vmatprep.subr.mxu0 0.0
      %339 = vmatpush1.msra.mxu0 %v218
      %340 = vmatprep.subr.mxu0 0.0
      %341 = vmatpush1.msra.mxu0 %v219
      %342 = vmatprep.subr.mxu0 0.0
      %343 = vmatpush1.msra.mxu0 %v220
      %344 = vmatprep.subr.mxu0 0.0
      %345 = vmatpush1.msra.mxu0 %v221
      %346 = vmatprep.subr.mxu0 0.0
      %347 = vmatpush1.msra.mxu0 %v222
      %348 = vmatprep.subr.mxu0 0.0
      %349 = vmatpush1.msra.mxu0 0.0
      %350 = vmatprep.subr.mxu0 0.0
      %351 = vmatpush1.msra.mxu0 0.0
      %352 = vmatprep.subr.mxu0 0.0
      %353 = vmatpush1.msra.mxu0 0.0
      %354 = vmatprep.subr.mxu0 0.0
      %355 = vmatpush1.msra.mxu0 0.0
      %356 = vmatprep.subr.mxu0 0.0
      %357 = vmatpush1.msra.mxu0 0.0
      %358 = vmatprep.subr.mxu0 0.0
      %359 = vmatpush1.msra.mxu0 0.0
      %360 = vmatprep.subr.mxu0 0.0
      %361 = vmatpush1.msra.mxu0 0.0
      %362 = vmatprep.subr.mxu0 0.0
      %363 = vmatpush1.msra.mxu0 0.0
      %364 = vmatprep.subr.mxu0 0.0
      %365 = vmatpush1.msra.mxu0 0.0
      %366 = vmatprep.subr.mxu0 0.0
      %367 = vmatpush1.msra.mxu0 0.0
      %368 = vmatprep.subr.mxu0 0.0
      %369 = vmatpush1.msra.mxu0 0.0
      %370 = vmatprep.subr.mxu0 0.0
      %371 = vmatpush1.msra.mxu0 0.0
      %372 = vmatprep.subr.mxu0 0.0
      %373 = vmatpush1.msra.mxu0 0.0
      %374 = vmatprep.subr.mxu0 0.0
      %375 = vmatpush1.msra.mxu0 0.0
      %376 = vmatprep.subr.mxu0 0.0
      %377 = vmatpush1.msra.mxu0 0.0
      %378 = vmatprep.subr.mxu0 0.0
      %379 = vmatpush1.msra.mxu0 0.0
      %380 = vmatprep.subr.mxu0 0.0
      %381 = vmatpush1.msra.mxu0 0.0
      %382 = vmatprep.subr.mxu0 0.0
      %383 = vmatpush1.msra.mxu0 0.0
      %384 = vmatprep.subr.mxu0 0.0
      %385 = vmatpush1.msra.mxu0 0.0
      %386 = vmatprep.subr.mxu0 0.0
      %387 = vmatpush1.msra.mxu0 0.0
      %388 = vmatprep.subr.mxu0 0.0
      %389 = vmatpush1.msra.mxu0 0.0
      %390 = vmatprep.subr.mxu0 0.0
      %391 = vmatpush1.msra.mxu0 0.0
      %392 = vmatprep.subr.mxu0 0.0
      %393 = vmatpush1.msra.mxu0 0.0
      %394 = vmatprep.subr.mxu0 0.0
      %395 = vmatpush1.msra.mxu0 0.0
      %396 = vmatprep.mubr.f32.mxu0 0.0
      %397 = vmatmul.mubr.f32.gmra.mrb[0].mxu0 %v225
      %v398 = vpop.f32.mrb[0].mxu0
      %v399 = vadd.f32 0.0, %v398
      %v400 = vpop.f32.mrb[0].mxu0
      %401 = vmatprep.mubr.f32.mxu0 0.0
      %402 = vmatmul.mubr.f32.gmra.mrb[0].mxu0 %v228
      %v403 = vpop.f32.mrb[0].mxu0
      %v404 = vadd.f32 0.0, %v403
      %v405 = vpop.f32.mrb[0].mxu0
      %406 = vmatprep.mubr.f32.mxu0 0.0
      %407 = vmatmul.mubr.f32.gmra.mrb[0].mxu0 %v231
      %v408 = vpop.f32.mrb[0].mxu0
      %v409 = vadd.f32 0.0, %v408
      %v410 = vpop.f32.mrb[0].mxu0
      %411 = vmatprep.mubr.f32.mxu0 0.0
      %412 = vmatmul.mubr.f32.gmra.mrb[0].mxu0 %v234
      %v413 = vpop.f32.mrb[0].mxu0
      %v414 = vadd.f32 0.0, %v413
      %v415 = vpop.f32.mrb[0].mxu0
      %416 = vmatprep.mubr.f32.mxu0 0.0
      %417 = vmatmul.mubr.f32.gmra.mrb[0].mxu0 %v237
      %v418 = vpop.f32.mrb[0].mxu0
      %v419 = vadd.f32 0.0, %v418
      %v420 = vpop.f32.mrb[0].mxu0
      %421 = vmatprep.mubr.f32.mxu0 0.0
      %422 = vmatmul.mubr.f32.gmra.mrb[0].mxu0 %v240
      %v423 = vpop.f32.mrb[0].mxu0
      %v424 = vadd.f32 0.0, %v423
      %v425 = vpop.f32.mrb[0].mxu0
      %426 = vmatprep.mubr.f32.mxu0 0.0
      %427 = vmatmul.mubr.f32.gmra.mrb[0].mxu0 %v243
      %v428 = vpop.f32.mrb[0].mxu0
      %v429 = vadd.f32 0.0, %v428
      %v430 = vpop.f32.mrb[0].mxu0
      %431 = vmatprep.mubr.f32.mxu0 0.0
      %432 = vmatmul.mubr.f32.gmra.mrb[0].mxu0 %v246
      %v433 = vpop.f32.mrb[0].mxu0
      %v434 = vadd.f32 0.0, %v433
      %v435 = vpop.f32.mrb[0].mxu0
      %436 = vmatprep.mubr.f32.mxu0 0.0
      %437 = vmatmul.mubr.f32.gmra.mrb[0].mxu0 %v249
      %v438 = vpop.f32.mrb[0].mxu0
      %v439 = vadd.f32 0.0, %v438
      %v440 = vpop.f32.mrb[0].mxu0
      %441 = vmatprep.mubr.f32.mxu0 0.0
      %442 = vmatmul.mubr.f32.gmra.mrb[0].mxu0 %v252
      %v443 = vpop.f32.mrb[0].mxu0
      %v444 = vadd.f32 0.0, %v443
      %v445 = vpop.f32.mrb[0].mxu0
      %446 = vmatprep.mubr.f32.mxu0 0.0
      %447 = vmatmul.mubr.f32.gmra.mrb[0].mxu0 %v255
      %v448 = vpop.f32.mrb[0].mxu0
      %v449 = vadd.f32 0.0, %v448
      %v450 = vpop.f32.mrb[0].mxu0
      %451 = vmatprep.mubr.f32.mxu0 0.0
      %452 = vmatmul.mubr.f32.gmra.mrb[0].mxu0 %v258
      %v453 = vpop.f32.mrb[0].mxu0
      %v454 = vadd.f32 0.0, %v453
      %v455 = vpop.f32.mrb[0].mxu0
      %456 = vmatprep.mubr.f32.mxu0 0.0
      %457 = vmatmul.mubr.f32.gmra.mrb[0].mxu0 %v261
      %v458 = vpop.f32.mrb[0].mxu0
      %v459 = vadd.f32 0.0, %v458
      %v460 = vpop.f32.mrb[0].mxu0
      %461 = vmatprep.mubr.f32.mxu0 0.0
      %462 = vmatmul.mubr.f32.gmra.mrb[0].mxu0 %v264
      %v463 = vpop.f32.mrb[0].mxu0
      %v464 = vadd.f32 0.0, %v463
      %v465 = vpop.f32.mrb[0].mxu0
      %466 = vmatprep.mubr.f32.mxu0 0.0
      %467 = vmatmul.mubr.f32.gmra.mrb[0].mxu0 %v267
      %v468 = vpop.f32.mrb[0].mxu0
      %v469 = vadd.f32 0.0, %v468
      %v470 = vpop.f32.mrb[0].mxu0
      %471 = vmatprep.mubr.f32.mxu0 0.0
      %472 = vmatmul.mubr.f32.gmra.mrb[0].mxu0 %v270
      %v473 = vpop.f32.mrb[0].mxu0
      %v474 = vadd.f32 0.0, %v473
      %v475 = vpop.f32.mrb[0].mxu0
      %476 = vmatprep.mubr.f32.mxu0 0.0
      %477 = vmatmul.mubr.f32.gmra.mrb[0].mxu0 %v273
      %v478 = vpop.f32.mrb[0].mxu0
      %v479 = vadd.f32 0.0, %v478
      %v480 = vpop.f32.mrb[0].mxu0
      %481 = vmatprep.mubr.f32.mxu0 0.0
      %482 = vmatmul.mubr.f32.gmra.mrb[0].mxu0 %v276
      %v483 = vpop.f32.mrb[0].mxu0
      %v484 = vadd.f32 0.0, %v483
      %v485 = vpop.f32.mrb[0].mxu0
      %486 = vmatprep.mubr.f32.mxu0 0.0
      %487 = vmatmul.mubr.f32.gmra.mrb[0].mxu0 %v279
      %v488 = vpop.f32.mrb[0].mxu0
      %v489 = vadd.f32 0.0, %v488
      %v490 = vpop.f32.mrb[0].mxu0
      %491 = vmatprep.mubr.f32.mxu0 0.0
      %492 = vmatmul.mubr.f32.gmra.mrb[0].mxu0 %v282
      %v493 = vpop.f32.mrb[0].mxu0
      %v494 = vadd.f32 0.0, %v493
      %v495 = vpop.f32.mrb[0].mxu0
      %496 = vmatprep.mubr.f32.mxu0 0.0
      %497 = vmatmul.mubr.f32.gmra.mrb[0].mxu0 %v285
      %v498 = vpop.f32.mrb[0].mxu0
      %v499 = vadd.f32 0.0, %v498
      %v500 = vpop.f32.mrb[0].mxu0
      %501 = vmatprep.mubr.f32.mxu0 0.0
      %502 = vmatmul.mubr.f32.gmra.mrb[0].mxu0 %v288
      %v503 = vpop.f32.mrb[0].mxu0
      %v504 = vadd.f32 0.0, %v503
      %v505 = vpop.f32.mrb[0].mxu0
      %506 = vmatprep.mubr.f32.mxu0 0.0
      %507 = vmatmul.mubr.f32.gmra.mrb[0].mxu0 %v291
      %v508 = vpop.f32.mrb[0].mxu0
      %v509 = vadd.f32 0.0, %v508
      %v510 = vpop.f32.mrb[0].mxu0
      %511 = vmatprep.mubr.f32.mxu0 0.0
      %512 = vmatmul.mubr.f32.gmra.mrb[0].mxu0 %v294
      %v513 = vpop.f32.mrb[0].mxu0
      %v514 = vadd.f32 0.0, %v513
      %v515 = vpop.f32.mrb[0].mxu0
      %516 = vmatprep.mubr.f32.mxu0 0.0
      %517 = vmatmul.mubr.f32.gmra.mrb[0].mxu0 %v297
      %v518 = vpop.f32.mrb[0].mxu0
      %v519 = vadd.f32 0.0, %v518
      %v520 = vpop.f32.mrb[0].mxu0
      %521 = vmatprep.mubr.f32.mxu0 0.0
      %522 = vmatmul.mubr.f32.gmra.mrb[0].mxu0 %v300
      %v523 = vpop.f32.mrb[0].mxu0
      %v524 = vadd.f32 0.0, %v523
      %v525 = vpop.f32.mrb[0].mxu0
      %526 = vmatprep.mubr.f32.mxu0 0.0
      %527 = vmatmul.mubr.f32.gmra.mrb[0].mxu0 %v303
      %v528 = vpop.f32.mrb[0].mxu0
      %v529 = vadd.f32 0.0, %v528
      %v530 = vpop.f32.mrb[0].mxu0
      %531 = vmatprep.mubr.f32.mxu0 0.0
      %532 = vmatmul.mubr.f32.gmra.mrb[0].mxu0 %v306
      %v533 = vpop.f32.mrb[0].mxu0
      %v534 = vadd.f32 0.0, %v533
      %v535 = vpop.f32.mrb[0].mxu0
      %536 = vmatprep.mubr.f32.mxu0 0.0
      %537 = vmatmul.mubr.f32.gmra.mrb[0].mxu0 %v309
      %v538 = vpop.f32.mrb[0].mxu0
      %v539 = vadd.f32 0.0, %v538
      %v540 = vpop.f32.mrb[0].mxu0
      %541 = vmatprep.mubr.f32.mxu0 0.0
      %542 = vmatmul.mubr.f32.gmra.mrb[0].mxu0 %v312
      %v543 = vpop.f32.mrb[0].mxu0
      %v544 = vadd.f32 0.0, %v543
      %v545 = vpop.f32.mrb[0].mxu0
      %546 = vmatprep.mubr.f32.mxu0 0.0
      %547 = vmatmul.mubr.f32.gmra.mrb[0].mxu0 %v315
      %v548 = vpop.f32.mrb[0].mxu0
      %v549 = vadd.f32 0.0, %v548
      %v550 = vpop.f32.mrb[0].mxu0
      %551 = vmatprep.mubr.f32.mxu0 0.0
      %552 = vmatmul.mubr.f32.gmra.mrb[0].mxu0 %v318
      %v553 = vpop.f32.mrb[0].mxu0
      %v554 = vadd.f32 0.0, %v553
      %v555 = vpop.f32.mrb[0].mxu0
      %556 = vmatprep.mubr.f32.mxu0 0.0
      %557 = vmatmul.mubr.f32.gmra.mrb[0].mxu0 %v321
      %v558 = vpop.f32.mrb[0].mxu0
      %v559 = vadd.f32 0.0, %v558
      %v560 = vpop.f32.mrb[0].mxu0
      %561 = vmatprep.mubr.f32.mxu0 0.0
      %562 = vmatmul.mubr.f32.gmra.mrb[0].mxu0 %v324
      %v563 = vpop.f32.mrb[0].mxu0
      %v564 = vadd.f32 0.0, %v563
      %v565 = vpop.f32.mrb[0].mxu0
      %566 = vmatprep.mubr.f32.mxu0 0.0
      %567 = vmatmul.mubr.f32.gmra.mrb[0].mxu0 %v327
      %v568 = vpop.f32.mrb[0].mxu0
      %v569 = vadd.f32 0.0, %v568
      %v570 = vpop.f32.mrb[0].mxu0
      %571 = vmatprep.mubr.f32.mxu0 0.0
      %572 = vmatmul.mubr.f32.gmra.mrb[0].mxu0 %v330
      %v573 = vpop.f32.mrb[0].mxu0
      %v574 = vadd.f32 0.0, %v573
      %v575 = vpop.f32.mrb[0].mxu0
      %576 = vdwg.mxu0
      %v577 = vadd.f32 %v178, %v399
      %v578 = vadd.f32 %v178, %v404
      %v579 = vadd.f32 %v178, %v409
      %v580 = vadd.f32 %v178, %v414
      %v581 = vadd.f32 %v178, %v419
      %v582 = vadd.f32 %v178, %v424
      %v583 = vadd.f32 %v178, %v429
      %v584 = vadd.f32 %v178, %v434
      %v585 = vadd.f32 %v178, %v439
      %v586 = vadd.f32 %v178, %v444
      %v587 = vadd.f32 %v178, %v449
      %v588 = vadd.f32 %v178, %v454
      %v589 = vadd.f32 %v178, %v459
      %v590 = vadd.f32 %v178, %v464
      %v591 = vadd.f32 %v178, %v469
      %v592 = vadd.f32 %v178, %v474
      %v593 = vadd.f32 %v178, %v479
      %v594 = vadd.f32 %v178, %v484
      %v595 = vadd.f32 %v178, %v489
      %v596 = vadd.f32 %v178, %v494
      %v597 = vadd.f32 %v178, %v499
      %v598 = vadd.f32 %v178, %v504
      %v599 = vadd.f32 %v178, %v509
      %v600 = vadd.f32 %v178, %v514
      %v601 = vadd.f32 %v178, %v519
      %v602 = vadd.f32 %v178, %v524
      %v603 = vadd.f32 %v178, %v529
      %v604 = vadd.f32 %v178, %v534
      %v605 = vadd.f32 %v178, %v539
      %v606 = vadd.f32 %v178, %v544
      %v607 = vadd.f32 %v178, %v549
      %v608 = vadd.f32 %v178, %v554
      %v609 = vadd.f32 %v178, %v559
      %v610 = vadd.f32 %v178, %v564
      %v611 = vadd.f32 %v178, %v569
      %v612 = vadd.f32 %v178, %v574
      %v613 = vld [vmem:[%s165 + $0x1] sm:$0xff]
      %v614 = vld [vmem:[%s165 + $0x9] sm:$0xff]
      %v615 = vld [vmem:[%s165 + $0x11] sm:$0xff]
      %v616 = vld [vmem:[%s165 + $0x19] sm:$0xff]
      %v617 = vld [vmem:[%s165 + $0x21] sm:$0xff]
      %v618 = vld [vmem:[%s165 + $0x29] sm:$0xff]
      %v619 = vld [vmem:[%s165 + $0x31] sm:$0xff]
      %v620 = vld [vmem:[%s165 + $0x39] sm:$0xff]
      %v621 = vld [vmem:[%s165 + $0x41] sm:$0xff]
      %v622 = vld [vmem:[%s165 + $0x49] sm:$0xff]
      %v623 = vld [vmem:[%s165 + $0x51] sm:$0xff]
      %v624 = vld [vmem:[%s165 + $0x59] sm:$0xff]
      %v625 = vld [vmem:[%s165 + $0x61] sm:$0xff]
      %v626 = vld [vmem:[%s165 + $0x69] sm:$0xff]
      %v627 = vld [vmem:[%s165 + $0x71] sm:$0xff]
      %v628 = vld [vmem:[%s165 + $0x79] sm:$0xff]
      %v629 = vld [vmem:[%s165 + $0x81] sm:$0xff]
      %v630 = vld [vmem:[%s165 + $0x89] sm:$0xff]
      %v631 = vld [vmem:[%s165 + $0x91] sm:$0xff]
      %v632 = vld [vmem:[%s165 + $0x99] sm:$0xff]
      %v633 = vld [vmem:[%s165 + $0xa1] sm:$0xff]
      %v634 = vld [vmem:[%s165 + $0xa9] sm:$0xff]
      %v635 = vld [vmem:[%s165 + $0xb1] sm:$0xff]
      %v636 = vld [vmem:[%s165 + $0xb9] sm:$0xff]
      %v637 = vld [vmem:[%s165 + $0xc1] sm:$0xff]
      %v638 = vld [vmem:[%s165 + $0xc9] sm:$0xff]
      %v639 = vld [vmem:[%s165 + $0xd1] sm:$0xff]
      %v640 = vld [vmem:[%s165 + $0xd9] sm:$0xff]
      %v641 = vld [vmem:[%s165 + $0xe1] sm:$0xff]
      %v642 = vld [vmem:[%s165 + $0xe9] sm:$0xff]
      %v643 = vld [vmem:[%s165 + $0xf1] sm:$0xff]
      %v644 = vld [vmem:[%s165 + $0xf9] sm:$0xff]
      %v645 = vld [vmem:[%s165 + $0x101] sm:$0xff]
      %v646 = vld [vmem:[%s165 + $0x109] sm:$0xff]
      %v647 = vld [vmem:[%s165 + $0x111] sm:$0xff]
      %v648 = vld [vmem:[%s165 + $0x119] sm:$0xff]
      %s649 = scalar_lea.vmem %s1, 64
      %v650 = vld [vmem:[%s649] sm:$0xff]
      %v651 = vld [vmem:[%s649 + $0x8] sm:$0xff]
      %v652 = vld [vmem:[%s649 + $0x10] sm:$0xff]
      %v653 = vld [vmem:[%s649 + $0x18] sm:$0xff]
      %v654 = vld [vmem:[%s649 + $0x20] sm:$0xff]
      %v655 = vld [vmem:[%s649 + $0x28] sm:$0xff]
      %v656 = vld [vmem:[%s649 + $0x30] sm:$0xff]
      %v657 = vld [vmem:[%s649 + $0x38] sm:$0xff]
      %v659 = vsel %vm223, %v613, 0
      %v662 = vsel %vm223, %v614, 0
      %v665 = vsel %vm223, %v615, 0
      %v668 = vsel %vm223, %v616, 0
      %v671 = vsel %vm223, %v617, 0
      %v674 = vsel %vm223, %v618, 0
      %v677 = vsel %vm223, %v619, 0
      %v680 = vsel %vm223, %v620, 0
      %v683 = vsel %vm223, %v621, 0
      %v686 = vsel %vm223, %v622, 0
      %v689 = vsel %vm223, %v623, 0
      %v692 = vsel %vm223, %v624, 0
      %v695 = vsel %vm223, %v625, 0
      %v698 = vsel %vm223, %v626, 0
      %v701 = vsel %vm223, %v627, 0
      %v704 = vsel %vm223, %v628, 0
      %v707 = vsel %vm223, %v629, 0
      %v710 = vsel %vm223, %v630, 0
      %v713 = vsel %vm223, %v631, 0
      %v716 = vsel %vm223, %v632, 0
      %v719 = vsel %vm223, %v633, 0
      %v722 = vsel %vm223, %v634, 0
      %v725 = vsel %vm223, %v635, 0
      %v728 = vsel %vm223, %v636, 0
      %v731 = vsel %vm223, %v637, 0
      %v734 = vsel %vm223, %v638, 0
      %v737 = vsel %vm223, %v639, 0
      %v740 = vsel %vm223, %v640, 0
      %v743 = vsel %vm223, %v641, 0
      %v746 = vsel %vm223, %v642, 0
      %v749 = vsel %vm223, %v643, 0
      %v752 = vsel %vm223, %v644, 0
      %v755 = vsel %vm223, %v645, 0
      %v758 = vsel %vm223, %v646, 0
      %v761 = vsel %vm223, %v647, 0
      %v764 = vsel %vm223, %v648, 0
      %766 = vmatprep.subr.mxu0 0.0
      %767 = vmatpush1.msra.mxu0 %v650
      %768 = vmatprep.subr.mxu0 0.0
      %769 = vmatpush1.msra.mxu0 %v651
      %770 = vmatprep.subr.mxu0 0.0
      %771 = vmatpush1.msra.mxu0 %v652
      %772 = vmatprep.subr.mxu0 0.0
      %773 = vmatpush1.msra.mxu0 %v653
      %774 = vmatprep.subr.mxu0 0.0
      %775 = vmatpush1.msra.mxu0 %v654
      %776 = vmatprep.subr.mxu0 0.0
      %777 = vmatpush1.msra.mxu0 %v655
      %778 = vmatprep.subr.mxu0 0.0
      %779 = vmatpush1.msra.mxu0 %v656
      %780 = vmatprep.subr.mxu0 0.0
      %781 = vmatpush1.msra.mxu0 %v657
      %782 = vmatprep.subr.mxu0 0.0
      %783 = vmatpush1.msra.mxu0 0.0
      %784 = vmatprep.subr.mxu0 0.0
      %785 = vmatpush1.msra.mxu0 0.0
      %786 = vmatprep.subr.mxu0 0.0
      %787 = vmatpush1.msra.mxu0 0.0
      %788 = vmatprep.subr.mxu0 0.0
      %789 = vmatpush1.msra.mxu0 0.0
      %790 = vmatprep.subr.mxu0 0.0
      %791 = vmatpush1.msra.mxu0 0.0
      %792 = vmatprep.subr.mxu0 0.0
      %793 = vmatpush1.msra.mxu0 0.0
      %794 = vmatprep.subr.mxu0 0.0
      %795 = vmatpush1.msra.mxu0 0.0
      %796 = vmatprep.subr.mxu0 0.0
      %797 = vmatpush1.msra.mxu0 0.0
      %798 = vmatprep.subr.mxu0 0.0
      %799 = vmatpush1.msra.mxu0 0.0
      %800 = vmatprep.subr.mxu0 0.0
      %801 = vmatpush1.msra.mxu0 0.0
      %802 = vmatprep.subr.mxu0 0.0
      %803 = vmatpush1.msra.mxu0 0.0
      %804 = vmatprep.subr.mxu0 0.0
      %805 = vmatpush1.msra.mxu0 0.0
      %806 = vmatprep.subr.mxu0 0.0
      %807 = vmatpush1.msra.mxu0 0.0
      %808 = vmatprep.subr.mxu0 0.0
      %809 = vmatpush1.msra.mxu0 0.0
      %810 = vmatprep.subr.mxu0 0.0
      %811 = vmatpush1.msra.mxu0 0.0
      %812 = vmatprep.subr.mxu0 0.0
      %813 = vmatpush1.msra.mxu0 0.0
      %814 = vmatprep.subr.mxu0 0.0
      %815 = vmatpush1.msra.mxu0 0.0
      %816 = vmatprep.subr.mxu0 0.0
      %817 = vmatpush1.msra.mxu0 0.0
      %818 = vmatprep.subr.mxu0 0.0
      %819 = vmatpush1.msra.mxu0 0.0
      %820 = vmatprep.subr.mxu0 0.0
      %821 = vmatpush1.msra.mxu0 0.0
      %822 = vmatprep.subr.mxu0 0.0
      %823 = vmatpush1.msra.mxu0 0.0
      %824 = vmatprep.subr.mxu0 0.0
      %825 = vmatpush1.msra.mxu0 0.0
      %826 = vmatprep.subr.mxu0 0.0
      %827 = vmatpush1.msra.mxu0 0.0
      %828 = vmatprep.subr.mxu0 0.0
      %829 = vmatpush1.msra.mxu0 0.0
      %830 = vmatprep.mubr.f32.mxu0 0.0
      %831 = vmatmul.mubr.f32.gmra.mrb[0].mxu0 %v659
      %v832 = vpop.f32.mrb[0].mxu0
      %v833 = vadd.f32 0.0, %v832
      %v834 = vpop.f32.mrb[0].mxu0
      %835 = vmatprep.mubr.f32.mxu0 0.0
      %836 = vmatmul.mubr.f32.gmra.mrb[0].mxu0 %v662
      %v837 = vpop.f32.mrb[0].mxu0
      %v838 = vadd.f32 0.0, %v837
      %v839 = vpop.f32.mrb[0].mxu0
      %840 = vmatprep.mubr.f32.mxu0 0.0
      %841 = vmatmul.mubr.f32.gmra.mrb[0].mxu0 %v665
      %v842 = vpop.f32.mrb[0].mxu0
      %v843 = vadd.f32 0.0, %v842
      %v844 = vpop.f32.mrb[0].mxu0
      %845 = vmatprep.mubr.f32.mxu0 0.0
      %846 = vmatmul.mubr.f32.gmra.mrb[0].mxu0 %v668
      %v847 = vpop.f32.mrb[0].mxu0
      %v848 = vadd.f32 0.0, %v847
      %v849 = vpop.f32.mrb[0].mxu0
      %850 = vmatprep.mubr.f32.mxu0 0.0
      %851 = vmatmul.mubr.f32.gmra.mrb[0].mxu0 %v671
      %v852 = vpop.f32.mrb[0].mxu0
      %v853 = vadd.f32 0.0, %v852
      %v854 = vpop.f32.mrb[0].mxu0
      %855 = vmatprep.mubr.f32.mxu0 0.0
      %856 = vmatmul.mubr.f32.gmra.mrb[0].mxu0 %v674
      %v857 = vpop.f32.mrb[0].mxu0
      %v858 = vadd.f32 0.0, %v857
      %v859 = vpop.f32.mrb[0].mxu0
      %860 = vmatprep.mubr.f32.mxu0 0.0
      %861 = vmatmul.mubr.f32.gmra.mrb[0].mxu0 %v677
      %v862 = vpop.f32.mrb[0].mxu0
      %v863 = vadd.f32 0.0, %v862
      %v864 = vpop.f32.mrb[0].mxu0
      %865 = vmatprep.mubr.f32.mxu0 0.0
      %866 = vmatmul.mubr.f32.gmra.mrb[0].mxu0 %v680
      %v867 = vpop.f32.mrb[0].mxu0
      %v868 = vadd.f32 0.0, %v867
      %v869 = vpop.f32.mrb[0].mxu0
      %870 = vmatprep.mubr.f32.mxu0 0.0
      %871 = vmatmul.mubr.f32.gmra.mrb[0].mxu0 %v683
      %v872 = vpop.f32.mrb[0].mxu0
      %v873 = vadd.f32 0.0, %v872
      %v874 = vpop.f32.mrb[0].mxu0
      %875 = vmatprep.mubr.f32.mxu0 0.0
      %876 = vmatmul.mubr.f32.gmra.mrb[0].mxu0 %v686
      %v877 = vpop.f32.mrb[0].mxu0
      %v878 = vadd.f32 0.0, %v877
      %v879 = vpop.f32.mrb[0].mxu0
      %880 = vmatprep.mubr.f32.mxu0 0.0
      %881 = vmatmul.mubr.f32.gmra.mrb[0].mxu0 %v689
      %v882 = vpop.f32.mrb[0].mxu0
      %v883 = vadd.f32 0.0, %v882
      %v884 = vpop.f32.mrb[0].mxu0
      %885 = vmatprep.mubr.f32.mxu0 0.0
      %886 = vmatmul.mubr.f32.gmra.mrb[0].mxu0 %v692
      %v887 = vpop.f32.mrb[0].mxu0
      %v888 = vadd.f32 0.0, %v887
      %v889 = vpop.f32.mrb[0].mxu0
      %890 = vmatprep.mubr.f32.mxu0 0.0
      %891 = vmatmul.mubr.f32.gmra.mrb[0].mxu0 %v695
      %v892 = vpop.f32.mrb[0].mxu0
      %v893 = vadd.f32 0.0, %v892
      %v894 = vpop.f32.mrb[0].mxu0
      %895 = vmatprep.mubr.f32.mxu0 0.0
      %896 = vmatmul.mubr.f32.gmra.mrb[0].mxu0 %v698
      %v897 = vpop.f32.mrb[0].mxu0
      %v898 = vadd.f32 0.0, %v897
      %v899 = vpop.f32.mrb[0].mxu0
      %900 = vmatprep.mubr.f32.mxu0 0.0
      %901 = vmatmul.mubr.f32.gmra.mrb[0].mxu0 %v701
      %v902 = vpop.f32.mrb[0].mxu0
      %v903 = vadd.f32 0.0, %v902
      %v904 = vpop.f32.mrb[0].mxu0
      %905 = vmatprep.mubr.f32.mxu0 0.0
      %906 = vmatmul.mubr.f32.gmra.mrb[0].mxu0 %v704
      %v907 = vpop.f32.mrb[0].mxu0
      %v908 = vadd.f32 0.0, %v907
      %v909 = vpop.f32.mrb[0].mxu0
      %910 = vmatprep.mubr.f32.mxu0 0.0
      %911 = vmatmul.mubr.f32.gmra.mrb[0].mxu0 %v707
      %v912 = vpop.f32.mrb[0].mxu0
      %v913 = vadd.f32 0.0, %v912
      %v914 = vpop.f32.mrb[0].mxu0
      %915 = vmatprep.mubr.f32.mxu0 0.0
      %916 = vmatmul.mubr.f32.gmra.mrb[0].mxu0 %v710
      %v917 = vpop.f32.mrb[0].mxu0
      %v918 = vadd.f32 0.0, %v917
      %v919 = vpop.f32.mrb[0].mxu0
      %920 = vmatprep.mubr.f32.mxu0 0.0
      %921 = vmatmul.mubr.f32.gmra.mrb[0].mxu0 %v713
      %v922 = vpop.f32.mrb[0].mxu0
      %v923 = vadd.f32 0.0, %v922
      %v924 = vpop.f32.mrb[0].mxu0
      %925 = vmatprep.mubr.f32.mxu0 0.0
      %926 = vmatmul.mubr.f32.gmra.mrb[0].mxu0 %v716
      %v927 = vpop.f32.mrb[0].mxu0
      %v928 = vadd.f32 0.0, %v927
      %v929 = vpop.f32.mrb[0].mxu0
      %930 = vmatprep.mubr.f32.mxu0 0.0
      %931 = vmatmul.mubr.f32.gmra.mrb[0].mxu0 %v719
      %v932 = vpop.f32.mrb[0].mxu0
      %v933 = vadd.f32 0.0, %v932
      %v934 = vpop.f32.mrb[0].mxu0
      %935 = vmatprep.mubr.f32.mxu0 0.0
      %936 = vmatmul.mubr.f32.gmra.mrb[0].mxu0 %v722
      %v937 = vpop.f32.mrb[0].mxu0
      %v938 = vadd.f32 0.0, %v937
      %v939 = vpop.f32.mrb[0].mxu0
      %940 = vmatprep.mubr.f32.mxu0 0.0
      %941 = vmatmul.mubr.f32.gmra.mrb[0].mxu0 %v725
      %v942 = vpop.f32.mrb[0].mxu0
      %v943 = vadd.f32 0.0, %v942
      %v944 = vpop.f32.mrb[0].mxu0
      %945 = vmatprep.mubr.f32.mxu0 0.0
      %946 = vmatmul.mubr.f32.gmra.mrb[0].mxu0 %v728
      %v947 = vpop.f32.mrb[0].mxu0
      %v948 = vadd.f32 0.0, %v947
      %v949 = vpop.f32.mrb[0].mxu0
      %950 = vmatprep.mubr.f32.mxu0 0.0
      %951 = vmatmul.mubr.f32.gmra.mrb[0].mxu0 %v731
      %v952 = vpop.f32.mrb[0].mxu0
      %v953 = vadd.f32 0.0, %v952
      %v954 = vpop.f32.mrb[0].mxu0
      %955 = vmatprep.mubr.f32.mxu0 0.0
      %956 = vmatmul.mubr.f32.gmra.mrb[0].mxu0 %v734
      %v957 = vpop.f32.mrb[0].mxu0
      %v958 = vadd.f32 0.0, %v957
      %v959 = vpop.f32.mrb[0].mxu0
      %960 = vmatprep.mubr.f32.mxu0 0.0
      %961 = vmatmul.mubr.f32.gmra.mrb[0].mxu0 %v737
      %v962 = vpop.f32.mrb[0].mxu0
      %v963 = vadd.f32 0.0, %v962
      %v964 = vpop.f32.mrb[0].mxu0
      %965 = vmatprep.mubr.f32.mxu0 0.0
      %966 = vmatmul.mubr.f32.gmra.mrb[0].mxu0 %v740
      %v967 = vpop.f32.mrb[0].mxu0
      %v968 = vadd.f32 0.0, %v967
      %v969 = vpop.f32.mrb[0].mxu0
      %970 = vmatprep.mubr.f32.mxu0 0.0
      %971 = vmatmul.mubr.f32.gmra.mrb[0].mxu0 %v743
      %v972 = vpop.f32.mrb[0].mxu0
      %v973 = vadd.f32 0.0, %v972
      %v974 = vpop.f32.mrb[0].mxu0
      %975 = vmatprep.mubr.f32.mxu0 0.0
      %976 = vmatmul.mubr.f32.gmra.mrb[0].mxu0 %v746
      %v977 = vpop.f32.mrb[0].mxu0
      %v978 = vadd.f32 0.0, %v977
      %v979 = vpop.f32.mrb[0].mxu0
      %980 = vmatprep.mubr.f32.mxu0 0.0
      %981 = vmatmul.mubr.f32.gmra.mrb[0].mxu0 %v749
      %v982 = vpop.f32.mrb[0].mxu0
      %v983 = vadd.f32 0.0, %v982
      %v984 = vpop.f32.mrb[0].mxu0
      %985 = vmatprep.mubr.f32.mxu0 0.0
      %986 = vmatmul.mubr.f32.gmra.mrb[0].mxu0 %v752
      %v987 = vpop.f32.mrb[0].mxu0
      %v988 = vadd.f32 0.0, %v987
      %v989 = vpop.f32.mrb[0].mxu0
      %990 = vmatprep.mubr.f32.mxu0 0.0
      %991 = vmatmul.mubr.f32.gmra.mrb[0].mxu0 %v755
      %v992 = vpop.f32.mrb[0].mxu0
      %v993 = vadd.f32 0.0, %v992
      %v994 = vpop.f32.mrb[0].mxu0
      %995 = vmatprep.mubr.f32.mxu0 0.0
      %996 = vmatmul.mubr.f32.gmra.mrb[0].mxu0 %v758
      %v997 = vpop.f32.mrb[0].mxu0
      %v998 = vadd.f32 0.0, %v997
      %v999 = vpop.f32.mrb[0].mxu0
      %1000 = vmatprep.mubr.f32.mxu0 0.0
      %1001 = vmatmul.mubr.f32.gmra.mrb[0].mxu0 %v761
      %v1002 = vpop.f32.mrb[0].mxu0
      %v1003 = vadd.f32 0.0, %v1002
      %v1004 = vpop.f32.mrb[0].mxu0
      %1005 = vmatprep.mubr.f32.mxu0 0.0
      %1006 = vmatmul.mubr.f32.gmra.mrb[0].mxu0 %v764
      %v1007 = vpop.f32.mrb[0].mxu0
      %v1008 = vadd.f32 0.0, %v1007
      %v1009 = vpop.f32.mrb[0].mxu0
      %1010 = vdwg.mxu0
      %v1011 = vadd.f32 %v577, %v833
      %v1012 = vadd.f32 %v578, %v838
      %v1013 = vadd.f32 %v579, %v843
      %v1014 = vadd.f32 %v580, %v848
      %v1015 = vadd.f32 %v581, %v853
      %v1016 = vadd.f32 %v582, %v858
      %v1017 = vadd.f32 %v583, %v863
      %v1018 = vadd.f32 %v584, %v868
      %v1019 = vadd.f32 %v585, %v873
      %v1020 = vadd.f32 %v586, %v878
      %v1021 = vadd.f32 %v587, %v883
      %v1022 = vadd.f32 %v588, %v888
      %v1023 = vadd.f32 %v589, %v893
      %v1024 = vadd.f32 %v590, %v898
      %v1025 = vadd.f32 %v591, %v903
      %v1026 = vadd.f32 %v592, %v908
      %v1027 = vadd.f32 %v593, %v913
      %v1028 = vadd.f32 %v594, %v918
      %v1029 = vadd.f32 %v595, %v923
      %v1030 = vadd.f32 %v596, %v928
      %v1031 = vadd.f32 %v597, %v933
      %v1032 = vadd.f32 %v598, %v938
      %v1033 = vadd.f32 %v599, %v943
      %v1034 = vadd.f32 %v600, %v948
      %v1035 = vadd.f32 %v601, %v953
      %v1036 = vadd.f32 %v602, %v958
      %v1037 = vadd.f32 %v603, %v963
      %v1038 = vadd.f32 %v604, %v968
      %v1039 = vadd.f32 %v605, %v973
      %v1040 = vadd.f32 %v606, %v978
      %v1041 = vadd.f32 %v607, %v983
      %v1042 = vadd.f32 %v608, %v988
      %v1043 = vadd.f32 %v609, %v993
      %v1044 = vadd.f32 %v610, %v998
      %v1045 = vadd.f32 %v611, %v1003
      %v1046 = vadd.f32 %v612, %v1008
      %v1047 = vld [vmem:[%s165 + $0x2] sm:$0xff]
      %v1048 = vld [vmem:[%s165 + $0xa] sm:$0xff]
      %v1049 = vld [vmem:[%s165 + $0x12] sm:$0xff]
      %v1050 = vld [vmem:[%s165 + $0x1a] sm:$0xff]
      %v1051 = vld [vmem:[%s165 + $0x22] sm:$0xff]
      %v1052 = vld [vmem:[%s165 + $0x2a] sm:$0xff]
      %v1053 = vld [vmem:[%s165 + $0x32] sm:$0xff]
      %v1054 = vld [vmem:[%s165 + $0x3a] sm:$0xff]
      %v1055 = vld [vmem:[%s165 + $0x42] sm:$0xff]
      %v1056 = vld [vmem:[%s165 + $0x4a] sm:$0xff]
      %v1057 = vld [vmem:[%s165 + $0x52] sm:$0xff]
      %v1058 = vld [vmem:[%s165 + $0x5a] sm:$0xff]
      %v1059 = vld [vmem:[%s165 + $0x62] sm:$0xff]
      %v1060 = vld [vmem:[%s165 + $0x6a] sm:$0xff]
      %v1061 = vld [vmem:[%s165 + $0x72] sm:$0xff]
      %v1062 = vld [vmem:[%s165 + $0x7a] sm:$0xff]
      %v1063 = vld [vmem:[%s165 + $0x82] sm:$0xff]
      %v1064 = vld [vmem:[%s165 + $0x8a] sm:$0xff]
      %v1065 = vld [vmem:[%s165 + $0x92] sm:$0xff]
      %v1066 = vld [vmem:[%s165 + $0x9a] sm:$0xff]
      %v1067 = vld [vmem:[%s165 + $0xa2] sm:$0xff]
      %v1068 = vld [vmem:[%s165 + $0xaa] sm:$0xff]
      %v1069 = vld [vmem:[%s165 + $0xb2] sm:$0xff]
      %v1070 = vld [vmem:[%s165 + $0xba] sm:$0xff]
      %v1071 = vld [vmem:[%s165 + $0xc2] sm:$0xff]
      %v1072 = vld [vmem:[%s165 + $0xca] sm:$0xff]
      %v1073 = vld [vmem:[%s165 + $0xd2] sm:$0xff]
      %v1074 = vld [vmem:[%s165 + $0xda] sm:$0xff]
      %v1075 = vld [vmem:[%s165 + $0xe2] sm:$0xff]
      %v1076 = vld [vmem:[%s165 + $0xea] sm:$0xff]
      %v1077 = vld [vmem:[%s165 + $0xf2] sm:$0xff]
      %v1078 = vld [vmem:[%s165 + $0xfa] sm:$0xff]
      %v1079 = vld [vmem:[%s165 + $0x102] sm:$0xff]
      %v1080 = vld [vmem:[%s165 + $0x10a] sm:$0xff]
      %v1081 = vld [vmem:[%s165 + $0x112] sm:$0xff]
      %v1082 = vld [vmem:[%s165 + $0x11a] sm:$0xff]
      %s1083 = scalar_lea.vmem %s1, 128
      %v1084 = vld [vmem:[%s1083] sm:$0xff]
      %v1085 = vld [vmem:[%s1083 + $0x8] sm:$0xff]
      %v1086 = vld [vmem:[%s1083 + $0x10] sm:$0xff]
      %v1087 = vld [vmem:[%s1083 + $0x18] sm:$0xff]
      %v1088 = vld [vmem:[%s1083 + $0x20] sm:$0xff]
      %v1089 = vld [vmem:[%s1083 + $0x28] sm:$0xff]
      %v1090 = vld [vmem:[%s1083 + $0x30] sm:$0xff]
      %v1091 = vld [vmem:[%s1083 + $0x38] sm:$0xff]
      %v1093 = vsel %vm223, %v1047, 0
      %v1096 = vsel %vm223, %v1048, 0
      %v1099 = vsel %vm223, %v1049, 0
      %v1102 = vsel %vm223, %v1050, 0
      %v1105 = vsel %vm223, %v1051, 0
      %v1108 = vsel %vm223, %v1052, 0
      %v1111 = vsel %vm223, %v1053, 0
      %v1114 = vsel %vm223, %v1054, 0
      %v1117 = vsel %vm223, %v1055, 0
      %v1120 = vsel %vm223, %v1056, 0
      %v1123 = vsel %vm223, %v1057, 0
      %v1126 = vsel %vm223, %v1058, 0
      %v1129 = vsel %vm223, %v1059, 0
      %v1132 = vsel %vm223, %v1060, 0
      %v1135 = vsel %vm223, %v1061, 0
      %v1138 = vsel %vm223, %v1062, 0
      %v1141 = vsel %vm223, %v1063, 0
      %v1144 = vsel %vm223, %v1064, 0
      %v1147 = vsel %vm223, %v1065, 0
      %v1150 = vsel %vm223, %v1066, 0
      %v1153 = vsel %vm223, %v1067, 0
      %v1156 = vsel %vm223, %v1068, 0
      %v1159 = vsel %vm223, %v1069, 0
      %v1162 = vsel %vm223, %v1070, 0
      %v1165 = vsel %vm223, %v1071, 0
      %v1168 = vsel %vm223, %v1072, 0
      %v1171 = vsel %vm223, %v1073, 0
      %v1174 = vsel %vm223, %v1074, 0
      %v1177 = vsel %vm223, %v1075, 0
      %v1180 = vsel %vm223, %v1076, 0
      %v1183 = vsel %vm223, %v1077, 0
      %v1186 = vsel %vm223, %v1078, 0
      %v1189 = vsel %vm223, %v1079, 0
      %v1192 = vsel %vm223, %v1080, 0
      %v1195 = vsel %vm223, %v1081, 0
      %v1198 = vsel %vm223, %v1082, 0
      %1200 = vmatprep.subr.mxu0 0.0
      %1201 = vmatpush1.msra.mxu0 %v1084
      %1202 = vmatprep.subr.mxu0 0.0
      %1203 = vmatpush1.msra.mxu0 %v1085
      %1204 = vmatprep.subr.mxu0 0.0
      %1205 = vmatpush1.msra.mxu0 %v1086
      %1206 = vmatprep.subr.mxu0 0.0
      %1207 = vmatpush1.msra.mxu0 %v1087
      %1208 = vmatprep.subr.mxu0 0.0
      %1209 = vmatpush1.msra.mxu0 %v1088
      %1210 = vmatprep.subr.mxu0 0.0
      %1211 = vmatpush1.msra.mxu0 %v1089
      %1212 = vmatprep.subr.mxu0 0.0
      %1213 = vmatpush1.msra.mxu0 %v1090
      %1214 = vmatprep.subr.mxu0 0.0
      %1215 = vmatpush1.msra.mxu0 %v1091
      %1216 = vmatprep.subr.mxu0 0.0
      %1217 = vmatpush1.msra.mxu0 0.0
      %1218 = vmatprep.subr.mxu0 0.0
      %1219 = vmatpush1.msra.mxu0 0.0
      %1220 = vmatprep.subr.mxu0 0.0
      %1221 = vmatpush1.msra.mxu0 0.0
      %1222 = vmatprep.subr.mxu0 0.0
      %1223 = vmatpush1.msra.mxu0 0.0
      %1224 = vmatprep.subr.mxu0 0.0
      %1225 = vmatpush1.msra.mxu0 0.0
      %1226 = vmatprep.subr.mxu0 0.0
      %1227 = vmatpush1.msra.mxu0 0.0
      %1228 = vmatprep.subr.mxu0 0.0
      %1229 = vmatpush1.msra.mxu0 0.0
      %1230 = vmatprep.subr.mxu0 0.0
      %1231 = vmatpush1.msra.mxu0 0.0
      %1232 = vmatprep.subr.mxu0 0.0
      %1233 = vmatpush1.msra.mxu0 0.0
      %1234 = vmatprep.subr.mxu0 0.0
      %1235 = vmatpush1.msra.mxu0 0.0
      %1236 = vmatprep.subr.mxu0 0.0
      %1237 = vmatpush1.msra.mxu0 0.0
      %1238 = vmatprep.subr.mxu0 0.0
      %1239 = vmatpush1.msra.mxu0 0.0
      %1240 = vmatprep.subr.mxu0 0.0
      %1241 = vmatpush1.msra.mxu0 0.0
      %1242 = vmatprep.subr.mxu0 0.0
      %1243 = vmatpush1.msra.mxu0 0.0
      %1244 = vmatprep.subr.mxu0 0.0
      %1245 = vmatpush1.msra.mxu0 0.0
      %1246 = vmatprep.subr.mxu0 0.0
      %1247 = vmatpush1.msra.mxu0 0.0
      %1248 = vmatprep.subr.mxu0 0.0
      %1249 = vmatpush1.msra.mxu0 0.0
      %1250 = vmatprep.subr.mxu0 0.0
      %1251 = vmatpush1.msra.mxu0 0.0
      %1252 = vmatprep.subr.mxu0 0.0
      %1253 = vmatpush1.msra.mxu0 0.0
      %1254 = vmatprep.subr.mxu0 0.0
      %1255 = vmatpush1.msra.mxu0 0.0
      %1256 = vmatprep.subr.mxu0 0.0
      %1257 = vmatpush1.msra.mxu0 0.0
      %1258 = vmatprep.subr.mxu0 0.0
      %1259 = vmatpush1.msra.mxu0 0.0
      %1260 = vmatprep.subr.mxu0 0.0
      %1261 = vmatpush1.msra.mxu0 0.0
      %1262 = vmatprep.subr.mxu0 0.0
      %1263 = vmatpush1.msra.mxu0 0.0
      %1264 = vmatprep.mubr.f32.mxu0 0.0
      %1265 = vmatmul.mubr.f32.gmra.mrb[0].mxu0 %v1093
      %v1266 = vpop.f32.mrb[0].mxu0
      %v1267 = vadd.f32 0.0, %v1266
      %v1268 = vpop.f32.mrb[0].mxu0
      %1269 = vmatprep.mubr.f32.mxu0 0.0
      %1270 = vmatmul.mubr.f32.gmra.mrb[0].mxu0 %v1096
      %v1271 = vpop.f32.mrb[0].mxu0
      %v1272 = vadd.f32 0.0, %v1271
      %v1273 = vpop.f32.mrb[0].mxu0
      %1274 = vmatprep.mubr.f32.mxu0 0.0
      %1275 = vmatmul.mubr.f32.gmra.mrb[0].mxu0 %v1099
      %v1276 = vpop.f32.mrb[0].mxu0
      %v1277 = vadd.f32 0.0, %v1276
      %v1278 = vpop.f32.mrb[0].mxu0
      %1279 = vmatprep.mubr.f32.mxu0 0.0
      %1280 = vmatmul.mubr.f32.gmra.mrb[0].mxu0 %v1102
      %v1281 = vpop.f32.mrb[0].mxu0
      %v1282 = vadd.f32 0.0, %v1281
      %v1283 = vpop.f32.mrb[0].mxu0
      %1284 = vmatprep.mubr.f32.mxu0 0.0
      %1285 = vmatmul.mubr.f32.gmra.mrb[0].mxu0 %v1105
      %v1286 = vpop.f32.mrb[0].mxu0
      %v1287 = vadd.f32 0.0, %v1286
      %v1288 = vpop.f32.mrb[0].mxu0
      %1289 = vmatprep.mubr.f32.mxu0 0.0
      %1290 = vmatmul.mubr.f32.gmra.mrb[0].mxu0 %v1108
      %v1291 = vpop.f32.mrb[0].mxu0
      %v1292 = vadd.f32 0.0, %v1291
      %v1293 = vpop.f32.mrb[0].mxu0
      %1294 = vmatprep.mubr.f32.mxu0 0.0
      %1295 = vmatmul.mubr.f32.gmra.mrb[0].mxu0 %v1111
      %v1296 = vpop.f32.mrb[0].mxu0
      %v1297 = vadd.f32 0.0, %v1296
      %v1298 = vpop.f32.mrb[0].mxu0
      %1299 = vmatprep.mubr.f32.mxu0 0.0
      %1300 = vmatmul.mubr.f32.gmra.mrb[0].mxu0 %v1114
      %v1301 = vpop.f32.mrb[0].mxu0
      %v1302 = vadd.f32 0.0, %v1301
      %v1303 = vpop.f32.mrb[0].mxu0
      %1304 = vmatprep.mubr.f32.mxu0 0.0
      %1305 = vmatmul.mubr.f32.gmra.mrb[0].mxu0 %v1117
      %v1306 = vpop.f32.mrb[0].mxu0
      %v1307 = vadd.f32 0.0, %v1306
      %v1308 = vpop.f32.mrb[0].mxu0
      %1309 = vmatprep.mubr.f32.mxu0 0.0
      %1310 = vmatmul.mubr.f32.gmra.mrb[0].mxu0 %v1120
      %v1311 = vpop.f32.mrb[0].mxu0
      %v1312 = vadd.f32 0.0, %v1311
      %v1313 = vpop.f32.mrb[0].mxu0
      %1314 = vmatprep.mubr.f32.mxu0 0.0
      %1315 = vmatmul.mubr.f32.gmra.mrb[0].mxu0 %v1123
      %v1316 = vpop.f32.mrb[0].mxu0
      %v1317 = vadd.f32 0.0, %v1316
      %v1318 = vpop.f32.mrb[0].mxu0
      %1319 = vmatprep.mubr.f32.mxu0 0.0
      %1320 = vmatmul.mubr.f32.gmra.mrb[0].mxu0 %v1126
      %v1321 = vpop.f32.mrb[0].mxu0
      %v1322 = vadd.f32 0.0, %v1321
      %v1323 = vpop.f32.mrb[0].mxu0
      %1324 = vmatprep.mubr.f32.mxu0 0.0
      %1325 = vmatmul.mubr.f32.gmra.mrb[0].mxu0 %v1129
      %v1326 = vpop.f32.mrb[0].mxu0
      %v1327 = vadd.f32 0.0, %v1326
      %v1328 = vpop.f32.mrb[0].mxu0
      %1329 = vmatprep.mubr.f32.mxu0 0.0
      %1330 = vmatmul.mubr.f32.gmra.mrb[0].mxu0 %v1132
      %v1331 = vpop.f32.mrb[0].mxu0
      %v1332 = vadd.f32 0.0, %v1331
      %v1333 = vpop.f32.mrb[0].mxu0
      %1334 = vmatprep.mubr.f32.mxu0 0.0
      %1335 = vmatmul.mubr.f32.gmra.mrb[0].mxu0 %v1135
      %v1336 = vpop.f32.mrb[0].mxu0
      %v1337 = vadd.f32 0.0, %v1336
      %v1338 = vpop.f32.mrb[0].mxu0
      %1339 = vmatprep.mubr.f32.mxu0 0.0
      %1340 = vmatmul.mubr.f32.gmra.mrb[0].mxu0 %v1138
      %v1341 = vpop.f32.mrb[0].mxu0
      %v1342 = vadd.f32 0.0, %v1341
      %v1343 = vpop.f32.mrb[0].mxu0
      %1344 = vmatprep.mubr.f32.mxu0 0.0
      %1345 = vmatmul.mubr.f32.gmra.mrb[0].mxu0 %v1141
      %v1346 = vpop.f32.mrb[0].mxu0
      %v1347 = vadd.f32 0.0, %v1346
      %v1348 = vpop.f32.mrb[0].mxu0
      %1349 = vmatprep.mubr.f32.mxu0 0.0
      %1350 = vmatmul.mubr.f32.gmra.mrb[0].mxu0 %v1144
      %v1351 = vpop.f32.mrb[0].mxu0
      %v1352 = vadd.f32 0.0, %v1351
      %v1353 = vpop.f32.mrb[0].mxu0
      %1354 = vmatprep.mubr.f32.mxu0 0.0
      %1355 = vmatmul.mubr.f32.gmra.mrb[0].mxu0 %v1147
      %v1356 = vpop.f32.mrb[0].mxu0
      %v1357 = vadd.f32 0.0, %v1356
      %v1358 = vpop.f32.mrb[0].mxu0
      %1359 = vmatprep.mubr.f32.mxu0 0.0
      %1360 = vmatmul.mubr.f32.gmra.mrb[0].mxu0 %v1150
      %v1361 = vpop.f32.mrb[0].mxu0
      %v1362 = vadd.f32 0.0, %v1361
      %v1363 = vpop.f32.mrb[0].mxu0
      %1364 = vmatprep.mubr.f32.mxu0 0.0
      %1365 = vmatmul.mubr.f32.gmra.mrb[0].mxu0 %v1153
      %v1366 = vpop.f32.mrb[0].mxu0
      %v1367 = vadd.f32 0.0, %v1366
      %v1368 = vpop.f32.mrb[0].mxu0
      %1369 = vmatprep.mubr.f32.mxu0 0.0
      %1370 = vmatmul.mubr.f32.gmra.mrb[0].mxu0 %v1156
      %v1371 = vpop.f32.mrb[0].mxu0
      %v1372 = vadd.f32 0.0, %v1371
      %v1373 = vpop.f32.mrb[0].mxu0
      %1374 = vmatprep.mubr.f32.mxu0 0.0
      %1375 = vmatmul.mubr.f32.gmra.mrb[0].mxu0 %v1159
      %v1376 = vpop.f32.mrb[0].mxu0
      %v1377 = vadd.f32 0.0, %v1376
      %v1378 = vpop.f32.mrb[0].mxu0
      %1379 = vmatprep.mubr.f32.mxu0 0.0
      %1380 = vmatmul.mubr.f32.gmra.mrb[0].mxu0 %v1162
      %v1381 = vpop.f32.mrb[0].mxu0
      %v1382 = vadd.f32 0.0, %v1381
      %v1383 = vpop.f32.mrb[0].mxu0
      %1384 = vmatprep.mubr.f32.mxu0 0.0
      %1385 = vmatmul.mubr.f32.gmra.mrb[0].mxu0 %v1165
      %v1386 = vpop.f32.mrb[0].mxu0
      %v1387 = vadd.f32 0.0, %v1386
      %v1388 = vpop.f32.mrb[0].mxu0
      %1389 = vmatprep.mubr.f32.mxu0 0.0
      %1390 = vmatmul.mubr.f32.gmra.mrb[0].mxu0 %v1168
      %v1391 = vpop.f32.mrb[0].mxu0
      %v1392 = vadd.f32 0.0, %v1391
      %v1393 = vpop.f32.mrb[0].mxu0
      %1394 = vmatprep.mubr.f32.mxu0 0.0
      %1395 = vmatmul.mubr.f32.gmra.mrb[0].mxu0 %v1171
      %v1396 = vpop.f32.mrb[0].mxu0
      %v1397 = vadd.f32 0.0, %v1396
      %v1398 = vpop.f32.mrb[0].mxu0
      %1399 = vmatprep.mubr.f32.mxu0 0.0
      %1400 = vmatmul.mubr.f32.gmra.mrb[0].mxu0 %v1174
      %v1401 = vpop.f32.mrb[0].mxu0
      %v1402 = vadd.f32 0.0, %v1401
      %v1403 = vpop.f32.mrb[0].mxu0
      %1404 = vmatprep.mubr.f32.mxu0 0.0
      %1405 = vmatmul.mubr.f32.gmra.mrb[0].mxu0 %v1177
      %v1406 = vpop.f32.mrb[0].mxu0
      %v1407 = vadd.f32 0.0, %v1406
      %v1408 = vpop.f32.mrb[0].mxu0
      %1409 = vmatprep.mubr.f32.mxu0 0.0
      %1410 = vmatmul.mubr.f32.gmra.mrb[0].mxu0 %v1180
      %v1411 = vpop.f32.mrb[0].mxu0
      %v1412 = vadd.f32 0.0, %v1411
      %v1413 = vpop.f32.mrb[0].mxu0
      %1414 = vmatprep.mubr.f32.mxu0 0.0
      %1415 = vmatmul.mubr.f32.gmra.mrb[0].mxu0 %v1183
      %v1416 = vpop.f32.mrb[0].mxu0
      %v1417 = vadd.f32 0.0, %v1416
      %v1418 = vpop.f32.mrb[0].mxu0
      %1419 = vmatprep.mubr.f32.mxu0 0.0
      %1420 = vmatmul.mubr.f32.gmra.mrb[0].mxu0 %v1186
      %v1421 = vpop.f32.mrb[0].mxu0
      %v1422 = vadd.f32 0.0, %v1421
      %v1423 = vpop.f32.mrb[0].mxu0
      %1424 = vmatprep.mubr.f32.mxu0 0.0
      %1425 = vmatmul.mubr.f32.gmra.mrb[0].mxu0 %v1189
      %v1426 = vpop.f32.mrb[0].mxu0
      %v1427 = vadd.f32 0.0, %v1426
      %v1428 = vpop.f32.mrb[0].mxu0
      %1429 = vmatprep.mubr.f32.mxu0 0.0
      %1430 = vmatmul.mubr.f32.gmra.mrb[0].mxu0 %v1192
      %v1431 = vpop.f32.mrb[0].mxu0
      %v1432 = vadd.f32 0.0, %v1431
      %v1433 = vpop.f32.mrb[0].mxu0
      %1434 = vmatprep.mubr.f32.mxu0 0.0
      %1435 = vmatmul.mubr.f32.gmra.mrb[0].mxu0 %v1195
      %v1436 = vpop.f32.mrb[0].mxu0
      %v1437 = vadd.f32 0.0, %v1436
      %v1438 = vpop.f32.mrb[0].mxu0
      %1439 = vmatprep.mubr.f32.mxu0 0.0
      %1440 = vmatmul.mubr.f32.gmra.mrb[0].mxu0 %v1198
      %v1441 = vpop.f32.mrb[0].mxu0
      %v1442 = vadd.f32 0.0, %v1441
      %v1443 = vpop.f32.mrb[0].mxu0
      %1444 = vdwg.mxu0
      %v1445 = vadd.f32 %v1011, %v1267
      %v1446 = vadd.f32 %v1012, %v1272
      %v1447 = vadd.f32 %v1013, %v1277
      %v1448 = vadd.f32 %v1014, %v1282
      %v1449 = vadd.f32 %v1015, %v1287
      %v1450 = vadd.f32 %v1016, %v1292
      %v1451 = vadd.f32 %v1017, %v1297
      %v1452 = vadd.f32 %v1018, %v1302
      %v1453 = vadd.f32 %v1019, %v1307
      %v1454 = vadd.f32 %v1020, %v1312
      %v1455 = vadd.f32 %v1021, %v1317
      %v1456 = vadd.f32 %v1022, %v1322
      %v1457 = vadd.f32 %v1023, %v1327
      %v1458 = vadd.f32 %v1024, %v1332
      %v1459 = vadd.f32 %v1025, %v1337
      %v1460 = vadd.f32 %v1026, %v1342
      %v1461 = vadd.f32 %v1027, %v1347
      %v1462 = vadd.f32 %v1028, %v1352
      %v1463 = vadd.f32 %v1029, %v1357
      %v1464 = vadd.f32 %v1030, %v1362
      %v1465 = vadd.f32 %v1031, %v1367
      %v1466 = vadd.f32 %v1032, %v1372
      %v1467 = vadd.f32 %v1033, %v1377
      %v1468 = vadd.f32 %v1034, %v1382
      %v1469 = vadd.f32 %v1035, %v1387
      %v1470 = vadd.f32 %v1036, %v1392
      %v1471 = vadd.f32 %v1037, %v1397
      %v1472 = vadd.f32 %v1038, %v1402
      %v1473 = vadd.f32 %v1039, %v1407
      %v1474 = vadd.f32 %v1040, %v1412
      %v1475 = vadd.f32 %v1041, %v1417
      %v1476 = vadd.f32 %v1042, %v1422
      %v1477 = vadd.f32 %v1043, %v1427
      %v1478 = vadd.f32 %v1044, %v1432
      %v1479 = vadd.f32 %v1045, %v1437
      %v1480 = vadd.f32 %v1046, %v1442
      %v1481 = vld [vmem:[%s165 + $0x12] sm:$0xff]
      %v1482 = vld [vmem:[%s165 + $0x1a] sm:$0xff]
      %v1483 = vld [vmem:[%s165 + $0x22] sm:$0xff]
      %v1484 = vld [vmem:[%s165 + $0x2a] sm:$0xff]
      %v1485 = vld [vmem:[%s165 + $0x32] sm:$0xff]
      %v1486 = vld [vmem:[%s165 + $0x3a] sm:$0xff]
      %v1487 = vld [vmem:[%s165 + $0x42] sm:$0xff]
      %v1488 = vld [vmem:[%s165 + $0x4a] sm:$0xff]
      %v1489 = vld [vmem:[%s165 + $0x52] sm:$0xff]
      %v1490 = vld [vmem:[%s165 + $0x5a] sm:$0xff]
      %v1491 = vld [vmem:[%s165 + $0x62] sm:$0xff]
      %v1492 = vld [vmem:[%s165 + $0x6a] sm:$0xff]
      %v1493 = vld [vmem:[%s165 + $0x72] sm:$0xff]
      %v1494 = vld [vmem:[%s165 + $0x7a] sm:$0xff]
      %v1495 = vld [vmem:[%s165 + $0x82] sm:$0xff]
      %v1496 = vld [vmem:[%s165 + $0x8a] sm:$0xff]
      %v1497 = vld [vmem:[%s165 + $0x92] sm:$0xff]
      %v1498 = vld [vmem:[%s165 + $0x9a] sm:$0xff]
      %v1499 = vld [vmem:[%s165 + $0xa2] sm:$0xff]
      %v1500 = vld [vmem:[%s165 + $0xaa] sm:$0xff]
      %v1501 = vld [vmem:[%s165 + $0xb2] sm:$0xff]
      %v1502 = vld [vmem:[%s165 + $0xba] sm:$0xff]
      %v1503 = vld [vmem:[%s165 + $0xc2] sm:$0xff]
      %v1504 = vld [vmem:[%s165 + $0xca] sm:$0xff]
      %v1505 = vld [vmem:[%s165 + $0xd2] sm:$0xff]
      %v1506 = vld [vmem:[%s165 + $0xda] sm:$0xff]
      %v1507 = vld [vmem:[%s165 + $0xe2] sm:$0xff]
      %v1508 = vld [vmem:[%s165 + $0xea] sm:$0xff]
      %v1509 = vld [vmem:[%s165 + $0xf2] sm:$0xff]
      %v1510 = vld [vmem:[%s165 + $0xfa] sm:$0xff]
      %v1511 = vld [vmem:[%s165 + $0x102] sm:$0xff]
      %v1512 = vld [vmem:[%s165 + $0x10a] sm:$0xff]
      %v1513 = vld [vmem:[%s165 + $0x112] sm:$0xff]
      %v1514 = vld [vmem:[%s165 + $0x11a] sm:$0xff]
      %v1515 = vld [vmem:[%s165 + $0x122] sm:$0xff]
      %v1516 = vld [vmem:[%s165 + $0x12a] sm:$0xff]
      %s1517 = scalar_lea.vmem %s1, 192
      %v1518 = vld [vmem:[%s1517] sm:$0xff]
      %v1519 = vld [vmem:[%s1517 + $0x8] sm:$0xff]
      %v1520 = vld [vmem:[%s1517 + $0x10] sm:$0xff]
      %v1521 = vld [vmem:[%s1517 + $0x18] sm:$0xff]
      %v1522 = vld [vmem:[%s1517 + $0x20] sm:$0xff]
      %v1523 = vld [vmem:[%s1517 + $0x28] sm:$0xff]
      %v1524 = vld [vmem:[%s1517 + $0x30] sm:$0xff]
      %v1525 = vld [vmem:[%s1517 + $0x38] sm:$0xff]
      %v1527 = vsel %vm223, %v1481, 0
      %v1530 = vsel %vm223, %v1482, 0
      %v1533 = vsel %vm223, %v1483, 0
      %v1536 = vsel %vm223, %v1484, 0
      %v1539 = vsel %vm223, %v1485, 0
      %v1542 = vsel %vm223, %v1486, 0
      %v1545 = vsel %vm223, %v1487, 0
      %v1548 = vsel %vm223, %v1488, 0
      %v1551 = vsel %vm223, %v1489, 0
      %v1554 = vsel %vm223, %v1490, 0
      %v1557 = vsel %vm223, %v1491, 0
      %v1560 = vsel %vm223, %v1492, 0
      %v1563 = vsel %vm223, %v1493, 0
      %v1566 = vsel %vm223, %v1494, 0
      %v1569 = vsel %vm223, %v1495, 0
      %v1572 = vsel %vm223, %v1496, 0
      %v1575 = vsel %vm223, %v1497, 0
      %v1578 = vsel %vm223, %v1498, 0
      %v1581 = vsel %vm223, %v1499, 0
      %v1584 = vsel %vm223, %v1500, 0
      %v1587 = vsel %vm223, %v1501, 0
      %v1590 = vsel %vm223, %v1502, 0
      %v1593 = vsel %vm223, %v1503, 0
      %v1596 = vsel %vm223, %v1504, 0
      %v1599 = vsel %vm223, %v1505, 0
      %v1602 = vsel %vm223, %v1506, 0
      %v1605 = vsel %vm223, %v1507, 0
      %v1608 = vsel %vm223, %v1508, 0
      %v1611 = vsel %vm223, %v1509, 0
      %v1614 = vsel %vm223, %v1510, 0
      %v1617 = vsel %vm223, %v1511, 0
      %v1620 = vsel %vm223, %v1512, 0
      %v1623 = vsel %vm223, %v1513, 0
      %v1626 = vsel %vm223, %v1514, 0
      %v1629 = vsel %vm223, %v1515, 0
      %v1632 = vsel %vm223, %v1516, 0
      %1634 = vmatprep.subr.mxu0 0.0
      %1635 = vmatpush1.msra.mxu0 %v1518
      %1636 = vmatprep.subr.mxu0 0.0
      %1637 = vmatpush1.msra.mxu0 %v1519
      %1638 = vmatprep.subr.mxu0 0.0
      %1639 = vmatpush1.msra.mxu0 %v1520
      %1640 = vmatprep.subr.mxu0 0.0
      %1641 = vmatpush1.msra.mxu0 %v1521
      %1642 = vmatprep.subr.mxu0 0.0
      %1643 = vmatpush1.msra.mxu0 %v1522
      %1644 = vmatprep.subr.mxu0 0.0
      %1645 = vmatpush1.msra.mxu0 %v1523
      %1646 = vmatprep.subr.mxu0 0.0
      %1647 = vmatpush1.msra.mxu0 %v1524
      %1648 = vmatprep.subr.mxu0 0.0
      %1649 = vmatpush1.msra.mxu0 %v1525
      %1650 = vmatprep.subr.mxu0 0.0
      %1651 = vmatpush1.msra.mxu0 0.0
      %1652 = vmatprep.subr.mxu0 0.0
      %1653 = vmatpush1.msra.mxu0 0.0
      %1654 = vmatprep.subr.mxu0 0.0
      %1655 = vmatpush1.msra.mxu0 0.0
      %1656 = vmatprep.subr.mxu0 0.0
      %1657 = vmatpush1.msra.mxu0 0.0
      %1658 = vmatprep.subr.mxu0 0.0
      %1659 = vmatpush1.msra.mxu0 0.0
      %1660 = vmatprep.subr.mxu0 0.0
      %1661 = vmatpush1.msra.mxu0 0.0
      %1662 = vmatprep.subr.mxu0 0.0
      %1663 = vmatpush1.msra.mxu0 0.0
      %1664 = vmatprep.subr.mxu0 0.0
      %1665 = vmatpush1.msra.mxu0 0.0
      %1666 = vmatprep.subr.mxu0 0.0
      %1667 = vmatpush1.msra.mxu0 0.0
      %1668 = vmatprep.subr.mxu0 0.0
      %1669 = vmatpush1.msra.mxu0 0.0
      %1670 = vmatprep.subr.mxu0 0.0
      %1671 = vmatpush1.msra.mxu0 0.0
      %1672 = vmatprep.subr.mxu0 0.0
      %1673 = vmatpush1.msra.mxu0 0.0
      %1674 = vmatprep.subr.mxu0 0.0
      %1675 = vmatpush1.msra.mxu0 0.0
      %1676 = vmatprep.subr.mxu0 0.0
      %1677 = vmatpush1.msra.mxu0 0.0
      %1678 = vmatprep.subr.mxu0 0.0
      %1679 = vmatpush1.msra.mxu0 0.0
      %1680 = vmatprep.subr.mxu0 0.0
      %1681 = vmatpush1.msra.mxu0 0.0
      %1682 = vmatprep.subr.mxu0 0.0
      %1683 = vmatpush1.msra.mxu0 0.0
      %1684 = vmatprep.subr.mxu0 0.0
      %1685 = vmatpush1.msra.mxu0 0.0
      %1686 = vmatprep.subr.mxu0 0.0
      %1687 = vmatpush1.msra.mxu0 0.0
      %1688 = vmatprep.subr.mxu0 0.0
      %1689 = vmatpush1.msra.mxu0 0.0
      %1690 = vmatprep.subr.mxu0 0.0
      %1691 = vmatpush1.msra.mxu0 0.0
      %1692 = vmatprep.subr.mxu0 0.0
      %1693 = vmatpush1.msra.mxu0 0.0
      %1694 = vmatprep.subr.mxu0 0.0
      %1695 = vmatpush1.msra.mxu0 0.0
      %1696 = vmatprep.subr.mxu0 0.0
      %1697 = vmatpush1.msra.mxu0 0.0
      %1698 = vmatprep.mubr.f32.mxu0 0.0
      %1699 = vmatmul.mubr.f32.gmra.mrb[0].mxu0 %v1527
      %v1700 = vpop.f32.mrb[0].mxu0
      %v1701 = vadd.f32 0.0, %v1700
      %v1702 = vpop.f32.mrb[0].mxu0
      %1703 = vmatprep.mubr.f32.mxu0 0.0
      %1704 = vmatmul.mubr.f32.gmra.mrb[0].mxu0 %v1530
      %v1705 = vpop.f32.mrb[0].mxu0
      %v1706 = vadd.f32 0.0, %v1705
      %v1707 = vpop.f32.mrb[0].mxu0
      %1708 = vmatprep.mubr.f32.mxu0 0.0
      %1709 = vmatmul.mubr.f32.gmra.mrb[0].mxu0 %v1533
      %v1710 = vpop.f32.mrb[0].mxu0
      %v1711 = vadd.f32 0.0, %v1710
      %v1712 = vpop.f32.mrb[0].mxu0
      %1713 = vmatprep.mubr.f32.mxu0 0.0
      %1714 = vmatmul.mubr.f32.gmra.mrb[0].mxu0 %v1536
      %v1715 = vpop.f32.mrb[0].mxu0
      %v1716 = vadd.f32 0.0, %v1715
      %v1717 = vpop.f32.mrb[0].mxu0
      %1718 = vmatprep.mubr.f32.mxu0 0.0
      %1719 = vmatmul.mubr.f32.gmra.mrb[0].mxu0 %v1539
      %v1720 = vpop.f32.mrb[0].mxu0
      %v1721 = vadd.f32 0.0, %v1720
      %v1722 = vpop.f32.mrb[0].mxu0
      %1723 = vmatprep.mubr.f32.mxu0 0.0
      %1724 = vmatmul.mubr.f32.gmra.mrb[0].mxu0 %v1542
      %v1725 = vpop.f32.mrb[0].mxu0
      %v1726 = vadd.f32 0.0, %v1725
      %v1727 = vpop.f32.mrb[0].mxu0
      %1728 = vmatprep.mubr.f32.mxu0 0.0
      %1729 = vmatmul.mubr.f32.gmra.mrb[0].mxu0 %v1545
      %v1730 = vpop.f32.mrb[0].mxu0
      %v1731 = vadd.f32 0.0, %v1730
      %v1732 = vpop.f32.mrb[0].mxu0
      %1733 = vmatprep.mubr.f32.mxu0 0.0
      %1734 = vmatmul.mubr.f32.gmra.mrb[0].mxu0 %v1548
      %v1735 = vpop.f32.mrb[0].mxu0
      %v1736 = vadd.f32 0.0, %v1735
      %v1737 = vpop.f32.mrb[0].mxu0
      %1738 = vmatprep.mubr.f32.mxu0 0.0
      %1739 = vmatmul.mubr.f32.gmra.mrb[0].mxu0 %v1551
      %v1740 = vpop.f32.mrb[0].mxu0
      %v1741 = vadd.f32 0.0, %v1740
      %v1742 = vpop.f32.mrb[0].mxu0
      %1743 = vmatprep.mubr.f32.mxu0 0.0
      %1744 = vmatmul.mubr.f32.gmra.mrb[0].mxu0 %v1554
      %v1745 = vpop.f32.mrb[0].mxu0
      %v1746 = vadd.f32 0.0, %v1745
      %v1747 = vpop.f32.mrb[0].mxu0
      %1748 = vmatprep.mubr.f32.mxu0 0.0
      %1749 = vmatmul.mubr.f32.gmra.mrb[0].mxu0 %v1557
      %v1750 = vpop.f32.mrb[0].mxu0
      %v1751 = vadd.f32 0.0, %v1750
      %v1752 = vpop.f32.mrb[0].mxu0
      %1753 = vmatprep.mubr.f32.mxu0 0.0
      %1754 = vmatmul.mubr.f32.gmra.mrb[0].mxu0 %v1560
      %v1755 = vpop.f32.mrb[0].mxu0
      %v1756 = vadd.f32 0.0, %v1755
      %v1757 = vpop.f32.mrb[0].mxu0
      %1758 = vmatprep.mubr.f32.mxu0 0.0
      %1759 = vmatmul.mubr.f32.gmra.mrb[0].mxu0 %v1563
      %v1760 = vpop.f32.mrb[0].mxu0
      %v1761 = vadd.f32 0.0, %v1760
      %v1762 = vpop.f32.mrb[0].mxu0
      %1763 = vmatprep.mubr.f32.mxu0 0.0
      %1764 = vmatmul.mubr.f32.gmra.mrb[0].mxu0 %v1566
      %v1765 = vpop.f32.mrb[0].mxu0
      %v1766 = vadd.f32 0.0, %v1765
      %v1767 = vpop.f32.mrb[0].mxu0
      %1768 = vmatprep.mubr.f32.mxu0 0.0
      %1769 = vmatmul.mubr.f32.gmra.mrb[0].mxu0 %v1569
      %v1770 = vpop.f32.mrb[0].mxu0
      %v1771 = vadd.f32 0.0, %v1770
      %v1772 = vpop.f32.mrb[0].mxu0
      %1773 = vmatprep.mubr.f32.mxu0 0.0
      %1774 = vmatmul.mubr.f32.gmra.mrb[0].mxu0 %v1572
      %v1775 = vpop.f32.mrb[0].mxu0
      %v1776 = vadd.f32 0.0, %v1775
      %v1777 = vpop.f32.mrb[0].mxu0
      %1778 = vmatprep.mubr.f32.mxu0 0.0
      %1779 = vmatmul.mubr.f32.gmra.mrb[0].mxu0 %v1575
      %v1780 = vpop.f32.mrb[0].mxu0
      %v1781 = vadd.f32 0.0, %v1780
      %v1782 = vpop.f32.mrb[0].mxu0
      %1783 = vmatprep.mubr.f32.mxu0 0.0
      %1784 = vmatmul.mubr.f32.gmra.mrb[0].mxu0 %v1578
      %v1785 = vpop.f32.mrb[0].mxu0
      %v1786 = vadd.f32 0.0, %v1785
      %v1787 = vpop.f32.mrb[0].mxu0
      %1788 = vmatprep.mubr.f32.mxu0 0.0
      %1789 = vmatmul.mubr.f32.gmra.mrb[0].mxu0 %v1581
      %v1790 = vpop.f32.mrb[0].mxu0
      %v1791 = vadd.f32 0.0, %v1790
      %v1792 = vpop.f32.mrb[0].mxu0
      %1793 = vmatprep.mubr.f32.mxu0 0.0
      %1794 = vmatmul.mubr.f32.gmra.mrb[0].mxu0 %v1584
      %v1795 = vpop.f32.mrb[0].mxu0
      %v1796 = vadd.f32 0.0, %v1795
      %v1797 = vpop.f32.mrb[0].mxu0
      %1798 = vmatprep.mubr.f32.mxu0 0.0
      %1799 = vmatmul.mubr.f32.gmra.mrb[0].mxu0 %v1587
      %v1800 = vpop.f32.mrb[0].mxu0
      %v1801 = vadd.f32 0.0, %v1800
      %v1802 = vpop.f32.mrb[0].mxu0
      %1803 = vmatprep.mubr.f32.mxu0 0.0
      %1804 = vmatmul.mubr.f32.gmra.mrb[0].mxu0 %v1590
      %v1805 = vpop.f32.mrb[0].mxu0
      %v1806 = vadd.f32 0.0, %v1805
      %v1807 = vpop.f32.mrb[0].mxu0
      %1808 = vmatprep.mubr.f32.mxu0 0.0
      %1809 = vmatmul.mubr.f32.gmra.mrb[0].mxu0 %v1593
      %v1810 = vpop.f32.mrb[0].mxu0
      %v1811 = vadd.f32 0.0, %v1810
      %v1812 = vpop.f32.mrb[0].mxu0
      %1813 = vmatprep.mubr.f32.mxu0 0.0
      %1814 = vmatmul.mubr.f32.gmra.mrb[0].mxu0 %v1596
      %v1815 = vpop.f32.mrb[0].mxu0
      %v1816 = vadd.f32 0.0, %v1815
      %v1817 = vpop.f32.mrb[0].mxu0
      %1818 = vmatprep.mubr.f32.mxu0 0.0
      %1819 = vmatmul.mubr.f32.gmra.mrb[0].mxu0 %v1599
      %v1820 = vpop.f32.mrb[0].mxu0
      %v1821 = vadd.f32 0.0, %v1820
      %v1822 = vpop.f32.mrb[0].mxu0
      %1823 = vmatprep.mubr.f32.mxu0 0.0
      %1824 = vmatmul.mubr.f32.gmra.mrb[0].mxu0 %v1602
      %v1825 = vpop.f32.mrb[0].mxu0
      %v1826 = vadd.f32 0.0, %v1825
      %v1827 = vpop.f32.mrb[0].mxu0
      %1828 = vmatprep.mubr.f32.mxu0 0.0
      %1829 = vmatmul.mubr.f32.gmra.mrb[0].mxu0 %v1605
      %v1830 = vpop.f32.mrb[0].mxu0
      %v1831 = vadd.f32 0.0, %v1830
      %v1832 = vpop.f32.mrb[0].mxu0
      %1833 = vmatprep.mubr.f32.mxu0 0.0
      %1834 = vmatmul.mubr.f32.gmra.mrb[0].mxu0 %v1608
      %v1835 = vpop.f32.mrb[0].mxu0
      %v1836 = vadd.f32 0.0, %v1835
      %v1837 = vpop.f32.mrb[0].mxu0
      %1838 = vmatprep.mubr.f32.mxu0 0.0
      %1839 = vmatmul.mubr.f32.gmra.mrb[0].mxu0 %v1611
      %v1840 = vpop.f32.mrb[0].mxu0
      %v1841 = vadd.f32 0.0, %v1840
      %v1842 = vpop.f32.mrb[0].mxu0
      %1843 = vmatprep.mubr.f32.mxu0 0.0
      %1844 = vmatmul.mubr.f32.gmra.mrb[0].mxu0 %v1614
      %v1845 = vpop.f32.mrb[0].mxu0
      %v1846 = vadd.f32 0.0, %v1845
      %v1847 = vpop.f32.mrb[0].mxu0
      %1848 = vmatprep.mubr.f32.mxu0 0.0
      %1849 = vmatmul.mubr.f32.gmra.mrb[0].mxu0 %v1617
      %v1850 = vpop.f32.mrb[0].mxu0
      %v1851 = vadd.f32 0.0, %v1850
      %v1852 = vpop.f32.mrb[0].mxu0
      %1853 = vmatprep.mubr.f32.mxu0 0.0
      %1854 = vmatmul.mubr.f32.gmra.mrb[0].mxu0 %v1620
      %v1855 = vpop.f32.mrb[0].mxu0
      %v1856 = vadd.f32 0.0, %v1855
      %v1857 = vpop.f32.mrb[0].mxu0
      %1858 = vmatprep.mubr.f32.mxu0 0.0
      %1859 = vmatmul.mubr.f32.gmra.mrb[0].mxu0 %v1623
      %v1860 = vpop.f32.mrb[0].mxu0
      %v1861 = vadd.f32 0.0, %v1860
      %v1862 = vpop.f32.mrb[0].mxu0
      %1863 = vmatprep.mubr.f32.mxu0 0.0
      %1864 = vmatmul.mubr.f32.gmra.mrb[0].mxu0 %v1626
      %v1865 = vpop.f32.mrb[0].mxu0
      %v1866 = vadd.f32 0.0, %v1865
      %v1867 = vpop.f32.mrb[0].mxu0
      %1868 = vmatprep.mubr.f32.mxu0 0.0
      %1869 = vmatmul.mubr.f32.gmra.mrb[0].mxu0 %v1629
      %v1870 = vpop.f32.mrb[0].mxu0
      %v1871 = vadd.f32 0.0, %v1870
      %v1872 = vpop.f32.mrb[0].mxu0
      %1873 = vmatprep.mubr.f32.mxu0 0.0
      %1874 = vmatmul.mubr.f32.gmra.mrb[0].mxu0 %v1632
      %v1875 = vpop.f32.mrb[0].mxu0
      %v1876 = vadd.f32 0.0, %v1875
      %v1877 = vpop.f32.mrb[0].mxu0
      %1878 = vdwg.mxu0
      %v1879 = vadd.f32 %v1445, %v1701
      %v1880 = vadd.f32 %v1446, %v1706
      %v1881 = vadd.f32 %v1447, %v1711
      %v1882 = vadd.f32 %v1448, %v1716
      %v1883 = vadd.f32 %v1449, %v1721
      %v1884 = vadd.f32 %v1450, %v1726
      %v1885 = vadd.f32 %v1451, %v1731
      %v1886 = vadd.f32 %v1452, %v1736
      %v1887 = vadd.f32 %v1453, %v1741
      %v1888 = vadd.f32 %v1454, %v1746
      %v1889 = vadd.f32 %v1455, %v1751
      %v1890 = vadd.f32 %v1456, %v1756
      %v1891 = vadd.f32 %v1457, %v1761
      %v1892 = vadd.f32 %v1458, %v1766
      %v1893 = vadd.f32 %v1459, %v1771
      %v1894 = vadd.f32 %v1460, %v1776
      %v1895 = vadd.f32 %v1461, %v1781
      %v1896 = vadd.f32 %v1462, %v1786
      %v1897 = vadd.f32 %v1463, %v1791
      %v1898 = vadd.f32 %v1464, %v1796
      %v1899 = vadd.f32 %v1465, %v1801
      %v1900 = vadd.f32 %v1466, %v1806
      %v1901 = vadd.f32 %v1467, %v1811
      %v1902 = vadd.f32 %v1468, %v1816
      %v1903 = vadd.f32 %v1469, %v1821
      %v1904 = vadd.f32 %v1470, %v1826
      %v1905 = vadd.f32 %v1471, %v1831
      %v1906 = vadd.f32 %v1472, %v1836
      %v1907 = vadd.f32 %v1473, %v1841
      %v1908 = vadd.f32 %v1474, %v1846
      %v1909 = vadd.f32 %v1475, %v1851
      %v1910 = vadd.f32 %v1476, %v1856
      %v1911 = vadd.f32 %v1477, %v1861
      %v1912 = vadd.f32 %v1478, %v1866
      %v1913 = vadd.f32 %v1479, %v1871
      %v1914 = vadd.f32 %v1480, %v1876
      %v1915 = vld [vmem:[%s165 + $0x13] sm:$0xff]
      %v1916 = vld [vmem:[%s165 + $0x1b] sm:$0xff]
      %v1917 = vld [vmem:[%s165 + $0x23] sm:$0xff]
      %v1918 = vld [vmem:[%s165 + $0x2b] sm:$0xff]
      %v1919 = vld [vmem:[%s165 + $0x33] sm:$0xff]
      %v1920 = vld [vmem:[%s165 + $0x3b] sm:$0xff]
      %v1921 = vld [vmem:[%s165 + $0x43] sm:$0xff]
      %v1922 = vld [vmem:[%s165 + $0x4b] sm:$0xff]
      %v1923 = vld [vmem:[%s165 + $0x53] sm:$0xff]
      %v1924 = vld [vmem:[%s165 + $0x5b] sm:$0xff]
      %v1925 = vld [vmem:[%s165 + $0x63] sm:$0xff]
      %v1926 = vld [vmem:[%s165 + $0x6b] sm:$0xff]
      %v1927 = vld [vmem:[%s165 + $0x73] sm:$0xff]
      %v1928 = vld [vmem:[%s165 + $0x7b] sm:$0xff]
      %v1929 = vld [vmem:[%s165 + $0x83] sm:$0xff]
      %v1930 = vld [vmem:[%s165 + $0x8b] sm:$0xff]
      %v1931 = vld [vmem:[%s165 + $0x93] sm:$0xff]
      %v1932 = vld [vmem:[%s165 + $0x9b] sm:$0xff]
      %v1933 = vld [vmem:[%s165 + $0xa3] sm:$0xff]
      %v1934 = vld [vmem:[%s165 + $0xab] sm:$0xff]
      %v1935 = vld [vmem:[%s165 + $0xb3] sm:$0xff]
      %v1936 = vld [vmem:[%s165 + $0xbb] sm:$0xff]
      %v1937 = vld [vmem:[%s165 + $0xc3] sm:$0xff]
      %v1938 = vld [vmem:[%s165 + $0xcb] sm:$0xff]
      %v1939 = vld [vmem:[%s165 + $0xd3] sm:$0xff]
      %v1940 = vld [vmem:[%s165 + $0xdb] sm:$0xff]
      %v1941 = vld [vmem:[%s165 + $0xe3] sm:$0xff]
      %v1942 = vld [vmem:[%s165 + $0xeb] sm:$0xff]
      %v1943 = vld [vmem:[%s165 + $0xf3] sm:$0xff]
      %v1944 = vld [vmem:[%s165 + $0xfb] sm:$0xff]
      %v1945 = vld [vmem:[%s165 + $0x103] sm:$0xff]
      %v1946 = vld [vmem:[%s165 + $0x10b] sm:$0xff]
      %v1947 = vld [vmem:[%s165 + $0x113] sm:$0xff]
      %v1948 = vld [vmem:[%s165 + $0x11b] sm:$0xff]
      %v1949 = vld [vmem:[%s165 + $0x123] sm:$0xff]
      %v1950 = vld [vmem:[%s165 + $0x12b] sm:$0xff]
      %s1951 = scalar_lea.vmem %s1, 256
      %v1952 = vld [vmem:[%s1951] sm:$0xff]
      %v1953 = vld [vmem:[%s1951 + $0x8] sm:$0xff]
      %v1954 = vld [vmem:[%s1951 + $0x10] sm:$0xff]
      %v1955 = vld [vmem:[%s1951 + $0x18] sm:$0xff]
      %v1956 = vld [vmem:[%s1951 + $0x20] sm:$0xff]
      %v1957 = vld [vmem:[%s1951 + $0x28] sm:$0xff]
      %v1958 = vld [vmem:[%s1951 + $0x30] sm:$0xff]
      %v1959 = vld [vmem:[%s1951 + $0x38] sm:$0xff]
      %v1961 = vsel %vm223, %v1915, 0
      %v1964 = vsel %vm223, %v1916, 0
      %v1967 = vsel %vm223, %v1917, 0
      %v1970 = vsel %vm223, %v1918, 0
      %v1973 = vsel %vm223, %v1919, 0
      %v1976 = vsel %vm223, %v1920, 0
      %v1979 = vsel %vm223, %v1921, 0
      %v1982 = vsel %vm223, %v1922, 0
      %v1985 = vsel %vm223, %v1923, 0
      %v1988 = vsel %vm223, %v1924, 0
      %v1991 = vsel %vm223, %v1925, 0
      %v1994 = vsel %vm223, %v1926, 0
      %v1997 = vsel %vm223, %v1927, 0
      %v2000 = vsel %vm223, %v1928, 0
      %v2003 = vsel %vm223, %v1929, 0
      %v2006 = vsel %vm223, %v1930, 0
      %v2009 = vsel %vm223, %v1931, 0
      %v2012 = vsel %vm223, %v1932, 0
      %v2015 = vsel %vm223, %v1933, 0
      %v2018 = vsel %vm223, %v1934, 0
      %v2021 = vsel %vm223, %v1935, 0
      %v2024 = vsel %vm223, %v1936, 0
      %v2027 = vsel %vm223, %v1937, 0
      %v2030 = vsel %vm223, %v1938, 0
      %v2033 = vsel %vm223, %v1939, 0
      %v2036 = vsel %vm223, %v1940, 0
      %v2039 = vsel %vm223, %v1941, 0
      %v2042 = vsel %vm223, %v1942, 0
      %v2045 = vsel %vm223, %v1943, 0
      %v2048 = vsel %vm223, %v1944, 0
      %v2051 = vsel %vm223, %v1945, 0
      %v2054 = vsel %vm223, %v1946, 0
      %v2057 = vsel %vm223, %v1947, 0
      %v2060 = vsel %vm223, %v1948, 0
      %v2063 = vsel %vm223, %v1949, 0
      %v2066 = vsel %vm223, %v1950, 0
      %2068 = vmatprep.subr.mxu0 0.0
      %2069 = vmatpush1.msra.mxu0 %v1952
      %2070 = vmatprep.subr.mxu0 0.0
      %2071 = vmatpush1.msra.mxu0 %v1953
      %2072 = vmatprep.subr.mxu0 0.0
      %2073 = vmatpush1.msra.mxu0 %v1954
      %2074 = vmatprep.subr.mxu0 0.0
      %2075 = vmatpush1.msra.mxu0 %v1955
      %2076 = vmatprep.subr.mxu0 0.0
      %2077 = vmatpush1.msra.mxu0 %v1956
      %2078 = vmatprep.subr.mxu0 0.0
      %2079 = vmatpush1.msra.mxu0 %v1957
      %2080 = vmatprep.subr.mxu0 0.0
      %2081 = vmatpush1.msra.mxu0 %v1958
      %2082 = vmatprep.subr.mxu0 0.0
      %2083 = vmatpush1.msra.mxu0 %v1959
      %2084 = vmatprep.subr.mxu0 0.0
      %2085 = vmatpush1.msra.mxu0 0.0
      %2086 = vmatprep.subr.mxu0 0.0
      %2087 = vmatpush1.msra.mxu0 0.0
      %2088 = vmatprep.subr.mxu0 0.0
      %2089 = vmatpush1.msra.mxu0 0.0
      %2090 = vmatprep.subr.mxu0 0.0
      %2091 = vmatpush1.msra.mxu0 0.0
      %2092 = vmatprep.subr.mxu0 0.0
      %2093 = vmatpush1.msra.mxu0 0.0
      %2094 = vmatprep.subr.mxu0 0.0
      %2095 = vmatpush1.msra.mxu0 0.0
      %2096 = vmatprep.subr.mxu0 0.0
      %2097 = vmatpush1.msra.mxu0 0.0
      %2098 = vmatprep.subr.mxu0 0.0
      %2099 = vmatpush1.msra.mxu0 0.0
      %2100 = vmatprep.subr.mxu0 0.0
      %2101 = vmatpush1.msra.mxu0 0.0
      %2102 = vmatprep.subr.mxu0 0.0
      %2103 = vmatpush1.msra.mxu0 0.0
      %2104 = vmatprep.subr.mxu0 0.0
      %2105 = vmatpush1.msra.mxu0 0.0
      %2106 = vmatprep.subr.mxu0 0.0
      %2107 = vmatpush1.msra.mxu0 0.0
      %2108 = vmatprep.subr.mxu0 0.0
      %2109 = vmatpush1.msra.mxu0 0.0
      %2110 = vmatprep.subr.mxu0 0.0
      %2111 = vmatpush1.msra.mxu0 0.0
      %2112 = vmatprep.subr.mxu0 0.0
      %2113 = vmatpush1.msra.mxu0 0.0
      %2114 = vmatprep.subr.mxu0 0.0
      %2115 = vmatpush1.msra.mxu0 0.0
      %2116 = vmatprep.subr.mxu0 0.0
      %2117 = vmatpush1.msra.mxu0 0.0
      %2118 = vmatprep.subr.mxu0 0.0
      %2119 = vmatpush1.msra.mxu0 0.0
      %2120 = vmatprep.subr.mxu0 0.0
      %2121 = vmatpush1.msra.mxu0 0.0
      %2122 = vmatprep.subr.mxu0 0.0
      %2123 = vmatpush1.msra.mxu0 0.0
      %2124 = vmatprep.subr.mxu0 0.0
      %2125 = vmatpush1.msra.mxu0 0.0
      %2126 = vmatprep.subr.mxu0 0.0
      %2127 = vmatpush1.msra.mxu0 0.0
      %2128 = vmatprep.subr.mxu0 0.0
      %2129 = vmatpush1.msra.mxu0 0.0
      %2130 = vmatprep.subr.mxu0 0.0
      %2131 = vmatpush1.msra.mxu0 0.0
      %2132 = vmatprep.mubr.f32.mxu0 0.0
      %2133 = vmatmul.mubr.f32.gmra.mrb[0].mxu0 %v1961
      %v2134 = vpop.f32.mrb[0].mxu0
      %v2135 = vadd.f32 0.0, %v2134
      %v2136 = vpop.f32.mrb[0].mxu0
      %2137 = vmatprep.mubr.f32.mxu0 0.0
      %2138 = vmatmul.mubr.f32.gmra.mrb[0].mxu0 %v1964
      %v2139 = vpop.f32.mrb[0].mxu0
      %v2140 = vadd.f32 0.0, %v2139
      %v2141 = vpop.f32.mrb[0].mxu0
      %2142 = vmatprep.mubr.f32.mxu0 0.0
      %2143 = vmatmul.mubr.f32.gmra.mrb[0].mxu0 %v1967
      %v2144 = vpop.f32.mrb[0].mxu0
      %v2145 = vadd.f32 0.0, %v2144
      %v2146 = vpop.f32.mrb[0].mxu0
      %2147 = vmatprep.mubr.f32.mxu0 0.0
      %2148 = vmatmul.mubr.f32.gmra.mrb[0].mxu0 %v1970
      %v2149 = vpop.f32.mrb[0].mxu0
      %v2150 = vadd.f32 0.0, %v2149
      %v2151 = vpop.f32.mrb[0].mxu0
      %2152 = vmatprep.mubr.f32.mxu0 0.0
      %2153 = vmatmul.mubr.f32.gmra.mrb[0].mxu0 %v1973
      %v2154 = vpop.f32.mrb[0].mxu0
      %v2155 = vadd.f32 0.0, %v2154
      %v2156 = vpop.f32.mrb[0].mxu0
      %2157 = vmatprep.mubr.f32.mxu0 0.0
      %2158 = vmatmul.mubr.f32.gmra.mrb[0].mxu0 %v1976
      %v2159 = vpop.f32.mrb[0].mxu0
      %v2160 = vadd.f32 0.0, %v2159
      %v2161 = vpop.f32.mrb[0].mxu0
      %2162 = vmatprep.mubr.f32.mxu0 0.0
      %2163 = vmatmul.mubr.f32.gmra.mrb[0].mxu0 %v1979
      %v2164 = vpop.f32.mrb[0].mxu0
      %v2165 = vadd.f32 0.0, %v2164
      %v2166 = vpop.f32.mrb[0].mxu0
      %2167 = vmatprep.mubr.f32.mxu0 0.0
      %2168 = vmatmul.mubr.f32.gmra.mrb[0].mxu0 %v1982
      %v2169 = vpop.f32.mrb[0].mxu0
      %v2170 = vadd.f32 0.0, %v2169
      %v2171 = vpop.f32.mrb[0].mxu0
      %2172 = vmatprep.mubr.f32.mxu0 0.0
      %2173 = vmatmul.mubr.f32.gmra.mrb[0].mxu0 %v1985
      %v2174 = vpop.f32.mrb[0].mxu0
      %v2175 = vadd.f32 0.0, %v2174
      %v2176 = vpop.f32.mrb[0].mxu0
      %2177 = vmatprep.mubr.f32.mxu0 0.0
      %2178 = vmatmul.mubr.f32.gmra.mrb[0].mxu0 %v1988
      %v2179 = vpop.f32.mrb[0].mxu0
      %v2180 = vadd.f32 0.0, %v2179
      %v2181 = vpop.f32.mrb[0].mxu0
      %2182 = vmatprep.mubr.f32.mxu0 0.0
      %2183 = vmatmul.mubr.f32.gmra.mrb[0].mxu0 %v1991
      %v2184 = vpop.f32.mrb[0].mxu0
      %v2185 = vadd.f32 0.0, %v2184
      %v2186 = vpop.f32.mrb[0].mxu0
      %2187 = vmatprep.mubr.f32.mxu0 0.0
      %2188 = vmatmul.mubr.f32.gmra.mrb[0].mxu0 %v1994
      %v2189 = vpop.f32.mrb[0].mxu0
      %v2190 = vadd.f32 0.0, %v2189
      %v2191 = vpop.f32.mrb[0].mxu0
      %2192 = vmatprep.mubr.f32.mxu0 0.0
      %2193 = vmatmul.mubr.f32.gmra.mrb[0].mxu0 %v1997
      %v2194 = vpop.f32.mrb[0].mxu0
      %v2195 = vadd.f32 0.0, %v2194
      %v2196 = vpop.f32.mrb[0].mxu0
      %2197 = vmatprep.mubr.f32.mxu0 0.0
      %2198 = vmatmul.mubr.f32.gmra.mrb[0].mxu0 %v2000
      %v2199 = vpop.f32.mrb[0].mxu0
      %v2200 = vadd.f32 0.0, %v2199
      %v2201 = vpop.f32.mrb[0].mxu0
      %2202 = vmatprep.mubr.f32.mxu0 0.0
      %2203 = vmatmul.mubr.f32.gmra.mrb[0].mxu0 %v2003
      %v2204 = vpop.f32.mrb[0].mxu0
      %v2205 = vadd.f32 0.0, %v2204
      %v2206 = vpop.f32.mrb[0].mxu0
      %2207 = vmatprep.mubr.f32.mxu0 0.0
      %2208 = vmatmul.mubr.f32.gmra.mrb[0].mxu0 %v2006
      %v2209 = vpop.f32.mrb[0].mxu0
      %v2210 = vadd.f32 0.0, %v2209
      %v2211 = vpop.f32.mrb[0].mxu0
      %2212 = vmatprep.mubr.f32.mxu0 0.0
      %2213 = vmatmul.mubr.f32.gmra.mrb[0].mxu0 %v2009
      %v2214 = vpop.f32.mrb[0].mxu0
      %v2215 = vadd.f32 0.0, %v2214
      %v2216 = vpop.f32.mrb[0].mxu0
      %2217 = vmatprep.mubr.f32.mxu0 0.0
      %2218 = vmatmul.mubr.f32.gmra.mrb[0].mxu0 %v2012
      %v2219 = vpop.f32.mrb[0].mxu0
      %v2220 = vadd.f32 0.0, %v2219
      %v2221 = vpop.f32.mrb[0].mxu0
      %2222 = vmatprep.mubr.f32.mxu0 0.0
      %2223 = vmatmul.mubr.f32.gmra.mrb[0].mxu0 %v2015
      %v2224 = vpop.f32.mrb[0].mxu0
      %v2225 = vadd.f32 0.0, %v2224
      %v2226 = vpop.f32.mrb[0].mxu0
      %2227 = vmatprep.mubr.f32.mxu0 0.0
      %2228 = vmatmul.mubr.f32.gmra.mrb[0].mxu0 %v2018
      %v2229 = vpop.f32.mrb[0].mxu0
      %v2230 = vadd.f32 0.0, %v2229
      %v2231 = vpop.f32.mrb[0].mxu0
      %2232 = vmatprep.mubr.f32.mxu0 0.0
      %2233 = vmatmul.mubr.f32.gmra.mrb[0].mxu0 %v2021
      %v2234 = vpop.f32.mrb[0].mxu0
      %v2235 = vadd.f32 0.0, %v2234
      %v2236 = vpop.f32.mrb[0].mxu0
      %2237 = vmatprep.mubr.f32.mxu0 0.0
      %2238 = vmatmul.mubr.f32.gmra.mrb[0].mxu0 %v2024
      %v2239 = vpop.f32.mrb[0].mxu0
      %v2240 = vadd.f32 0.0, %v2239
      %v2241 = vpop.f32.mrb[0].mxu0
      %2242 = vmatprep.mubr.f32.mxu0 0.0
      %2243 = vmatmul.mubr.f32.gmra.mrb[0].mxu0 %v2027
      %v2244 = vpop.f32.mrb[0].mxu0
      %v2245 = vadd.f32 0.0, %v2244
      %v2246 = vpop.f32.mrb[0].mxu0
      %2247 = vmatprep.mubr.f32.mxu0 0.0
      %2248 = vmatmul.mubr.f32.gmra.mrb[0].mxu0 %v2030
      %v2249 = vpop.f32.mrb[0].mxu0
      %v2250 = vadd.f32 0.0, %v2249
      %v2251 = vpop.f32.mrb[0].mxu0
      %2252 = vmatprep.mubr.f32.mxu0 0.0
      %2253 = vmatmul.mubr.f32.gmra.mrb[0].mxu0 %v2033
      %v2254 = vpop.f32.mrb[0].mxu0
      %v2255 = vadd.f32 0.0, %v2254
      %v2256 = vpop.f32.mrb[0].mxu0
      %2257 = vmatprep.mubr.f32.mxu0 0.0
      %2258 = vmatmul.mubr.f32.gmra.mrb[0].mxu0 %v2036
      %v2259 = vpop.f32.mrb[0].mxu0
      %v2260 = vadd.f32 0.0, %v2259
      %v2261 = vpop.f32.mrb[0].mxu0
      %2262 = vmatprep.mubr.f32.mxu0 0.0
      %2263 = vmatmul.mubr.f32.gmra.mrb[0].mxu0 %v2039
      %v2264 = vpop.f32.mrb[0].mxu0
      %v2265 = vadd.f32 0.0, %v2264
      %v2266 = vpop.f32.mrb[0].mxu0
      %2267 = vmatprep.mubr.f32.mxu0 0.0
      %2268 = vmatmul.mubr.f32.gmra.mrb[0].mxu0 %v2042
      %v2269 = vpop.f32.mrb[0].mxu0
      %v2270 = vadd.f32 0.0, %v2269
      %v2271 = vpop.f32.mrb[0].mxu0
      %2272 = vmatprep.mubr.f32.mxu0 0.0
      %2273 = vmatmul.mubr.f32.gmra.mrb[0].mxu0 %v2045
      %v2274 = vpop.f32.mrb[0].mxu0
      %v2275 = vadd.f32 0.0, %v2274
      %v2276 = vpop.f32.mrb[0].mxu0
      %2277 = vmatprep.mubr.f32.mxu0 0.0
      %2278 = vmatmul.mubr.f32.gmra.mrb[0].mxu0 %v2048
      %v2279 = vpop.f32.mrb[0].mxu0
      %v2280 = vadd.f32 0.0, %v2279
      %v2281 = vpop.f32.mrb[0].mxu0
      %2282 = vmatprep.mubr.f32.mxu0 0.0
      %2283 = vmatmul.mubr.f32.gmra.mrb[0].mxu0 %v2051
      %v2284 = vpop.f32.mrb[0].mxu0
      %v2285 = vadd.f32 0.0, %v2284
      %v2286 = vpop.f32.mrb[0].mxu0
      %2287 = vmatprep.mubr.f32.mxu0 0.0
      %2288 = vmatmul.mubr.f32.gmra.mrb[0].mxu0 %v2054
      %v2289 = vpop.f32.mrb[0].mxu0
      %v2290 = vadd.f32 0.0, %v2289
      %v2291 = vpop.f32.mrb[0].mxu0
      %2292 = vmatprep.mubr.f32.mxu0 0.0
      %2293 = vmatmul.mubr.f32.gmra.mrb[0].mxu0 %v2057
      %v2294 = vpop.f32.mrb[0].mxu0
      %v2295 = vadd.f32 0.0, %v2294
      %v2296 = vpop.f32.mrb[0].mxu0
      %2297 = vmatprep.mubr.f32.mxu0 0.0
      %2298 = vmatmul.mubr.f32.gmra.mrb[0].mxu0 %v2060
      %v2299 = vpop.f32.mrb[0].mxu0
      %v2300 = vadd.f32 0.0, %v2299
      %v2301 = vpop.f32.mrb[0].mxu0
      %2302 = vmatprep.mubr.f32.mxu0 0.0
      %2303 = vmatmul.mubr.f32.gmra.mrb[0].mxu0 %v2063
      %v2304 = vpop.f32.mrb[0].mxu0
      %v2305 = vadd.f32 0.0, %v2304
      %v2306 = vpop.f32.mrb[0].mxu0
      %2307 = vmatprep.mubr.f32.mxu0 0.0
      %2308 = vmatmul.mubr.f32.gmra.mrb[0].mxu0 %v2066
      %v2309 = vpop.f32.mrb[0].mxu0
      %v2310 = vadd.f32 0.0, %v2309
      %v2311 = vpop.f32.mrb[0].mxu0
      %2312 = vdwg.mxu0
      %v2313 = vadd.f32 %v1879, %v2135
      %v2314 = vadd.f32 %v1880, %v2140
      %v2315 = vadd.f32 %v1881, %v2145
      %v2316 = vadd.f32 %v1882, %v2150
      %v2317 = vadd.f32 %v1883, %v2155
      %v2318 = vadd.f32 %v1884, %v2160
      %v2319 = vadd.f32 %v1885, %v2165
      %v2320 = vadd.f32 %v1886, %v2170
      %v2321 = vadd.f32 %v1887, %v2175
      %v2322 = vadd.f32 %v1888, %v2180
      %v2323 = vadd.f32 %v1889, %v2185
      %v2324 = vadd.f32 %v1890, %v2190
      %v2325 = vadd.f32 %v1891, %v2195
      %v2326 = vadd.f32 %v1892, %v2200
      %v2327 = vadd.f32 %v1893, %v2205
      %v2328 = vadd.f32 %v1894, %v2210
      %v2329 = vadd.f32 %v1895, %v2215
      %v2330 = vadd.f32 %v1896, %v2220
      %v2331 = vadd.f32 %v1897, %v2225
      %v2332 = vadd.f32 %v1898, %v2230
      %v2333 = vadd.f32 %v1899, %v2235
      %v2334 = vadd.f32 %v1900, %v2240
      %v2335 = vadd.f32 %v1901, %v2245
      %v2336 = vadd.f32 %v1902, %v2250
      %v2337 = vadd.f32 %v1903, %v2255
      %v2338 = vadd.f32 %v1904, %v2260
      %v2339 = vadd.f32 %v1905, %v2265
      %v2340 = vadd.f32 %v1906, %v2270
      %v2341 = vadd.f32 %v1907, %v2275
      %v2342 = vadd.f32 %v1908, %v2280
      %v2343 = vadd.f32 %v1909, %v2285
      %v2344 = vadd.f32 %v1910, %v2290
      %v2345 = vadd.f32 %v1911, %v2295
      %v2346 = vadd.f32 %v1912, %v2300
      %v2347 = vadd.f32 %v1913, %v2305
      %v2348 = vadd.f32 %v1914, %v2310
      %v2349 = vld [vmem:[%s165 + $0x14] sm:$0xff]
      %v2350 = vld [vmem:[%s165 + $0x1c] sm:$0xff]
      %v2351 = vld [vmem:[%s165 + $0x24] sm:$0xff]
      %v2352 = vld [vmem:[%s165 + $0x2c] sm:$0xff]
      %v2353 = vld [vmem:[%s165 + $0x34] sm:$0xff]
      %v2354 = vld [vmem:[%s165 + $0x3c] sm:$0xff]
      %v2355 = vld [vmem:[%s165 + $0x44] sm:$0xff]
      %v2356 = vld [vmem:[%s165 + $0x4c] sm:$0xff]
      %v2357 = vld [vmem:[%s165 + $0x54] sm:$0xff]
      %v2358 = vld [vmem:[%s165 + $0x5c] sm:$0xff]
      %v2359 = vld [vmem:[%s165 + $0x64] sm:$0xff]
      %v2360 = vld [vmem:[%s165 + $0x6c] sm:$0xff]
      %v2361 = vld [vmem:[%s165 + $0x74] sm:$0xff]
      %v2362 = vld [vmem:[%s165 + $0x7c] sm:$0xff]
      %v2363 = vld [vmem:[%s165 + $0x84] sm:$0xff]
      %v2364 = vld [vmem:[%s165 + $0x8c] sm:$0xff]
      %v2365 = vld [vmem:[%s165 + $0x94] sm:$0xff]
      %v2366 = vld [vmem:[%s165 + $0x9c] sm:$0xff]
      %v2367 = vld [vmem:[%s165 + $0xa4] sm:$0xff]
      %v2368 = vld [vmem:[%s165 + $0xac] sm:$0xff]
      %v2369 = vld [vmem:[%s165 + $0xb4] sm:$0xff]
      %v2370 = vld [vmem:[%s165 + $0xbc] sm:$0xff]
      %v2371 = vld [vmem:[%s165 + $0xc4] sm:$0xff]
      %v2372 = vld [vmem:[%s165 + $0xcc] sm:$0xff]
      %v2373 = vld [vmem:[%s165 + $0xd4] sm:$0xff]
      %v2374 = vld [vmem:[%s165 + $0xdc] sm:$0xff]
      %v2375 = vld [vmem:[%s165 + $0xe4] sm:$0xff]
      %v2376 = vld [vmem:[%s165 + $0xec] sm:$0xff]
      %v2377 = vld [vmem:[%s165 + $0xf4] sm:$0xff]
      %v2378 = vld [vmem:[%s165 + $0xfc] sm:$0xff]
      %v2379 = vld [vmem:[%s165 + $0x104] sm:$0xff]
      %v2380 = vld [vmem:[%s165 + $0x10c] sm:$0xff]
      %v2381 = vld [vmem:[%s165 + $0x114] sm:$0xff]
      %v2382 = vld [vmem:[%s165 + $0x11c] sm:$0xff]
      %v2383 = vld [vmem:[%s165 + $0x124] sm:$0xff]
      %v2384 = vld [vmem:[%s165 + $0x12c] sm:$0xff]
      %s2385 = scalar_lea.vmem %s1, 320
      %v2386 = vld [vmem:[%s2385] sm:$0xff]
      %v2387 = vld [vmem:[%s2385 + $0x8] sm:$0xff]
      %v2388 = vld [vmem:[%s2385 + $0x10] sm:$0xff]
      %v2389 = vld [vmem:[%s2385 + $0x18] sm:$0xff]
      %v2390 = vld [vmem:[%s2385 + $0x20] sm:$0xff]
      %v2391 = vld [vmem:[%s2385 + $0x28] sm:$0xff]
      %v2392 = vld [vmem:[%s2385 + $0x30] sm:$0xff]
      %v2393 = vld [vmem:[%s2385 + $0x38] sm:$0xff]
      %v2395 = vsel %vm223, %v2349, 0
      %v2398 = vsel %vm223, %v2350, 0
      %v2401 = vsel %vm223, %v2351, 0
      %v2404 = vsel %vm223, %v2352, 0
      %v2407 = vsel %vm223, %v2353, 0
      %v2410 = vsel %vm223, %v2354, 0
      %v2413 = vsel %vm223, %v2355, 0
      %v2416 = vsel %vm223, %v2356, 0
      %v2419 = vsel %vm223, %v2357, 0
      %v2422 = vsel %vm223, %v2358, 0
      %v2425 = vsel %vm223, %v2359, 0
      %v2428 = vsel %vm223, %v2360, 0
      %v2431 = vsel %vm223, %v2361, 0
      %v2434 = vsel %vm223, %v2362, 0
      %v2437 = vsel %vm223, %v2363, 0
      %v2440 = vsel %vm223, %v2364, 0
      %v2443 = vsel %vm223, %v2365, 0
      %v2446 = vsel %vm223, %v2366, 0
      %v2449 = vsel %vm223, %v2367, 0
      %v2452 = vsel %vm223, %v2368, 0
      %v2455 = vsel %vm223, %v2369, 0
      %v2458 = vsel %vm223, %v2370, 0
      %v2461 = vsel %vm223, %v2371, 0
      %v2464 = vsel %vm223, %v2372, 0
      %v2467 = vsel %vm223, %v2373, 0
      %v2470 = vsel %vm223, %v2374, 0
      %v2473 = vsel %vm223, %v2375, 0
      %v2476 = vsel %vm223, %v2376, 0
      %v2479 = vsel %vm223, %v2377, 0
      %v2482 = vsel %vm223, %v2378, 0
      %v2485 = vsel %vm223, %v2379, 0
      %v2488 = vsel %vm223, %v2380, 0
      %v2491 = vsel %vm223, %v2381, 0
      %v2494 = vsel %vm223, %v2382, 0
      %v2497 = vsel %vm223, %v2383, 0
      %v2500 = vsel %vm223, %v2384, 0
      %2502 = vmatprep.subr.mxu0 0.0
      %2503 = vmatpush1.msra.mxu0 %v2386
      %2504 = vmatprep.subr.mxu0 0.0
      %2505 = vmatpush1.msra.mxu0 %v2387
      %2506 = vmatprep.subr.mxu0 0.0
      %2507 = vmatpush1.msra.mxu0 %v2388
      %2508 = vmatprep.subr.mxu0 0.0
      %2509 = vmatpush1.msra.mxu0 %v2389
      %2510 = vmatprep.subr.mxu0 0.0
      %2511 = vmatpush1.msra.mxu0 %v2390
      %2512 = vmatprep.subr.mxu0 0.0
      %2513 = vmatpush1.msra.mxu0 %v2391
      %2514 = vmatprep.subr.mxu0 0.0
      %2515 = vmatpush1.msra.mxu0 %v2392
      %2516 = vmatprep.subr.mxu0 0.0
      %2517 = vmatpush1.msra.mxu0 %v2393
      %2518 = vmatprep.subr.mxu0 0.0
      %2519 = vmatpush1.msra.mxu0 0.0
      %2520 = vmatprep.subr.mxu0 0.0
      %2521 = vmatpush1.msra.mxu0 0.0
      %2522 = vmatprep.subr.mxu0 0.0
      %2523 = vmatpush1.msra.mxu0 0.0
      %2524 = vmatprep.subr.mxu0 0.0
      %2525 = vmatpush1.msra.mxu0 0.0
      %2526 = vmatprep.subr.mxu0 0.0
      %2527 = vmatpush1.msra.mxu0 0.0
      %2528 = vmatprep.subr.mxu0 0.0
      %2529 = vmatpush1.msra.mxu0 0.0
      %2530 = vmatprep.subr.mxu0 0.0
      %2531 = vmatpush1.msra.mxu0 0.0
      %2532 = vmatprep.subr.mxu0 0.0
      %2533 = vmatpush1.msra.mxu0 0.0
      %2534 = vmatprep.subr.mxu0 0.0
      %2535 = vmatpush1.msra.mxu0 0.0
      %2536 = vmatprep.subr.mxu0 0.0
      %2537 = vmatpush1.msra.mxu0 0.0
      %2538 = vmatprep.subr.mxu0 0.0
      %2539 = vmatpush1.msra.mxu0 0.0
      %2540 = vmatprep.subr.mxu0 0.0
      %2541 = vmatpush1.msra.mxu0 0.0
      %2542 = vmatprep.subr.mxu0 0.0
      %2543 = vmatpush1.msra.mxu0 0.0
      %2544 = vmatprep.subr.mxu0 0.0
      %2545 = vmatpush1.msra.mxu0 0.0
      %2546 = vmatprep.subr.mxu0 0.0
      %2547 = vmatpush1.msra.mxu0 0.0
      %2548 = vmatprep.subr.mxu0 0.0
      %2549 = vmatpush1.msra.mxu0 0.0
      %2550 = vmatprep.subr.mxu0 0.0
      %2551 = vmatpush1.msra.mxu0 0.0
      %2552 = vmatprep.subr.mxu0 0.0
      %2553 = vmatpush1.msra.mxu0 0.0
      %2554 = vmatprep.subr.mxu0 0.0
      %2555 = vmatpush1.msra.mxu0 0.0
      %2556 = vmatprep.subr.mxu0 0.0
      %2557 = vmatpush1.msra.mxu0 0.0
      %2558 = vmatprep.subr.mxu0 0.0
      %2559 = vmatpush1.msra.mxu0 0.0
      %2560 = vmatprep.subr.mxu0 0.0
      %2561 = vmatpush1.msra.mxu0 0.0
      %2562 = vmatprep.subr.mxu0 0.0
      %2563 = vmatpush1.msra.mxu0 0.0
      %2564 = vmatprep.subr.mxu0 0.0
      %2565 = vmatpush1.msra.mxu0 0.0
      %2566 = vmatprep.mubr.f32.mxu0 0.0
      %2567 = vmatmul.mubr.f32.gmra.mrb[0].mxu0 %v2395
      %v2568 = vpop.f32.mrb[0].mxu0
      %v2569 = vadd.f32 0.0, %v2568
      %v2570 = vpop.f32.mrb[0].mxu0
      %2571 = vmatprep.mubr.f32.mxu0 0.0
      %2572 = vmatmul.mubr.f32.gmra.mrb[0].mxu0 %v2398
      %v2573 = vpop.f32.mrb[0].mxu0
      %v2574 = vadd.f32 0.0, %v2573
      %v2575 = vpop.f32.mrb[0].mxu0
      %2576 = vmatprep.mubr.f32.mxu0 0.0
      %2577 = vmatmul.mubr.f32.gmra.mrb[0].mxu0 %v2401
      %v2578 = vpop.f32.mrb[0].mxu0
      %v2579 = vadd.f32 0.0, %v2578
      %v2580 = vpop.f32.mrb[0].mxu0
      %2581 = vmatprep.mubr.f32.mxu0 0.0
      %2582 = vmatmul.mubr.f32.gmra.mrb[0].mxu0 %v2404
      %v2583 = vpop.f32.mrb[0].mxu0
      %v2584 = vadd.f32 0.0, %v2583
      %v2585 = vpop.f32.mrb[0].mxu0
      %2586 = vmatprep.mubr.f32.mxu0 0.0
      %2587 = vmatmul.mubr.f32.gmra.mrb[0].mxu0 %v2407
      %v2588 = vpop.f32.mrb[0].mxu0
      %v2589 = vadd.f32 0.0, %v2588
      %v2590 = vpop.f32.mrb[0].mxu0
      %2591 = vmatprep.mubr.f32.mxu0 0.0
      %2592 = vmatmul.mubr.f32.gmra.mrb[0].mxu0 %v2410
      %v2593 = vpop.f32.mrb[0].mxu0
      %v2594 = vadd.f32 0.0, %v2593
      %v2595 = vpop.f32.mrb[0].mxu0
      %2596 = vmatprep.mubr.f32.mxu0 0.0
      %2597 = vmatmul.mubr.f32.gmra.mrb[0].mxu0 %v2413
      %v2598 = vpop.f32.mrb[0].mxu0
      %v2599 = vadd.f32 0.0, %v2598
      %v2600 = vpop.f32.mrb[0].mxu0
      %2601 = vmatprep.mubr.f32.mxu0 0.0
      %2602 = vmatmul.mubr.f32.gmra.mrb[0].mxu0 %v2416
      %v2603 = vpop.f32.mrb[0].mxu0
      %v2604 = vadd.f32 0.0, %v2603
      %v2605 = vpop.f32.mrb[0].mxu0
      %2606 = vmatprep.mubr.f32.mxu0 0.0
      %2607 = vmatmul.mubr.f32.gmra.mrb[0].mxu0 %v2419
      %v2608 = vpop.f32.mrb[0].mxu0
      %v2609 = vadd.f32 0.0, %v2608
      %v2610 = vpop.f32.mrb[0].mxu0
      %2611 = vmatprep.mubr.f32.mxu0 0.0
      %2612 = vmatmul.mubr.f32.gmra.mrb[0].mxu0 %v2422
      %v2613 = vpop.f32.mrb[0].mxu0
      %v2614 = vadd.f32 0.0, %v2613
      %v2615 = vpop.f32.mrb[0].mxu0
      %2616 = vmatprep.mubr.f32.mxu0 0.0
      %2617 = vmatmul.mubr.f32.gmra.mrb[0].mxu0 %v2425
      %v2618 = vpop.f32.mrb[0].mxu0
      %v2619 = vadd.f32 0.0, %v2618
      %v2620 = vpop.f32.mrb[0].mxu0
      %2621 = vmatprep.mubr.f32.mxu0 0.0
      %2622 = vmatmul.mubr.f32.gmra.mrb[0].mxu0 %v2428
      %v2623 = vpop.f32.mrb[0].mxu0
      %v2624 = vadd.f32 0.0, %v2623
      %v2625 = vpop.f32.mrb[0].mxu0
      %2626 = vmatprep.mubr.f32.mxu0 0.0
      %2627 = vmatmul.mubr.f32.gmra.mrb[0].mxu0 %v2431
      %v2628 = vpop.f32.mrb[0].mxu0
      %v2629 = vadd.f32 0.0, %v2628
      %v2630 = vpop.f32.mrb[0].mxu0
      %2631 = vmatprep.mubr.f32.mxu0 0.0
      %2632 = vmatmul.mubr.f32.gmra.mrb[0].mxu0 %v2434
      %v2633 = vpop.f32.mrb[0].mxu0
      %v2634 = vadd.f32 0.0, %v2633
      %v2635 = vpop.f32.mrb[0].mxu0
      %2636 = vmatprep.mubr.f32.mxu0 0.0
      %2637 = vmatmul.mubr.f32.gmra.mrb[0].mxu0 %v2437
      %v2638 = vpop.f32.mrb[0].mxu0
      %v2639 = vadd.f32 0.0, %v2638
      %v2640 = vpop.f32.mrb[0].mxu0
      %2641 = vmatprep.mubr.f32.mxu0 0.0
      %2642 = vmatmul.mubr.f32.gmra.mrb[0].mxu0 %v2440
      %v2643 = vpop.f32.mrb[0].mxu0
      %v2644 = vadd.f32 0.0, %v2643
      %v2645 = vpop.f32.mrb[0].mxu0
      %2646 = vmatprep.mubr.f32.mxu0 0.0
      %2647 = vmatmul.mubr.f32.gmra.mrb[0].mxu0 %v2443
      %v2648 = vpop.f32.mrb[0].mxu0
      %v2649 = vadd.f32 0.0, %v2648
      %v2650 = vpop.f32.mrb[0].mxu0
      %2651 = vmatprep.mubr.f32.mxu0 0.0
      %2652 = vmatmul.mubr.f32.gmra.mrb[0].mxu0 %v2446
      %v2653 = vpop.f32.mrb[0].mxu0
      %v2654 = vadd.f32 0.0, %v2653
      %v2655 = vpop.f32.mrb[0].mxu0
      %2656 = vmatprep.mubr.f32.mxu0 0.0
      %2657 = vmatmul.mubr.f32.gmra.mrb[0].mxu0 %v2449
      %v2658 = vpop.f32.mrb[0].mxu0
      %v2659 = vadd.f32 0.0, %v2658
      %v2660 = vpop.f32.mrb[0].mxu0
      %2661 = vmatprep.mubr.f32.mxu0 0.0
      %2662 = vmatmul.mubr.f32.gmra.mrb[0].mxu0 %v2452
      %v2663 = vpop.f32.mrb[0].mxu0
      %v2664 = vadd.f32 0.0, %v2663
      %v2665 = vpop.f32.mrb[0].mxu0
      %2666 = vmatprep.mubr.f32.mxu0 0.0
      %2667 = vmatmul.mubr.f32.gmra.mrb[0].mxu0 %v2455
      %v2668 = vpop.f32.mrb[0].mxu0
      %v2669 = vadd.f32 0.0, %v2668
      %v2670 = vpop.f32.mrb[0].mxu0
      %2671 = vmatprep.mubr.f32.mxu0 0.0
      %2672 = vmatmul.mubr.f32.gmra.mrb[0].mxu0 %v2458
      %v2673 = vpop.f32.mrb[0].mxu0
      %v2674 = vadd.f32 0.0, %v2673
      %v2675 = vpop.f32.mrb[0].mxu0
      %2676 = vmatprep.mubr.f32.mxu0 0.0
      %2677 = vmatmul.mubr.f32.gmra.mrb[0].mxu0 %v2461
      %v2678 = vpop.f32.mrb[0].mxu0
      %v2679 = vadd.f32 0.0, %v2678
      %v2680 = vpop.f32.mrb[0].mxu0
      %2681 = vmatprep.mubr.f32.mxu0 0.0
      %2682 = vmatmul.mubr.f32.gmra.mrb[0].mxu0 %v2464
      %v2683 = vpop.f32.mrb[0].mxu0
      %v2684 = vadd.f32 0.0, %v2683
      %v2685 = vpop.f32.mrb[0].mxu0
      %2686 = vmatprep.mubr.f32.mxu0 0.0
      %2687 = vmatmul.mubr.f32.gmra.mrb[0].mxu0 %v2467
      %v2688 = vpop.f32.mrb[0].mxu0
      %v2689 = vadd.f32 0.0, %v2688
      %v2690 = vpop.f32.mrb[0].mxu0
      %2691 = vmatprep.mubr.f32.mxu0 0.0
      %2692 = vmatmul.mubr.f32.gmra.mrb[0].mxu0 %v2470
      %v2693 = vpop.f32.mrb[0].mxu0
      %v2694 = vadd.f32 0.0, %v2693
      %v2695 = vpop.f32.mrb[0].mxu0
      %2696 = vmatprep.mubr.f32.mxu0 0.0
      %2697 = vmatmul.mubr.f32.gmra.mrb[0].mxu0 %v2473
      %v2698 = vpop.f32.mrb[0].mxu0
      %v2699 = vadd.f32 0.0, %v2698
      %v2700 = vpop.f32.mrb[0].mxu0
      %2701 = vmatprep.mubr.f32.mxu0 0.0
      %2702 = vmatmul.mubr.f32.gmra.mrb[0].mxu0 %v2476
      %v2703 = vpop.f32.mrb[0].mxu0
      %v2704 = vadd.f32 0.0, %v2703
      %v2705 = vpop.f32.mrb[0].mxu0
      %2706 = vmatprep.mubr.f32.mxu0 0.0
      %2707 = vmatmul.mubr.f32.gmra.mrb[0].mxu0 %v2479
      %v2708 = vpop.f32.mrb[0].mxu0
      %v2709 = vadd.f32 0.0, %v2708
      %v2710 = vpop.f32.mrb[0].mxu0
      %2711 = vmatprep.mubr.f32.mxu0 0.0
      %2712 = vmatmul.mubr.f32.gmra.mrb[0].mxu0 %v2482
      %v2713 = vpop.f32.mrb[0].mxu0
      %v2714 = vadd.f32 0.0, %v2713
      %v2715 = vpop.f32.mrb[0].mxu0
      %2716 = vmatprep.mubr.f32.mxu0 0.0
      %2717 = vmatmul.mubr.f32.gmra.mrb[0].mxu0 %v2485
      %v2718 = vpop.f32.mrb[0].mxu0
      %v2719 = vadd.f32 0.0, %v2718
      %v2720 = vpop.f32.mrb[0].mxu0
      %2721 = vmatprep.mubr.f32.mxu0 0.0
      %2722 = vmatmul.mubr.f32.gmra.mrb[0].mxu0 %v2488
      %v2723 = vpop.f32.mrb[0].mxu0
      %v2724 = vadd.f32 0.0, %v2723
      %v2725 = vpop.f32.mrb[0].mxu0
      %2726 = vmatprep.mubr.f32.mxu0 0.0
      %2727 = vmatmul.mubr.f32.gmra.mrb[0].mxu0 %v2491
      %v2728 = vpop.f32.mrb[0].mxu0
      %v2729 = vadd.f32 0.0, %v2728
      %v2730 = vpop.f32.mrb[0].mxu0
      %2731 = vmatprep.mubr.f32.mxu0 0.0
      %2732 = vmatmul.mubr.f32.gmra.mrb[0].mxu0 %v2494
      %v2733 = vpop.f32.mrb[0].mxu0
      %v2734 = vadd.f32 0.0, %v2733
      %v2735 = vpop.f32.mrb[0].mxu0
      %2736 = vmatprep.mubr.f32.mxu0 0.0
      %2737 = vmatmul.mubr.f32.gmra.mrb[0].mxu0 %v2497
      %v2738 = vpop.f32.mrb[0].mxu0
      %v2739 = vadd.f32 0.0, %v2738
      %v2740 = vpop.f32.mrb[0].mxu0
      %2741 = vmatprep.mubr.f32.mxu0 0.0
      %2742 = vmatmul.mubr.f32.gmra.mrb[0].mxu0 %v2500
      %v2743 = vpop.f32.mrb[0].mxu0
      %v2744 = vadd.f32 0.0, %v2743
      %v2745 = vpop.f32.mrb[0].mxu0
      %2746 = vdwg.mxu0
      %v2747 = vadd.f32 %v2313, %v2569
      %v2748 = vadd.f32 %v2314, %v2574
      %v2749 = vadd.f32 %v2315, %v2579
      %v2750 = vadd.f32 %v2316, %v2584
      %v2751 = vadd.f32 %v2317, %v2589
      %v2752 = vadd.f32 %v2318, %v2594
      %v2753 = vadd.f32 %v2319, %v2599
      %v2754 = vadd.f32 %v2320, %v2604
      %v2755 = vadd.f32 %v2321, %v2609
      %v2756 = vadd.f32 %v2322, %v2614
      %v2757 = vadd.f32 %v2323, %v2619
      %v2758 = vadd.f32 %v2324, %v2624
      %v2759 = vadd.f32 %v2325, %v2629
      %v2760 = vadd.f32 %v2326, %v2634
      %v2761 = vadd.f32 %v2327, %v2639
      %v2762 = vadd.f32 %v2328, %v2644
      %v2763 = vadd.f32 %v2329, %v2649
      %v2764 = vadd.f32 %v2330, %v2654
      %v2765 = vadd.f32 %v2331, %v2659
      %v2766 = vadd.f32 %v2332, %v2664
      %v2767 = vadd.f32 %v2333, %v2669
      %v2768 = vadd.f32 %v2334, %v2674
      %v2769 = vadd.f32 %v2335, %v2679
      %v2770 = vadd.f32 %v2336, %v2684
      %v2771 = vadd.f32 %v2337, %v2689
      %v2772 = vadd.f32 %v2338, %v2694
      %v2773 = vadd.f32 %v2339, %v2699
      %v2774 = vadd.f32 %v2340, %v2704
      %v2775 = vadd.f32 %v2341, %v2709
      %v2776 = vadd.f32 %v2342, %v2714
      %v2777 = vadd.f32 %v2343, %v2719
      %v2778 = vadd.f32 %v2344, %v2724
      %v2779 = vadd.f32 %v2345, %v2729
      %v2780 = vadd.f32 %v2346, %v2734
      %v2781 = vadd.f32 %v2347, %v2739
      %v2782 = vadd.f32 %v2348, %v2744
      %v2783 = vld [vmem:[%s165 + $0x24] sm:$0xff]
      %v2784 = vld [vmem:[%s165 + $0x2c] sm:$0xff]
      %v2785 = vld [vmem:[%s165 + $0x34] sm:$0xff]
      %v2786 = vld [vmem:[%s165 + $0x3c] sm:$0xff]
      %v2787 = vld [vmem:[%s165 + $0x44] sm:$0xff]
      %v2788 = vld [vmem:[%s165 + $0x4c] sm:$0xff]
      %v2789 = vld [vmem:[%s165 + $0x54] sm:$0xff]
      %v2790 = vld [vmem:[%s165 + $0x5c] sm:$0xff]
      %v2791 = vld [vmem:[%s165 + $0x64] sm:$0xff]
      %v2792 = vld [vmem:[%s165 + $0x6c] sm:$0xff]
      %v2793 = vld [vmem:[%s165 + $0x74] sm:$0xff]
      %v2794 = vld [vmem:[%s165 + $0x7c] sm:$0xff]
      %v2795 = vld [vmem:[%s165 + $0x84] sm:$0xff]
      %v2796 = vld [vmem:[%s165 + $0x8c] sm:$0xff]
      %v2797 = vld [vmem:[%s165 + $0x94] sm:$0xff]
      %v2798 = vld [vmem:[%s165 + $0x9c] sm:$0xff]
      %v2799 = vld [vmem:[%s165 + $0xa4] sm:$0xff]
      %v2800 = vld [vmem:[%s165 + $0xac] sm:$0xff]
      %v2801 = vld [vmem:[%s165 + $0xb4] sm:$0xff]
      %v2802 = vld [vmem:[%s165 + $0xbc] sm:$0xff]
      %v2803 = vld [vmem:[%s165 + $0xc4] sm:$0xff]
      %v2804 = vld [vmem:[%s165 + $0xcc] sm:$0xff]
      %v2805 = vld [vmem:[%s165 + $0xd4] sm:$0xff]
      %v2806 = vld [vmem:[%s165 + $0xdc] sm:$0xff]
      %v2807 = vld [vmem:[%s165 + $0xe4] sm:$0xff]
      %v2808 = vld [vmem:[%s165 + $0xec] sm:$0xff]
      %v2809 = vld [vmem:[%s165 + $0xf4] sm:$0xff]
      %v2810 = vld [vmem:[%s165 + $0xfc] sm:$0xff]
      %v2811 = vld [vmem:[%s165 + $0x104] sm:$0xff]
      %v2812 = vld [vmem:[%s165 + $0x10c] sm:$0xff]
      %v2813 = vld [vmem:[%s165 + $0x114] sm:$0xff]
      %v2814 = vld [vmem:[%s165 + $0x11c] sm:$0xff]
      %v2815 = vld [vmem:[%s165 + $0x124] sm:$0xff]
      %v2816 = vld [vmem:[%s165 + $0x12c] sm:$0xff]
      %v2817 = vld [vmem:[%s165 + $0x134] sm:$0xff]
      %v2818 = vld [vmem:[%s165 + $0x13c] sm:$0xff]
      %s2819 = scalar_lea.vmem %s1, 384
      %v2820 = vld [vmem:[%s2819] sm:$0xff]
      %v2821 = vld [vmem:[%s2819 + $0x8] sm:$0xff]
      %v2822 = vld [vmem:[%s2819 + $0x10] sm:$0xff]
      %v2823 = vld [vmem:[%s2819 + $0x18] sm:$0xff]
      %v2824 = vld [vmem:[%s2819 + $0x20] sm:$0xff]
      %v2825 = vld [vmem:[%s2819 + $0x28] sm:$0xff]
      %v2826 = vld [vmem:[%s2819 + $0x30] sm:$0xff]
      %v2827 = vld [vmem:[%s2819 + $0x38] sm:$0xff]
      %v2829 = vsel %vm223, %v2783, 0
      %v2832 = vsel %vm223, %v2784, 0
      %v2835 = vsel %vm223, %v2785, 0
      %v2838 = vsel %vm223, %v2786, 0
      %v2841 = vsel %vm223, %v2787, 0
      %v2844 = vsel %vm223, %v2788, 0
      %v2847 = vsel %vm223, %v2789, 0
      %v2850 = vsel %vm223, %v2790, 0
      %v2853 = vsel %vm223, %v2791, 0
      %v2856 = vsel %vm223, %v2792, 0
      %v2859 = vsel %vm223, %v2793, 0
      %v2862 = vsel %vm223, %v2794, 0
      %v2865 = vsel %vm223, %v2795, 0
      %v2868 = vsel %vm223, %v2796, 0
      %v2871 = vsel %vm223, %v2797, 0
      %v2874 = vsel %vm223, %v2798, 0
      %v2877 = vsel %vm223, %v2799, 0
      %v2880 = vsel %vm223, %v2800, 0
      %v2883 = vsel %vm223, %v2801, 0
      %v2886 = vsel %vm223, %v2802, 0
      %v2889 = vsel %vm223, %v2803, 0
      %v2892 = vsel %vm223, %v2804, 0
      %v2895 = vsel %vm223, %v2805, 0
      %v2898 = vsel %vm223, %v2806, 0
      %v2901 = vsel %vm223, %v2807, 0
      %v2904 = vsel %vm223, %v2808, 0
      %v2907 = vsel %vm223, %v2809, 0
      %v2910 = vsel %vm223, %v2810, 0
      %v2913 = vsel %vm223, %v2811, 0
      %v2916 = vsel %vm223, %v2812, 0
      %v2919 = vsel %vm223, %v2813, 0
      %v2922 = vsel %vm223, %v2814, 0
      %v2925 = vsel %vm223, %v2815, 0
      %v2928 = vsel %vm223, %v2816, 0
      %v2931 = vsel %vm223, %v2817, 0
      %v2934 = vsel %vm223, %v2818, 0
      %2936 = vmatprep.subr.mxu0 0.0
      %2937 = vmatpush1.msra.mxu0 %v2820
      %2938 = vmatprep.subr.mxu0 0.0
      %2939 = vmatpush1.msra.mxu0 %v2821
      %2940 = vmatprep.subr.mxu0 0.0
      %2941 = vmatpush1.msra.mxu0 %v2822
      %2942 = vmatprep.subr.mxu0 0.0
      %2943 = vmatpush1.msra.mxu0 %v2823
      %2944 = vmatprep.subr.mxu0 0.0
      %2945 = vmatpush1.msra.mxu0 %v2824
      %2946 = vmatprep.subr.mxu0 0.0
      %2947 = vmatpush1.msra.mxu0 %v2825
      %2948 = vmatprep.subr.mxu0 0.0
      %2949 = vmatpush1.msra.mxu0 %v2826
      %2950 = vmatprep.subr.mxu0 0.0
      %2951 = vmatpush1.msra.mxu0 %v2827
      %2952 = vmatprep.subr.mxu0 0.0
      %2953 = vmatpush1.msra.mxu0 0.0
      %2954 = vmatprep.subr.mxu0 0.0
      %2955 = vmatpush1.msra.mxu0 0.0
      %2956 = vmatprep.subr.mxu0 0.0
      %2957 = vmatpush1.msra.mxu0 0.0
      %2958 = vmatprep.subr.mxu0 0.0
      %2959 = vmatpush1.msra.mxu0 0.0
      %2960 = vmatprep.subr.mxu0 0.0
      %2961 = vmatpush1.msra.mxu0 0.0
      %2962 = vmatprep.subr.mxu0 0.0
      %2963 = vmatpush1.msra.mxu0 0.0
      %2964 = vmatprep.subr.mxu0 0.0
      %2965 = vmatpush1.msra.mxu0 0.0
      %2966 = vmatprep.subr.mxu0 0.0
      %2967 = vmatpush1.msra.mxu0 0.0
      %2968 = vmatprep.subr.mxu0 0.0
      %2969 = vmatpush1.msra.mxu0 0.0
      %2970 = vmatprep.subr.mxu0 0.0
      %2971 = vmatpush1.msra.mxu0 0.0
      %2972 = vmatprep.subr.mxu0 0.0
      %2973 = vmatpush1.msra.mxu0 0.0
      %2974 = vmatprep.subr.mxu0 0.0
      %2975 = vmatpush1.msra.mxu0 0.0
      %2976 = vmatprep.subr.mxu0 0.0
      %2977 = vmatpush1.msra.mxu0 0.0
      %2978 = vmatprep.subr.mxu0 0.0
      %2979 = vmatpush1.msra.mxu0 0.0
      %2980 = vmatprep.subr.mxu0 0.0
      %2981 = vmatpush1.msra.mxu0 0.0
      %2982 = vmatprep.subr.mxu0 0.0
      %2983 = vmatpush1.msra.mxu0 0.0
      %2984 = vmatprep.subr.mxu0 0.0
      %2985 = vmatpush1.msra.mxu0 0.0
      %2986 = vmatprep.subr.mxu0 0.0
      %2987 = vmatpush1.msra.mxu0 0.0
      %2988 = vmatprep.subr.mxu0 0.0
      %2989 = vmatpush1.msra.mxu0 0.0
      %2990 = vmatprep.subr.mxu0 0.0
      %2991 = vmatpush1.msra.mxu0 0.0
      %2992 = vmatprep.subr.mxu0 0.0
      %2993 = vmatpush1.msra.mxu0 0.0
      %2994 = vmatprep.subr.mxu0 0.0
      %2995 = vmatpush1.msra.mxu0 0.0
      %2996 = vmatprep.subr.mxu0 0.0
      %2997 = vmatpush1.msra.mxu0 0.0
      %2998 = vmatprep.subr.mxu0 0.0
      %2999 = vmatpush1.msra.mxu0 0.0
      %3000 = vmatprep.mubr.f32.mxu0 0.0
      %3001 = vmatmul.mubr.f32.gmra.mrb[0].mxu0 %v2829
      %v3002 = vpop.f32.mrb[0].mxu0
      %v3003 = vadd.f32 0.0, %v3002
      %v3004 = vpop.f32.mrb[0].mxu0
      %3005 = vmatprep.mubr.f32.mxu0 0.0
      %3006 = vmatmul.mubr.f32.gmra.mrb[0].mxu0 %v2832
      %v3007 = vpop.f32.mrb[0].mxu0
      %v3008 = vadd.f32 0.0, %v3007
      %v3009 = vpop.f32.mrb[0].mxu0
      %3010 = vmatprep.mubr.f32.mxu0 0.0
      %3011 = vmatmul.mubr.f32.gmra.mrb[0].mxu0 %v2835
      %v3012 = vpop.f32.mrb[0].mxu0
      %v3013 = vadd.f32 0.0, %v3012
      %v3014 = vpop.f32.mrb[0].mxu0
      %3015 = vmatprep.mubr.f32.mxu0 0.0
      %3016 = vmatmul.mubr.f32.gmra.mrb[0].mxu0 %v2838
      %v3017 = vpop.f32.mrb[0].mxu0
      %v3018 = vadd.f32 0.0, %v3017
      %v3019 = vpop.f32.mrb[0].mxu0
      %3020 = vmatprep.mubr.f32.mxu0 0.0
      %3021 = vmatmul.mubr.f32.gmra.mrb[0].mxu0 %v2841
      %v3022 = vpop.f32.mrb[0].mxu0
      %v3023 = vadd.f32 0.0, %v3022
      %v3024 = vpop.f32.mrb[0].mxu0
      %3025 = vmatprep.mubr.f32.mxu0 0.0
      %3026 = vmatmul.mubr.f32.gmra.mrb[0].mxu0 %v2844
      %v3027 = vpop.f32.mrb[0].mxu0
      %v3028 = vadd.f32 0.0, %v3027
      %v3029 = vpop.f32.mrb[0].mxu0
      %3030 = vmatprep.mubr.f32.mxu0 0.0
      %3031 = vmatmul.mubr.f32.gmra.mrb[0].mxu0 %v2847
      %v3032 = vpop.f32.mrb[0].mxu0
      %v3033 = vadd.f32 0.0, %v3032
      %v3034 = vpop.f32.mrb[0].mxu0
      %3035 = vmatprep.mubr.f32.mxu0 0.0
      %3036 = vmatmul.mubr.f32.gmra.mrb[0].mxu0 %v2850
      %v3037 = vpop.f32.mrb[0].mxu0
      %v3038 = vadd.f32 0.0, %v3037
      %v3039 = vpop.f32.mrb[0].mxu0
      %3040 = vmatprep.mubr.f32.mxu0 0.0
      %3041 = vmatmul.mubr.f32.gmra.mrb[0].mxu0 %v2853
      %v3042 = vpop.f32.mrb[0].mxu0
      %v3043 = vadd.f32 0.0, %v3042
      %v3044 = vpop.f32.mrb[0].mxu0
      %3045 = vmatprep.mubr.f32.mxu0 0.0
      %3046 = vmatmul.mubr.f32.gmra.mrb[0].mxu0 %v2856
      %v3047 = vpop.f32.mrb[0].mxu0
      %v3048 = vadd.f32 0.0, %v3047
      %v3049 = vpop.f32.mrb[0].mxu0
      %3050 = vmatprep.mubr.f32.mxu0 0.0
      %3051 = vmatmul.mubr.f32.gmra.mrb[0].mxu0 %v2859
      %v3052 = vpop.f32.mrb[0].mxu0
      %v3053 = vadd.f32 0.0, %v3052
      %v3054 = vpop.f32.mrb[0].mxu0
      %3055 = vmatprep.mubr.f32.mxu0 0.0
      %3056 = vmatmul.mubr.f32.gmra.mrb[0].mxu0 %v2862
      %v3057 = vpop.f32.mrb[0].mxu0
      %v3058 = vadd.f32 0.0, %v3057
      %v3059 = vpop.f32.mrb[0].mxu0
      %3060 = vmatprep.mubr.f32.mxu0 0.0
      %3061 = vmatmul.mubr.f32.gmra.mrb[0].mxu0 %v2865
      %v3062 = vpop.f32.mrb[0].mxu0
      %v3063 = vadd.f32 0.0, %v3062
      %v3064 = vpop.f32.mrb[0].mxu0
      %3065 = vmatprep.mubr.f32.mxu0 0.0
      %3066 = vmatmul.mubr.f32.gmra.mrb[0].mxu0 %v2868
      %v3067 = vpop.f32.mrb[0].mxu0
      %v3068 = vadd.f32 0.0, %v3067
      %v3069 = vpop.f32.mrb[0].mxu0
      %3070 = vmatprep.mubr.f32.mxu0 0.0
      %3071 = vmatmul.mubr.f32.gmra.mrb[0].mxu0 %v2871
      %v3072 = vpop.f32.mrb[0].mxu0
      %v3073 = vadd.f32 0.0, %v3072
      %v3074 = vpop.f32.mrb[0].mxu0
      %3075 = vmatprep.mubr.f32.mxu0 0.0
      %3076 = vmatmul.mubr.f32.gmra.mrb[0].mxu0 %v2874
      %v3077 = vpop.f32.mrb[0].mxu0
      %v3078 = vadd.f32 0.0, %v3077
      %v3079 = vpop.f32.mrb[0].mxu0
      %3080 = vmatprep.mubr.f32.mxu0 0.0
      %3081 = vmatmul.mubr.f32.gmra.mrb[0].mxu0 %v2877
      %v3082 = vpop.f32.mrb[0].mxu0
      %v3083 = vadd.f32 0.0, %v3082
      %v3084 = vpop.f32.mrb[0].mxu0
      %3085 = vmatprep.mubr.f32.mxu0 0.0
      %3086 = vmatmul.mubr.f32.gmra.mrb[0].mxu0 %v2880
      %v3087 = vpop.f32.mrb[0].mxu0
      %v3088 = vadd.f32 0.0, %v3087
      %v3089 = vpop.f32.mrb[0].mxu0
      %3090 = vmatprep.mubr.f32.mxu0 0.0
      %3091 = vmatmul.mubr.f32.gmra.mrb[0].mxu0 %v2883
      %v3092 = vpop.f32.mrb[0].mxu0
      %v3093 = vadd.f32 0.0, %v3092
      %v3094 = vpop.f32.mrb[0].mxu0
      %3095 = vmatprep.mubr.f32.mxu0 0.0
      %3096 = vmatmul.mubr.f32.gmra.mrb[0].mxu0 %v2886
      %v3097 = vpop.f32.mrb[0].mxu0
      %v3098 = vadd.f32 0.0, %v3097
      %v3099 = vpop.f32.mrb[0].mxu0
      %3100 = vmatprep.mubr.f32.mxu0 0.0
      %3101 = vmatmul.mubr.f32.gmra.mrb[0].mxu0 %v2889
      %v3102 = vpop.f32.mrb[0].mxu0
      %v3103 = vadd.f32 0.0, %v3102
      %v3104 = vpop.f32.mrb[0].mxu0
      %3105 = vmatprep.mubr.f32.mxu0 0.0
      %3106 = vmatmul.mubr.f32.gmra.mrb[0].mxu0 %v2892
      %v3107 = vpop.f32.mrb[0].mxu0
      %v3108 = vadd.f32 0.0, %v3107
      %v3109 = vpop.f32.mrb[0].mxu0
      %3110 = vmatprep.mubr.f32.mxu0 0.0
      %3111 = vmatmul.mubr.f32.gmra.mrb[0].mxu0 %v2895
      %v3112 = vpop.f32.mrb[0].mxu0
      %v3113 = vadd.f32 0.0, %v3112
      %v3114 = vpop.f32.mrb[0].mxu0
      %3115 = vmatprep.mubr.f32.mxu0 0.0
      %3116 = vmatmul.mubr.f32.gmra.mrb[0].mxu0 %v2898
      %v3117 = vpop.f32.mrb[0].mxu0
      %v3118 = vadd.f32 0.0, %v3117
      %v3119 = vpop.f32.mrb[0].mxu0
      %3120 = vmatprep.mubr.f32.mxu0 0.0
      %3121 = vmatmul.mubr.f32.gmra.mrb[0].mxu0 %v2901
      %v3122 = vpop.f32.mrb[0].mxu0
      %v3123 = vadd.f32 0.0, %v3122
      %v3124 = vpop.f32.mrb[0].mxu0
      %3125 = vmatprep.mubr.f32.mxu0 0.0
      %3126 = vmatmul.mubr.f32.gmra.mrb[0].mxu0 %v2904
      %v3127 = vpop.f32.mrb[0].mxu0
      %v3128 = vadd.f32 0.0, %v3127
      %v3129 = vpop.f32.mrb[0].mxu0
      %3130 = vmatprep.mubr.f32.mxu0 0.0
      %3131 = vmatmul.mubr.f32.gmra.mrb[0].mxu0 %v2907
      %v3132 = vpop.f32.mrb[0].mxu0
      %v3133 = vadd.f32 0.0, %v3132
      %v3134 = vpop.f32.mrb[0].mxu0
      %3135 = vmatprep.mubr.f32.mxu0 0.0
      %3136 = vmatmul.mubr.f32.gmra.mrb[0].mxu0 %v2910
      %v3137 = vpop.f32.mrb[0].mxu0
      %v3138 = vadd.f32 0.0, %v3137
      %v3139 = vpop.f32.mrb[0].mxu0
      %3140 = vmatprep.mubr.f32.mxu0 0.0
      %3141 = vmatmul.mubr.f32.gmra.mrb[0].mxu0 %v2913
      %v3142 = vpop.f32.mrb[0].mxu0
      %v3143 = vadd.f32 0.0, %v3142
      %v3144 = vpop.f32.mrb[0].mxu0
      %3145 = vmatprep.mubr.f32.mxu0 0.0
      %3146 = vmatmul.mubr.f32.gmra.mrb[0].mxu0 %v2916
      %v3147 = vpop.f32.mrb[0].mxu0
      %v3148 = vadd.f32 0.0, %v3147
      %v3149 = vpop.f32.mrb[0].mxu0
      %3150 = vmatprep.mubr.f32.mxu0 0.0
      %3151 = vmatmul.mubr.f32.gmra.mrb[0].mxu0 %v2919
      %v3152 = vpop.f32.mrb[0].mxu0
      %v3153 = vadd.f32 0.0, %v3152
      %v3154 = vpop.f32.mrb[0].mxu0
      %3155 = vmatprep.mubr.f32.mxu0 0.0
      %3156 = vmatmul.mubr.f32.gmra.mrb[0].mxu0 %v2922
      %v3157 = vpop.f32.mrb[0].mxu0
      %v3158 = vadd.f32 0.0, %v3157
      %v3159 = vpop.f32.mrb[0].mxu0
      %3160 = vmatprep.mubr.f32.mxu0 0.0
      %3161 = vmatmul.mubr.f32.gmra.mrb[0].mxu0 %v2925
      %v3162 = vpop.f32.mrb[0].mxu0
      %v3163 = vadd.f32 0.0, %v3162
      %v3164 = vpop.f32.mrb[0].mxu0
      %3165 = vmatprep.mubr.f32.mxu0 0.0
      %3166 = vmatmul.mubr.f32.gmra.mrb[0].mxu0 %v2928
      %v3167 = vpop.f32.mrb[0].mxu0
      %v3168 = vadd.f32 0.0, %v3167
      %v3169 = vpop.f32.mrb[0].mxu0
      %3170 = vmatprep.mubr.f32.mxu0 0.0
      %3171 = vmatmul.mubr.f32.gmra.mrb[0].mxu0 %v2931
      %v3172 = vpop.f32.mrb[0].mxu0
      %v3173 = vadd.f32 0.0, %v3172
      %v3174 = vpop.f32.mrb[0].mxu0
      %3175 = vmatprep.mubr.f32.mxu0 0.0
      %3176 = vmatmul.mubr.f32.gmra.mrb[0].mxu0 %v2934
      %v3177 = vpop.f32.mrb[0].mxu0
      %v3178 = vadd.f32 0.0, %v3177
      %v3179 = vpop.f32.mrb[0].mxu0
      %3180 = vdwg.mxu0
      %v3181 = vadd.f32 %v2747, %v3003
      %v3182 = vadd.f32 %v2748, %v3008
      %v3183 = vadd.f32 %v2749, %v3013
      %v3184 = vadd.f32 %v2750, %v3018
      %v3185 = vadd.f32 %v2751, %v3023
      %v3186 = vadd.f32 %v2752, %v3028
      %v3187 = vadd.f32 %v2753, %v3033
      %v3188 = vadd.f32 %v2754, %v3038
      %v3189 = vadd.f32 %v2755, %v3043
      %v3190 = vadd.f32 %v2756, %v3048
      %v3191 = vadd.f32 %v2757, %v3053
      %v3192 = vadd.f32 %v2758, %v3058
      %v3193 = vadd.f32 %v2759, %v3063
      %v3194 = vadd.f32 %v2760, %v3068
      %v3195 = vadd.f32 %v2761, %v3073
      %v3196 = vadd.f32 %v2762, %v3078
      %v3197 = vadd.f32 %v2763, %v3083
      %v3198 = vadd.f32 %v2764, %v3088
      %v3199 = vadd.f32 %v2765, %v3093
      %v3200 = vadd.f32 %v2766, %v3098
      %v3201 = vadd.f32 %v2767, %v3103
      %v3202 = vadd.f32 %v2768, %v3108
      %v3203 = vadd.f32 %v2769, %v3113
      %v3204 = vadd.f32 %v2770, %v3118
      %v3205 = vadd.f32 %v2771, %v3123
      %v3206 = vadd.f32 %v2772, %v3128
      %v3207 = vadd.f32 %v2773, %v3133
      %v3208 = vadd.f32 %v2774, %v3138
      %v3209 = vadd.f32 %v2775, %v3143
      %v3210 = vadd.f32 %v2776, %v3148
      %v3211 = vadd.f32 %v2777, %v3153
      %v3212 = vadd.f32 %v2778, %v3158
      %v3213 = vadd.f32 %v2779, %v3163
      %v3214 = vadd.f32 %v2780, %v3168
      %v3215 = vadd.f32 %v2781, %v3173
      %v3216 = vadd.f32 %v2782, %v3178
      %v3217 = vld [vmem:[%s165 + $0x25] sm:$0xff]
      %v3218 = vld [vmem:[%s165 + $0x2d] sm:$0xff]
      %v3219 = vld [vmem:[%s165 + $0x35] sm:$0xff]
      %v3220 = vld [vmem:[%s165 + $0x3d] sm:$0xff]
      %v3221 = vld [vmem:[%s165 + $0x45] sm:$0xff]
      %v3222 = vld [vmem:[%s165 + $0x4d] sm:$0xff]
      %v3223 = vld [vmem:[%s165 + $0x55] sm:$0xff]
      %v3224 = vld [vmem:[%s165 + $0x5d] sm:$0xff]
      %v3225 = vld [vmem:[%s165 + $0x65] sm:$0xff]
      %v3226 = vld [vmem:[%s165 + $0x6d] sm:$0xff]
      %v3227 = vld [vmem:[%s165 + $0x75] sm:$0xff]
      %v3228 = vld [vmem:[%s165 + $0x7d] sm:$0xff]
      %v3229 = vld [vmem:[%s165 + $0x85] sm:$0xff]
      %v3230 = vld [vmem:[%s165 + $0x8d] sm:$0xff]
      %v3231 = vld [vmem:[%s165 + $0x95] sm:$0xff]
      %v3232 = vld [vmem:[%s165 + $0x9d] sm:$0xff]
      %v3233 = vld [vmem:[%s165 + $0xa5] sm:$0xff]
      %v3234 = vld [vmem:[%s165 + $0xad] sm:$0xff]
      %v3235 = vld [vmem:[%s165 + $0xb5] sm:$0xff]
      %v3236 = vld [vmem:[%s165 + $0xbd] sm:$0xff]
      %v3237 = vld [vmem:[%s165 + $0xc5] sm:$0xff]
      %v3238 = vld [vmem:[%s165 + $0xcd] sm:$0xff]
      %v3239 = vld [vmem:[%s165 + $0xd5] sm:$0xff]
      %v3240 = vld [vmem:[%s165 + $0xdd] sm:$0xff]
      %v3241 = vld [vmem:[%s165 + $0xe5] sm:$0xff]
      %v3242 = vld [vmem:[%s165 + $0xed] sm:$0xff]
      %v3243 = vld [vmem:[%s165 + $0xf5] sm:$0xff]
      %v3244 = vld [vmem:[%s165 + $0xfd] sm:$0xff]
      %v3245 = vld [vmem:[%s165 + $0x105] sm:$0xff]
      %v3246 = vld [vmem:[%s165 + $0x10d] sm:$0xff]
      %v3247 = vld [vmem:[%s165 + $0x115] sm:$0xff]
      %v3248 = vld [vmem:[%s165 + $0x11d] sm:$0xff]
      %v3249 = vld [vmem:[%s165 + $0x125] sm:$0xff]
      %v3250 = vld [vmem:[%s165 + $0x12d] sm:$0xff]
      %v3251 = vld [vmem:[%s165 + $0x135] sm:$0xff]
      %v3252 = vld [vmem:[%s165 + $0x13d] sm:$0xff]
      %s3253 = scalar_lea.vmem %s1, 448
      %v3254 = vld [vmem:[%s3253] sm:$0xff]
      %v3255 = vld [vmem:[%s3253 + $0x8] sm:$0xff]
      %v3256 = vld [vmem:[%s3253 + $0x10] sm:$0xff]
      %v3257 = vld [vmem:[%s3253 + $0x18] sm:$0xff]
      %v3258 = vld [vmem:[%s3253 + $0x20] sm:$0xff]
      %v3259 = vld [vmem:[%s3253 + $0x28] sm:$0xff]
      %v3260 = vld [vmem:[%s3253 + $0x30] sm:$0xff]
      %v3261 = vld [vmem:[%s3253 + $0x38] sm:$0xff]
      %v3263 = vsel %vm223, %v3217, 0
      %v3266 = vsel %vm223, %v3218, 0
      %v3269 = vsel %vm223, %v3219, 0
      %v3272 = vsel %vm223, %v3220, 0
      %v3275 = vsel %vm223, %v3221, 0
      %v3278 = vsel %vm223, %v3222, 0
      %v3281 = vsel %vm223, %v3223, 0
      %v3284 = vsel %vm223, %v3224, 0
      %v3287 = vsel %vm223, %v3225, 0
      %v3290 = vsel %vm223, %v3226, 0
      %v3293 = vsel %vm223, %v3227, 0
      %v3296 = vsel %vm223, %v3228, 0
      %v3299 = vsel %vm223, %v3229, 0
      %v3302 = vsel %vm223, %v3230, 0
      %v3305 = vsel %vm223, %v3231, 0
      %v3308 = vsel %vm223, %v3232, 0
      %v3311 = vsel %vm223, %v3233, 0
      %v3314 = vsel %vm223, %v3234, 0
      %v3317 = vsel %vm223, %v3235, 0
      %v3320 = vsel %vm223, %v3236, 0
      %v3323 = vsel %vm223, %v3237, 0
      %v3326 = vsel %vm223, %v3238, 0
      %v3329 = vsel %vm223, %v3239, 0
      %v3332 = vsel %vm223, %v3240, 0
      %v3335 = vsel %vm223, %v3241, 0
      %v3338 = vsel %vm223, %v3242, 0
      %v3341 = vsel %vm223, %v3243, 0
      %v3344 = vsel %vm223, %v3244, 0
      %v3347 = vsel %vm223, %v3245, 0
      %v3350 = vsel %vm223, %v3246, 0
      %v3353 = vsel %vm223, %v3247, 0
      %v3356 = vsel %vm223, %v3248, 0
      %v3359 = vsel %vm223, %v3249, 0
      %v3362 = vsel %vm223, %v3250, 0
      %v3365 = vsel %vm223, %v3251, 0
      %v3368 = vsel %vm223, %v3252, 0
      %3370 = vmatprep.subr.mxu0 0.0
      %3371 = vmatpush1.msra.mxu0 %v3254
      %3372 = vmatprep.subr.mxu0 0.0
      %3373 = vmatpush1.msra.mxu0 %v3255
      %3374 = vmatprep.subr.mxu0 0.0
      %3375 = vmatpush1.msra.mxu0 %v3256
      %3376 = vmatprep.subr.mxu0 0.0
      %3377 = vmatpush1.msra.mxu0 %v3257
      %3378 = vmatprep.subr.mxu0 0.0
      %3379 = vmatpush1.msra.mxu0 %v3258
      %3380 = vmatprep.subr.mxu0 0.0
      %3381 = vmatpush1.msra.mxu0 %v3259
      %3382 = vmatprep.subr.mxu0 0.0
      %3383 = vmatpush1.msra.mxu0 %v3260
      %3384 = vmatprep.subr.mxu0 0.0
      %3385 = vmatpush1.msra.mxu0 %v3261
      %3386 = vmatprep.subr.mxu0 0.0
      %3387 = vmatpush1.msra.mxu0 0.0
      %3388 = vmatprep.subr.mxu0 0.0
      %3389 = vmatpush1.msra.mxu0 0.0
      %3390 = vmatprep.subr.mxu0 0.0
      %3391 = vmatpush1.msra.mxu0 0.0
      %3392 = vmatprep.subr.mxu0 0.0
      %3393 = vmatpush1.msra.mxu0 0.0
      %3394 = vmatprep.subr.mxu0 0.0
      %3395 = vmatpush1.msra.mxu0 0.0
      %3396 = vmatprep.subr.mxu0 0.0
      %3397 = vmatpush1.msra.mxu0 0.0
      %3398 = vmatprep.subr.mxu0 0.0
      %3399 = vmatpush1.msra.mxu0 0.0
      %3400 = vmatprep.subr.mxu0 0.0
      %3401 = vmatpush1.msra.mxu0 0.0
      %3402 = vmatprep.subr.mxu0 0.0
      %3403 = vmatpush1.msra.mxu0 0.0
      %3404 = vmatprep.subr.mxu0 0.0
      %3405 = vmatpush1.msra.mxu0 0.0
      %3406 = vmatprep.subr.mxu0 0.0
      %3407 = vmatpush1.msra.mxu0 0.0
      %3408 = vmatprep.subr.mxu0 0.0
      %3409 = vmatpush1.msra.mxu0 0.0
      %3410 = vmatprep.subr.mxu0 0.0
      %3411 = vmatpush1.msra.mxu0 0.0
      %3412 = vmatprep.subr.mxu0 0.0
      %3413 = vmatpush1.msra.mxu0 0.0
      %3414 = vmatprep.subr.mxu0 0.0
      %3415 = vmatpush1.msra.mxu0 0.0
      %3416 = vmatprep.subr.mxu0 0.0
      %3417 = vmatpush1.msra.mxu0 0.0
      %3418 = vmatprep.subr.mxu0 0.0
      %3419 = vmatpush1.msra.mxu0 0.0
      %3420 = vmatprep.subr.mxu0 0.0
      %3421 = vmatpush1.msra.mxu0 0.0
      %3422 = vmatprep.subr.mxu0 0.0
      %3423 = vmatpush1.msra.mxu0 0.0
      %3424 = vmatprep.subr.mxu0 0.0
      %3425 = vmatpush1.msra.mxu0 0.0
      %3426 = vmatprep.subr.mxu0 0.0
      %3427 = vmatpush1.msra.mxu0 0.0
      %3428 = vmatprep.subr.mxu0 0.0
      %3429 = vmatpush1.msra.mxu0 0.0
      %3430 = vmatprep.subr.mxu0 0.0
      %3431 = vmatpush1.msra.mxu0 0.0
      %3432 = vmatprep.subr.mxu0 0.0
      %3433 = vmatpush1.msra.mxu0 0.0
      %3434 = vmatprep.mubr.f32.mxu0 0.0
      %3435 = vmatmul.mubr.f32.gmra.mrb[0].mxu0 %v3263
      %v3436 = vpop.f32.mrb[0].mxu0
      %v3437 = vadd.f32 0.0, %v3436
      %v3438 = vpop.f32.mrb[0].mxu0
      %3439 = vmatprep.mubr.f32.mxu0 0.0
      %3440 = vmatmul.mubr.f32.gmra.mrb[0].mxu0 %v3266
      %v3441 = vpop.f32.mrb[0].mxu0
      %v3442 = vadd.f32 0.0, %v3441
      %v3443 = vpop.f32.mrb[0].mxu0
      %3444 = vmatprep.mubr.f32.mxu0 0.0
      %3445 = vmatmul.mubr.f32.gmra.mrb[0].mxu0 %v3269
      %v3446 = vpop.f32.mrb[0].mxu0
      %v3447 = vadd.f32 0.0, %v3446
      %v3448 = vpop.f32.mrb[0].mxu0
      %3449 = vmatprep.mubr.f32.mxu0 0.0
      %3450 = vmatmul.mubr.f32.gmra.mrb[0].mxu0 %v3272
      %v3451 = vpop.f32.mrb[0].mxu0
      %v3452 = vadd.f32 0.0, %v3451
      %v3453 = vpop.f32.mrb[0].mxu0
      %3454 = vmatprep.mubr.f32.mxu0 0.0
      %3455 = vmatmul.mubr.f32.gmra.mrb[0].mxu0 %v3275
      %v3456 = vpop.f32.mrb[0].mxu0
      %v3457 = vadd.f32 0.0, %v3456
      %v3458 = vpop.f32.mrb[0].mxu0
      %3459 = vmatprep.mubr.f32.mxu0 0.0
      %3460 = vmatmul.mubr.f32.gmra.mrb[0].mxu0 %v3278
      %v3461 = vpop.f32.mrb[0].mxu0
      %v3462 = vadd.f32 0.0, %v3461
      %v3463 = vpop.f32.mrb[0].mxu0
      %3464 = vmatprep.mubr.f32.mxu0 0.0
      %3465 = vmatmul.mubr.f32.gmra.mrb[0].mxu0 %v3281
      %v3466 = vpop.f32.mrb[0].mxu0
      %v3467 = vadd.f32 0.0, %v3466
      %v3468 = vpop.f32.mrb[0].mxu0
      %3469 = vmatprep.mubr.f32.mxu0 0.0
      %3470 = vmatmul.mubr.f32.gmra.mrb[0].mxu0 %v3284
      %v3471 = vpop.f32.mrb[0].mxu0
      %v3472 = vadd.f32 0.0, %v3471
      %v3473 = vpop.f32.mrb[0].mxu0
      %3474 = vmatprep.mubr.f32.mxu0 0.0
      %3475 = vmatmul.mubr.f32.gmra.mrb[0].mxu0 %v3287
      %v3476 = vpop.f32.mrb[0].mxu0
      %v3477 = vadd.f32 0.0, %v3476
      %v3478 = vpop.f32.mrb[0].mxu0
      %3479 = vmatprep.mubr.f32.mxu0 0.0
      %3480 = vmatmul.mubr.f32.gmra.mrb[0].mxu0 %v3290
      %v3481 = vpop.f32.mrb[0].mxu0
      %v3482 = vadd.f32 0.0, %v3481
      %v3483 = vpop.f32.mrb[0].mxu0
      %3484 = vmatprep.mubr.f32.mxu0 0.0
      %3485 = vmatmul.mubr.f32.gmra.mrb[0].mxu0 %v3293
      %v3486 = vpop.f32.mrb[0].mxu0
      %v3487 = vadd.f32 0.0, %v3486
      %v3488 = vpop.f32.mrb[0].mxu0
      %3489 = vmatprep.mubr.f32.mxu0 0.0
      %3490 = vmatmul.mubr.f32.gmra.mrb[0].mxu0 %v3296
      %v3491 = vpop.f32.mrb[0].mxu0
      %v3492 = vadd.f32 0.0, %v3491
      %v3493 = vpop.f32.mrb[0].mxu0
      %3494 = vmatprep.mubr.f32.mxu0 0.0
      %3495 = vmatmul.mubr.f32.gmra.mrb[0].mxu0 %v3299
      %v3496 = vpop.f32.mrb[0].mxu0
      %v3497 = vadd.f32 0.0, %v3496
      %v3498 = vpop.f32.mrb[0].mxu0
      %3499 = vmatprep.mubr.f32.mxu0 0.0
      %3500 = vmatmul.mubr.f32.gmra.mrb[0].mxu0 %v3302
      %v3501 = vpop.f32.mrb[0].mxu0
      %v3502 = vadd.f32 0.0, %v3501
      %v3503 = vpop.f32.mrb[0].mxu0
      %3504 = vmatprep.mubr.f32.mxu0 0.0
      %3505 = vmatmul.mubr.f32.gmra.mrb[0].mxu0 %v3305
      %v3506 = vpop.f32.mrb[0].mxu0
      %v3507 = vadd.f32 0.0, %v3506
      %v3508 = vpop.f32.mrb[0].mxu0
      %3509 = vmatprep.mubr.f32.mxu0 0.0
      %3510 = vmatmul.mubr.f32.gmra.mrb[0].mxu0 %v3308
      %v3511 = vpop.f32.mrb[0].mxu0
      %v3512 = vadd.f32 0.0, %v3511
      %v3513 = vpop.f32.mrb[0].mxu0
      %3514 = vmatprep.mubr.f32.mxu0 0.0
      %3515 = vmatmul.mubr.f32.gmra.mrb[0].mxu0 %v3311
      %v3516 = vpop.f32.mrb[0].mxu0
      %v3517 = vadd.f32 0.0, %v3516
      %v3518 = vpop.f32.mrb[0].mxu0
      %3519 = vmatprep.mubr.f32.mxu0 0.0
      %3520 = vmatmul.mubr.f32.gmra.mrb[0].mxu0 %v3314
      %v3521 = vpop.f32.mrb[0].mxu0
      %v3522 = vadd.f32 0.0, %v3521
      %v3523 = vpop.f32.mrb[0].mxu0
      %3524 = vmatprep.mubr.f32.mxu0 0.0
      %3525 = vmatmul.mubr.f32.gmra.mrb[0].mxu0 %v3317
      %v3526 = vpop.f32.mrb[0].mxu0
      %v3527 = vadd.f32 0.0, %v3526
      %v3528 = vpop.f32.mrb[0].mxu0
      %3529 = vmatprep.mubr.f32.mxu0 0.0
      %3530 = vmatmul.mubr.f32.gmra.mrb[0].mxu0 %v3320
      %v3531 = vpop.f32.mrb[0].mxu0
      %v3532 = vadd.f32 0.0, %v3531
      %v3533 = vpop.f32.mrb[0].mxu0
      %3534 = vmatprep.mubr.f32.mxu0 0.0
      %3535 = vmatmul.mubr.f32.gmra.mrb[0].mxu0 %v3323
      %v3536 = vpop.f32.mrb[0].mxu0
      %v3537 = vadd.f32 0.0, %v3536
      %v3538 = vpop.f32.mrb[0].mxu0
      %3539 = vmatprep.mubr.f32.mxu0 0.0
      %3540 = vmatmul.mubr.f32.gmra.mrb[0].mxu0 %v3326
      %v3541 = vpop.f32.mrb[0].mxu0
      %v3542 = vadd.f32 0.0, %v3541
      %v3543 = vpop.f32.mrb[0].mxu0
      %3544 = vmatprep.mubr.f32.mxu0 0.0
      %3545 = vmatmul.mubr.f32.gmra.mrb[0].mxu0 %v3329
      %v3546 = vpop.f32.mrb[0].mxu0
      %v3547 = vadd.f32 0.0, %v3546
      %v3548 = vpop.f32.mrb[0].mxu0
      %3549 = vmatprep.mubr.f32.mxu0 0.0
      %3550 = vmatmul.mubr.f32.gmra.mrb[0].mxu0 %v3332
      %v3551 = vpop.f32.mrb[0].mxu0
      %v3552 = vadd.f32 0.0, %v3551
      %v3553 = vpop.f32.mrb[0].mxu0
      %3554 = vmatprep.mubr.f32.mxu0 0.0
      %3555 = vmatmul.mubr.f32.gmra.mrb[0].mxu0 %v3335
      %v3556 = vpop.f32.mrb[0].mxu0
      %v3557 = vadd.f32 0.0, %v3556
      %v3558 = vpop.f32.mrb[0].mxu0
      %3559 = vmatprep.mubr.f32.mxu0 0.0
      %3560 = vmatmul.mubr.f32.gmra.mrb[0].mxu0 %v3338
      %v3561 = vpop.f32.mrb[0].mxu0
      %v3562 = vadd.f32 0.0, %v3561
      %v3563 = vpop.f32.mrb[0].mxu0
      %3564 = vmatprep.mubr.f32.mxu0 0.0
      %3565 = vmatmul.mubr.f32.gmra.mrb[0].mxu0 %v3341
      %v3566 = vpop.f32.mrb[0].mxu0
      %v3567 = vadd.f32 0.0, %v3566
      %v3568 = vpop.f32.mrb[0].mxu0
      %3569 = vmatprep.mubr.f32.mxu0 0.0
      %3570 = vmatmul.mubr.f32.gmra.mrb[0].mxu0 %v3344
      %v3571 = vpop.f32.mrb[0].mxu0
      %v3572 = vadd.f32 0.0, %v3571
      %v3573 = vpop.f32.mrb[0].mxu0
      %3574 = vmatprep.mubr.f32.mxu0 0.0
      %3575 = vmatmul.mubr.f32.gmra.mrb[0].mxu0 %v3347
      %v3576 = vpop.f32.mrb[0].mxu0
      %v3577 = vadd.f32 0.0, %v3576
      %v3578 = vpop.f32.mrb[0].mxu0
      %3579 = vmatprep.mubr.f32.mxu0 0.0
      %3580 = vmatmul.mubr.f32.gmra.mrb[0].mxu0 %v3350
      %v3581 = vpop.f32.mrb[0].mxu0
      %v3582 = vadd.f32 0.0, %v3581
      %v3583 = vpop.f32.mrb[0].mxu0
      %3584 = vmatprep.mubr.f32.mxu0 0.0
      %3585 = vmatmul.mubr.f32.gmra.mrb[0].mxu0 %v3353
      %v3586 = vpop.f32.mrb[0].mxu0
      %v3587 = vadd.f32 0.0, %v3586
      %v3588 = vpop.f32.mrb[0].mxu0
      %3589 = vmatprep.mubr.f32.mxu0 0.0
      %3590 = vmatmul.mubr.f32.gmra.mrb[0].mxu0 %v3356
      %v3591 = vpop.f32.mrb[0].mxu0
      %v3592 = vadd.f32 0.0, %v3591
      %v3593 = vpop.f32.mrb[0].mxu0
      %3594 = vmatprep.mubr.f32.mxu0 0.0
      %3595 = vmatmul.mubr.f32.gmra.mrb[0].mxu0 %v3359
      %v3596 = vpop.f32.mrb[0].mxu0
      %v3597 = vadd.f32 0.0, %v3596
      %v3598 = vpop.f32.mrb[0].mxu0
      %3599 = vmatprep.mubr.f32.mxu0 0.0
      %3600 = vmatmul.mubr.f32.gmra.mrb[0].mxu0 %v3362
      %v3601 = vpop.f32.mrb[0].mxu0
      %v3602 = vadd.f32 0.0, %v3601
      %v3603 = vpop.f32.mrb[0].mxu0
      %3604 = vmatprep.mubr.f32.mxu0 0.0
      %3605 = vmatmul.mubr.f32.gmra.mrb[0].mxu0 %v3365
      %v3606 = vpop.f32.mrb[0].mxu0
      %v3607 = vadd.f32 0.0, %v3606
      %v3608 = vpop.f32.mrb[0].mxu0
      %3609 = vmatprep.mubr.f32.mxu0 0.0
      %3610 = vmatmul.mubr.f32.gmra.mrb[0].mxu0 %v3368
      %v3611 = vpop.f32.mrb[0].mxu0
      %v3612 = vadd.f32 0.0, %v3611
      %v3613 = vpop.f32.mrb[0].mxu0
      %3614 = vdwg.mxu0
      %v3615 = vadd.f32 %v3181, %v3437
      %v3616 = vadd.f32 %v3182, %v3442
      %v3617 = vadd.f32 %v3183, %v3447
      %v3618 = vadd.f32 %v3184, %v3452
      %v3619 = vadd.f32 %v3185, %v3457
      %v3620 = vadd.f32 %v3186, %v3462
      %v3621 = vadd.f32 %v3187, %v3467
      %v3622 = vadd.f32 %v3188, %v3472
      %v3623 = vadd.f32 %v3189, %v3477
      %v3624 = vadd.f32 %v3190, %v3482
      %v3625 = vadd.f32 %v3191, %v3487
      %v3626 = vadd.f32 %v3192, %v3492
      %v3627 = vadd.f32 %v3193, %v3497
      %v3628 = vadd.f32 %v3194, %v3502
      %v3629 = vadd.f32 %v3195, %v3507
      %v3630 = vadd.f32 %v3196, %v3512
      %v3631 = vadd.f32 %v3197, %v3517
      %v3632 = vadd.f32 %v3198, %v3522
      %v3633 = vadd.f32 %v3199, %v3527
      %v3634 = vadd.f32 %v3200, %v3532
      %v3635 = vadd.f32 %v3201, %v3537
      %v3636 = vadd.f32 %v3202, %v3542
      %v3637 = vadd.f32 %v3203, %v3547
      %v3638 = vadd.f32 %v3204, %v3552
      %v3639 = vadd.f32 %v3205, %v3557
      %v3640 = vadd.f32 %v3206, %v3562
      %v3641 = vadd.f32 %v3207, %v3567
      %v3642 = vadd.f32 %v3208, %v3572
      %v3643 = vadd.f32 %v3209, %v3577
      %v3644 = vadd.f32 %v3210, %v3582
      %v3645 = vadd.f32 %v3211, %v3587
      %v3646 = vadd.f32 %v3212, %v3592
      %v3647 = vadd.f32 %v3213, %v3597
      %v3648 = vadd.f32 %v3214, %v3602
      %v3649 = vadd.f32 %v3215, %v3607
      %v3650 = vadd.f32 %v3216, %v3612
      %v3651 = vld [vmem:[%s165 + $0x26] sm:$0xff]
      %v3652 = vld [vmem:[%s165 + $0x2e] sm:$0xff]
      %v3653 = vld [vmem:[%s165 + $0x36] sm:$0xff]
      %v3654 = vld [vmem:[%s165 + $0x3e] sm:$0xff]
      %v3655 = vld [vmem:[%s165 + $0x46] sm:$0xff]
      %v3656 = vld [vmem:[%s165 + $0x4e] sm:$0xff]
      %v3657 = vld [vmem:[%s165 + $0x56] sm:$0xff]
      %v3658 = vld [vmem:[%s165 + $0x5e] sm:$0xff]
      %v3659 = vld [vmem:[%s165 + $0x66] sm:$0xff]
      %v3660 = vld [vmem:[%s165 + $0x6e] sm:$0xff]
      %v3661 = vld [vmem:[%s165 + $0x76] sm:$0xff]
      %v3662 = vld [vmem:[%s165 + $0x7e] sm:$0xff]
      %v3663 = vld [vmem:[%s165 + $0x86] sm:$0xff]
      %v3664 = vld [vmem:[%s165 + $0x8e] sm:$0xff]
      %v3665 = vld [vmem:[%s165 + $0x96] sm:$0xff]
      %v3666 = vld [vmem:[%s165 + $0x9e] sm:$0xff]
      %v3667 = vld [vmem:[%s165 + $0xa6] sm:$0xff]
      %v3668 = vld [vmem:[%s165 + $0xae] sm:$0xff]
      %v3669 = vld [vmem:[%s165 + $0xb6] sm:$0xff]
      %v3670 = vld [vmem:[%s165 + $0xbe] sm:$0xff]
      %v3671 = vld [vmem:[%s165 + $0xc6] sm:$0xff]
      %v3672 = vld [vmem:[%s165 + $0xce] sm:$0xff]
      %v3673 = vld [vmem:[%s165 + $0xd6] sm:$0xff]
      %v3674 = vld [vmem:[%s165 + $0xde] sm:$0xff]
      %v3675 = vld [vmem:[%s165 + $0xe6] sm:$0xff]
      %v3676 = vld [vmem:[%s165 + $0xee] sm:$0xff]
      %v3677 = vld [vmem:[%s165 + $0xf6] sm:$0xff]
      %v3678 = vld [vmem:[%s165 + $0xfe] sm:$0xff]
      %v3679 = vld [vmem:[%s165 + $0x106] sm:$0xff]
      %v3680 = vld [vmem:[%s165 + $0x10e] sm:$0xff]
      %v3681 = vld [vmem:[%s165 + $0x116] sm:$0xff]
      %v3682 = vld [vmem:[%s165 + $0x11e] sm:$0xff]
      %v3683 = vld [vmem:[%s165 + $0x126] sm:$0xff]
      %v3684 = vld [vmem:[%s165 + $0x12e] sm:$0xff]
      %v3685 = vld [vmem:[%s165 + $0x136] sm:$0xff]
      %v3686 = vld [vmem:[%s165 + $0x13e] sm:$0xff]
      %s3687 = scalar_lea.vmem %s1, 512
      %v3688 = vld [vmem:[%s3687] sm:$0xff]
      %v3689 = vld [vmem:[%s3687 + $0x8] sm:$0xff]
      %v3690 = vld [vmem:[%s3687 + $0x10] sm:$0xff]
      %v3691 = vld [vmem:[%s3687 + $0x18] sm:$0xff]
      %v3692 = vld [vmem:[%s3687 + $0x20] sm:$0xff]
      %v3693 = vld [vmem:[%s3687 + $0x28] sm:$0xff]
      %v3694 = vld [vmem:[%s3687 + $0x30] sm:$0xff]
      %v3695 = vld [vmem:[%s3687 + $0x38] sm:$0xff]
      %v3697 = vsel %vm223, %v3651, 0
      %v3700 = vsel %vm223, %v3652, 0
      %v3703 = vsel %vm223, %v3653, 0
      %v3706 = vsel %vm223, %v3654, 0
      %v3709 = vsel %vm223, %v3655, 0
      %v3712 = vsel %vm223, %v3656, 0
      %v3715 = vsel %vm223, %v3657, 0
      %v3718 = vsel %vm223, %v3658, 0
      %v3721 = vsel %vm223, %v3659, 0
      %v3724 = vsel %vm223, %v3660, 0
      %v3727 = vsel %vm223, %v3661, 0
      %v3730 = vsel %vm223, %v3662, 0
      %v3733 = vsel %vm223, %v3663, 0
      %v3736 = vsel %vm223, %v3664, 0
      %v3739 = vsel %vm223, %v3665, 0
      %v3742 = vsel %vm223, %v3666, 0
      %v3745 = vsel %vm223, %v3667, 0
      %v3748 = vsel %vm223, %v3668, 0
      %v3751 = vsel %vm223, %v3669, 0
      %v3754 = vsel %vm223, %v3670, 0
      %v3757 = vsel %vm223, %v3671, 0
      %v3760 = vsel %vm223, %v3672, 0
      %v3763 = vsel %vm223, %v3673, 0
      %v3766 = vsel %vm223, %v3674, 0
      %v3769 = vsel %vm223, %v3675, 0
      %v3772 = vsel %vm223, %v3676, 0
      %v3775 = vsel %vm223, %v3677, 0
      %v3778 = vsel %vm223, %v3678, 0
      %v3781 = vsel %vm223, %v3679, 0
      %v3784 = vsel %vm223, %v3680, 0
      %v3787 = vsel %vm223, %v3681, 0
      %v3790 = vsel %vm223, %v3682, 0
      %v3793 = vsel %vm223, %v3683, 0
      %v3796 = vsel %vm223, %v3684, 0
      %v3799 = vsel %vm223, %v3685, 0
      %v3802 = vsel %vm223, %v3686, 0
      %3804 = vmatprep.subr.mxu0 0.0
      %3805 = vmatpush1.msra.mxu0 %v3688
      %3806 = vmatprep.subr.mxu0 0.0
      %3807 = vmatpush1.msra.mxu0 %v3689
      %3808 = vmatprep.subr.mxu0 0.0
      %3809 = vmatpush1.msra.mxu0 %v3690
      %3810 = vmatprep.subr.mxu0 0.0
      %3811 = vmatpush1.msra.mxu0 %v3691
      %3812 = vmatprep.subr.mxu0 0.0
      %3813 = vmatpush1.msra.mxu0 %v3692
      %3814 = vmatprep.subr.mxu0 0.0
      %3815 = vmatpush1.msra.mxu0 %v3693
      %3816 = vmatprep.subr.mxu0 0.0
      %3817 = vmatpush1.msra.mxu0 %v3694
      %3818 = vmatprep.subr.mxu0 0.0
      %3819 = vmatpush1.msra.mxu0 %v3695
      %3820 = vmatprep.subr.mxu0 0.0
      %3821 = vmatpush1.msra.mxu0 0.0
      %3822 = vmatprep.subr.mxu0 0.0
      %3823 = vmatpush1.msra.mxu0 0.0
      %3824 = vmatprep.subr.mxu0 0.0
      %3825 = vmatpush1.msra.mxu0 0.0
      %3826 = vmatprep.subr.mxu0 0.0
      %3827 = vmatpush1.msra.mxu0 0.0
      %3828 = vmatprep.subr.mxu0 0.0
      %3829 = vmatpush1.msra.mxu0 0.0
      %3830 = vmatprep.subr.mxu0 0.0
      %3831 = vmatpush1.msra.mxu0 0.0
      %3832 = vmatprep.subr.mxu0 0.0
      %3833 = vmatpush1.msra.mxu0 0.0
      %3834 = vmatprep.subr.mxu0 0.0
      %3835 = vmatpush1.msra.mxu0 0.0
      %3836 = vmatprep.subr.mxu0 0.0
      %3837 = vmatpush1.msra.mxu0 0.0
      %3838 = vmatprep.subr.mxu0 0.0
      %3839 = vmatpush1.msra.mxu0 0.0
      %3840 = vmatprep.subr.mxu0 0.0
      %3841 = vmatpush1.msra.mxu0 0.0
      %3842 = vmatprep.subr.mxu0 0.0
      %3843 = vmatpush1.msra.mxu0 0.0
      %3844 = vmatprep.subr.mxu0 0.0
      %3845 = vmatpush1.msra.mxu0 0.0
      %3846 = vmatprep.subr.mxu0 0.0
      %3847 = vmatpush1.msra.mxu0 0.0
      %3848 = vmatprep.subr.mxu0 0.0
      %3849 = vmatpush1.msra.mxu0 0.0
      %3850 = vmatprep.subr.mxu0 0.0
      %3851 = vmatpush1.msra.mxu0 0.0
      %3852 = vmatprep.subr.mxu0 0.0
      %3853 = vmatpush1.msra.mxu0 0.0
      %3854 = vmatprep.subr.mxu0 0.0
      %3855 = vmatpush1.msra.mxu0 0.0
      %3856 = vmatprep.subr.mxu0 0.0
      %3857 = vmatpush1.msra.mxu0 0.0
      %3858 = vmatprep.subr.mxu0 0.0
      %3859 = vmatpush1.msra.mxu0 0.0
      %3860 = vmatprep.subr.mxu0 0.0
      %3861 = vmatpush1.msra.mxu0 0.0
      %3862 = vmatprep.subr.mxu0 0.0
      %3863 = vmatpush1.msra.mxu0 0.0
      %3864 = vmatprep.subr.mxu0 0.0
      %3865 = vmatpush1.msra.mxu0 0.0
      %3866 = vmatprep.subr.mxu0 0.0
      %3867 = vmatpush1.msra.mxu0 0.0
      %3868 = vmatprep.mubr.f32.mxu0 0.0
      %3869 = vmatmul.mubr.f32.gmra.mrb[0].mxu0 %v3697
      %v3870 = vpop.f32.mrb[0].mxu0
      %v3871 = vadd.f32 0.0, %v3870
      %v3872 = vpop.f32.mrb[0].mxu0
      %3873 = vmatprep.mubr.f32.mxu0 0.0
      %3874 = vmatmul.mubr.f32.gmra.mrb[0].mxu0 %v3700
      %v3875 = vpop.f32.mrb[0].mxu0
      %v3876 = vadd.f32 0.0, %v3875
      %v3877 = vpop.f32.mrb[0].mxu0
      %3878 = vmatprep.mubr.f32.mxu0 0.0
      %3879 = vmatmul.mubr.f32.gmra.mrb[0].mxu0 %v3703
      %v3880 = vpop.f32.mrb[0].mxu0
      %v3881 = vadd.f32 0.0, %v3880
      %v3882 = vpop.f32.mrb[0].mxu0
      %3883 = vmatprep.mubr.f32.mxu0 0.0
      %3884 = vmatmul.mubr.f32.gmra.mrb[0].mxu0 %v3706
      %v3885 = vpop.f32.mrb[0].mxu0
      %v3886 = vadd.f32 0.0, %v3885
      %v3887 = vpop.f32.mrb[0].mxu0
      %3888 = vmatprep.mubr.f32.mxu0 0.0
      %3889 = vmatmul.mubr.f32.gmra.mrb[0].mxu0 %v3709
      %v3890 = vpop.f32.mrb[0].mxu0
      %v3891 = vadd.f32 0.0, %v3890
      %v3892 = vpop.f32.mrb[0].mxu0
      %3893 = vmatprep.mubr.f32.mxu0 0.0
      %3894 = vmatmul.mubr.f32.gmra.mrb[0].mxu0 %v3712
      %v3895 = vpop.f32.mrb[0].mxu0
      %v3896 = vadd.f32 0.0, %v3895
      %v3897 = vpop.f32.mrb[0].mxu0
      %3898 = vmatprep.mubr.f32.mxu0 0.0
      %3899 = vmatmul.mubr.f32.gmra.mrb[0].mxu0 %v3715
      %v3900 = vpop.f32.mrb[0].mxu0
      %v3901 = vadd.f32 0.0, %v3900
      %v3902 = vpop.f32.mrb[0].mxu0
      %3903 = vmatprep.mubr.f32.mxu0 0.0
      %3904 = vmatmul.mubr.f32.gmra.mrb[0].mxu0 %v3718
      %v3905 = vpop.f32.mrb[0].mxu0
      %v3906 = vadd.f32 0.0, %v3905
      %v3907 = vpop.f32.mrb[0].mxu0
      %3908 = vmatprep.mubr.f32.mxu0 0.0
      %3909 = vmatmul.mubr.f32.gmra.mrb[0].mxu0 %v3721
      %v3910 = vpop.f32.mrb[0].mxu0
      %v3911 = vadd.f32 0.0, %v3910
      %v3912 = vpop.f32.mrb[0].mxu0
      %3913 = vmatprep.mubr.f32.mxu0 0.0
      %3914 = vmatmul.mubr.f32.gmra.mrb[0].mxu0 %v3724
      %v3915 = vpop.f32.mrb[0].mxu0
      %v3916 = vadd.f32 0.0, %v3915
      %v3917 = vpop.f32.mrb[0].mxu0
      %3918 = vmatprep.mubr.f32.mxu0 0.0
      %3919 = vmatmul.mubr.f32.gmra.mrb[0].mxu0 %v3727
      %v3920 = vpop.f32.mrb[0].mxu0
      %v3921 = vadd.f32 0.0, %v3920
      %v3922 = vpop.f32.mrb[0].mxu0
      %3923 = vmatprep.mubr.f32.mxu0 0.0
      %3924 = vmatmul.mubr.f32.gmra.mrb[0].mxu0 %v3730
      %v3925 = vpop.f32.mrb[0].mxu0
      %v3926 = vadd.f32 0.0, %v3925
      %v3927 = vpop.f32.mrb[0].mxu0
      %3928 = vmatprep.mubr.f32.mxu0 0.0
      %3929 = vmatmul.mubr.f32.gmra.mrb[0].mxu0 %v3733
      %v3930 = vpop.f32.mrb[0].mxu0
      %v3931 = vadd.f32 0.0, %v3930
      %v3932 = vpop.f32.mrb[0].mxu0
      %3933 = vmatprep.mubr.f32.mxu0 0.0
      %3934 = vmatmul.mubr.f32.gmra.mrb[0].mxu0 %v3736
      %v3935 = vpop.f32.mrb[0].mxu0
      %v3936 = vadd.f32 0.0, %v3935
      %v3937 = vpop.f32.mrb[0].mxu0
      %3938 = vmatprep.mubr.f32.mxu0 0.0
      %3939 = vmatmul.mubr.f32.gmra.mrb[0].mxu0 %v3739
      %v3940 = vpop.f32.mrb[0].mxu0
      %v3941 = vadd.f32 0.0, %v3940
      %v3942 = vpop.f32.mrb[0].mxu0
      %3943 = vmatprep.mubr.f32.mxu0 0.0
      %3944 = vmatmul.mubr.f32.gmra.mrb[0].mxu0 %v3742
      %v3945 = vpop.f32.mrb[0].mxu0
      %v3946 = vadd.f32 0.0, %v3945
      %v3947 = vpop.f32.mrb[0].mxu0
      %3948 = vmatprep.mubr.f32.mxu0 0.0
      %3949 = vmatmul.mubr.f32.gmra.mrb[0].mxu0 %v3745
      %v3950 = vpop.f32.mrb[0].mxu0
      %v3951 = vadd.f32 0.0, %v3950
      %v3952 = vpop.f32.mrb[0].mxu0
      %3953 = vmatprep.mubr.f32.mxu0 0.0
      %3954 = vmatmul.mubr.f32.gmra.mrb[0].mxu0 %v3748
      %v3955 = vpop.f32.mrb[0].mxu0
      %v3956 = vadd.f32 0.0, %v3955
      %v3957 = vpop.f32.mrb[0].mxu0
      %3958 = vmatprep.mubr.f32.mxu0 0.0
      %3959 = vmatmul.mubr.f32.gmra.mrb[0].mxu0 %v3751
      %v3960 = vpop.f32.mrb[0].mxu0
      %v3961 = vadd.f32 0.0, %v3960
      %v3962 = vpop.f32.mrb[0].mxu0
      %3963 = vmatprep.mubr.f32.mxu0 0.0
      %3964 = vmatmul.mubr.f32.gmra.mrb[0].mxu0 %v3754
      %v3965 = vpop.f32.mrb[0].mxu0
      %v3966 = vadd.f32 0.0, %v3965
      %v3967 = vpop.f32.mrb[0].mxu0
      %3968 = vmatprep.mubr.f32.mxu0 0.0
      %3969 = vmatmul.mubr.f32.gmra.mrb[0].mxu0 %v3757
      %v3970 = vpop.f32.mrb[0].mxu0
      %v3971 = vadd.f32 0.0, %v3970
      %v3972 = vpop.f32.mrb[0].mxu0
      %3973 = vmatprep.mubr.f32.mxu0 0.0
      %3974 = vmatmul.mubr.f32.gmra.mrb[0].mxu0 %v3760
      %v3975 = vpop.f32.mrb[0].mxu0
      %v3976 = vadd.f32 0.0, %v3975
      %v3977 = vpop.f32.mrb[0].mxu0
      %3978 = vmatprep.mubr.f32.mxu0 0.0
      %3979 = vmatmul.mubr.f32.gmra.mrb[0].mxu0 %v3763
      %v3980 = vpop.f32.mrb[0].mxu0
      %v3981 = vadd.f32 0.0, %v3980
      %v3982 = vpop.f32.mrb[0].mxu0
      %3983 = vmatprep.mubr.f32.mxu0 0.0
      %3984 = vmatmul.mubr.f32.gmra.mrb[0].mxu0 %v3766
      %v3985 = vpop.f32.mrb[0].mxu0
      %v3986 = vadd.f32 0.0, %v3985
      %v3987 = vpop.f32.mrb[0].mxu0
      %3988 = vmatprep.mubr.f32.mxu0 0.0
      %3989 = vmatmul.mubr.f32.gmra.mrb[0].mxu0 %v3769
      %v3990 = vpop.f32.mrb[0].mxu0
      %v3991 = vadd.f32 0.0, %v3990
      %v3992 = vpop.f32.mrb[0].mxu0
      %3993 = vmatprep.mubr.f32.mxu0 0.0
      %3994 = vmatmul.mubr.f32.gmra.mrb[0].mxu0 %v3772
      %v3995 = vpop.f32.mrb[0].mxu0
      %v3996 = vadd.f32 0.0, %v3995
      %v3997 = vpop.f32.mrb[0].mxu0
      %3998 = vmatprep.mubr.f32.mxu0 0.0
      %3999 = vmatmul.mubr.f32.gmra.mrb[0].mxu0 %v3775
      %v4000 = vpop.f32.mrb[0].mxu0
      %v4001 = vadd.f32 0.0, %v4000
      %v4002 = vpop.f32.mrb[0].mxu0
      %4003 = vmatprep.mubr.f32.mxu0 0.0
      %4004 = vmatmul.mubr.f32.gmra.mrb[0].mxu0 %v3778
      %v4005 = vpop.f32.mrb[0].mxu0
      %v4006 = vadd.f32 0.0, %v4005
      %v4007 = vpop.f32.mrb[0].mxu0
      %4008 = vmatprep.mubr.f32.mxu0 0.0
      %4009 = vmatmul.mubr.f32.gmra.mrb[0].mxu0 %v3781
      %v4010 = vpop.f32.mrb[0].mxu0
      %v4011 = vadd.f32 0.0, %v4010
      %v4012 = vpop.f32.mrb[0].mxu0
      %4013 = vmatprep.mubr.f32.mxu0 0.0
      %4014 = vmatmul.mubr.f32.gmra.mrb[0].mxu0 %v3784
      %v4015 = vpop.f32.mrb[0].mxu0
      %v4016 = vadd.f32 0.0, %v4015
      %v4017 = vpop.f32.mrb[0].mxu0
      %4018 = vmatprep.mubr.f32.mxu0 0.0
      %4019 = vmatmul.mubr.f32.gmra.mrb[0].mxu0 %v3787
      %v4020 = vpop.f32.mrb[0].mxu0
      %v4021 = vadd.f32 0.0, %v4020
      %v4022 = vpop.f32.mrb[0].mxu0
      %4023 = vmatprep.mubr.f32.mxu0 0.0
      %4024 = vmatmul.mubr.f32.gmra.mrb[0].mxu0 %v3790
      %v4025 = vpop.f32.mrb[0].mxu0
      %v4026 = vadd.f32 0.0, %v4025
      %v4027 = vpop.f32.mrb[0].mxu0
      %4028 = vmatprep.mubr.f32.mxu0 0.0
      %4029 = vmatmul.mubr.f32.gmra.mrb[0].mxu0 %v3793
      %v4030 = vpop.f32.mrb[0].mxu0
      %v4031 = vadd.f32 0.0, %v4030
      %v4032 = vpop.f32.mrb[0].mxu0
      %4033 = vmatprep.mubr.f32.mxu0 0.0
      %4034 = vmatmul.mubr.f32.gmra.mrb[0].mxu0 %v3796
      %v4035 = vpop.f32.mrb[0].mxu0
      %v4036 = vadd.f32 0.0, %v4035
      %v4037 = vpop.f32.mrb[0].mxu0
      %4038 = vmatprep.mubr.f32.mxu0 0.0
      %4039 = vmatmul.mubr.f32.gmra.mrb[0].mxu0 %v3799
      %v4040 = vpop.f32.mrb[0].mxu0
      %v4041 = vadd.f32 0.0, %v4040
      %v4042 = vpop.f32.mrb[0].mxu0
      %4043 = vmatprep.mubr.f32.mxu0 0.0
      %4044 = vmatmul.mubr.f32.gmra.mrb[0].mxu0 %v3802
      %v4045 = vpop.f32.mrb[0].mxu0
      %v4046 = vadd.f32 0.0, %v4045
      %v4047 = vpop.f32.mrb[0].mxu0
      %4048 = vdwg.mxu0
      %v4049 = vadd.f32 %v3615, %v3871
      %v4050 = vadd.f32 %v3616, %v3876
      %v4051 = vadd.f32 %v3617, %v3881
      %v4052 = vadd.f32 %v3618, %v3886
      %v4053 = vadd.f32 %v3619, %v3891
      %v4054 = vadd.f32 %v3620, %v3896
      %v4055 = vadd.f32 %v3621, %v3901
      %v4056 = vadd.f32 %v3622, %v3906
      %v4057 = vadd.f32 %v3623, %v3911
      %v4058 = vadd.f32 %v3624, %v3916
      %v4059 = vadd.f32 %v3625, %v3921
      %v4060 = vadd.f32 %v3626, %v3926
      %v4061 = vadd.f32 %v3627, %v3931
      %v4062 = vadd.f32 %v3628, %v3936
      %v4063 = vadd.f32 %v3629, %v3941
      %v4064 = vadd.f32 %v3630, %v3946
      %v4065 = vadd.f32 %v3631, %v3951
      %v4066 = vadd.f32 %v3632, %v3956
      %v4067 = vadd.f32 %v3633, %v3961
      %v4068 = vadd.f32 %v3634, %v3966
      %v4069 = vadd.f32 %v3635, %v3971
      %v4070 = vadd.f32 %v3636, %v3976
      %v4071 = vadd.f32 %v3637, %v3981
      %v4072 = vadd.f32 %v3638, %v3986
      %v4073 = vadd.f32 %v3639, %v3991
      %v4074 = vadd.f32 %v3640, %v3996
      %v4075 = vadd.f32 %v3641, %v4001
      %v4076 = vadd.f32 %v3642, %v4006
      %v4077 = vadd.f32 %v3643, %v4011
      %v4078 = vadd.f32 %v3644, %v4016
      %v4079 = vadd.f32 %v3645, %v4021
      %v4080 = vadd.f32 %v3646, %v4026
      %v4081 = vadd.f32 %v3647, %v4031
      %v4082 = vadd.f32 %v3648, %v4036
      %v4083 = vadd.f32 %v3649, %v4041
      %v4084 = vadd.f32 %v3650, %v4046
      %v4085 = vmax.f32 %v4049, 0.0
      %v4086 = vmax.f32 %v4050, 0.0
      %v4087 = vmax.f32 %v4051, 0.0
      %v4088 = vmax.f32 %v4052, 0.0
      %v4089 = vmax.f32 %v4053, 0.0
      %v4090 = vmax.f32 %v4054, 0.0
      %v4091 = vmax.f32 %v4055, 0.0
      %v4092 = vmax.f32 %v4056, 0.0
      %v4093 = vmax.f32 %v4057, 0.0
      %v4094 = vmax.f32 %v4058, 0.0
      %v4095 = vmax.f32 %v4059, 0.0
      %v4096 = vmax.f32 %v4060, 0.0
      %v4097 = vmax.f32 %v4061, 0.0
      %v4098 = vmax.f32 %v4062, 0.0
      %v4099 = vmax.f32 %v4063, 0.0
      %v4100 = vmax.f32 %v4064, 0.0
      %v4101 = vmax.f32 %v4065, 0.0
      %v4102 = vmax.f32 %v4066, 0.0
      %v4103 = vmax.f32 %v4067, 0.0
      %v4104 = vmax.f32 %v4068, 0.0
      %v4105 = vmax.f32 %v4069, 0.0
      %v4106 = vmax.f32 %v4070, 0.0
      %v4107 = vmax.f32 %v4071, 0.0
      %v4108 = vmax.f32 %v4072, 0.0
      %v4109 = vmax.f32 %v4073, 0.0
      %v4110 = vmax.f32 %v4074, 0.0
      %v4111 = vmax.f32 %v4075, 0.0
      %v4112 = vmax.f32 %v4076, 0.0
      %v4113 = vmax.f32 %v4077, 0.0
      %v4114 = vmax.f32 %v4078, 0.0
      %v4115 = vmax.f32 %v4079, 0.0
      %v4116 = vmax.f32 %v4080, 0.0
      %v4117 = vmax.f32 %v4081, 0.0
      %v4118 = vmax.f32 %v4082, 0.0
      %v4119 = vmax.f32 %v4083, 0.0
      %v4120 = vmax.f32 %v4084, 0.0
      %4121 = vst.msk [vmem:[%s170] sm:$0xff] %vm223, %v4085
      %4122 = vst.msk [vmem:[%s170 + $0x8] sm:$0xff] %vm223, %v4086
      %4123 = vst.msk [vmem:[%s170 + $0x10] sm:$0xff] %vm223, %v4087
      %4124 = vst.msk [vmem:[%s170 + $0x18] sm:$0xff] %vm223, %v4088
      %4125 = vst.msk [vmem:[%s170 + $0x20] sm:$0xff] %vm223, %v4089
      %4126 = vst.msk [vmem:[%s170 + $0x28] sm:$0xff] %vm223, %v4090
      %4127 = vst.msk [vmem:[%s170 + $0x30] sm:$0xff] %vm223, %v4091
      %4128 = vst.msk [vmem:[%s170 + $0x38] sm:$0xff] %vm223, %v4092
      %4129 = vst.msk [vmem:[%s170 + $0x40] sm:$0xff] %vm223, %v4093
      %4130 = vst.msk [vmem:[%s170 + $0x48] sm:$0xff] %vm223, %v4094
      %4131 = vst.msk [vmem:[%s170 + $0x50] sm:$0xff] %vm223, %v4095
      %4132 = vst.msk [vmem:[%s170 + $0x58] sm:$0xff] %vm223, %v4096
      %4133 = vst.msk [vmem:[%s170 + $0x60] sm:$0xff] %vm223, %v4097
      %4134 = vst.msk [vmem:[%s170 + $0x68] sm:$0xff] %vm223, %v4098
      %4135 = vst.msk [vmem:[%s170 + $0x70] sm:$0xff] %vm223, %v4099
      %4136 = vst.msk [vmem:[%s170 + $0x78] sm:$0xff] %vm223, %v4100
      %4137 = vst.msk [vmem:[%s170 + $0x80] sm:$0xff] %vm223, %v4101
      %4138 = vst.msk [vmem:[%s170 + $0x88] sm:$0xff] %vm223, %v4102
      %4139 = vst.msk [vmem:[%s170 + $0x90] sm:$0xff] %vm223, %v4103
      %4140 = vst.msk [vmem:[%s170 + $0x98] sm:$0xff] %vm223, %v4104
      %4141 = vst.msk [vmem:[%s170 + $0xa0] sm:$0xff] %vm223, %v4105
      %4142 = vst.msk [vmem:[%s170 + $0xa8] sm:$0xff] %vm223, %v4106
      %4143 = vst.msk [vmem:[%s170 + $0xb0] sm:$0xff] %vm223, %v4107
      %4144 = vst.msk [vmem:[%s170 + $0xb8] sm:$0xff] %vm223, %v4108
      %4145 = vst.msk [vmem:[%s170 + $0xc0] sm:$0xff] %vm223, %v4109
      %4146 = vst.msk [vmem:[%s170 + $0xc8] sm:$0xff] %vm223, %v4110
      %4147 = vst.msk [vmem:[%s170 + $0xd0] sm:$0xff] %vm223, %v4111
      %4148 = vst.msk [vmem:[%s170 + $0xd8] sm:$0xff] %vm223, %v4112
      %4149 = vst.msk [vmem:[%s170 + $0xe0] sm:$0xff] %vm223, %v4113
      %4150 = vst.msk [vmem:[%s170 + $0xe8] sm:$0xff] %vm223, %v4114
      %4151 = vst.msk [vmem:[%s170 + $0xf0] sm:$0xff] %vm223, %v4115
      %4152 = vst.msk [vmem:[%s170 + $0xf8] sm:$0xff] %vm223, %v4116
      %4153 = vst.msk [vmem:[%s170 + $0x100] sm:$0xff] %vm223, %v4117
      %4154 = vst.msk [vmem:[%s170 + $0x108] sm:$0xff] %vm223, %v4118
      %4155 = vst.msk [vmem:[%s170 + $0x110] sm:$0xff] %vm223, %v4119
      %4156 = vst.msk [vmem:[%s170 + $0x118] sm:$0xff] %vm223, %v4120
      %p4157 = scmp.lt.s32.totalorder %s14, 1
      %s4158 = scalar_select %p4157, %s14, 1
      %s4159 = smul.addr %s4158, 36
      %s4160 = smul.addr %s4159, 8
      %s4161 = scalar_lea.vmem %s3, %s4160
      // Predicated region
      $region33: #{qkplus_forward.6} parent=31 // pred_check
        %p4162 = pneg %p100
      $region34: #{qkplus_forward.6} parent=31 // pred_check_branch
        %4164 = sbr.rel (%p4162) target = $region36
      $region35: #{qkplus_forward.6} parent=31 // pred_region
        _
      $region36: #{qkplus_forward.6} parent=31 // pred_fallthru
        _
    $region32: #{qkplus_forward.6} parent=5 // pred_fallthru
      _
    %p4165 = scmp.le.s32.totalorder 2, %s9
    // Predicated region
    $region37: #{qkplus_forward.6} parent=5 // pred_check
      %p4166 = pneg %p4165
    $region38: #{qkplus_forward.6} parent=5 // pred_check_branch
      %4168 = sbr.rel (%p4166) target = $region40
    $region39: #{qkplus_forward.6} parent=5 // pred_region
      %s4169 = ssub.s32 %s9, 2
      // Predicated region
      $region41: #{qkplus_forward.6} parent=39 // pred_check
        %p4170 = pneg %p106
      $region42: #{qkplus_forward.6} parent=39 // pred_check_branch
        %4172 = sbr.rel (%p4170) target = $region44
      $region43: #{qkplus_forward.6} parent=39 // pred_region
        %p4173 = scmp.lt.s32.totalorder %s15, 1
        %s4174 = scalar_select %p4173, %s15, 1
        %s4175 = smul.addr %s4174, 36
        %s4176 = smul.addr %s4175, 8
        %s4177 = scalar_lea.vmem %s3, %s4176
      $region44: #{qkplus_forward.6} parent=39 // pred_fallthru
        _
    $region40: #{qkplus_forward.6} parent=5 // pred_fallthru
      _
  $region6: #{qkplus_forward.6} parent=0 // loop_footer
    %s13 = sadd.s32 1, %s9
  $region7: #{qkplus_forward.6} parent=0 // loop_footer_branch
    %8 = sbr.rel target = $region3
  $region8: #{qkplus_forward.6} parent=0 // loop_exit
    _

</llo_original>
